<compile_context>
chip_gen: v7x
topology: tpu7x:2x2x1
jax: 0.10.0
libtpu: 0.0.40
codegen_flags: <defaults>
</compile_context>

<pallas_src>
import numpy as np
import jax
import jax.numpy as jnp
from jax.experimental import pallas as pl
from jax.experimental.pallas import tpu as pltpu

TILE_B = 8            # images per grid step (tiny footprint; fits v7x 64 MiB VMEM)

C1, C2 = 10, 20       # conv output channels
H0 = W0 = 28          # input spatial (MNIST-sized, implied by fc1 = 20*4*4)
H1 = W1 = 24          # conv1 output spatial
P1 = 12               # pool1 output spatial
H2 = W2 = 8           # conv2 output spatial
P2 = 4                # pool2 output spatial
FC1, FC2 = 50, 10


# ----------------------------------------------------------------------------
# Fused Pallas kernel: the entire forward pass for one batch tile.
# Activation layout: rows = (image, spatial-row), lanes = (spatial-col, chan).
# ----------------------------------------------------------------------------
def _fused_forward_kernel(
    x_ref,                 # (TILE_B*28, 28)  input rows, images stacked on rows
    t1_ref,                # (5, 28, W1*C1)   conv1 Toeplitz (one per kh)
    b1_ref,                # (1, W1*C1)
    r1_ref,                # (5, TILE_B*H1, TILE_B*28)  conv1 row gather (per kh)
    sv1e_ref, sv1o_ref,    # (TILE_B*P1, TILE_B*H1)     pool1 vertical even/odd
    sh1e_ref, sh1o_ref,    # (W1*C1, P1*C1)             pool1 horizontal even/odd
    u2_ref,                # (5, P1*C1, W2*C2)          conv2 weights (per kh)
    b2_ref,                # (1, W2*C2)
    r2_ref,                # (5, TILE_B*H2, TILE_B*P1)
    sv2e_ref, sv2o_ref,    # (TILE_B*P2, TILE_B*H2)
    sh2e_ref, sh2o_ref,    # (W2*C2, P2*C2)
    f_ref,                 # (P2, TILE_B, TILE_B*P2)    fc row gather (per h)
    w1_ref,                # (P2, P2*C2, FC1)           fc1, flatten-permuted
    bf1_ref,               # (1, FC1)
    w2_ref,                # (FC1, FC2)
    bf2_ref,               # (1, FC2)
    o_ref,                 # (TILE_B, FC2)
):
    def mm(a, b):
        return jnp.dot(a, b, preferred_element_type=jnp.float32)

    x = x_ref[...]

    # ---- conv1: rows (n, i) x cols (j, c_out)  -> (TILE_B*24, 240) ----
    c1 = b1_ref[...]
    for kh in range(5):
        c1 = c1 + mm(mm(r1_ref[kh], x), t1_ref[kh])

    # ---- maxpool 2x2/2 + relu  -> (TILE_B*12, 120) ----
    v1 = jnp.maximum(mm(sv1e_ref[...], c1), mm(sv1o_ref[...], c1))
    a1 = jnp.maximum(jnp.maximum(mm(v1, sh1e_ref[...]), mm(v1, sh1o_ref[...])), 0.0)

    # ---- conv2: rows (n, i) x cols (j, c_out)  -> (TILE_B*8, 160) ----
    c2 = b2_ref[...]
    for kh in range(5):
        c2 = c2 + mm(mm(r2_ref[kh], a1), u2_ref[kh])

    # ---- maxpool 2x2/2 + relu  -> (TILE_B*4, 80) ----
    v2 = jnp.maximum(mm(sv2e_ref[...], c2), mm(sv2o_ref[...], c2))
    a2 = jnp.maximum(jnp.maximum(mm(v2, sh2e_ref[...]), mm(v2, sh2o_ref[...])), 0.0)

    # Dropout(p=0.3) is identity at inference (model.eval()).
    # TODO(synk): add train-mode dropout masking via pltpu.prng_random_bits if needed.

    # ---- fc1 + relu (torch NCHW flatten order folded into w1_ref at prep) ----
    h = bf1_ref[...]
    for hh in range(P2):
        h = h + mm(mm(f_ref[hh], a2), w1_ref[hh])
    h = jnp.maximum(h, 0.0)

    # ---- fc2 + log_softmax(dim=1) ----
    logits = mm(h, w2_ref[...]) + bf2_ref[...]
    m = jnp.max(logits, axis=-1, keepdims=True)
    s = logits - m
    lse = jnp.log(jnp.sum(jnp.exp(s), axis=-1, keepdims=True))
    o_ref[...] = s - lse


# ----------------------------------------------------------------------------
# One-time parameter preprocessing (hoisted out of the jitted forward).
# ----------------------------------------------------------------------------
def init_params(seed=42):
    key = jax.random.PRNGKey(seed)
    ks = jax.random.split(key, 8)
    return {
        "conv1_w": jax.random.normal(ks[0], (C1, 1, 5, 5), jnp.float32) * 0.1,
        "conv1_b": jax.random.normal(ks[1], (C1,), jnp.float32) * 0.01,
        "conv2_w": jax.random.normal(ks[2], (C2, C1, 5, 5), jnp.float32) * 0.05,
        "conv2_b": jax.random.normal(ks[3], (C2,), jnp.float32) * 0.01,
        "fc1_w": jax.random.normal(ks[4], (FC1, C2 * P2 * P2), jnp.float32) * 0.05,
        "fc1_b": jax.random.normal(ks[5], (FC1,), jnp.float32) * 0.01,
        "fc2_w": jax.random.normal(ks[6], (FC2, FC1), jnp.float32) * 0.1,
        "fc2_b": jax.random.normal(ks[7], (FC2,), jnp.float32) * 0.01,
    }


def prepare_params(params, tile_b=TILE_B):
    """Build the constant matrices that encode im2col / pooling / flatten."""
    f32 = np.float32
    w1 = np.asarray(params["conv1_w"], f32)
    b1 = np.asarray(params["conv1_b"], f32)
    w2 = np.asarray(params["conv2_w"], f32)
    b2 = np.asarray(params["conv2_b"], f32)
    fw1 = np.asarray(params["fc1_w"], f32)
    fb1 = np.asarray(params["fc1_b"], f32)
    fw2 = np.asarray(params["fc2_w"], f32)
    fb2 = np.asarray(params["fc2_b"], f32)

    # conv1 as Toeplitz matmuls over W (one per kh); output cols = (j, c_out).
    t1 = np.zeros((5, W0, W1 * C1), f32)
    for kh in range(5):
        for j in range(W1):
            for kw in range(5):
                t1[kh, j + kw, j * C1:(j + 1) * C1] = w1[:, 0, kh, kw]
    b1row = np.tile(b1, W1)[None, :]

    # conv1 row gather: picks rows i+kh of each image's 28 input rows.
    r1 = np.zeros((5, tile_b * H1, tile_b * H0), f32)
    for kh in range(5):
        for n in range(tile_b):
            for i in range(H1):
                r1[kh, n * H1 + i, n * H0 + i + kh] = 1.0

    # pool1 selectors (even/odd rows; even/odd column groups).
    sv1e = np.zeros((tile_b * P1, tile_b * H1), f32)
    sv1o = np.zeros_like(sv1e)
    for n in range(tile_b):
        for i in range(P1):
            sv1e[n * P1 + i, n * H1 + 2 * i] = 1.0
            sv1o[n * P1 + i, n * H1 + 2 * i + 1] = 1.0
    sh1e = np.zeros((W1 * C1, P1 * C1), f32)
    sh1o = np.zeros_like(sh1e)
    for j in range(P1):
        for c in range(C1):
            sh1e[(2 * j) * C1 + c, j * C1 + c] = 1.0
            sh1o[(2 * j + 1) * C1 + c, j * C1 + c] = 1.0

    # conv2 as matmuls contracting (w_in, c_in) per kh; output cols = (j, c_out).
    u2 = np.zeros((5, P1 * C1, W2 * C2), f32)
    for kh in range(5):
        for j in range(W2):
            for kw in range(5):
                for ci in range(C1):
                    u2[kh, (j + kw) * C1 + ci, j * C2:(j + 1) * C2] = w2[:, ci, kh, kw]
    b2row = np.tile(b2, W2)[None, :]

    r2 = np.zeros((5, tile_b * H2, tile_b * P1), f32)
    for kh in range(5):
        for n in range(tile_b):
            for i in range(H2):
                r2[kh, n * H2 + i, n * P1 + i + kh] = 1.0

    sv2e = np.zeros((tile_b * P2, tile_b * H2), f32)
    sv2o = np.zeros_like(sv2e)
    for n in range(tile_b):
        for i in range(P2):
            sv2e[n * P2 + i, n * H2 + 2 * i] = 1.0
            sv2o[n * P2 + i, n * H2 + 2 * i + 1] = 1.0
    sh2e = np.zeros((W2 * C2, P2 * C2), f32)
    sh2o = np.zeros_like(sh2e)
    for j in range(P2):
        for c in range(C2):
            sh2e[(2 * j) * C2 + c, j * C2 + c] = 1.0
            sh2o[(2 * j + 1) * C2 + c, j * C2 + c] = 1.0

    # FC head: gather spatial row h per image; fold torch NCHW flatten order
    # (index = c*16 + h*4 + w) into the fc1 weight layout.
    fsel = np.zeros((P2, tile_b, tile_b * P2), f32)
    for h in range(P2):
        for n in range(tile_b):
            fsel[h, n, n * P2 + h] = 1.0
    w1p = np.zeros((P2, P2 * C2, FC1), f32)
    for h in range(P2):
        for w in range(P2):
            for c in range(C2):
                w1p[h, w * C2 + c, :] = fw1[:, c * (P2 * P2) + h * P2 + w]
    bf1row = fb1[None, :]
    w2p = np.ascontiguousarray(fw2.T)
    bf2row = fb2[None, :]

    arrays = (t1, b1row, r1, sv1e, sv1o, sh1e, sh1o,
              u2, b2row, r2, sv2e, sv2o, sh2e, sh2o,
              fsel, w1p, bf1row, w2p, bf2row)
    return tuple(jnp.asarray(a) for a in arrays)


# ----------------------------------------------------------------------------
# Forward wrapper: one fused pallas_call over batch tiles.
# ----------------------------------------------------------------------------
def _const_index_map(ndim):
    return lambda i: (0,) * ndim


@jax.jit
def my_network_forward(x_nchw, prepped):
    """MyNetwork forward (eval mode).  x_nchw: (N, 1, 28, 28) -> (N, 10)."""
    n = x_nchw.shape[0]
    pad_n = ((n + TILE_B - 1) // TILE_B) * TILE_B

    x = x_nchw.reshape(n, H0, W0).astype(jnp.float32)
    if pad_n != n:
        x = jnp.pad(x, ((0, pad_n - n), (0, 0), (0, 0)))
    x2d = x.reshape(pad_n * H0, W0)          # images stacked along rows

    in_specs = [pl.BlockSpec((TILE_B * H0, W0), lambda i: (i, 0))]
    for arr in prepped:
        in_specs.append(pl.BlockSpec(arr.shape, _const_index_map(arr.ndim)))

    out = pl.pallas_call(
        _fused_forward_kernel,
        out_shape=jax.ShapeDtypeStruct((pad_n, FC2), jnp.float32),
        grid=(pad_n // TILE_B,),
        in_specs=in_specs,
        out_specs=pl.BlockSpec((TILE_B, FC2), lambda i: (i, 0)),
        compiler_params=pltpu.CompilerParams(
            dimension_semantics=("parallel",),
        ),
    )(x2d, *prepped)
    return out[:n]


# ----------------------------------------------------------------------------
# Pure-XLA reference (for correctness check only).
# ----------------------------------------------------------------------------
def _reference_forward(x_nchw, params):
    x = x_nchw.astype(jnp.float32)

    def conv(z, w, b):
        y = jax.lax.conv_general_dilated(
            z, w, window_strides=(1, 1), padding="VALID",
            dimension_numbers=("NCHW", "OIHW", "NCHW"))
        return y + b[None, :, None, None]

    def pool2x2(z):
        n, c, h, w = z.shape
        return z.reshape(n, c, h // 2, 2, w // 2, 2).max(axis=(3, 5))

    a1 = jax.nn.relu(pool2x2(conv(x, params["conv1_w"], params["conv1_b"])))
    a2 = jax.nn.relu(pool2x2(conv(a1, params["conv2_w"], params["conv2_b"])))
    flat = a2.reshape(a2.shape[0], -1)
    h = jax.nn.relu(flat @ params["fc1_w"].T + params["fc1_b"])
    logits = h @ params["fc2_w"].T + params["fc2_b"]
    return jax.nn.log_softmax(logits, axis=-1)


if __name__ == "__main__":
    params = init_params(seed=42)
    prepped = prepare_params(params)

    # MyNetwork implies MNIST-sized input: (batch, 1, 28, 28) so that
    # 20 * 4 * 4 = 320 matches fc1's input dimension.
    x = jax.random.normal(jax.random.PRNGKey(0), (2, 1, 28, 28), jnp.float32)

    out = jax.block_until_ready(my_network_forward(x, prepped))
    ref = jax.block_until_ready(_reference_forward(x, params))

    assert out.shape == (2, 10)
    assert bool(jnp.all(jnp.isfinite(out)))
    # log_softmax rows should (approximately) exponentiate-sum to 1.
    row_sums = jnp.sum(jnp.exp(out), axis=1)
    assert bool(jnp.all(jnp.abs(row_sums - 1.0) < 1e-3))
    # Matches the XLA reference (tolerance covers TPU f32 matmul emulation).
    max_err = float(jnp.max(jnp.abs(out - ref)))
    assert max_err < 0.1, max_err

    print("KERNEL_OK")
</pallas_src>

<mosaic_0001>
module attributes {stable_mosaic.version = 11 : i64} {
  func.func @_fused_forward_kernel(%arg0: i32, %arg1: memref<224x28xf32, #tpu.memory_space<vmem>>, %arg2: memref<5x28x240xf32, #tpu.memory_space<vmem>>, %arg3: memref<1x240xf32, #tpu.memory_space<vmem>>, %arg4: memref<5x192x224xf32, #tpu.memory_space<vmem>>, %arg5: memref<96x192xf32, #tpu.memory_space<vmem>>, %arg6: memref<96x192xf32, #tpu.memory_space<vmem>>, %arg7: memref<240x120xf32, #tpu.memory_space<vmem>>, %arg8: memref<240x120xf32, #tpu.memory_space<vmem>>, %arg9: memref<5x120x160xf32, #tpu.memory_space<vmem>>, %arg10: memref<1x160xf32, #tpu.memory_space<vmem>>, %arg11: memref<5x64x96xf32, #tpu.memory_space<vmem>>, %arg12: memref<32x64xf32, #tpu.memory_space<vmem>>, %arg13: memref<32x64xf32, #tpu.memory_space<vmem>>, %arg14: memref<160x80xf32, #tpu.memory_space<vmem>>, %arg15: memref<160x80xf32, #tpu.memory_space<vmem>>, %arg16: memref<4x8x32xf32, #tpu.memory_space<vmem>>, %arg17: memref<4x80x50xf32, #tpu.memory_space<vmem>>, %arg18: memref<1x50xf32, #tpu.memory_space<vmem>>, %arg19: memref<50x10xf32, #tpu.memory_space<vmem>>, %arg20: memref<1x10xf32, #tpu.memory_space<vmem>>, %arg21: memref<8x10xf32, #tpu.memory_space<vmem>>) attributes {dimension_semantics = [#tpu.dimension_semantics<parallel>], iteration_bounds = array<i64: 1>, scalar_prefetch = 0 : i64, scratch_operands = 0 : i64, tpu.core_type = #tpu.core_type<tc>, window_params = [{transform_indices = @transform_0, window_bounds = array<i64: 224, 28>}, {pipeline_mode = #tpu.pipeline_mode<synchronous>, transform_indices = @transform_1, window_bounds = array<i64: 5, 28, 240>}, {pipeline_mode = #tpu.pipeline_mode<synchronous>, transform_indices = @transform_2, window_bounds = array<i64: 1, 240>}, {pipeline_mode = #tpu.pipeline_mode<synchronous>, transform_indices = @transform_3, window_bounds = array<i64: 5, 192, 224>}, {pipeline_mode = #tpu.pipeline_mode<synchronous>, transform_indices = @transform_4, window_bounds = array<i64: 96, 192>}, {pipeline_mode = #tpu.pipeline_mode<synchronous>, transform_indices = @transform_5, window_bounds = array<i64: 96, 192>}, {pipeline_mode = #tpu.pipeline_mode<synchronous>, transform_indices = @transform_6, window_bounds = array<i64: 240, 120>}, {pipeline_mode = #tpu.pipeline_mode<synchronous>, transform_indices = @transform_7, window_bounds = array<i64: 240, 120>}, {pipeline_mode = #tpu.pipeline_mode<synchronous>, transform_indices = @transform_8, window_bounds = array<i64: 5, 120, 160>}, {pipeline_mode = #tpu.pipeline_mode<synchronous>, transform_indices = @transform_9, window_bounds = array<i64: 1, 160>}, {pipeline_mode = #tpu.pipeline_mode<synchronous>, transform_indices = @transform_10, window_bounds = array<i64: 5, 64, 96>}, {pipeline_mode = #tpu.pipeline_mode<synchronous>, transform_indices = @transform_11, window_bounds = array<i64: 32, 64>}, {pipeline_mode = #tpu.pipeline_mode<synchronous>, transform_indices = @transform_12, window_bounds = array<i64: 32, 64>}, {pipeline_mode = #tpu.pipeline_mode<synchronous>, transform_indices = @transform_13, window_bounds = array<i64: 160, 80>}, {pipeline_mode = #tpu.pipeline_mode<synchronous>, transform_indices = @transform_14, window_bounds = array<i64: 160, 80>}, {pipeline_mode = #tpu.pipeline_mode<synchronous>, transform_indices = @transform_15, window_bounds = array<i64: 4, 8, 32>}, {pipeline_mode = #tpu.pipeline_mode<synchronous>, transform_indices = @transform_16, window_bounds = array<i64: 4, 80, 50>}, {pipeline_mode = #tpu.pipeline_mode<synchronous>, transform_indices = @transform_17, window_bounds = array<i64: 1, 50>}, {pipeline_mode = #tpu.pipeline_mode<synchronous>, transform_indices = @transform_18, window_bounds = array<i64: 50, 10>}, {pipeline_mode = #tpu.pipeline_mode<synchronous>, transform_indices = @transform_19, window_bounds = array<i64: 1, 10>}, {transform_indices = @transform_20, window_bounds = array<i64: 8, 10>}]} {
    %c0 = arith.constant 0 : index
    %c0_0 = arith.constant 0 : index
    %0 = vector.load %arg1[%c0, %c0_0] : memref<224x28xf32, #tpu.memory_space<vmem>>, vector<224x28xf32>
    %c0_1 = arith.constant 0 : index
    %c0_2 = arith.constant 0 : index
    %1 = vector.load %arg3[%c0_1, %c0_2] : memref<1x240xf32, #tpu.memory_space<vmem>>, vector<1x240xf32>
    %c0_3 = arith.constant 0 : index
    %c0_4 = arith.constant 0 : index
    %c0_5 = arith.constant 0 : index
    %2 = vector.load %arg4[%c0_3, %c0_4, %c0_5] : memref<5x192x224xf32, #tpu.memory_space<vmem>>, vector<1x192x224xf32>
    %3 = vector.shape_cast %2 : vector<1x192x224xf32> to vector<192x224xf32>
    %cst = arith.constant dense<0.000000e+00> : vector<192x28xf32>
    %4 = tpu.matmul %3, %0, %cst {dimension_numbers = #tpu.dot_dimension_numbers<[1], [0], [0], [1], [0, 0, 1, 1], [], []>} : vector<192x224xf32>, vector<224x28xf32>, vector<192x28xf32> -> vector<192x28xf32>
    %c0_6 = arith.constant 0 : index
    %c0_7 = arith.constant 0 : index
    %c0_8 = arith.constant 0 : index
    %5 = vector.load %arg2[%c0_6, %c0_7, %c0_8] : memref<5x28x240xf32, #tpu.memory_space<vmem>>, vector<1x28x240xf32>
    %6 = vector.shape_cast %5 : vector<1x28x240xf32> to vector<28x240xf32>
    %cst_9 = arith.constant dense<0.000000e+00> : vector<192x240xf32>
    %7 = tpu.matmul %4, %6, %cst_9 {dimension_numbers = #tpu.dot_dimension_numbers<[1], [0], [0], [1], [0, 0, 1, 1], [], []>} : vector<192x28xf32>, vector<28x240xf32>, vector<192x240xf32> -> vector<192x240xf32>
    %8 = vector.broadcast %1 : vector<1x240xf32> to vector<192x240xf32>
    %9 = arith.addf %8, %7 : vector<192x240xf32>
    %c1 = arith.constant 1 : index
    %c0_10 = arith.constant 0 : index
    %c0_11 = arith.constant 0 : index
    %10 = vector.load %arg4[%c1, %c0_10, %c0_11] : memref<5x192x224xf32, #tpu.memory_space<vmem>>, vector<1x192x224xf32>
    %11 = vector.shape_cast %10 : vector<1x192x224xf32> to vector<192x224xf32>
    %cst_12 = arith.constant dense<0.000000e+00> : vector<192x28xf32>
    %12 = tpu.matmul %11, %0, %cst_12 {dimension_numbers = #tpu.dot_dimension_numbers<[1], [0], [0], [1], [0, 0, 1, 1], [], []>} : vector<192x224xf32>, vector<224x28xf32>, vector<192x28xf32> -> vector<192x28xf32>
    %c1_13 = arith.constant 1 : index
    %c0_14 = arith.constant 0 : index
    %c0_15 = arith.constant 0 : index
    %13 = vector.load %arg2[%c1_13, %c0_14, %c0_15] : memref<5x28x240xf32, #tpu.memory_space<vmem>>, vector<1x28x240xf32>
    %14 = vector.shape_cast %13 : vector<1x28x240xf32> to vector<28x240xf32>
    %cst_16 = arith.constant dense<0.000000e+00> : vector<192x240xf32>
    %15 = tpu.matmul %12, %14, %cst_16 {dimension_numbers = #tpu.dot_dimension_numbers<[1], [0], [0], [1], [0, 0, 1, 1], [], []>} : vector<192x28xf32>, vector<28x240xf32>, vector<192x240xf32> -> vector<192x240xf32>
    %16 = arith.addf %9, %15 : vector<192x240xf32>
    %c2 = arith.constant 2 : index
    %c0_17 = arith.constant 0 : index
    %c0_18 = arith.constant 0 : index
    %17 = vector.load %arg4[%c2, %c0_17, %c0_18] : memref<5x192x224xf32, #tpu.memory_space<vmem>>, vector<1x192x224xf32>
    %18 = vector.shape_cast %17 : vector<1x192x224xf32> to vector<192x224xf32>
    %cst_19 = arith.constant dense<0.000000e+00> : vector<192x28xf32>
    %19 = tpu.matmul %18, %0, %cst_19 {dimension_numbers = #tpu.dot_dimension_numbers<[1], [0], [0], [1], [0, 0, 1, 1], [], []>} : vector<192x224xf32>, vector<224x28xf32>, vector<192x28xf32> -> vector<192x28xf32>
    %c2_20 = arith.constant 2 : index
    %c0_21 = arith.constant 0 : index
    %c0_22 = arith.constant 0 : index
    %20 = vector.load %arg2[%c2_20, %c0_21, %c0_22] : memref<5x28x240xf32, #tpu.memory_space<vmem>>, vector<1x28x240xf32>
    %21 = vector.shape_cast %20 : vector<1x28x240xf32> to vector<28x240xf32>
    %cst_23 = arith.constant dense<0.000000e+00> : vector<192x240xf32>
    %22 = tpu.matmul %19, %21, %cst_23 {dimension_numbers = #tpu.dot_dimension_numbers<[1], [0], [0], [1], [0, 0, 1, 1], [], []>} : vector<192x28xf32>, vector<28x240xf32>, vector<192x240xf32> -> vector<192x240xf32>
    %23 = arith.addf %16, %22 : vector<192x240xf32>
    %c3 = arith.constant 3 : index
    %c0_24 = arith.constant 0 : index
    %c0_25 = arith.constant 0 : index
    %24 = vector.load %arg4[%c3, %c0_24, %c0_25] : memref<5x192x224xf32, #tpu.memory_space<vmem>>, vector<1x192x224xf32>
    %25 = vector.shape_cast %24 : vector<1x192x224xf32> to vector<192x224xf32>
    %cst_26 = arith.constant dense<0.000000e+00> : vector<192x28xf32>
    %26 = tpu.matmul %25, %0, %cst_26 {dimension_numbers = #tpu.dot_dimension_numbers<[1], [0], [0], [1], [0, 0, 1, 1], [], []>} : vector<192x224xf32>, vector<224x28xf32>, vector<192x28xf32> -> vector<192x28xf32>
    %c3_27 = arith.constant 3 : index
    %c0_28 = arith.constant 0 : index
    %c0_29 = arith.constant 0 : index
    %27 = vector.load %arg2[%c3_27, %c0_28, %c0_29] : memref<5x28x240xf32, #tpu.memory_space<vmem>>, vector<1x28x240xf32>
    %28 = vector.shape_cast %27 : vector<1x28x240xf32> to vector<28x240xf32>
    %cst_30 = arith.constant dense<0.000000e+00> : vector<192x240xf32>
    %29 = tpu.matmul %26, %28, %cst_30 {dimension_numbers = #tpu.dot_dimension_numbers<[1], [0], [0], [1], [0, 0, 1, 1], [], []>} : vector<192x28xf32>, vector<28x240xf32>, vector<192x240xf32> -> vector<192x240xf32>
    %30 = arith.addf %23, %29 : vector<192x240xf32>
    %c4 = arith.constant 4 : index
    %c0_31 = arith.constant 0 : index
    %c0_32 = arith.constant 0 : index
    %31 = vector.load %arg4[%c4, %c0_31, %c0_32] : memref<5x192x224xf32, #tpu.memory_space<vmem>>, vector<1x192x224xf32>
    %32 = vector.shape_cast %31 : vector<1x192x224xf32> to vector<192x224xf32>
    %cst_33 = arith.constant dense<0.000000e+00> : vector<192x28xf32>
    %33 = tpu.matmul %32, %0, %cst_33 {dimension_numbers = #tpu.dot_dimension_numbers<[1], [0], [0], [1], [0, 0, 1, 1], [], []>} : vector<192x224xf32>, vector<224x28xf32>, vector<192x28xf32> -> vector<192x28xf32>
    %c4_34 = arith.constant 4 : index
    %c0_35 = arith.constant 0 : index
    %c0_36 = arith.constant 0 : index
    %34 = vector.load %arg2[%c4_34, %c0_35, %c0_36] : memref<5x28x240xf32, #tpu.memory_space<vmem>>, vector<1x28x240xf32>
    %35 = vector.shape_cast %34 : vector<1x28x240xf32> to vector<28x240xf32>
    %cst_37 = arith.constant dense<0.000000e+00> : vector<192x240xf32>
    %36 = tpu.matmul %33, %35, %cst_37 {dimension_numbers = #tpu.dot_dimension_numbers<[1], [0], [0], [1], [0, 0, 1, 1], [], []>} : vector<192x28xf32>, vector<28x240xf32>, vector<192x240xf32> -> vector<192x240xf32>
    %37 = arith.addf %30, %36 : vector<192x240xf32>
    %c0_38 = arith.constant 0 : index
    %c0_39 = arith.constant 0 : index
    %38 = vector.load %arg5[%c0_38, %c0_39] : memref<96x192xf32, #tpu.memory_space<vmem>>, vector<96x192xf32>
    %cst_40 = arith.constant dense<0.000000e+00> : vector<96x240xf32>
    %39 = tpu.matmul %38, %37, %cst_40 {dimension_numbers = #tpu.dot_dimension_numbers<[1], [0], [0], [1], [0, 0, 1, 1], [], []>} : vector<96x192xf32>, vector<192x240xf32>, vector<96x240xf32> -> vector<96x240xf32>
    %c0_41 = arith.constant 0 : index
    %c0_42 = arith.constant 0 : index
    %40 = vector.load %arg6[%c0_41, %c0_42] : memref<96x192xf32, #tpu.memory_space<vmem>>, vector<96x192xf32>
    %cst_43 = arith.constant dense<0.000000e+00> : vector<96x240xf32>
    %41 = tpu.matmul %40, %37, %cst_43 {dimension_numbers = #tpu.dot_dimension_numbers<[1], [0], [0], [1], [0, 0, 1, 1], [], []>} : vector<96x192xf32>, vector<192x240xf32>, vector<96x240xf32> -> vector<96x240xf32>
    %42 = arith.maximumf %39, %41 : vector<96x240xf32>
    %c0_44 = arith.constant 0 : index
    %c0_45 = arith.constant 0 : index
    %43 = vector.load %arg7[%c0_44, %c0_45] : memref<240x120xf32, #tpu.memory_space<vmem>>, vector<240x120xf32>
    %cst_46 = arith.constant dense<0.000000e+00> : vector<96x120xf32>
    %44 = tpu.matmul %42, %43, %cst_46 {dimension_numbers = #tpu.dot_dimension_numbers<[1], [0], [0], [1], [0, 0, 1, 1], [], []>} : vector<96x240xf32>, vector<240x120xf32>, vector<96x120xf32> -> vector<96x120xf32>
    %c0_47 = arith.constant 0 : index
    %c0_48 = arith.constant 0 : index
    %45 = vector.load %arg8[%c0_47, %c0_48] : memref<240x120xf32, #tpu.memory_space<vmem>>, vector<240x120xf32>
    %cst_49 = arith.constant dense<0.000000e+00> : vector<96x120xf32>
    %46 = tpu.matmul %42, %45, %cst_49 {dimension_numbers = #tpu.dot_dimension_numbers<[1], [0], [0], [1], [0, 0, 1, 1], [], []>} : vector<96x240xf32>, vector<240x120xf32>, vector<96x120xf32> -> vector<96x120xf32>
    %47 = arith.maximumf %44, %46 : vector<96x120xf32>
    %cst_50 = arith.constant 0.000000e+00 : f32
    %48 = vector.broadcast %cst_50 : f32 to vector<96x120xf32>
    %49 = arith.maximumf %47, %48 : vector<96x120xf32>
    %c0_51 = arith.constant 0 : index
    %c0_52 = arith.constant 0 : index
    %50 = vector.load %arg10[%c0_51, %c0_52] : memref<1x160xf32, #tpu.memory_space<vmem>>, vector<1x160xf32>
    %c0_53 = arith.constant 0 : index
    %c0_54 = arith.constant 0 : index
    %c0_55 = arith.constant 0 : index
    %51 = vector.load %arg11[%c0_53, %c0_54, %c0_55] : memref<5x64x96xf32, #tpu.memory_space<vmem>>, vector<1x64x96xf32>
    %52 = vector.shape_cast %51 : vector<1x64x96xf32> to vector<64x96xf32>
    %cst_56 = arith.constant dense<0.000000e+00> : vector<64x120xf32>
    %53 = tpu.matmul %52, %49, %cst_56 {dimension_numbers = #tpu.dot_dimension_numbers<[1], [0], [0], [1], [0, 0, 1, 1], [], []>} : vector<64x96xf32>, vector<96x120xf32>, vector<64x120xf32> -> vector<64x120xf32>
    %c0_57 = arith.constant 0 : index
    %c0_58 = arith.constant 0 : index
    %c0_59 = arith.constant 0 : index
    %54 = vector.load %arg9[%c0_57, %c0_58, %c0_59] : memref<5x120x160xf32, #tpu.memory_space<vmem>>, vector<1x120x160xf32>
    %55 = vector.shape_cast %54 : vector<1x120x160xf32> to vector<120x160xf32>
    %cst_60 = arith.constant dense<0.000000e+00> : vector<64x160xf32>
    %56 = tpu.matmul %53, %55, %cst_60 {dimension_numbers = #tpu.dot_dimension_numbers<[1], [0], [0], [1], [0, 0, 1, 1], [], []>} : vector<64x120xf32>, vector<120x160xf32>, vector<64x160xf32> -> vector<64x160xf32>
    %57 = vector.broadcast %50 : vector<1x160xf32> to vector<64x160xf32>
    %58 = arith.addf %57, %56 : vector<64x160xf32>
    %c1_61 = arith.constant 1 : index
    %c0_62 = arith.constant 0 : index
    %c0_63 = arith.constant 0 : index
    %59 = vector.load %arg11[%c1_61, %c0_62, %c0_63] : memref<5x64x96xf32, #tpu.memory_space<vmem>>, vector<1x64x96xf32>
    %60 = vector.shape_cast %59 : vector<1x64x96xf32> to vector<64x96xf32>
    %cst_64 = arith.constant dense<0.000000e+00> : vector<64x120xf32>
    %61 = tpu.matmul %60, %49, %cst_64 {dimension_numbers = #tpu.dot_dimension_numbers<[1], [0], [0], [1], [0, 0, 1, 1], [], []>} : vector<64x96xf32>, vector<96x120xf32>, vector<64x120xf32> -> vector<64x120xf32>
    %c1_65 = arith.constant 1 : index
    %c0_66 = arith.constant 0 : index
    %c0_67 = arith.constant 0 : index
    %62 = vector.load %arg9[%c1_65, %c0_66, %c0_67] : memref<5x120x160xf32, #tpu.memory_space<vmem>>, vector<1x120x160xf32>
    %63 = vector.shape_cast %62 : vector<1x120x160xf32> to vector<120x160xf32>
    %cst_68 = arith.constant dense<0.000000e+00> : vector<64x160xf32>
    %64 = tpu.matmul %61, %63, %cst_68 {dimension_numbers = #tpu.dot_dimension_numbers<[1], [0], [0], [1], [0, 0, 1, 1], [], []>} : vector<64x120xf32>, vector<120x160xf32>, vector<64x160xf32> -> vector<64x160xf32>
    %65 = arith.addf %58, %64 : vector<64x160xf32>
    %c2_69 = arith.constant 2 : index
    %c0_70 = arith.constant 0 : index
    %c0_71 = arith.constant 0 : index
    %66 = vector.load %arg11[%c2_69, %c0_70, %c0_71] : memref<5x64x96xf32, #tpu.memory_space<vmem>>, vector<1x64x96xf32>
    %67 = vector.shape_cast %66 : vector<1x64x96xf32> to vector<64x96xf32>
    %cst_72 = arith.constant dense<0.000000e+00> : vector<64x120xf32>
    %68 = tpu.matmul %67, %49, %cst_72 {dimension_numbers = #tpu.dot_dimension_numbers<[1], [0], [0], [1], [0, 0, 1, 1], [], []>} : vector<64x96xf32>, vector<96x120xf32>, vector<64x120xf32> -> vector<64x120xf32>
    %c2_73 = arith.constant 2 : index
    %c0_74 = arith.constant 0 : index
    %c0_75 = arith.constant 0 : index
    %69 = vector.load %arg9[%c2_73, %c0_74, %c0_75] : memref<5x120x160xf32, #tpu.memory_space<vmem>>, vector<1x120x160xf32>
    %70 = vector.shape_cast %69 : vector<1x120x160xf32> to vector<120x160xf32>
    %cst_76 = arith.constant dense<0.000000e+00> : vector<64x160xf32>
    %71 = tpu.matmul %68, %70, %cst_76 {dimension_numbers = #tpu.dot_dimension_numbers<[1], [0], [0], [1], [0, 0, 1, 1], [], []>} : vector<64x120xf32>, vector<120x160xf32>, vector<64x160xf32> -> vector<64x160xf32>
    %72 = arith.addf %65, %71 : vector<64x160xf32>
    %c3_77 = arith.constant 3 : index
    %c0_78 = arith.constant 0 : index
    %c0_79 = arith.constant 0 : index
    %73 = vector.load %arg11[%c3_77, %c0_78, %c0_79] : memref<5x64x96xf32, #tpu.memory_space<vmem>>, vector<1x64x96xf32>
    %74 = vector.shape_cast %73 : vector<1x64x96xf32> to vector<64x96xf32>
    %cst_80 = arith.constant dense<0.000000e+00> : vector<64x120xf32>
    %75 = tpu.matmul %74, %49, %cst_80 {dimension_numbers = #tpu.dot_dimension_numbers<[1], [0], [0], [1], [0, 0, 1, 1], [], []>} : vector<64x96xf32>, vector<96x120xf32>, vector<64x120xf32> -> vector<64x120xf32>
    %c3_81 = arith.constant 3 : index
    %c0_82 = arith.constant 0 : index
    %c0_83 = arith.constant 0 : index
    %76 = vector.load %arg9[%c3_81, %c0_82, %c0_83] : memref<5x120x160xf32, #tpu.memory_space<vmem>>, vector<1x120x160xf32>
    %77 = vector.shape_cast %76 : vector<1x120x160xf32> to vector<120x160xf32>
    %cst_84 = arith.constant dense<0.000000e+00> : vector<64x160xf32>
    %78 = tpu.matmul %75, %77, %cst_84 {dimension_numbers = #tpu.dot_dimension_numbers<[1], [0], [0], [1], [0, 0, 1, 1], [], []>} : vector<64x120xf32>, vector<120x160xf32>, vector<64x160xf32> -> vector<64x160xf32>
    %79 = arith.addf %72, %78 : vector<64x160xf32>
    %c4_85 = arith.constant 4 : index
    %c0_86 = arith.constant 0 : index
    %c0_87 = arith.constant 0 : index
    %80 = vector.load %arg11[%c4_85, %c0_86, %c0_87] : memref<5x64x96xf32, #tpu.memory_space<vmem>>, vector<1x64x96xf32>
    %81 = vector.shape_cast %80 : vector<1x64x96xf32> to vector<64x96xf32>
    %cst_88 = arith.constant dense<0.000000e+00> : vector<64x120xf32>
    %82 = tpu.matmul %81, %49, %cst_88 {dimension_numbers = #tpu.dot_dimension_numbers<[1], [0], [0], [1], [0, 0, 1, 1], [], []>} : vector<64x96xf32>, vector<96x120xf32>, vector<64x120xf32> -> vector<64x120xf32>
    %c4_89 = arith.constant 4 : index
    %c0_90 = arith.constant 0 : index
    %c0_91 = arith.constant 0 : index
    %83 = vector.load %arg9[%c4_89, %c0_90, %c0_91] : memref<5x120x160xf32, #tpu.memory_space<vmem>>, vector<1x120x160xf32>
    %84 = vector.shape_cast %83 : vector<1x120x160xf32> to vector<120x160xf32>
    %cst_92 = arith.constant dense<0.000000e+00> : vector<64x160xf32>
    %85 = tpu.matmul %82, %84, %cst_92 {dimension_numbers = #tpu.dot_dimension_numbers<[1], [0], [0], [1], [0, 0, 1, 1], [], []>} : vector<64x120xf32>, vector<120x160xf32>, vector<64x160xf32> -> vector<64x160xf32>
    %86 = arith.addf %79, %85 : vector<64x160xf32>
    %c0_93 = arith.constant 0 : index
    %c0_94 = arith.constant 0 : index
    %87 = vector.load %arg12[%c0_93, %c0_94] : memref<32x64xf32, #tpu.memory_space<vmem>>, vector<32x64xf32>
    %cst_95 = arith.constant dense<0.000000e+00> : vector<32x160xf32>
    %88 = tpu.matmul %87, %86, %cst_95 {dimension_numbers = #tpu.dot_dimension_numbers<[1], [0], [0], [1], [0, 0, 1, 1], [], []>} : vector<32x64xf32>, vector<64x160xf32>, vector<32x160xf32> -> vector<32x160xf32>
    %c0_96 = arith.constant 0 : index
    %c0_97 = arith.constant 0 : index
    %89 = vector.load %arg13[%c0_96, %c0_97] : memref<32x64xf32, #tpu.memory_space<vmem>>, vector<32x64xf32>
    %cst_98 = arith.constant dense<0.000000e+00> : vector<32x160xf32>
    %90 = tpu.matmul %89, %86, %cst_98 {dimension_numbers = #tpu.dot_dimension_numbers<[1], [0], [0], [1], [0, 0, 1, 1], [], []>} : vector<32x64xf32>, vector<64x160xf32>, vector<32x160xf32> -> vector<32x160xf32>
    %91 = arith.maximumf %88, %90 : vector<32x160xf32>
    %c0_99 = arith.constant 0 : index
    %c0_100 = arith.constant 0 : index
    %92 = vector.load %arg14[%c0_99, %c0_100] : memref<160x80xf32, #tpu.memory_space<vmem>>, vector<160x80xf32>
    %cst_101 = arith.constant dense<0.000000e+00> : vector<32x80xf32>
    %93 = tpu.matmul %91, %92, %cst_101 {dimension_numbers = #tpu.dot_dimension_numbers<[1], [0], [0], [1], [0, 0, 1, 1], [], []>} : vector<32x160xf32>, vector<160x80xf32>, vector<32x80xf32> -> vector<32x80xf32>
    %c0_102 = arith.constant 0 : index
    %c0_103 = arith.constant 0 : index
    %94 = vector.load %arg15[%c0_102, %c0_103] : memref<160x80xf32, #tpu.memory_space<vmem>>, vector<160x80xf32>
    %cst_104 = arith.constant dense<0.000000e+00> : vector<32x80xf32>
    %95 = tpu.matmul %91, %94, %cst_104 {dimension_numbers = #tpu.dot_dimension_numbers<[1], [0], [0], [1], [0, 0, 1, 1], [], []>} : vector<32x160xf32>, vector<160x80xf32>, vector<32x80xf32> -> vector<32x80xf32>
    %96 = arith.maximumf %93, %95 : vector<32x80xf32>
    %cst_105 = arith.constant 0.000000e+00 : f32
    %97 = vector.broadcast %cst_105 : f32 to vector<32x80xf32>
    %98 = arith.maximumf %96, %97 : vector<32x80xf32>
    %c0_106 = arith.constant 0 : index
    %c0_107 = arith.constant 0 : index
    %99 = vector.load %arg18[%c0_106, %c0_107] : memref<1x50xf32, #tpu.memory_space<vmem>>, vector<1x50xf32>
    %c0_108 = arith.constant 0 : index
    %c0_109 = arith.constant 0 : index
    %c0_110 = arith.constant 0 : index
    %100 = vector.load %arg16[%c0_108, %c0_109, %c0_110] : memref<4x8x32xf32, #tpu.memory_space<vmem>>, vector<1x8x32xf32>
    %101 = vector.shape_cast %100 : vector<1x8x32xf32> to vector<8x32xf32>
    %cst_111 = arith.constant dense<0.000000e+00> : vector<8x80xf32>
    %102 = tpu.matmul %101, %98, %cst_111 {dimension_numbers = #tpu.dot_dimension_numbers<[1], [0], [0], [1], [0, 0, 1, 1], [], []>} : vector<8x32xf32>, vector<32x80xf32>, vector<8x80xf32> -> vector<8x80xf32>
    %c0_112 = arith.constant 0 : index
    %c0_113 = arith.constant 0 : index
    %c0_114 = arith.constant 0 : index
    %103 = vector.load %arg17[%c0_112, %c0_113, %c0_114] : memref<4x80x50xf32, #tpu.memory_space<vmem>>, vector<1x80x50xf32>
    %104 = vector.shape_cast %103 : vector<1x80x50xf32> to vector<80x50xf32>
    %cst_115 = arith.constant dense<0.000000e+00> : vector<8x50xf32>
    %105 = tpu.matmul %102, %104, %cst_115 {dimension_numbers = #tpu.dot_dimension_numbers<[1], [0], [0], [1], [0, 0, 1, 1], [], []>} : vector<8x80xf32>, vector<80x50xf32>, vector<8x50xf32> -> vector<8x50xf32>
    %106 = vector.broadcast %99 : vector<1x50xf32> to vector<8x50xf32>
    %107 = arith.addf %106, %105 : vector<8x50xf32>
    %c1_116 = arith.constant 1 : index
    %c0_117 = arith.constant 0 : index
    %c0_118 = arith.constant 0 : index
    %108 = vector.load %arg16[%c1_116, %c0_117, %c0_118] : memref<4x8x32xf32, #tpu.memory_space<vmem>>, vector<1x8x32xf32>
    %109 = vector.shape_cast %108 : vector<1x8x32xf32> to vector<8x32xf32>
    %cst_119 = arith.constant dense<0.000000e+00> : vector<8x80xf32>
    %110 = tpu.matmul %109, %98, %cst_119 {dimension_numbers = #tpu.dot_dimension_numbers<[1], [0], [0], [1], [0, 0, 1, 1], [], []>} : vector<8x32xf32>, vector<32x80xf32>, vector<8x80xf32> -> vector<8x80xf32>
    %c1_120 = arith.constant 1 : index
    %c0_121 = arith.constant 0 : index
    %c0_122 = arith.constant 0 : index
    %111 = vector.load %arg17[%c1_120, %c0_121, %c0_122] : memref<4x80x50xf32, #tpu.memory_space<vmem>>, vector<1x80x50xf32>
    %112 = vector.shape_cast %111 : vector<1x80x50xf32> to vector<80x50xf32>
    %cst_123 = arith.constant dense<0.000000e+00> : vector<8x50xf32>
    %113 = tpu.matmul %110, %112, %cst_123 {dimension_numbers = #tpu.dot_dimension_numbers<[1], [0], [0], [1], [0, 0, 1, 1], [], []>} : vector<8x80xf32>, vector<80x50xf32>, vector<8x50xf32> -> vector<8x50xf32>
    %114 = arith.addf %107, %113 : vector<8x50xf32>
    %c2_124 = arith.constant 2 : index
    %c0_125 = arith.constant 0 : index
    %c0_126 = arith.constant 0 : index
    %115 = vector.load %arg16[%c2_124, %c0_125, %c0_126] : memref<4x8x32xf32, #tpu.memory_space<vmem>>, vector<1x8x32xf32>
    %116 = vector.shape_cast %115 : vector<1x8x32xf32> to vector<8x32xf32>
    %cst_127 = arith.constant dense<0.000000e+00> : vector<8x80xf32>
    %117 = tpu.matmul %116, %98, %cst_127 {dimension_numbers = #tpu.dot_dimension_numbers<[1], [0], [0], [1], [0, 0, 1, 1], [], []>} : vector<8x32xf32>, vector<32x80xf32>, vector<8x80xf32> -> vector<8x80xf32>
    %c2_128 = arith.constant 2 : index
    %c0_129 = arith.constant 0 : index
    %c0_130 = arith.constant 0 : index
    %118 = vector.load %arg17[%c2_128, %c0_129, %c0_130] : memref<4x80x50xf32, #tpu.memory_space<vmem>>, vector<1x80x50xf32>
    %119 = vector.shape_cast %118 : vector<1x80x50xf32> to vector<80x50xf32>
    %cst_131 = arith.constant dense<0.000000e+00> : vector<8x50xf32>
    %120 = tpu.matmul %117, %119, %cst_131 {dimension_numbers = #tpu.dot_dimension_numbers<[1], [0], [0], [1], [0, 0, 1, 1], [], []>} : vector<8x80xf32>, vector<80x50xf32>, vector<8x50xf32> -> vector<8x50xf32>
    %121 = arith.addf %114, %120 : vector<8x50xf32>
    %c3_132 = arith.constant 3 : index
    %c0_133 = arith.constant 0 : index
    %c0_134 = arith.constant 0 : index
    %122 = vector.load %arg16[%c3_132, %c0_133, %c0_134] : memref<4x8x32xf32, #tpu.memory_space<vmem>>, vector<1x8x32xf32>
    %123 = vector.shape_cast %122 : vector<1x8x32xf32> to vector<8x32xf32>
    %cst_135 = arith.constant dense<0.000000e+00> : vector<8x80xf32>
    %124 = tpu.matmul %123, %98, %cst_135 {dimension_numbers = #tpu.dot_dimension_numbers<[1], [0], [0], [1], [0, 0, 1, 1], [], []>} : vector<8x32xf32>, vector<32x80xf32>, vector<8x80xf32> -> vector<8x80xf32>
    %c3_136 = arith.constant 3 : index
    %c0_137 = arith.constant 0 : index
    %c0_138 = arith.constant 0 : index
    %125 = vector.load %arg17[%c3_136, %c0_137, %c0_138] : memref<4x80x50xf32, #tpu.memory_space<vmem>>, vector<1x80x50xf32>
    %126 = vector.shape_cast %125 : vector<1x80x50xf32> to vector<80x50xf32>
    %cst_139 = arith.constant dense<0.000000e+00> : vector<8x50xf32>
    %127 = tpu.matmul %124, %126, %cst_139 {dimension_numbers = #tpu.dot_dimension_numbers<[1], [0], [0], [1], [0, 0, 1, 1], [], []>} : vector<8x80xf32>, vector<80x50xf32>, vector<8x50xf32> -> vector<8x50xf32>
    %128 = arith.addf %121, %127 : vector<8x50xf32>
    %cst_140 = arith.constant 0.000000e+00 : f32
    %129 = vector.broadcast %cst_140 : f32 to vector<8x50xf32>
    %130 = arith.maximumf %128, %129 : vector<8x50xf32>
    %c0_141 = arith.constant 0 : index
    %c0_142 = arith.constant 0 : index
    %131 = vector.load %arg19[%c0_141, %c0_142] : memref<50x10xf32, #tpu.memory_space<vmem>>, vector<50x10xf32>
    %cst_143 = arith.constant dense<0.000000e+00> : vector<8x10xf32>
    %132 = tpu.matmul %130, %131, %cst_143 {dimension_numbers = #tpu.dot_dimension_numbers<[1], [0], [0], [1], [0, 0, 1, 1], [], []>} : vector<8x50xf32>, vector<50x10xf32>, vector<8x10xf32> -> vector<8x10xf32>
    %c0_144 = arith.constant 0 : index
    %c0_145 = arith.constant 0 : index
    %133 = vector.load %arg20[%c0_144, %c0_145] : memref<1x10xf32, #tpu.memory_space<vmem>>, vector<1x10xf32>
    %134 = vector.broadcast %133 : vector<1x10xf32> to vector<8x10xf32>
    %135 = arith.addf %132, %134 : vector<8x10xf32>
    %cst_146 = arith.constant dense<0xFF800000> : vector<8xf32>
    %136 = vector.multi_reduction <maximumf>, %135, %cst_146 [1] : vector<8x10xf32> to vector<8xf32>
    %137 = vector.shape_cast %136 : vector<8xf32> to vector<8x1xf32>
    %138 = vector.broadcast %137 : vector<8x1xf32> to vector<8x10xf32>
    %139 = arith.subf %135, %138 : vector<8x10xf32>
    %140 = math.exp %139 : vector<8x10xf32>
    %cst_147 = arith.constant dense<0.000000e+00> : vector<8xf32>
    %141 = vector.multi_reduction <add>, %140, %cst_147 [1] : vector<8x10xf32> to vector<8xf32>
    %142 = vector.shape_cast %141 : vector<8xf32> to vector<8x1xf32>
    %143 = math.log %142 : vector<8x1xf32>
    %144 = vector.broadcast %143 : vector<8x1xf32> to vector<8x10xf32>
    %145 = arith.subf %139, %144 : vector<8x10xf32>
    %c0_148 = arith.constant 0 : index
    %c0_149 = arith.constant 0 : index
    %146 = vector.load %arg21[%c0_148, %c0_149] : memref<8x10xf32, #tpu.memory_space<vmem>>, vector<8x10xf32>
    tpu.vector_store %arg21[%c0_148, %c0_149], %145 {strides = array<i32>} : memref<8x10xf32, #tpu.memory_space<vmem>>, vector<8x10xf32>,
    return
  }
  func.func @transform_0(%arg0: i32) -> (i32, i32) {
    %c0_i32 = arith.constant 0 : i32
    %c0_i32_0 = arith.constant 0 : i32
    return %arg0, %c0_i32 : i32, i32
  }
  func.func @transform_1(%arg0: i32) -> (i32, i32, i32) {
    %c0_i32 = arith.constant 0 : i32
    %c0_i32_0 = arith.constant 0 : i32
    %c0_i32_1 = arith.constant 0 : i32
    %c0_i32_2 = arith.constant 0 : i32
    return %c0_i32, %c0_i32_0, %c0_i32_1 : i32, i32, i32
  }
  func.func @transform_2(%arg0: i32) -> (i32, i32) {
    %c0_i32 = arith.constant 0 : i32
    %c0_i32_0 = arith.constant 0 : i32
    %c0_i32_1 = arith.constant 0 : i32
    return %c0_i32, %c0_i32_0 : i32, i32
  }
  func.func @transform_3(%arg0: i32) -> (i32, i32, i32) {
    %c0_i32 = arith.constant 0 : i32
    %c0_i32_0 = arith.constant 0 : i32
    %c0_i32_1 = arith.constant 0 : i32
    %c0_i32_2 = arith.constant 0 : i32
    return %c0_i32, %c0_i32_0, %c0_i32_1 : i32, i32, i32
  }
  func.func @transform_4(%arg0: i32) -> (i32, i32) {
    %c0_i32 = arith.constant 0 : i32
    %c0_i32_0 = arith.constant 0 : i32
    %c0_i32_1 = arith.constant 0 : i32
    return %c0_i32, %c0_i32_0 : i32, i32
  }
  func.func @transform_5(%arg0: i32) -> (i32, i32) {
    %c0_i32 = arith.constant 0 : i32
    %c0_i32_0 = arith.constant 0 : i32
    %c0_i32_1 = arith.constant 0 : i32
    return %c0_i32, %c0_i32_0 : i32, i32
  }
  func.func @transform_6(%arg0: i32) -> (i32, i32) {
    %c0_i32 = arith.constant 0 : i32
    %c0_i32_0 = arith.constant 0 : i32
    %c0_i32_1 = arith.constant 0 : i32
    return %c0_i32, %c0_i32_0 : i32, i32
  }
  func.func @transform_7(%arg0: i32) -> (i32, i32) {
    %c0_i32 = arith.constant 0 : i32
    %c0_i32_0 = arith.constant 0 : i32
    %c0_i32_1 = arith.constant 0 : i32
    return %c0_i32, %c0_i32_0 : i32, i32
  }
  func.func @transform_8(%arg0: i32) -> (i32, i32, i32) {
    %c0_i32 = arith.constant 0 : i32
    %c0_i32_0 = arith.constant 0 : i32
    %c0_i32_1 = arith.constant 0 : i32
    %c0_i32_2 = arith.constant 0 : i32
    return %c0_i32, %c0_i32_0, %c0_i32_1 : i32, i32, i32
  }
  func.func @transform_9(%arg0: i32) -> (i32, i32) {
    %c0_i32 = arith.constant 0 : i32
    %c0_i32_0 = arith.constant 0 : i32
    %c0_i32_1 = arith.constant 0 : i32
    return %c0_i32, %c0_i32_0 : i32, i32
  }
  func.func @transform_10(%arg0: i32) -> (i32, i32, i32) {
    %c0_i32 = arith.constant 0 : i32
    %c0_i32_0 = arith.constant 0 : i32
    %c0_i32_1 = arith.constant 0 : i32
    %c0_i32_2 = arith.constant 0 : i32
    return %c0_i32, %c0_i32_0, %c0_i32_1 : i32, i32, i32
  }
  func.func @transform_11(%arg0: i32) -> (i32, i32) {
    %c0_i32 = arith.constant 0 : i32
    %c0_i32_0 = arith.constant 0 : i32
    %c0_i32_1 = arith.constant 0 : i32
    return %c0_i32, %c0_i32_0 : i32, i32
  }
  func.func @transform_12(%arg0: i32) -> (i32, i32) {
    %c0_i32 = arith.constant 0 : i32
    %c0_i32_0 = arith.constant 0 : i32
    %c0_i32_1 = arith.constant 0 : i32
    return %c0_i32, %c0_i32_0 : i32, i32
  }
  func.func @transform_13(%arg0: i32) -> (i32, i32) {
    %c0_i32 = arith.constant 0 : i32
    %c0_i32_0 = arith.constant 0 : i32
    %c0_i32_1 = arith.constant 0 : i32
    return %c0_i32, %c0_i32_0 : i32, i32
  }
  func.func @transform_14(%arg0: i32) -> (i32, i32) {
    %c0_i32 = arith.constant 0 : i32
    %c0_i32_0 = arith.constant 0 : i32
    %c0_i32_1 = arith.constant 0 : i32
    return %c0_i32, %c0_i32_0 : i32, i32
  }
  func.func @transform_15(%arg0: i32) -> (i32, i32, i32) {
    %c0_i32 = arith.constant 0 : i32
    %c0_i32_0 = arith.constant 0 : i32
    %c0_i32_1 = arith.constant 0 : i32
    %c0_i32_2 = arith.constant 0 : i32
    return %c0_i32, %c0_i32_0, %c0_i32_1 : i32, i32, i32
  }
  func.func @transform_16(%arg0: i32) -> (i32, i32, i32) {
    %c0_i32 = arith.constant 0 : i32
    %c0_i32_0 = arith.constant 0 : i32
    %c0_i32_1 = arith.constant 0 : i32
    %c0_i32_2 = arith.constant 0 : i32
    return %c0_i32, %c0_i32_0, %c0_i32_1 : i32, i32, i32
  }
  func.func @transform_17(%arg0: i32) -> (i32, i32) {
    %c0_i32 = arith.constant 0 : i32
    %c0_i32_0 = arith.constant 0 : i32
    %c0_i32_1 = arith.constant 0 : i32
    return %c0_i32, %c0_i32_0 : i32, i32
  }
  func.func @transform_18(%arg0: i32) -> (i32, i32) {
    %c0_i32 = arith.constant 0 : i32
    %c0_i32_0 = arith.constant 0 : i32
    %c0_i32_1 = arith.constant 0 : i32
    return %c0_i32, %c0_i32_0 : i32, i32
  }
  func.func @transform_19(%arg0: i32) -> (i32, i32) {
    %c0_i32 = arith.constant 0 : i32
    %c0_i32_0 = arith.constant 0 : i32
    %c0_i32_1 = arith.constant 0 : i32
    return %c0_i32, %c0_i32_0 : i32, i32
  }
  func.func @transform_20(%arg0: i32) -> (i32, i32) {
    %c0_i32 = arith.constant 0 : i32
    %c0_i32_0 = arith.constant 0 : i32
    return %arg0, %c0_i32 : i32, i32
  }
}

</mosaic_0001>

<llo_original>
// kernel: my_network_forward.1
$region0: #{my_network_forward.1}
  #allocation0 [shape = 'u32[]', space=smem, size = 0x4, offset = 0x4, fixed_abs, tag = 'smem constant byte address 0x4 - core index']
  #allocation1 [shape = 'u32[144,128]{1,0:T(1,128)}', space=vmem, size = 0x12000, scoped, tag = 'internal scratch']
  %s0 = inlined_call_operand.vmem [shape: f32[224,28], index: 0, kind: input, shape index: {}]
  %s1 = inlined_call_operand.vmem [shape: f32[5,28,240], index: 1, kind: input, shape index: {}]
  %s2 = inlined_call_operand.vmem [shape: f32[1,240], index: 2, kind: input, shape index: {}]
  %s3 = inlined_call_operand.vmem [shape: f32[5,192,224], index: 3, kind: input, shape index: {}]
  %s4 = inlined_call_operand.hbm [shape: f32[96,192], index: 4, kind: input, shape index: {}]
  %s5 = inlined_call_operand.hbm [shape: f32[96,192], index: 5, kind: input, shape index: {}]
  %s6 = inlined_call_operand.vmem [shape: f32[240,120], index: 6, kind: input, shape index: {}]
  %s7 = inlined_call_operand.hbm [shape: f32[240,120], index: 7, kind: input, shape index: {}]
  %s8 = inlined_call_operand.vmem [shape: f32[5,120,160], index: 8, kind: input, shape index: {}]
  %s9 = inlined_call_operand.hbm [shape: f32[1,160], index: 9, kind: input, shape index: {}]
  %s10 = inlined_call_operand.vmem [shape: f32[5,64,96], index: 10, kind: input, shape index: {}]
  %s11 = inlined_call_operand.vmem [shape: f32[32,64], index: 11, kind: input, shape index: {}]
  %s12 = inlined_call_operand.hbm [shape: f32[32,64], index: 12, kind: input, shape index: {}]
  %s13 = inlined_call_operand.hbm [shape: f32[160,80], index: 13, kind: input, shape index: {}]
  %s14 = inlined_call_operand.hbm [shape: f32[160,80], index: 14, kind: input, shape index: {}]
  %s15 = inlined_call_operand.hbm [shape: f32[4,8,32], index: 15, kind: input, shape index: {}]
  %s16 = inlined_call_operand.vmem [shape: f32[4,80,50], index: 16, kind: input, shape index: {}]
  %s17 = inlined_call_operand.vmem [shape: f32[1,50], index: 17, kind: input, shape index: {}]
  %s18 = inlined_call_operand.vmem [shape: f32[50,10], index: 18, kind: input, shape index: {}]
  %s19 = inlined_call_operand.vmem [shape: f32[1,10], index: 19, kind: input, shape index: {}]
  %s20 = inlined_call_operand.vmem [shape: f32[8,10], index: 20, kind: output, shape index: {}]
  %s21 = sld [smem:[#allocation0]]
  $region122: #{my_network_forward.1} parent=0
    _
  %s23 = ssub.s32 1, %s21
  %s24 = scalar_select 0, %s23, %s21
  $region1: #{my_network_forward.1} parent=0
    #allocation2 [shape = 'u8[98304]{0}', space=vmem, size = 0x18000, scoped, tag = 'input window, operand 4, single buffered']
    #allocation3 [shape = 's32[1]{0}', space=sflag, size = 0x4, scoped, tag = 'scoped memory for my_network_forward.1']
    #allocation4 [shape = 'u8[98304]{0}', space=vmem, size = 0x18000, scoped, tag = 'input window, operand 5, single buffered']
    #allocation5 [shape = 's32[1]{0}', space=sflag, size = 0x4, scoped, tag = 'scoped memory for my_network_forward.1']
    #allocation6 [shape = 'u8[122880]{0}', space=vmem, size = 0x1e000, scoped, tag = 'input window, operand 7, single buffered']
    #allocation7 [shape = 'u8[1024]{0}', space=vmem, size = 0x400, scoped, tag = 'input window, operand 9, single buffered']
    #allocation8 [shape = 's32[1]{0}', space=sflag, size = 0x4, scoped, tag = 'scoped memory for my_network_forward.1']
    #allocation9 [shape = 'u8[16384]{0}', space=vmem, size = 0x4000, scoped, tag = 'input window, operand 12, single buffered']
    #allocation10 [shape = 'u8[81920]{0}', space=vmem, size = 0x14000, scoped, tag = 'input window, operand 13, single buffered']
    #allocation11 [shape = 's32[1]{0}', space=sflag, size = 0x4, scoped, tag = 'scoped memory for my_network_forward.1']
    #allocation12 [shape = 'u8[81920]{0}', space=vmem, size = 0x14000, scoped, tag = 'input window, operand 14, single buffered']
    #allocation13 [shape = 'u8[16384]{0}', space=vmem, size = 0x4000, scoped, tag = 'input window, operand 15, single buffered']
    #allocation14 [shape = 's32[1]{0}', space=sflag, size = 0x4, scoped, tag = 'scoped memory for my_network_forward.1']
    %25 = vsyncpa [#allocation3], 0
    %26 = vsyncpa [#allocation5], 0
    %27 = vsyncpa [#allocation8], 0
    %28 = vsyncpa [#allocation11], 0
    %29 = vsyncpa [#allocation14], 0
    // Predicated region
    $region2: #{my_network_forward.1} parent=1 // pred_check
      _
    $region3: #{my_network_forward.1} parent=1 // pred_check_branch
      %31 = sbr.rel (0) target = $region5
    $region4: #{my_network_forward.1} parent=1 // pred_region
      _
    $region5: #{my_network_forward.1} parent=1 // pred_fallthru
      _
    // Predicated region
    $region6: #{my_network_forward.1} parent=1 // pred_check
      _
    $region7: #{my_network_forward.1} parent=1 // pred_check_branch
      %33 = sbr.rel (0) target = $region9
    $region8: #{my_network_forward.1} parent=1 // pred_region
      _
    $region9: #{my_network_forward.1} parent=1 // pred_fallthru
      _
    // Predicated region
    $region10: #{my_network_forward.1} parent=1 // pred_check
      _
    $region11: #{my_network_forward.1} parent=1 // pred_check_branch
      %35 = sbr.rel (0) target = $region13
    $region12: #{my_network_forward.1} parent=1 // pred_region
      _
    $region13: #{my_network_forward.1} parent=1 // pred_fallthru
      _
    // Predicated region
    $region14: #{my_network_forward.1} parent=1 // pred_check
      _
    $region15: #{my_network_forward.1} parent=1 // pred_check_branch
      %37 = sbr.rel (0) target = $region17
    $region16: #{my_network_forward.1} parent=1 // pred_region
      _
    $region17: #{my_network_forward.1} parent=1 // pred_fallthru
      _
    // Predicated region
    $region18: #{my_network_forward.1} parent=1 // pred_check
      _
    $region19: #{my_network_forward.1} parent=1 // pred_check_branch
      %39 = sbr.rel (0) target = $region21
    $region20: #{my_network_forward.1} parent=1 // pred_region
      %s41 = ssub.s32 3072, 3072
      %42 = vsyncadd [#allocation3], %s41
      %s43 = sshll.u32 [#allocation2], 4
      %s44 = int_to_ptr.vmem [resolvable:$true] %s43
      %49 = dma.hbm_to_vmem [thread:$0]  %s4, 3072, %s44, [#allocation3], 256, 256, 16
    $region21: #{my_network_forward.1} parent=1 // pred_fallthru
      _
    // Predicated region
    $region22: #{my_network_forward.1} parent=1 // pred_check
      _
    $region23: #{my_network_forward.1} parent=1 // pred_check_branch
      %51 = sbr.rel (0) target = $region25
    $region24: #{my_network_forward.1} parent=1 // pred_region
      %s53 = ssub.s32 3072, 3072
      %54 = vsyncadd [#allocation5], %s53
      %s55 = sshll.u32 [#allocation4], 4
      %s56 = int_to_ptr.vmem [resolvable:$true] %s55
      %61 = dma.hbm_to_vmem [thread:$0]  %s5, 3072, %s56, [#allocation5], 256, 256, 16
    $region25: #{my_network_forward.1} parent=1 // pred_fallthru
      _
    // Predicated region
    $region26: #{my_network_forward.1} parent=1 // pred_check
      _
    $region27: #{my_network_forward.1} parent=1 // pred_check_branch
      %63 = sbr.rel (0) target = $region29
    $region28: #{my_network_forward.1} parent=1 // pred_region
      _
    $region29: #{my_network_forward.1} parent=1 // pred_fallthru
      _
    // Predicated region
    $region30: #{my_network_forward.1} parent=1 // pred_check
      _
    $region31: #{my_network_forward.1} parent=1 // pred_check_branch
      %65 = sbr.rel (0) target = $region33
    $region32: #{my_network_forward.1} parent=1 // pred_region
      %s67 = ssub.s32 3840, 3840
      %68 = vsyncadd [#allocation5], %s67
      %s69 = sshll.u32 [#allocation6], 4
      %s70 = int_to_ptr.vmem [resolvable:$true] %s69
      %75 = dma.hbm_to_vmem [thread:$0]  %s7, 3840, %s70, [#allocation5], 128, 128, 8
    $region33: #{my_network_forward.1} parent=1 // pred_fallthru
      _
    // Predicated region
    $region34: #{my_network_forward.1} parent=1 // pred_check
      _
    $region35: #{my_network_forward.1} parent=1 // pred_check_branch
      %77 = sbr.rel (0) target = $region37
    $region36: #{my_network_forward.1} parent=1 // pred_region
      _
    $region37: #{my_network_forward.1} parent=1 // pred_fallthru
      _
    // Predicated region
    $region38: #{my_network_forward.1} parent=1 // pred_check
      _
    $region39: #{my_network_forward.1} parent=1 // pred_check_branch
      %79 = sbr.rel (0) target = $region41
    $region40: #{my_network_forward.1} parent=1 // pred_region
      %s81 = ssub.s32 32, 32
      %82 = vsyncadd [#allocation8], %s81
      %s84 = sshll.u32 [#allocation7], 4
      %s85 = int_to_ptr.vmem [resolvable:$true] %s84
      %87 = dma.hbm_to_vmem [thread:$0]  %s9, 32, %s85, [#allocation8]
    $region41: #{my_network_forward.1} parent=1 // pred_fallthru
      _
    // Predicated region
    $region42: #{my_network_forward.1} parent=1 // pred_check
      _
    $region43: #{my_network_forward.1} parent=1 // pred_check_branch
      %89 = sbr.rel (0) target = $region45
    $region44: #{my_network_forward.1} parent=1 // pred_region
      _
    $region45: #{my_network_forward.1} parent=1 // pred_fallthru
      _
    // Predicated region
    $region46: #{my_network_forward.1} parent=1 // pred_check
      _
    $region47: #{my_network_forward.1} parent=1 // pred_check_branch
      %91 = sbr.rel (0) target = $region49
    $region48: #{my_network_forward.1} parent=1 // pred_region
      _
    $region49: #{my_network_forward.1} parent=1 // pred_fallthru
      _
    // Predicated region
    $region50: #{my_network_forward.1} parent=1 // pred_check
      _
    $region51: #{my_network_forward.1} parent=1 // pred_check_branch
      %93 = sbr.rel (0) target = $region53
    $region52: #{my_network_forward.1} parent=1 // pred_region
      %s95 = ssub.s32 512, 512
      %96 = vsyncadd [#allocation8], %s95
      %s97 = sshll.u32 [#allocation9], 4
      %s98 = int_to_ptr.vmem [resolvable:$true] %s97
      %103 = dma.hbm_to_vmem [thread:$0]  %s12, 512, %s98, [#allocation8], 128, 128, 8
    $region53: #{my_network_forward.1} parent=1 // pred_fallthru
      _
    // Predicated region
    $region54: #{my_network_forward.1} parent=1 // pred_check
      _
    $region55: #{my_network_forward.1} parent=1 // pred_check_branch
      %105 = sbr.rel (0) target = $region57
    $region56: #{my_network_forward.1} parent=1 // pred_region
      %s107 = ssub.s32 2560, 2560
      %108 = vsyncadd [#allocation11], %s107
      %s109 = sshll.u32 [#allocation10], 4
      %s110 = int_to_ptr.vmem [resolvable:$true] %s109
      %115 = dma.hbm_to_vmem [thread:$0]  %s13, 2560, %s110, [#allocation11], 128, 128, 8
    $region57: #{my_network_forward.1} parent=1 // pred_fallthru
      _
    // Predicated region
    $region58: #{my_network_forward.1} parent=1 // pred_check
      _
    $region59: #{my_network_forward.1} parent=1 // pred_check_branch
      %117 = sbr.rel (0) target = $region61
    $region60: #{my_network_forward.1} parent=1 // pred_region
      %s119 = ssub.s32 2560, 2560
      %120 = vsyncadd [#allocation11], %s119
      %s121 = sshll.u32 [#allocation12], 4
      %s122 = int_to_ptr.vmem [resolvable:$true] %s121
      %127 = dma.hbm_to_vmem [thread:$0]  %s14, 2560, %s122, [#allocation11], 128, 128, 8
    $region61: #{my_network_forward.1} parent=1 // pred_fallthru
      _
    // Predicated region
    $region62: #{my_network_forward.1} parent=1 // pred_check
      _
    $region63: #{my_network_forward.1} parent=1 // pred_check_branch
      %129 = sbr.rel (0) target = $region65
    $region64: #{my_network_forward.1} parent=1 // pred_region
      %s131 = ssub.s32 512, 512
      %132 = vsyncadd [#allocation14], %s131
      %s133 = sshll.u32 [#allocation13], 4
      %s134 = int_to_ptr.vmem [resolvable:$true] %s133
      %139 = dma.hbm_to_vmem [thread:$0]  %s15, 512, %s134, [#allocation14], 128, 128, 8
    $region65: #{my_network_forward.1} parent=1 // pred_fallthru
      _
    // Predicated region
    $region66: #{my_network_forward.1} parent=1 // pred_check
      _
    $region67: #{my_network_forward.1} parent=1 // pred_check_branch
      %141 = sbr.rel (0) target = $region69
    $region68: #{my_network_forward.1} parent=1 // pred_region
      _
    $region69: #{my_network_forward.1} parent=1 // pred_fallthru
      _
    // Predicated region
    $region70: #{my_network_forward.1} parent=1 // pred_check
      _
    $region71: #{my_network_forward.1} parent=1 // pred_check_branch
      %143 = sbr.rel (0) target = $region73
    $region72: #{my_network_forward.1} parent=1 // pred_region
      _
    $region73: #{my_network_forward.1} parent=1 // pred_fallthru
      _
    // Predicated region
    $region74: #{my_network_forward.1} parent=1 // pred_check
      _
    $region75: #{my_network_forward.1} parent=1 // pred_check_branch
      %145 = sbr.rel (0) target = $region77
    $region76: #{my_network_forward.1} parent=1 // pred_region
      _
    $region77: #{my_network_forward.1} parent=1 // pred_fallthru
      _
    // Predicated region
    $region78: #{my_network_forward.1} parent=1 // pred_check
      _
    $region79: #{my_network_forward.1} parent=1 // pred_check_branch
      %147 = sbr.rel (0) target = $region81
    $region80: #{my_network_forward.1} parent=1 // pred_region
      _
    $region81: #{my_network_forward.1} parent=1 // pred_fallthru
      _
    // Predicated region
    $region82: #{my_network_forward.1} parent=1 // pred_check
      _
    $region83: #{my_network_forward.1} parent=1 // pred_check_branch
      %149 = sbr.rel (0) target = $region85
    $region84: #{my_network_forward.1} parent=1 // pred_region
      %150 = dma.done [#allocation3], 3072
    $region85: #{my_network_forward.1} parent=1 // pred_fallthru
      _
    // Predicated region
    $region86: #{my_network_forward.1} parent=1 // pred_check
      _
    $region87: #{my_network_forward.1} parent=1 // pred_check_branch
      %152 = sbr.rel (0) target = $region89
    $region88: #{my_network_forward.1} parent=1 // pred_region
      %153 = dma.done [#allocation5], 3072
    $region89: #{my_network_forward.1} parent=1 // pred_fallthru
      _
    // Predicated region
    $region90: #{my_network_forward.1} parent=1 // pred_check
      _
    $region91: #{my_network_forward.1} parent=1 // pred_check_branch
      %155 = sbr.rel (0) target = $region93
    $region92: #{my_network_forward.1} parent=1 // pred_region
      %156 = dma.done [#allocation5], 3840
    $region93: #{my_network_forward.1} parent=1 // pred_fallthru
      _
    // Predicated region
    $region94: #{my_network_forward.1} parent=1 // pred_check
      _
    $region95: #{my_network_forward.1} parent=1 // pred_check_branch
      %158 = sbr.rel (0) target = $region97
    $region96: #{my_network_forward.1} parent=1 // pred_region
      %159 = dma.done [#allocation8], 32
    $region97: #{my_network_forward.1} parent=1 // pred_fallthru
      _
    // Predicated region
    $region98: #{my_network_forward.1} parent=1 // pred_check
      _
    $region99: #{my_network_forward.1} parent=1 // pred_check_branch
      %161 = sbr.rel (0) target = $region101
    $region100: #{my_network_forward.1} parent=1 // pred_region
      %162 = dma.done [#allocation8], 512
    $region101: #{my_network_forward.1} parent=1 // pred_fallthru
      _
    // Predicated region
    $region102: #{my_network_forward.1} parent=1 // pred_check
      _
    $region103: #{my_network_forward.1} parent=1 // pred_check_branch
      %164 = sbr.rel (0) target = $region105
    $region104: #{my_network_forward.1} parent=1 // pred_region
      %165 = dma.done [#allocation11], 2560
    $region105: #{my_network_forward.1} parent=1 // pred_fallthru
      _
    // Predicated region
    $region106: #{my_network_forward.1} parent=1 // pred_check
      _
    $region107: #{my_network_forward.1} parent=1 // pred_check_branch
      %167 = sbr.rel (0) target = $region109
    $region108: #{my_network_forward.1} parent=1 // pred_region
      %168 = dma.done [#allocation11], 2560
    $region109: #{my_network_forward.1} parent=1 // pred_fallthru
      _
    // Predicated region
    $region110: #{my_network_forward.1} parent=1 // pred_check
      _
    $region111: #{my_network_forward.1} parent=1 // pred_check_branch
      %170 = sbr.rel (0) target = $region113
    $region112: #{my_network_forward.1} parent=1 // pred_region
      %171 = dma.done [#allocation14], 512
    $region113: #{my_network_forward.1} parent=1 // pred_fallthru
      _
    %v172 = vld [vmem:[%s0] sm:$0xff]
    %v173 = vld [vmem:[%s0 + $0x8] sm:$0xff]
    %v174 = vld [vmem:[%s0 + $0x10] sm:$0xff]
    %v175 = vld [vmem:[%s0 + $0x18] sm:$0xff]
    %v176 = vld [vmem:[%s0 + $0x20] sm:$0xff]
    %v177 = vld [vmem:[%s0 + $0x28] sm:$0xff]
    %v178 = vld [vmem:[%s0 + $0x30] sm:$0xff]
    %v179 = vld [vmem:[%s0 + $0x38] sm:$0xff]
    %v180 = vld [vmem:[%s0 + $0x40] sm:$0xff]
    %v181 = vld [vmem:[%s0 + $0x48] sm:$0xff]
    %v182 = vld [vmem:[%s0 + $0x50] sm:$0xff]
    %v183 = vld [vmem:[%s0 + $0x58] sm:$0xff]
    %v184 = vld [vmem:[%s0 + $0x60] sm:$0xff]
    %v185 = vld [vmem:[%s0 + $0x68] sm:$0xff]
    %v186 = vld [vmem:[%s0 + $0x70] sm:$0xff]
    %v187 = vld [vmem:[%s0 + $0x78] sm:$0xff]
    %v188 = vld [vmem:[%s0 + $0x80] sm:$0xff]
    %v189 = vld [vmem:[%s0 + $0x88] sm:$0xff]
    %v190 = vld [vmem:[%s0 + $0x90] sm:$0xff]
    %v191 = vld [vmem:[%s0 + $0x98] sm:$0xff]
    %v192 = vld [vmem:[%s0 + $0xa0] sm:$0xff]
    %v193 = vld [vmem:[%s0 + $0xa8] sm:$0xff]
    %v194 = vld [vmem:[%s0 + $0xb0] sm:$0xff]
    %v195 = vld [vmem:[%s0 + $0xb8] sm:$0xff]
    %v196 = vld [vmem:[%s0 + $0xc0] sm:$0xff]
    %v197 = vld [vmem:[%s0 + $0xc8] sm:$0xff]
    %v198 = vld [vmem:[%s0 + $0xd0] sm:$0xff]
    %v199 = vld [vmem:[%s0 + $0xd8] sm:$0xff]
    %v200 = vld [vmem:[%s2] sm:$0x3]
    %v201 = vld [vmem:[%s3] sm:$0xff]
    %v202 = vld [vmem:[%s3 + $0x8] sm:$0xff]
    %v203 = vld [vmem:[%s3 + $0x10] sm:$0xff]
    %v204 = vld [vmem:[%s3 + $0x18] sm:$0xff]
    %v205 = vld [vmem:[%s3 + $0x20] sm:$0xff]
    %v206 = vld [vmem:[%s3 + $0x28] sm:$0xff]
    %v207 = vld [vmem:[%s3 + $0x30] sm:$0xff]
    %v208 = vld [vmem:[%s3 + $0x38] sm:$0xff]
    %v209 = vld [vmem:[%s3 + $0x40] sm:$0xff]
    %v210 = vld [vmem:[%s3 + $0x48] sm:$0xff]
    %v211 = vld [vmem:[%s3 + $0x50] sm:$0xff]
    %v212 = vld [vmem:[%s3 + $0x58] sm:$0xff]
    %v213 = vld [vmem:[%s3 + $0x60] sm:$0xff]
    %v214 = vld [vmem:[%s3 + $0x68] sm:$0xff]
    %v215 = vld [vmem:[%s3 + $0x70] sm:$0xff]
    %v216 = vld [vmem:[%s3 + $0x78] sm:$0xff]
    %v217 = vld [vmem:[%s3 + $0x80] sm:$0xff]
    %v218 = vld [vmem:[%s3 + $0x88] sm:$0xff]
    %v219 = vld [vmem:[%s3 + $0x90] sm:$0xff]
    %v220 = vld [vmem:[%s3 + $0x98] sm:$0xff]
    %v221 = vld [vmem:[%s3 + $0xa0] sm:$0xff]
    %v222 = vld [vmem:[%s3 + $0xa8] sm:$0xff]
    %v223 = vld [vmem:[%s3 + $0xb0] sm:$0xff]
    %v224 = vld [vmem:[%s3 + $0xb8] sm:$0xff]
    %v225 = vld [vmem:[%s3 + $0xc0] sm:$0xff]
    %v226 = vld [vmem:[%s3 + $0xc8] sm:$0xff]
    %v227 = vld [vmem:[%s3 + $0xd0] sm:$0xff]
    %v228 = vld [vmem:[%s3 + $0xd8] sm:$0xff]
    %v229 = vld [vmem:[%s3 + $0xe0] sm:$0xff]
    %v230 = vld [vmem:[%s3 + $0xe8] sm:$0xff]
    %v231 = vld [vmem:[%s3 + $0xf0] sm:$0xff]
    %v232 = vld [vmem:[%s3 + $0xf8] sm:$0xff]
    %v233 = vld [vmem:[%s3 + $0x100] sm:$0xff]
    %v234 = vld [vmem:[%s3 + $0x108] sm:$0xff]
    %v235 = vld [vmem:[%s3 + $0x110] sm:$0xff]
    %v236 = vld [vmem:[%s3 + $0x118] sm:$0xff]
    %v237 = vld [vmem:[%s3 + $0x120] sm:$0xff]
    %v238 = vld [vmem:[%s3 + $0x128] sm:$0xff]
    %v239 = vld [vmem:[%s3 + $0x130] sm:$0xff]
    %v240 = vld [vmem:[%s3 + $0x138] sm:$0xff]
    %v241 = vld [vmem:[%s3 + $0x140] sm:$0xff]
    %v242 = vld [vmem:[%s3 + $0x148] sm:$0xff]
    %v243 = vld [vmem:[%s3 + $0x150] sm:$0xff]
    %v244 = vld [vmem:[%s3 + $0x158] sm:$0xff]
    %v245 = vld [vmem:[%s3 + $0x160] sm:$0xff]
    %v246 = vld [vmem:[%s3 + $0x168] sm:$0xff]
    %v247 = vld [vmem:[%s3 + $0x170] sm:$0xff]
    %v248 = vld [vmem:[%s3 + $0x178] sm:$0xff]
    %vm249 = vcmask 785408
    %v251 = vsel %vm249, %v202, 0
    %v254 = vsel %vm249, %v204, 0
    %v257 = vsel %vm249, %v206, 0
    %v260 = vsel %vm249, %v208, 0
    %v263 = vsel %vm249, %v210, 0
    %v266 = vsel %vm249, %v212, 0
    %v269 = vsel %vm249, %v214, 0
    %v272 = vsel %vm249, %v216, 0
    %v275 = vsel %vm249, %v218, 0
    %v278 = vsel %vm249, %v220, 0
    %v281 = vsel %vm249, %v222, 0
    %v284 = vsel %vm249, %v224, 0
    %v287 = vsel %vm249, %v226, 0
    %v290 = vsel %vm249, %v228, 0
    %v293 = vsel %vm249, %v230, 0
    %v296 = vsel %vm249, %v232, 0
    %v299 = vsel %vm249, %v234, 0
    %v302 = vsel %vm249, %v236, 0
    %v305 = vsel %vm249, %v238, 0
    %v308 = vsel %vm249, %v240, 0
    %v311 = vsel %vm249, %v242, 0
    %v314 = vsel %vm249, %v244, 0
    %v317 = vsel %vm249, %v246, 0
    %v320 = vsel %vm249, %v248, 0
    %322 = vmatprep.subr.mxu0 0.0
    %323 = vmatpush1.msra.mxu0 %v172
    %324 = vmatprep.subr.mxu0 0.0
    %325 = vmatpush1.msra.mxu0 %v173
    %326 = vmatprep.subr.mxu0 0.0
    %327 = vmatpush1.msra.mxu0 %v174
    %328 = vmatprep.subr.mxu0 0.0
    %329 = vmatpush1.msra.mxu0 %v175
    %330 = vmatprep.subr.mxu0 0.0
    %331 = vmatpush1.msra.mxu0 %v176
    %332 = vmatprep.subr.mxu0 0.0
    %333 = vmatpush1.msra.mxu0 %v177
    %334 = vmatprep.subr.mxu0 0.0
    %335 = vmatpush1.msra.mxu0 %v178
    %336 = vmatprep.subr.mxu0 0.0
    %337 = vmatpush1.msra.mxu0 %v179
    %338 = vmatprep.subr.mxu0 0.0
    %339 = vmatpush1.msra.mxu0 %v180
    %340 = vmatprep.subr.mxu0 0.0
    %341 = vmatpush1.msra.mxu0 %v181
    %342 = vmatprep.subr.mxu0 0.0
    %343 = vmatpush1.msra.mxu0 %v182
    %344 = vmatprep.subr.mxu0 0.0
    %345 = vmatpush1.msra.mxu0 %v183
    %346 = vmatprep.subr.mxu0 0.0
    %347 = vmatpush1.msra.mxu0 %v184
    %348 = vmatprep.subr.mxu0 0.0
    %349 = vmatpush1.msra.mxu0 %v185
    %350 = vmatprep.subr.mxu0 0.0
    %351 = vmatpush1.msra.mxu0 %v186
    %352 = vmatprep.subr.mxu0 0.0
    %353 = vmatpush1.msra.mxu0 %v187
    %354 = vmatprep.subr.mxu0 0.0
    %355 = vmatpush1.msra.mxu0 %v188
    %356 = vmatprep.subr.mxu0 0.0
    %357 = vmatpush1.msra.mxu0 %v189
    %358 = vmatprep.subr.mxu0 0.0
    %359 = vmatpush1.msra.mxu0 %v190
    %360 = vmatprep.subr.mxu0 0.0
    %361 = vmatpush1.msra.mxu0 %v191
    %362 = vmatprep.subr.mxu0 0.0
    %363 = vmatpush1.msra.mxu0 %v192
    %364 = vmatprep.subr.mxu0 0.0
    %365 = vmatpush1.msra.mxu0 %v193
    %366 = vmatprep.subr.mxu0 0.0
    %367 = vmatpush1.msra.mxu0 %v194
    %368 = vmatprep.subr.mxu0 0.0
    %369 = vmatpush1.msra.mxu0 %v195
    %370 = vmatprep.subr.mxu0 0.0
    %371 = vmatpush1.msra.mxu0 %v196
    %372 = vmatprep.subr.mxu0 0.0
    %373 = vmatpush1.msra.mxu0 %v197
    %374 = vmatprep.subr.mxu0 0.0
    %375 = vmatpush1.msra.mxu0 %v198
    %376 = vmatprep.subr.mxu0 0.0
    %377 = vmatpush1.msra.mxu0 %v199
    %378 = vmatprep.subr.mxu0 0.0
    %379 = vmatpush1.msra.mxu0 0.0
    %380 = vmatprep.subr.mxu0 0.0
    %381 = vmatpush1.msra.mxu0 0.0
    %382 = vmatprep.subr.mxu0 0.0
    %383 = vmatpush1.msra.mxu0 0.0
    %384 = vmatprep.subr.mxu0 0.0
    %385 = vmatpush1.msra.mxu0 0.0
    %386 = vmatprep.mubr.f32.mxu0 %v251
    %387 = vmatmul.mubr.f32.gmra.mrb[0].mxu0 %v201
    %v388 = vpop.f32.mrb[0].mxu0
    %v389 = vadd.f32 0.0, %v388
    %v390 = vpop.f32.mrb[0].mxu0
    %391 = vmatprep.mubr.f32.mxu0 %v254
    %392 = vmatmul.mubr.f32.gmra.mrb[0].mxu0 %v203
    %v393 = vpop.f32.mrb[0].mxu0
    %v394 = vadd.f32 0.0, %v393
    %v395 = vpop.f32.mrb[0].mxu0
    %396 = vmatprep.mubr.f32.mxu0 %v257
    %397 = vmatmul.mubr.f32.gmra.mrb[0].mxu0 %v205
    %v398 = vpop.f32.mrb[0].mxu0
    %v399 = vadd.f32 0.0, %v398
    %v400 = vpop.f32.mrb[0].mxu0
    %401 = vmatprep.mubr.f32.mxu0 %v260
    %402 = vmatmul.mubr.f32.gmra.mrb[0].mxu0 %v207
    %v403 = vpop.f32.mrb[0].mxu0
    %v404 = vadd.f32 0.0, %v403
    %v405 = vpop.f32.mrb[0].mxu0
    %406 = vmatprep.mubr.f32.mxu0 %v263
    %407 = vmatmul.mubr.f32.gmra.mrb[0].mxu0 %v209
    %v408 = vpop.f32.mrb[0].mxu0
    %v409 = vadd.f32 0.0, %v408
    %v410 = vpop.f32.mrb[0].mxu0
    %411 = vmatprep.mubr.f32.mxu0 %v266
    %412 = vmatmul.mubr.f32.gmra.mrb[0].mxu0 %v211
    %v413 = vpop.f32.mrb[0].mxu0
    %v414 = vadd.f32 0.0, %v413
    %v415 = vpop.f32.mrb[0].mxu0
    %416 = vmatprep.mubr.f32.mxu0 %v269
    %417 = vmatmul.mubr.f32.gmra.mrb[0].mxu0 %v213
    %v418 = vpop.f32.mrb[0].mxu0
    %v419 = vadd.f32 0.0, %v418
    %v420 = vpop.f32.mrb[0].mxu0
    %421 = vmatprep.mubr.f32.mxu0 %v272
    %422 = vmatmul.mubr.f32.gmra.mrb[0].mxu0 %v215
    %v423 = vpop.f32.mrb[0].mxu0
    %v424 = vadd.f32 0.0, %v423
    %v425 = vpop.f32.mrb[0].mxu0
    %426 = vmatprep.mubr.f32.mxu0 %v275
    %427 = vmatmul.mubr.f32.gmra.mrb[0].mxu0 %v217
    %v428 = vpop.f32.mrb[0].mxu0
    %v429 = vadd.f32 0.0, %v428
    %v430 = vpop.f32.mrb[0].mxu0
    %431 = vmatprep.mubr.f32.mxu0 %v278
    %432 = vmatmul.mubr.f32.gmra.mrb[0].mxu0 %v219
    %v433 = vpop.f32.mrb[0].mxu0
    %v434 = vadd.f32 0.0, %v433
    %v435 = vpop.f32.mrb[0].mxu0
    %436 = vmatprep.mubr.f32.mxu0 %v281
    %437 = vmatmul.mubr.f32.gmra.mrb[0].mxu0 %v221
    %v438 = vpop.f32.mrb[0].mxu0
    %v439 = vadd.f32 0.0, %v438
    %v440 = vpop.f32.mrb[0].mxu0
    %441 = vmatprep.mubr.f32.mxu0 %v284
    %442 = vmatmul.mubr.f32.gmra.mrb[0].mxu0 %v223
    %v443 = vpop.f32.mrb[0].mxu0
    %v444 = vadd.f32 0.0, %v443
    %v445 = vpop.f32.mrb[0].mxu0
    %446 = vmatprep.mubr.f32.mxu0 %v287
    %447 = vmatmul.mubr.f32.gmra.mrb[0].mxu0 %v225
    %v448 = vpop.f32.mrb[0].mxu0
    %v449 = vadd.f32 0.0, %v448
    %v450 = vpop.f32.mrb[0].mxu0
    %451 = vmatprep.mubr.f32.mxu0 %v290
    %452 = vmatmul.mubr.f32.gmra.mrb[0].mxu0 %v227
    %v453 = vpop.f32.mrb[0].mxu0
    %v454 = vadd.f32 0.0, %v453
    %v455 = vpop.f32.mrb[0].mxu0
    %456 = vmatprep.mubr.f32.mxu0 %v293
    %457 = vmatmul.mubr.f32.gmra.mrb[0].mxu0 %v229
    %v458 = vpop.f32.mrb[0].mxu0
    %v459 = vadd.f32 0.0, %v458
    %v460 = vpop.f32.mrb[0].mxu0
    %461 = vmatprep.mubr.f32.mxu0 %v296
    %462 = vmatmul.mubr.f32.gmra.mrb[0].mxu0 %v231
    %v463 = vpop.f32.mrb[0].mxu0
    %v464 = vadd.f32 0.0, %v463
    %v465 = vpop.f32.mrb[0].mxu0
    %466 = vmatprep.mubr.f32.mxu0 %v299
    %467 = vmatmul.mubr.f32.gmra.mrb[0].mxu0 %v233
    %v468 = vpop.f32.mrb[0].mxu0
    %v469 = vadd.f32 0.0, %v468
    %v470 = vpop.f32.mrb[0].mxu0
    %471 = vmatprep.mubr.f32.mxu0 %v302
    %472 = vmatmul.mubr.f32.gmra.mrb[0].mxu0 %v235
    %v473 = vpop.f32.mrb[0].mxu0
    %v474 = vadd.f32 0.0, %v473
    %v475 = vpop.f32.mrb[0].mxu0
    %476 = vmatprep.mubr.f32.mxu0 %v305
    %477 = vmatmul.mubr.f32.gmra.mrb[0].mxu0 %v237
    %v478 = vpop.f32.mrb[0].mxu0
    %v479 = vadd.f32 0.0, %v478
    %v480 = vpop.f32.mrb[0].mxu0
    %481 = vmatprep.mubr.f32.mxu0 %v308
    %482 = vmatmul.mubr.f32.gmra.mrb[0].mxu0 %v239
    %v483 = vpop.f32.mrb[0].mxu0
    %v484 = vadd.f32 0.0, %v483
    %v485 = vpop.f32.mrb[0].mxu0
    %486 = vmatprep.mubr.f32.mxu0 %v311
    %487 = vmatmul.mubr.f32.gmra.mrb[0].mxu0 %v241
    %v488 = vpop.f32.mrb[0].mxu0
    %v489 = vadd.f32 0.0, %v488
    %v490 = vpop.f32.mrb[0].mxu0
    %491 = vmatprep.mubr.f32.mxu0 %v314
    %492 = vmatmul.mubr.f32.gmra.mrb[0].mxu0 %v243
    %v493 = vpop.f32.mrb[0].mxu0
    %v494 = vadd.f32 0.0, %v493
    %v495 = vpop.f32.mrb[0].mxu0
    %496 = vmatprep.mubr.f32.mxu0 %v317
    %497 = vmatmul.mubr.f32.gmra.mrb[0].mxu0 %v245
    %v498 = vpop.f32.mrb[0].mxu0
    %v499 = vadd.f32 0.0, %v498
    %v500 = vpop.f32.mrb[0].mxu0
    %501 = vmatprep.mubr.f32.mxu0 %v320
    %502 = vmatmul.mubr.f32.gmra.mrb[0].mxu0 %v247
    %v503 = vpop.f32.mrb[0].mxu0
    %v504 = vadd.f32 0.0, %v503
    %v505 = vpop.f32.mrb[0].mxu0
    %506 = vdwg.mxu0
    %v507 = vld [vmem:[%s1] sm:$0xff]
    %v508 = vld [vmem:[%s1 + $0x8] sm:$0xff]
    %v509 = vld [vmem:[%s1 + $0x10] sm:$0xff]
    %v510 = vld [vmem:[%s1 + $0x18] sm:$0xff]
    %v511 = vld [vmem:[%s1 + $0x20] sm:$0xff]
    %v512 = vld [vmem:[%s1 + $0x28] sm:$0xff]
    %v513 = vld [vmem:[%s1 + $0x30] sm:$0xf]
    %v514 = vld [vmem:[%s1 + $0x38] sm:$0xf]
    %vm515 = vcmask 228352
    %v517 = vsel %vm515, %v389, 0
    %v520 = vsel %vm515, %v394, 0
    %v523 = vsel %vm515, %v399, 0
    %v526 = vsel %vm515, %v404, 0
    %v529 = vsel %vm515, %v409, 0
    %v532 = vsel %vm515, %v414, 0
    %v535 = vsel %vm515, %v419, 0
    %v538 = vsel %vm515, %v424, 0
    %v541 = vsel %vm515, %v429, 0
    %v544 = vsel %vm515, %v434, 0
    %v547 = vsel %vm515, %v439, 0
    %v550 = vsel %vm515, %v444, 0
    %v553 = vsel %vm515, %v449, 0
    %v556 = vsel %vm515, %v454, 0
    %v559 = vsel %vm515, %v459, 0
    %v562 = vsel %vm515, %v464, 0
    %v565 = vsel %vm515, %v469, 0
    %v568 = vsel %vm515, %v474, 0
    %v571 = vsel %vm515, %v479, 0
    %v574 = vsel %vm515, %v484, 0
    %v577 = vsel %vm515, %v489, 0
    %v580 = vsel %vm515, %v494, 0
    %v583 = vsel %vm515, %v499, 0
    %v586 = vsel %vm515, %v504, 0
    %vm588 = vcmask 1043456
    %v590 = vsel %vm588, %v513, 0
    %v593 = vsel %vm588, %v514, 0
    %595 = vmatprep.subr.mxu0 %v508
    %596 = vmatpush1.msra.mxu0 %v507
    %597 = vmatprep.subr.mxu0 %v510
    %598 = vmatpush1.msra.mxu0 %v509
    %599 = vmatprep.subr.mxu0 %v512
    %600 = vmatpush1.msra.mxu0 %v511
    %601 = vmatprep.subr.mxu0 %v593
    %602 = vmatpush1.msra.mxu0 %v590
    %603 = vmatprep.subr.mxu0 0.0
    %604 = vmatpush1.msra.mxu0 0.0
    %605 = vmatprep.subr.mxu0 0.0
    %606 = vmatpush1.msra.mxu0 0.0
    %607 = vmatprep.subr.mxu0 0.0
    %608 = vmatpush1.msra.mxu0 0.0
    %609 = vmatprep.subr.mxu0 0.0
    %610 = vmatpush1.msra.mxu0 0.0
    %611 = vmatprep.subr.mxu0 0.0
    %612 = vmatpush1.msra.mxu0 0.0
    %613 = vmatprep.subr.mxu0 0.0
    %614 = vmatpush1.msra.mxu0 0.0
    %615 = vmatprep.subr.mxu0 0.0
    %616 = vmatpush1.msra.mxu0 0.0
    %617 = vmatprep.subr.mxu0 0.0
    %618 = vmatpush1.msra.mxu0 0.0
    %619 = vmatprep.subr.mxu0 0.0
    %620 = vmatpush1.msra.mxu0 0.0
    %621 = vmatprep.subr.mxu0 0.0
    %622 = vmatpush1.msra.mxu0 0.0
    %623 = vmatprep.subr.mxu0 0.0
    %624 = vmatpush1.msra.mxu0 0.0
    %625 = vmatprep.subr.mxu0 0.0
    %626 = vmatpush1.msra.mxu0 0.0
    %627 = vmatprep.subr.mxu0 0.0
    %628 = vmatpush1.msra.mxu0 0.0
    %629 = vmatprep.subr.mxu0 0.0
    %630 = vmatpush1.msra.mxu0 0.0
    %631 = vmatprep.subr.mxu0 0.0
    %632 = vmatpush1.msra.mxu0 0.0
    %633 = vmatprep.subr.mxu0 0.0
    %634 = vmatpush1.msra.mxu0 0.0
    %635 = vmatprep.subr.mxu0 0.0
    %636 = vmatpush1.msra.mxu0 0.0
    %637 = vmatprep.subr.mxu0 0.0
    %638 = vmatpush1.msra.mxu0 0.0
    %639 = vmatprep.subr.mxu0 0.0
    %640 = vmatpush1.msra.mxu0 0.0
    %641 = vmatprep.subr.mxu0 0.0
    %642 = vmatpush1.msra.mxu0 0.0
    %643 = vmatprep.subr.mxu0 0.0
    %644 = vmatpush1.msra.mxu0 0.0
    %645 = vmatprep.subr.mxu0 0.0
    %646 = vmatpush1.msra.mxu0 0.0
    %647 = vmatprep.subr.mxu0 0.0
    %648 = vmatpush1.msra.mxu0 0.0
    %649 = vmatprep.subr.mxu0 0.0
    %650 = vmatpush1.msra.mxu0 0.0
    %651 = vmatprep.subr.mxu0 0.0
    %652 = vmatpush1.msra.mxu0 0.0
    %653 = vmatprep.subr.mxu0 0.0
    %654 = vmatpush1.msra.mxu0 0.0
    %655 = vmatprep.subr.mxu0 0.0
    %656 = vmatpush1.msra.mxu0 0.0
    %657 = vmatprep.subr.mxu0 0.0
    %658 = vmatpush1.msra.mxu0 0.0
    %659 = vmatprep.mubr.f32.mxu0 0.0
    %660 = vmatmul.mubr.f32.gmra.mrb[0].mxu0 %v517
    %v661 = vpop.f32.mrb[0].mxu0
    %v662 = vadd.f32 0.0, %v661
    %v663 = vpop.f32.mrb[0].mxu0
    %v664 = vadd.f32 0.0, %v663
    %665 = vmatprep.mubr.f32.mxu0 0.0
    %666 = vmatmul.mubr.f32.gmra.mrb[0].mxu0 %v520
    %v667 = vpop.f32.mrb[0].mxu0
    %v668 = vadd.f32 0.0, %v667
    %v669 = vpop.f32.mrb[0].mxu0
    %v670 = vadd.f32 0.0, %v669
    %671 = vmatprep.mubr.f32.mxu0 0.0
    %672 = vmatmul.mubr.f32.gmra.mrb[0].mxu0 %v523
    %v673 = vpop.f32.mrb[0].mxu0
    %v674 = vadd.f32 0.0, %v673
    %v675 = vpop.f32.mrb[0].mxu0
    %v676 = vadd.f32 0.0, %v675
    %677 = vmatprep.mubr.f32.mxu0 0.0
    %678 = vmatmul.mubr.f32.gmra.mrb[0].mxu0 %v526
    %v679 = vpop.f32.mrb[0].mxu0
    %v680 = vadd.f32 0.0, %v679
    %v681 = vpop.f32.mrb[0].mxu0
    %v682 = vadd.f32 0.0, %v681
    %683 = vmatprep.mubr.f32.mxu0 0.0
    %684 = vmatmul.mubr.f32.gmra.mrb[0].mxu0 %v529
    %v685 = vpop.f32.mrb[0].mxu0
    %v686 = vadd.f32 0.0, %v685
    %v687 = vpop.f32.mrb[0].mxu0
    %v688 = vadd.f32 0.0, %v687
    %689 = vmatprep.mubr.f32.mxu0 0.0
    %690 = vmatmul.mubr.f32.gmra.mrb[0].mxu0 %v532
    %v691 = vpop.f32.mrb[0].mxu0
    %v692 = vadd.f32 0.0, %v691
    %v693 = vpop.f32.mrb[0].mxu0
    %v694 = vadd.f32 0.0, %v693
    %695 = vmatprep.mubr.f32.mxu0 0.0
    %696 = vmatmul.mubr.f32.gmra.mrb[0].mxu0 %v535
    %v697 = vpop.f32.mrb[0].mxu0
    %v698 = vadd.f32 0.0, %v697
    %v699 = vpop.f32.mrb[0].mxu0
    %v700 = vadd.f32 0.0, %v699
    %701 = vmatprep.mubr.f32.mxu0 0.0
    %702 = vmatmul.mubr.f32.gmra.mrb[0].mxu0 %v538
    %v703 = vpop.f32.mrb[0].mxu0
    %v704 = vadd.f32 0.0, %v703
    %v705 = vpop.f32.mrb[0].mxu0
    %v706 = vadd.f32 0.0, %v705
    %707 = vmatprep.mubr.f32.mxu0 0.0
    %708 = vmatmul.mubr.f32.gmra.mrb[0].mxu0 %v541
    %v709 = vpop.f32.mrb[0].mxu0
    %v710 = vadd.f32 0.0, %v709
    %v711 = vpop.f32.mrb[0].mxu0
    %v712 = vadd.f32 0.0, %v711
    %713 = vmatprep.mubr.f32.mxu0 0.0
    %714 = vmatmul.mubr.f32.gmra.mrb[0].mxu0 %v544
    %v715 = vpop.f32.mrb[0].mxu0
    %v716 = vadd.f32 0.0, %v715
    %v717 = vpop.f32.mrb[0].mxu0
    %v718 = vadd.f32 0.0, %v717
    %719 = vmatprep.mubr.f32.mxu0 0.0
    %720 = vmatmul.mubr.f32.gmra.mrb[0].mxu0 %v547
    %v721 = vpop.f32.mrb[0].mxu0
    %v722 = vadd.f32 0.0, %v721
    %v723 = vpop.f32.mrb[0].mxu0
    %v724 = vadd.f32 0.0, %v723
    %725 = vmatprep.mubr.f32.mxu0 0.0
    %726 = vmatmul.mubr.f32.gmra.mrb[0].mxu0 %v550
    %v727 = vpop.f32.mrb[0].mxu0
    %v728 = vadd.f32 0.0, %v727
    %v729 = vpop.f32.mrb[0].mxu0
    %v730 = vadd.f32 0.0, %v729
    %731 = vmatprep.mubr.f32.mxu0 0.0
    %732 = vmatmul.mubr.f32.gmra.mrb[0].mxu0 %v553
    %v733 = vpop.f32.mrb[0].mxu0
    %v734 = vadd.f32 0.0, %v733
    %v735 = vpop.f32.mrb[0].mxu0
    %v736 = vadd.f32 0.0, %v735
    %737 = vmatprep.mubr.f32.mxu0 0.0
    %738 = vmatmul.mubr.f32.gmra.mrb[0].mxu0 %v556
    %v739 = vpop.f32.mrb[0].mxu0
    %v740 = vadd.f32 0.0, %v739
    %v741 = vpop.f32.mrb[0].mxu0
    %v742 = vadd.f32 0.0, %v741
    %743 = vmatprep.mubr.f32.mxu0 0.0
    %744 = vmatmul.mubr.f32.gmra.mrb[0].mxu0 %v559
    %v745 = vpop.f32.mrb[0].mxu0
    %v746 = vadd.f32 0.0, %v745
    %v747 = vpop.f32.mrb[0].mxu0
    %v748 = vadd.f32 0.0, %v747
    %749 = vmatprep.mubr.f32.mxu0 0.0
    %750 = vmatmul.mubr.f32.gmra.mrb[0].mxu0 %v562
    %v751 = vpop.f32.mrb[0].mxu0
    %v752 = vadd.f32 0.0, %v751
    %v753 = vpop.f32.mrb[0].mxu0
    %v754 = vadd.f32 0.0, %v753
    %755 = vmatprep.mubr.f32.mxu0 0.0
    %756 = vmatmul.mubr.f32.gmra.mrb[0].mxu0 %v565
    %v757 = vpop.f32.mrb[0].mxu0
    %v758 = vadd.f32 0.0, %v757
    %v759 = vpop.f32.mrb[0].mxu0
    %v760 = vadd.f32 0.0, %v759
    %761 = vmatprep.mubr.f32.mxu0 0.0
    %762 = vmatmul.mubr.f32.gmra.mrb[0].mxu0 %v568
    %v763 = vpop.f32.mrb[0].mxu0
    %v764 = vadd.f32 0.0, %v763
    %v765 = vpop.f32.mrb[0].mxu0
    %v766 = vadd.f32 0.0, %v765
    %767 = vmatprep.mubr.f32.mxu0 0.0
    %768 = vmatmul.mubr.f32.gmra.mrb[0].mxu0 %v571
    %v769 = vpop.f32.mrb[0].mxu0
    %v770 = vadd.f32 0.0, %v769
    %v771 = vpop.f32.mrb[0].mxu0
    %v772 = vadd.f32 0.0, %v771
    %773 = vmatprep.mubr.f32.mxu0 0.0
    %774 = vmatmul.mubr.f32.gmra.mrb[0].mxu0 %v574
    %v775 = vpop.f32.mrb[0].mxu0
    %v776 = vadd.f32 0.0, %v775
    %v777 = vpop.f32.mrb[0].mxu0
    %v778 = vadd.f32 0.0, %v777
    %779 = vmatprep.mubr.f32.mxu0 0.0
    %780 = vmatmul.mubr.f32.gmra.mrb[0].mxu0 %v577
    %v781 = vpop.f32.mrb[0].mxu0
    %v782 = vadd.f32 0.0, %v781
    %v783 = vpop.f32.mrb[0].mxu0
    %v784 = vadd.f32 0.0, %v783
    %785 = vmatprep.mubr.f32.mxu0 0.0
    %786 = vmatmul.mubr.f32.gmra.mrb[0].mxu0 %v580
    %v787 = vpop.f32.mrb[0].mxu0
    %v788 = vadd.f32 0.0, %v787
    %v789 = vpop.f32.mrb[0].mxu0
    %v790 = vadd.f32 0.0, %v789
    %791 = vmatprep.mubr.f32.mxu0 0.0
    %792 = vmatmul.mubr.f32.gmra.mrb[0].mxu0 %v583
    %v793 = vpop.f32.mrb[0].mxu0
    %v794 = vadd.f32 0.0, %v793
    %v795 = vpop.f32.mrb[0].mxu0
    %v796 = vadd.f32 0.0, %v795
    %797 = vmatprep.mubr.f32.mxu0 0.0
    %798 = vmatmul.mubr.f32.gmra.mrb[0].mxu0 %v586
    %v799 = vpop.f32.mrb[0].mxu0
    %v800 = vadd.f32 0.0, %v799
    %v801 = vpop.f32.mrb[0].mxu0
    %v802 = vadd.f32 0.0, %v801
    %803 = vdwg.mxu0
    %v805 = vlaneseq
    %v806 = vshrl.u32 %v805, 7
    %v807 = vsub.s32 0, %v806
    %v808 = vrot.slane %v200, %v807
    %v809 = vlaneseq
    %v810 = vshrl.u32 %v809, 7
    %v811 = vsub.s32 1, %v810
    %v812 = vrot.slane %v200, %v811
    %v815 = vadd.f32 %v808, %v662
    %v816 = vadd.f32 %v812, %v664
    %v817 = vadd.f32 %v808, %v668
    %v818 = vadd.f32 %v812, %v670
    %v819 = vadd.f32 %v808, %v674
    %v820 = vadd.f32 %v812, %v676
    %v821 = vadd.f32 %v808, %v680
    %v822 = vadd.f32 %v812, %v682
    %v823 = vadd.f32 %v808, %v686
    %v824 = vadd.f32 %v812, %v688
    %v825 = vadd.f32 %v808, %v692
    %v826 = vadd.f32 %v812, %v694
    %v827 = vadd.f32 %v808, %v698
    %v828 = vadd.f32 %v812, %v700
    %v829 = vadd.f32 %v808, %v704
    %v830 = vadd.f32 %v812, %v706
    %v831 = vadd.f32 %v808, %v710
    %v832 = vadd.f32 %v812, %v712
    %v833 = vadd.f32 %v808, %v716
    %v834 = vadd.f32 %v812, %v718
    %v835 = vadd.f32 %v808, %v722
    %v836 = vadd.f32 %v812, %v724
    %v837 = vadd.f32 %v808, %v728
    %v838 = vadd.f32 %v812, %v730
    %v839 = vadd.f32 %v808, %v734
    %v840 = vadd.f32 %v812, %v736
    %v841 = vadd.f32 %v808, %v740
    %v842 = vadd.f32 %v812, %v742
    %v843 = vadd.f32 %v808, %v746
    %v844 = vadd.f32 %v812, %v748
    %v845 = vadd.f32 %v808, %v752
    %v846 = vadd.f32 %v812, %v754
    %v847 = vadd.f32 %v808, %v758
    %v848 = vadd.f32 %v812, %v760
    %v849 = vadd.f32 %v808, %v764
    %v850 = vadd.f32 %v812, %v766
    %v851 = vadd.f32 %v808, %v770
    %v852 = vadd.f32 %v812, %v772
    %v853 = vadd.f32 %v808, %v776
    %v854 = vadd.f32 %v812, %v778
    %v855 = vadd.f32 %v808, %v782
    %v856 = vadd.f32 %v812, %v784
    %v857 = vadd.f32 %v808, %v788
    %v858 = vadd.f32 %v812, %v790
    %v859 = vadd.f32 %v808, %v794
    %v860 = vadd.f32 %v812, %v796
    %v861 = vadd.f32 %v808, %v800
    %v862 = vadd.f32 %v812, %v802
    %s863 = scalar_lea.vmem %s3, 384
    %v864 = vld [vmem:[%s863] sm:$0xff]
    %v865 = vld [vmem:[%s863 + $0x8] sm:$0xff]
    %v866 = vld [vmem:[%s863 + $0x10] sm:$0xff]
    %v867 = vld [vmem:[%s863 + $0x18] sm:$0xff]
    %v868 = vld [vmem:[%s863 + $0x20] sm:$0xff]
    %v869 = vld [vmem:[%s863 + $0x28] sm:$0xff]
    %v870 = vld [vmem:[%s863 + $0x30] sm:$0xff]
    %v871 = vld [vmem:[%s863 + $0x38] sm:$0xff]
    %v872 = vld [vmem:[%s863 + $0x40] sm:$0xff]
    %v873 = vld [vmem:[%s863 + $0x48] sm:$0xff]
    %v874 = vld [vmem:[%s863 + $0x50] sm:$0xff]
    %v875 = vld [vmem:[%s863 + $0x58] sm:$0xff]
    %v876 = vld [vmem:[%s863 + $0x60] sm:$0xff]
    %v877 = vld [vmem:[%s863 + $0x68] sm:$0xff]
    %v878 = vld [vmem:[%s863 + $0x70] sm:$0xff]
    %v879 = vld [vmem:[%s863 + $0x78] sm:$0xff]
    %v880 = vld [vmem:[%s863 + $0x80] sm:$0xff]
    %v881 = vld [vmem:[%s863 + $0x88] sm:$0xff]
    %v882 = vld [vmem:[%s863 + $0x90] sm:$0xff]
    %v883 = vld [vmem:[%s863 + $0x98] sm:$0xff]
    %v884 = vld [vmem:[%s863 + $0xa0] sm:$0xff]
    %v885 = vld [vmem:[%s863 + $0xa8] sm:$0xff]
    %v886 = vld [vmem:[%s863 + $0xb0] sm:$0xff]
    %v887 = vld [vmem:[%s863 + $0xb8] sm:$0xff]
    %v888 = vld [vmem:[%s863 + $0xc0] sm:$0xff]
    %v889 = vld [vmem:[%s863 + $0xc8] sm:$0xff]
    %v890 = vld [vmem:[%s863 + $0xd0] sm:$0xff]
    %v891 = vld [vmem:[%s863 + $0xd8] sm:$0xff]
    %v892 = vld [vmem:[%s863 + $0xe0] sm:$0xff]
    %v893 = vld [vmem:[%s863 + $0xe8] sm:$0xff]
    %v894 = vld [vmem:[%s863 + $0xf0] sm:$0xff]
    %v895 = vld [vmem:[%s863 + $0xf8] sm:$0xff]
    %v896 = vld [vmem:[%s863 + $0x100] sm:$0xff]
    %v897 = vld [vmem:[%s863 + $0x108] sm:$0xff]
    %v898 = vld [vmem:[%s863 + $0x110] sm:$0xff]
    %v899 = vld [vmem:[%s863 + $0x118] sm:$0xff]
    %v900 = vld [vmem:[%s863 + $0x120] sm:$0xff]
    %v901 = vld [vmem:[%s863 + $0x128] sm:$0xff]
    %v902 = vld [vmem:[%s863 + $0x130] sm:$0xff]
    %v903 = vld [vmem:[%s863 + $0x138] sm:$0xff]
    %v904 = vld [vmem:[%s863 + $0x140] sm:$0xff]
    %v905 = vld [vmem:[%s863 + $0x148] sm:$0xff]
    %v906 = vld [vmem:[%s863 + $0x150] sm:$0xff]
    %v907 = vld [vmem:[%s863 + $0x158] sm:$0xff]
    %v908 = vld [vmem:[%s863 + $0x160] sm:$0xff]
    %v909 = vld [vmem:[%s863 + $0x168] sm:$0xff]
    %v910 = vld [vmem:[%s863 + $0x170] sm:$0xff]
    %v911 = vld [vmem:[%s863 + $0x178] sm:$0xff]
    %v913 = vsel %vm249, %v865, 0
    %v916 = vsel %vm249, %v867, 0
    %v919 = vsel %vm249, %v869, 0
    %v922 = vsel %vm249, %v871, 0
    %v925 = vsel %vm249, %v873, 0
    %v928 = vsel %vm249, %v875, 0
    %v931 = vsel %vm249, %v877, 0
    %v934 = vsel %vm249, %v879, 0
    %v937 = vsel %vm249, %v881, 0
    %v940 = vsel %vm249, %v883, 0
    %v943 = vsel %vm249, %v885, 0
    %v946 = vsel %vm249, %v887, 0
    %v949 = vsel %vm249, %v889, 0
    %v952 = vsel %vm249, %v891, 0
    %v955 = vsel %vm249, %v893, 0
    %v958 = vsel %vm249, %v895, 0
    %v961 = vsel %vm249, %v897, 0
    %v964 = vsel %vm249, %v899, 0
    %v967 = vsel %vm249, %v901, 0
    %v970 = vsel %vm249, %v903, 0
    %v973 = vsel %vm249, %v905, 0
    %v976 = vsel %vm249, %v907, 0
    %v979 = vsel %vm249, %v909, 0
    %v982 = vsel %vm249, %v911, 0
    %984 = vmatprep.subr.mxu0 0.0
    %985 = vmatpush1.msra.mxu0 %v172
    %986 = vmatprep.subr.mxu0 0.0
    %987 = vmatpush1.msra.mxu0 %v173
    %988 = vmatprep.subr.mxu0 0.0
    %989 = vmatpush1.msra.mxu0 %v174
    %990 = vmatprep.subr.mxu0 0.0
    %991 = vmatpush1.msra.mxu0 %v175
    %992 = vmatprep.subr.mxu0 0.0
    %993 = vmatpush1.msra.mxu0 %v176
    %994 = vmatprep.subr.mxu0 0.0
    %995 = vmatpush1.msra.mxu0 %v177
    %996 = vmatprep.subr.mxu0 0.0
    %997 = vmatpush1.msra.mxu0 %v178
    %998 = vmatprep.subr.mxu0 0.0
    %999 = vmatpush1.msra.mxu0 %v179
    %1000 = vmatprep.subr.mxu0 0.0
    %1001 = vmatpush1.msra.mxu0 %v180
    %1002 = vmatprep.subr.mxu0 0.0
    %1003 = vmatpush1.msra.mxu0 %v181
    %1004 = vmatprep.subr.mxu0 0.0
    %1005 = vmatpush1.msra.mxu0 %v182
    %1006 = vmatprep.subr.mxu0 0.0
    %1007 = vmatpush1.msra.mxu0 %v183
    %1008 = vmatprep.subr.mxu0 0.0
    %1009 = vmatpush1.msra.mxu0 %v184
    %1010 = vmatprep.subr.mxu0 0.0
    %1011 = vmatpush1.msra.mxu0 %v185
    %1012 = vmatprep.subr.mxu0 0.0
    %1013 = vmatpush1.msra.mxu0 %v186
    %1014 = vmatprep.subr.mxu0 0.0
    %1015 = vmatpush1.msra.mxu0 %v187
    %1016 = vmatprep.subr.mxu0 0.0
    %1017 = vmatpush1.msra.mxu0 %v188
    %1018 = vmatprep.subr.mxu0 0.0
    %1019 = vmatpush1.msra.mxu0 %v189
    %1020 = vmatprep.subr.mxu0 0.0
    %1021 = vmatpush1.msra.mxu0 %v190
    %1022 = vmatprep.subr.mxu0 0.0
    %1023 = vmatpush1.msra.mxu0 %v191
    %1024 = vmatprep.subr.mxu0 0.0
    %1025 = vmatpush1.msra.mxu0 %v192
    %1026 = vmatprep.subr.mxu0 0.0
    %1027 = vmatpush1.msra.mxu0 %v193
    %1028 = vmatprep.subr.mxu0 0.0
    %1029 = vmatpush1.msra.mxu0 %v194
    %1030 = vmatprep.subr.mxu0 0.0
    %1031 = vmatpush1.msra.mxu0 %v195
    %1032 = vmatprep.subr.mxu0 0.0
    %1033 = vmatpush1.msra.mxu0 %v196
    %1034 = vmatprep.subr.mxu0 0.0
    %1035 = vmatpush1.msra.mxu0 %v197
    %1036 = vmatprep.subr.mxu0 0.0
    %1037 = vmatpush1.msra.mxu0 %v198
    %1038 = vmatprep.subr.mxu0 0.0
    %1039 = vmatpush1.msra.mxu0 %v199
    %1040 = vmatprep.subr.mxu0 0.0
    %1041 = vmatpush1.msra.mxu0 0.0
    %1042 = vmatprep.subr.mxu0 0.0
    %1043 = vmatpush1.msra.mxu0 0.0
    %1044 = vmatprep.subr.mxu0 0.0
    %1045 = vmatpush1.msra.mxu0 0.0
    %1046 = vmatprep.subr.mxu0 0.0
    %1047 = vmatpush1.msra.mxu0 0.0
    %1048 = vmatprep.mubr.f32.mxu0 %v913
    %1049 = vmatmul.mubr.f32.gmra.mrb[0].mxu0 %v864
    %v1050 = vpop.f32.mrb[0].mxu0
    %v1051 = vadd.f32 0.0, %v1050
    %v1052 = vpop.f32.mrb[0].mxu0
    %1053 = vmatprep.mubr.f32.mxu0 %v916
    %1054 = vmatmul.mubr.f32.gmra.mrb[0].mxu0 %v866
    %v1055 = vpop.f32.mrb[0].mxu0
    %v1056 = vadd.f32 0.0, %v1055
    %v1057 = vpop.f32.mrb[0].mxu0
    %1058 = vmatprep.mubr.f32.mxu0 %v919
    %1059 = vmatmul.mubr.f32.gmra.mrb[0].mxu0 %v868
    %v1060 = vpop.f32.mrb[0].mxu0
    %v1061 = vadd.f32 0.0, %v1060
    %v1062 = vpop.f32.mrb[0].mxu0
    %1063 = vmatprep.mubr.f32.mxu0 %v922
    %1064 = vmatmul.mubr.f32.gmra.mrb[0].mxu0 %v870
    %v1065 = vpop.f32.mrb[0].mxu0
    %v1066 = vadd.f32 0.0, %v1065
    %v1067 = vpop.f32.mrb[0].mxu0
    %1068 = vmatprep.mubr.f32.mxu0 %v925
    %1069 = vmatmul.mubr.f32.gmra.mrb[0].mxu0 %v872
    %v1070 = vpop.f32.mrb[0].mxu0
    %v1071 = vadd.f32 0.0, %v1070
    %v1072 = vpop.f32.mrb[0].mxu0
    %1073 = vmatprep.mubr.f32.mxu0 %v928
    %1074 = vmatmul.mubr.f32.gmra.mrb[0].mxu0 %v874
    %v1075 = vpop.f32.mrb[0].mxu0
    %v1076 = vadd.f32 0.0, %v1075
    %v1077 = vpop.f32.mrb[0].mxu0
    %1078 = vmatprep.mubr.f32.mxu0 %v931
    %1079 = vmatmul.mubr.f32.gmra.mrb[0].mxu0 %v876
    %v1080 = vpop.f32.mrb[0].mxu0
    %v1081 = vadd.f32 0.0, %v1080
    %v1082 = vpop.f32.mrb[0].mxu0
    %1083 = vmatprep.mubr.f32.mxu0 %v934
    %1084 = vmatmul.mubr.f32.gmra.mrb[0].mxu0 %v878
    %v1085 = vpop.f32.mrb[0].mxu0
    %v1086 = vadd.f32 0.0, %v1085
    %v1087 = vpop.f32.mrb[0].mxu0
    %1088 = vmatprep.mubr.f32.mxu0 %v937
    %1089 = vmatmul.mubr.f32.gmra.mrb[0].mxu0 %v880
    %v1090 = vpop.f32.mrb[0].mxu0
    %v1091 = vadd.f32 0.0, %v1090
    %v1092 = vpop.f32.mrb[0].mxu0
    %1093 = vmatprep.mubr.f32.mxu0 %v940
    %1094 = vmatmul.mubr.f32.gmra.mrb[0].mxu0 %v882
    %v1095 = vpop.f32.mrb[0].mxu0
    %v1096 = vadd.f32 0.0, %v1095
    %v1097 = vpop.f32.mrb[0].mxu0
    %1098 = vmatprep.mubr.f32.mxu0 %v943
    %1099 = vmatmul.mubr.f32.gmra.mrb[0].mxu0 %v884
    %v1100 = vpop.f32.mrb[0].mxu0
    %v1101 = vadd.f32 0.0, %v1100
    %v1102 = vpop.f32.mrb[0].mxu0
    %1103 = vmatprep.mubr.f32.mxu0 %v946
    %1104 = vmatmul.mubr.f32.gmra.mrb[0].mxu0 %v886
    %v1105 = vpop.f32.mrb[0].mxu0
    %v1106 = vadd.f32 0.0, %v1105
    %v1107 = vpop.f32.mrb[0].mxu0
    %1108 = vmatprep.mubr.f32.mxu0 %v949
    %1109 = vmatmul.mubr.f32.gmra.mrb[0].mxu0 %v888
    %v1110 = vpop.f32.mrb[0].mxu0
    %v1111 = vadd.f32 0.0, %v1110
    %v1112 = vpop.f32.mrb[0].mxu0
    %1113 = vmatprep.mubr.f32.mxu0 %v952
    %1114 = vmatmul.mubr.f32.gmra.mrb[0].mxu0 %v890
    %v1115 = vpop.f32.mrb[0].mxu0
    %v1116 = vadd.f32 0.0, %v1115
    %v1117 = vpop.f32.mrb[0].mxu0
    %1118 = vmatprep.mubr.f32.mxu0 %v955
    %1119 = vmatmul.mubr.f32.gmra.mrb[0].mxu0 %v892
    %v1120 = vpop.f32.mrb[0].mxu0
    %v1121 = vadd.f32 0.0, %v1120
    %v1122 = vpop.f32.mrb[0].mxu0
    %1123 = vmatprep.mubr.f32.mxu0 %v958
    %1124 = vmatmul.mubr.f32.gmra.mrb[0].mxu0 %v894
    %v1125 = vpop.f32.mrb[0].mxu0
    %v1126 = vadd.f32 0.0, %v1125
    %v1127 = vpop.f32.mrb[0].mxu0
    %1128 = vmatprep.mubr.f32.mxu0 %v961
    %1129 = vmatmul.mubr.f32.gmra.mrb[0].mxu0 %v896
    %v1130 = vpop.f32.mrb[0].mxu0
    %v1131 = vadd.f32 0.0, %v1130
    %v1132 = vpop.f32.mrb[0].mxu0
    %1133 = vmatprep.mubr.f32.mxu0 %v964
    %1134 = vmatmul.mubr.f32.gmra.mrb[0].mxu0 %v898
    %v1135 = vpop.f32.mrb[0].mxu0
    %v1136 = vadd.f32 0.0, %v1135
    %v1137 = vpop.f32.mrb[0].mxu0
    %1138 = vmatprep.mubr.f32.mxu0 %v967
    %1139 = vmatmul.mubr.f32.gmra.mrb[0].mxu0 %v900
    %v1140 = vpop.f32.mrb[0].mxu0
    %v1141 = vadd.f32 0.0, %v1140
    %v1142 = vpop.f32.mrb[0].mxu0
    %1143 = vmatprep.mubr.f32.mxu0 %v970
    %1144 = vmatmul.mubr.f32.gmra.mrb[0].mxu0 %v902
    %v1145 = vpop.f32.mrb[0].mxu0
    %v1146 = vadd.f32 0.0, %v1145
    %v1147 = vpop.f32.mrb[0].mxu0
    %1148 = vmatprep.mubr.f32.mxu0 %v973
    %1149 = vmatmul.mubr.f32.gmra.mrb[0].mxu0 %v904
    %v1150 = vpop.f32.mrb[0].mxu0
    %v1151 = vadd.f32 0.0, %v1150
    %v1152 = vpop.f32.mrb[0].mxu0
    %1153 = vmatprep.mubr.f32.mxu0 %v976
    %1154 = vmatmul.mubr.f32.gmra.mrb[0].mxu0 %v906
    %v1155 = vpop.f32.mrb[0].mxu0
    %v1156 = vadd.f32 0.0, %v1155
    %v1157 = vpop.f32.mrb[0].mxu0
    %1158 = vmatprep.mubr.f32.mxu0 %v979
    %1159 = vmatmul.mubr.f32.gmra.mrb[0].mxu0 %v908
    %v1160 = vpop.f32.mrb[0].mxu0
    %v1161 = vadd.f32 0.0, %v1160
    %v1162 = vpop.f32.mrb[0].mxu0
    %1163 = vmatprep.mubr.f32.mxu0 %v982
    %1164 = vmatmul.mubr.f32.gmra.mrb[0].mxu0 %v910
    %v1165 = vpop.f32.mrb[0].mxu0
    %v1166 = vadd.f32 0.0, %v1165
    %v1167 = vpop.f32.mrb[0].mxu0
    %1168 = vdwg.mxu0
    %s1169 = scalar_lea.vmem %s1, 64
    %v1170 = vld [vmem:[%s1169] sm:$0xff]
    %v1171 = vld [vmem:[%s1169 + $0x8] sm:$0xff]
    %v1172 = vld [vmem:[%s1169 + $0x10] sm:$0xff]
    %v1173 = vld [vmem:[%s1169 + $0x18] sm:$0xff]
    %v1174 = vld [vmem:[%s1169 + $0x20] sm:$0xff]
    %v1175 = vld [vmem:[%s1169 + $0x28] sm:$0xff]
    %v1176 = vld [vmem:[%s1169 + $0x30] sm:$0xf]
    %v1177 = vld [vmem:[%s1169 + $0x38] sm:$0xf]
    %v1179 = vsel %vm515, %v1051, 0
    %v1182 = vsel %vm515, %v1056, 0
    %v1185 = vsel %vm515, %v1061, 0
    %v1188 = vsel %vm515, %v1066, 0
    %v1191 = vsel %vm515, %v1071, 0
    %v1194 = vsel %vm515, %v1076, 0
    %v1197 = vsel %vm515, %v1081, 0
    %v1200 = vsel %vm515, %v1086, 0
    %v1203 = vsel %vm515, %v1091, 0
    %v1206 = vsel %vm515, %v1096, 0
    %v1209 = vsel %vm515, %v1101, 0
    %v1212 = vsel %vm515, %v1106, 0
    %v1215 = vsel %vm515, %v1111, 0
    %v1218 = vsel %vm515, %v1116, 0
    %v1221 = vsel %vm515, %v1121, 0
    %v1224 = vsel %vm515, %v1126, 0
    %v1227 = vsel %vm515, %v1131, 0
    %v1230 = vsel %vm515, %v1136, 0
    %v1233 = vsel %vm515, %v1141, 0
    %v1236 = vsel %vm515, %v1146, 0
    %v1239 = vsel %vm515, %v1151, 0
    %v1242 = vsel %vm515, %v1156, 0
    %v1245 = vsel %vm515, %v1161, 0
    %v1248 = vsel %vm515, %v1166, 0
    %v1251 = vsel %vm588, %v1176, 0
    %v1254 = vsel %vm588, %v1177, 0
    %1256 = vmatprep.subr.mxu0 %v1171
    %1257 = vmatpush1.msra.mxu0 %v1170
    %1258 = vmatprep.subr.mxu0 %v1173
    %1259 = vmatpush1.msra.mxu0 %v1172
    %1260 = vmatprep.subr.mxu0 %v1175
    %1261 = vmatpush1.msra.mxu0 %v1174
    %1262 = vmatprep.subr.mxu0 %v1254
    %1263 = vmatpush1.msra.mxu0 %v1251
    %1264 = vmatprep.subr.mxu0 0.0
    %1265 = vmatpush1.msra.mxu0 0.0
    %1266 = vmatprep.subr.mxu0 0.0
    %1267 = vmatpush1.msra.mxu0 0.0
    %1268 = vmatprep.subr.mxu0 0.0
    %1269 = vmatpush1.msra.mxu0 0.0
    %1270 = vmatprep.subr.mxu0 0.0
    %1271 = vmatpush1.msra.mxu0 0.0
    %1272 = vmatprep.subr.mxu0 0.0
    %1273 = vmatpush1.msra.mxu0 0.0
    %1274 = vmatprep.subr.mxu0 0.0
    %1275 = vmatpush1.msra.mxu0 0.0
    %1276 = vmatprep.subr.mxu0 0.0
    %1277 = vmatpush1.msra.mxu0 0.0
    %1278 = vmatprep.subr.mxu0 0.0
    %1279 = vmatpush1.msra.mxu0 0.0
    %1280 = vmatprep.subr.mxu0 0.0
    %1281 = vmatpush1.msra.mxu0 0.0
    %1282 = vmatprep.subr.mxu0 0.0
    %1283 = vmatpush1.msra.mxu0 0.0
    %1284 = vmatprep.subr.mxu0 0.0
    %1285 = vmatpush1.msra.mxu0 0.0
    %1286 = vmatprep.subr.mxu0 0.0
    %1287 = vmatpush1.msra.mxu0 0.0
    %1288 = vmatprep.subr.mxu0 0.0
    %1289 = vmatpush1.msra.mxu0 0.0
    %1290 = vmatprep.subr.mxu0 0.0
    %1291 = vmatpush1.msra.mxu0 0.0
    %1292 = vmatprep.subr.mxu0 0.0
    %1293 = vmatpush1.msra.mxu0 0.0
    %1294 = vmatprep.subr.mxu0 0.0
    %1295 = vmatpush1.msra.mxu0 0.0
    %1296 = vmatprep.subr.mxu0 0.0
    %1297 = vmatpush1.msra.mxu0 0.0
    %1298 = vmatprep.subr.mxu0 0.0
    %1299 = vmatpush1.msra.mxu0 0.0
    %1300 = vmatprep.subr.mxu0 0.0
    %1301 = vmatpush1.msra.mxu0 0.0
    %1302 = vmatprep.subr.mxu0 0.0
    %1303 = vmatpush1.msra.mxu0 0.0
    %1304 = vmatprep.subr.mxu0 0.0
    %1305 = vmatpush1.msra.mxu0 0.0
    %1306 = vmatprep.subr.mxu0 0.0
    %1307 = vmatpush1.msra.mxu0 0.0
    %1308 = vmatprep.subr.mxu0 0.0
    %1309 = vmatpush1.msra.mxu0 0.0
    %1310 = vmatprep.subr.mxu0 0.0
    %1311 = vmatpush1.msra.mxu0 0.0
    %1312 = vmatprep.subr.mxu0 0.0
    %1313 = vmatpush1.msra.mxu0 0.0
    %1314 = vmatprep.subr.mxu0 0.0
    %1315 = vmatpush1.msra.mxu0 0.0
    %1316 = vmatprep.subr.mxu0 0.0
    %1317 = vmatpush1.msra.mxu0 0.0
    %1318 = vmatprep.subr.mxu0 0.0
    %1319 = vmatpush1.msra.mxu0 0.0
    %1320 = vmatprep.mubr.f32.mxu0 0.0
    %1321 = vmatmul.mubr.f32.gmra.mrb[0].mxu0 %v1179
    %v1322 = vpop.f32.mrb[0].mxu0
    %v1323 = vadd.f32 0.0, %v1322
    %v1324 = vpop.f32.mrb[0].mxu0
    %v1325 = vadd.f32 0.0, %v1324
    %1326 = vmatprep.mubr.f32.mxu0 0.0
    %1327 = vmatmul.mubr.f32.gmra.mrb[0].mxu0 %v1182
    %v1328 = vpop.f32.mrb[0].mxu0
    %v1329 = vadd.f32 0.0, %v1328
    %v1330 = vpop.f32.mrb[0].mxu0
    %v1331 = vadd.f32 0.0, %v1330
    %1332 = vmatprep.mubr.f32.mxu0 0.0
    %1333 = vmatmul.mubr.f32.gmra.mrb[0].mxu0 %v1185
    %v1334 = vpop.f32.mrb[0].mxu0
    %v1335 = vadd.f32 0.0, %v1334
    %v1336 = vpop.f32.mrb[0].mxu0
    %v1337 = vadd.f32 0.0, %v1336
    %1338 = vmatprep.mubr.f32.mxu0 0.0
    %1339 = vmatmul.mubr.f32.gmra.mrb[0].mxu0 %v1188
    %v1340 = vpop.f32.mrb[0].mxu0
    %v1341 = vadd.f32 0.0, %v1340
    %v1342 = vpop.f32.mrb[0].mxu0
    %v1343 = vadd.f32 0.0, %v1342
    %1344 = vmatprep.mubr.f32.mxu0 0.0
    %1345 = vmatmul.mubr.f32.gmra.mrb[0].mxu0 %v1191
    %v1346 = vpop.f32.mrb[0].mxu0
    %v1347 = vadd.f32 0.0, %v1346
    %v1348 = vpop.f32.mrb[0].mxu0
    %v1349 = vadd.f32 0.0, %v1348
    %1350 = vmatprep.mubr.f32.mxu0 0.0
    %1351 = vmatmul.mubr.f32.gmra.mrb[0].mxu0 %v1194
    %v1352 = vpop.f32.mrb[0].mxu0
    %v1353 = vadd.f32 0.0, %v1352
    %v1354 = vpop.f32.mrb[0].mxu0
    %v1355 = vadd.f32 0.0, %v1354
    %1356 = vmatprep.mubr.f32.mxu0 0.0
    %1357 = vmatmul.mubr.f32.gmra.mrb[0].mxu0 %v1197
    %v1358 = vpop.f32.mrb[0].mxu0
    %v1359 = vadd.f32 0.0, %v1358
    %v1360 = vpop.f32.mrb[0].mxu0
    %v1361 = vadd.f32 0.0, %v1360
    %1362 = vmatprep.mubr.f32.mxu0 0.0
    %1363 = vmatmul.mubr.f32.gmra.mrb[0].mxu0 %v1200
    %v1364 = vpop.f32.mrb[0].mxu0
    %v1365 = vadd.f32 0.0, %v1364
    %v1366 = vpop.f32.mrb[0].mxu0
    %v1367 = vadd.f32 0.0, %v1366
    %1368 = vmatprep.mubr.f32.mxu0 0.0
    %1369 = vmatmul.mubr.f32.gmra.mrb[0].mxu0 %v1203
    %v1370 = vpop.f32.mrb[0].mxu0
    %v1371 = vadd.f32 0.0, %v1370
    %v1372 = vpop.f32.mrb[0].mxu0
    %v1373 = vadd.f32 0.0, %v1372
    %1374 = vmatprep.mubr.f32.mxu0 0.0
    %1375 = vmatmul.mubr.f32.gmra.mrb[0].mxu0 %v1206
    %v1376 = vpop.f32.mrb[0].mxu0
    %v1377 = vadd.f32 0.0, %v1376
    %v1378 = vpop.f32.mrb[0].mxu0
    %v1379 = vadd.f32 0.0, %v1378
    %1380 = vmatprep.mubr.f32.mxu0 0.0
    %1381 = vmatmul.mubr.f32.gmra.mrb[0].mxu0 %v1209
    %v1382 = vpop.f32.mrb[0].mxu0
    %v1383 = vadd.f32 0.0, %v1382
    %v1384 = vpop.f32.mrb[0].mxu0
    %v1385 = vadd.f32 0.0, %v1384
    %1386 = vmatprep.mubr.f32.mxu0 0.0
    %1387 = vmatmul.mubr.f32.gmra.mrb[0].mxu0 %v1212
    %v1388 = vpop.f32.mrb[0].mxu0
    %v1389 = vadd.f32 0.0, %v1388
    %v1390 = vpop.f32.mrb[0].mxu0
    %v1391 = vadd.f32 0.0, %v1390
    %1392 = vmatprep.mubr.f32.mxu0 0.0
    %1393 = vmatmul.mubr.f32.gmra.mrb[0].mxu0 %v1215
    %v1394 = vpop.f32.mrb[0].mxu0
    %v1395 = vadd.f32 0.0, %v1394
    %v1396 = vpop.f32.mrb[0].mxu0
    %v1397 = vadd.f32 0.0, %v1396
    %1398 = vmatprep.mubr.f32.mxu0 0.0
    %1399 = vmatmul.mubr.f32.gmra.mrb[0].mxu0 %v1218
    %v1400 = vpop.f32.mrb[0].mxu0
    %v1401 = vadd.f32 0.0, %v1400
    %v1402 = vpop.f32.mrb[0].mxu0
    %v1403 = vadd.f32 0.0, %v1402
    %1404 = vmatprep.mubr.f32.mxu0 0.0
    %1405 = vmatmul.mubr.f32.gmra.mrb[0].mxu0 %v1221
    %v1406 = vpop.f32.mrb[0].mxu0
    %v1407 = vadd.f32 0.0, %v1406
    %v1408 = vpop.f32.mrb[0].mxu0
    %v1409 = vadd.f32 0.0, %v1408
    %1410 = vmatprep.mubr.f32.mxu0 0.0
    %1411 = vmatmul.mubr.f32.gmra.mrb[0].mxu0 %v1224
    %v1412 = vpop.f32.mrb[0].mxu0
    %v1413 = vadd.f32 0.0, %v1412
    %v1414 = vpop.f32.mrb[0].mxu0
    %v1415 = vadd.f32 0.0, %v1414
    %1416 = vmatprep.mubr.f32.mxu0 0.0
    %1417 = vmatmul.mubr.f32.gmra.mrb[0].mxu0 %v1227
    %v1418 = vpop.f32.mrb[0].mxu0
    %v1419 = vadd.f32 0.0, %v1418
    %v1420 = vpop.f32.mrb[0].mxu0
    %v1421 = vadd.f32 0.0, %v1420
    %1422 = vmatprep.mubr.f32.mxu0 0.0
    %1423 = vmatmul.mubr.f32.gmra.mrb[0].mxu0 %v1230
    %v1424 = vpop.f32.mrb[0].mxu0
    %v1425 = vadd.f32 0.0, %v1424
    %v1426 = vpop.f32.mrb[0].mxu0
    %v1427 = vadd.f32 0.0, %v1426
    %1428 = vmatprep.mubr.f32.mxu0 0.0
    %1429 = vmatmul.mubr.f32.gmra.mrb[0].mxu0 %v1233
    %v1430 = vpop.f32.mrb[0].mxu0
    %v1431 = vadd.f32 0.0, %v1430
    %v1432 = vpop.f32.mrb[0].mxu0
    %v1433 = vadd.f32 0.0, %v1432
    %1434 = vmatprep.mubr.f32.mxu0 0.0
    %1435 = vmatmul.mubr.f32.gmra.mrb[0].mxu0 %v1236
    %v1436 = vpop.f32.mrb[0].mxu0
    %v1437 = vadd.f32 0.0, %v1436
    %v1438 = vpop.f32.mrb[0].mxu0
    %v1439 = vadd.f32 0.0, %v1438
    %1440 = vmatprep.mubr.f32.mxu0 0.0
    %1441 = vmatmul.mubr.f32.gmra.mrb[0].mxu0 %v1239
    %v1442 = vpop.f32.mrb[0].mxu0
    %v1443 = vadd.f32 0.0, %v1442
    %v1444 = vpop.f32.mrb[0].mxu0
    %v1445 = vadd.f32 0.0, %v1444
    %1446 = vmatprep.mubr.f32.mxu0 0.0
    %1447 = vmatmul.mubr.f32.gmra.mrb[0].mxu0 %v1242
    %v1448 = vpop.f32.mrb[0].mxu0
    %v1449 = vadd.f32 0.0, %v1448
    %v1450 = vpop.f32.mrb[0].mxu0
    %v1451 = vadd.f32 0.0, %v1450
    %1452 = vmatprep.mubr.f32.mxu0 0.0
    %1453 = vmatmul.mubr.f32.gmra.mrb[0].mxu0 %v1245
    %v1454 = vpop.f32.mrb[0].mxu0
    %v1455 = vadd.f32 0.0, %v1454
    %v1456 = vpop.f32.mrb[0].mxu0
    %v1457 = vadd.f32 0.0, %v1456
    %1458 = vmatprep.mubr.f32.mxu0 0.0
    %1459 = vmatmul.mubr.f32.gmra.mrb[0].mxu0 %v1248
    %v1460 = vpop.f32.mrb[0].mxu0
    %v1461 = vadd.f32 0.0, %v1460
    %v1462 = vpop.f32.mrb[0].mxu0
    %v1463 = vadd.f32 0.0, %v1462
    %1464 = vdwg.mxu0
    %v1465 = vadd.f32 %v815, %v1323
    %v1466 = vadd.f32 %v816, %v1325
    %v1467 = vadd.f32 %v817, %v1329
    %v1468 = vadd.f32 %v818, %v1331
    %v1469 = vadd.f32 %v819, %v1335
    %v1470 = vadd.f32 %v820, %v1337
    %v1471 = vadd.f32 %v821, %v1341
    %v1472 = vadd.f32 %v822, %v1343
    %v1473 = vadd.f32 %v823, %v1347
    %v1474 = vadd.f32 %v824, %v1349
    %v1475 = vadd.f32 %v825, %v1353
    %v1476 = vadd.f32 %v826, %v1355
    %v1477 = vadd.f32 %v827, %v1359
    %v1478 = vadd.f32 %v828, %v1361
    %v1479 = vadd.f32 %v829, %v1365
    %v1480 = vadd.f32 %v830, %v1367
    %v1481 = vadd.f32 %v831, %v1371
    %v1482 = vadd.f32 %v832, %v1373
    %v1483 = vadd.f32 %v833, %v1377
    %v1484 = vadd.f32 %v834, %v1379
    %v1485 = vadd.f32 %v835, %v1383
    %v1486 = vadd.f32 %v836, %v1385
    %v1487 = vadd.f32 %v837, %v1389
    %v1488 = vadd.f32 %v838, %v1391
    %v1489 = vadd.f32 %v839, %v1395
    %v1490 = vadd.f32 %v840, %v1397
    %v1491 = vadd.f32 %v841, %v1401
    %v1492 = vadd.f32 %v842, %v1403
    %v1493 = vadd.f32 %v843, %v1407
    %v1494 = vadd.f32 %v844, %v1409
    %v1495 = vadd.f32 %v845, %v1413
    %v1496 = vadd.f32 %v846, %v1415
    %v1497 = vadd.f32 %v847, %v1419
    %v1498 = vadd.f32 %v848, %v1421
    %v1499 = vadd.f32 %v849, %v1425
    %v1500 = vadd.f32 %v850, %v1427
    %v1501 = vadd.f32 %v851, %v1431
    %v1502 = vadd.f32 %v852, %v1433
    %v1503 = vadd.f32 %v853, %v1437
    %v1504 = vadd.f32 %v854, %v1439
    %v1505 = vadd.f32 %v855, %v1443
    %v1506 = vadd.f32 %v856, %v1445
    %v1507 = vadd.f32 %v857, %v1449
    %v1508 = vadd.f32 %v858, %v1451
    %v1509 = vadd.f32 %v859, %v1455
    %v1510 = vadd.f32 %v860, %v1457
    %v1511 = vadd.f32 %v861, %v1461
    %v1512 = vadd.f32 %v862, %v1463
    %s1513 = scalar_lea.vmem %s3, 768
    %v1514 = vld [vmem:[%s1513] sm:$0xff]
    %v1515 = vld [vmem:[%s1513 + $0x8] sm:$0xff]
    %v1516 = vld [vmem:[%s1513 + $0x10] sm:$0xff]
    %v1517 = vld [vmem:[%s1513 + $0x18] sm:$0xff]
    %v1518 = vld [vmem:[%s1513 + $0x20] sm:$0xff]
    %v1519 = vld [vmem:[%s1513 + $0x28] sm:$0xff]
    %v1520 = vld [vmem:[%s1513 + $0x30] sm:$0xff]
    %v1521 = vld [vmem:[%s1513 + $0x38] sm:$0xff]
    %v1522 = vld [vmem:[%s1513 + $0x40] sm:$0xff]
    %v1523 = vld [vmem:[%s1513 + $0x48] sm:$0xff]
    %v1524 = vld [vmem:[%s1513 + $0x50] sm:$0xff]
    %v1525 = vld [vmem:[%s1513 + $0x58] sm:$0xff]
    %v1526 = vld [vmem:[%s1513 + $0x60] sm:$0xff]
    %v1527 = vld [vmem:[%s1513 + $0x68] sm:$0xff]
    %v1528 = vld [vmem:[%s1513 + $0x70] sm:$0xff]
    %v1529 = vld [vmem:[%s1513 + $0x78] sm:$0xff]
    %v1530 = vld [vmem:[%s1513 + $0x80] sm:$0xff]
    %v1531 = vld [vmem:[%s1513 + $0x88] sm:$0xff]
    %v1532 = vld [vmem:[%s1513 + $0x90] sm:$0xff]
    %v1533 = vld [vmem:[%s1513 + $0x98] sm:$0xff]
    %v1534 = vld [vmem:[%s1513 + $0xa0] sm:$0xff]
    %v1535 = vld [vmem:[%s1513 + $0xa8] sm:$0xff]
    %v1536 = vld [vmem:[%s1513 + $0xb0] sm:$0xff]
    %v1537 = vld [vmem:[%s1513 + $0xb8] sm:$0xff]
    %v1538 = vld [vmem:[%s1513 + $0xc0] sm:$0xff]
    %v1539 = vld [vmem:[%s1513 + $0xc8] sm:$0xff]
    %v1540 = vld [vmem:[%s1513 + $0xd0] sm:$0xff]
    %v1541 = vld [vmem:[%s1513 + $0xd8] sm:$0xff]
    %v1542 = vld [vmem:[%s1513 + $0xe0] sm:$0xff]
    %v1543 = vld [vmem:[%s1513 + $0xe8] sm:$0xff]
    %v1544 = vld [vmem:[%s1513 + $0xf0] sm:$0xff]
    %v1545 = vld [vmem:[%s1513 + $0xf8] sm:$0xff]
    %v1546 = vld [vmem:[%s1513 + $0x100] sm:$0xff]
    %v1547 = vld [vmem:[%s1513 + $0x108] sm:$0xff]
    %v1548 = vld [vmem:[%s1513 + $0x110] sm:$0xff]
    %v1549 = vld [vmem:[%s1513 + $0x118] sm:$0xff]
    %v1550 = vld [vmem:[%s1513 + $0x120] sm:$0xff]
    %v1551 = vld [vmem:[%s1513 + $0x128] sm:$0xff]
    %v1552 = vld [vmem:[%s1513 + $0x130] sm:$0xff]
    %v1553 = vld [vmem:[%s1513 + $0x138] sm:$0xff]
    %v1554 = vld [vmem:[%s1513 + $0x140] sm:$0xff]
    %v1555 = vld [vmem:[%s1513 + $0x148] sm:$0xff]
    %v1556 = vld [vmem:[%s1513 + $0x150] sm:$0xff]
    %v1557 = vld [vmem:[%s1513 + $0x158] sm:$0xff]
    %v1558 = vld [vmem:[%s1513 + $0x160] sm:$0xff]
    %v1559 = vld [vmem:[%s1513 + $0x168] sm:$0xff]
    %v1560 = vld [vmem:[%s1513 + $0x170] sm:$0xff]
    %v1561 = vld [vmem:[%s1513 + $0x178] sm:$0xff]
    %v1563 = vsel %vm249, %v1515, 0
    %v1566 = vsel %vm249, %v1517, 0
    %v1569 = vsel %vm249, %v1519, 0
    %v1572 = vsel %vm249, %v1521, 0
    %v1575 = vsel %vm249, %v1523, 0
    %v1578 = vsel %vm249, %v1525, 0
    %v1581 = vsel %vm249, %v1527, 0
    %v1584 = vsel %vm249, %v1529, 0
    %v1587 = vsel %vm249, %v1531, 0
    %v1590 = vsel %vm249, %v1533, 0
    %v1593 = vsel %vm249, %v1535, 0
    %v1596 = vsel %vm249, %v1537, 0
    %v1599 = vsel %vm249, %v1539, 0
    %v1602 = vsel %vm249, %v1541, 0
    %v1605 = vsel %vm249, %v1543, 0
    %v1608 = vsel %vm249, %v1545, 0
    %v1611 = vsel %vm249, %v1547, 0
    %v1614 = vsel %vm249, %v1549, 0
    %v1617 = vsel %vm249, %v1551, 0
    %v1620 = vsel %vm249, %v1553, 0
    %v1623 = vsel %vm249, %v1555, 0
    %v1626 = vsel %vm249, %v1557, 0
    %v1629 = vsel %vm249, %v1559, 0
    %v1632 = vsel %vm249, %v1561, 0
    %1634 = vmatprep.subr.mxu0 0.0
    %1635 = vmatpush1.msra.mxu0 %v172
    %1636 = vmatprep.subr.mxu0 0.0
    %1637 = vmatpush1.msra.mxu0 %v173
    %1638 = vmatprep.subr.mxu0 0.0
    %1639 = vmatpush1.msra.mxu0 %v174
    %1640 = vmatprep.subr.mxu0 0.0
    %1641 = vmatpush1.msra.mxu0 %v175
    %1642 = vmatprep.subr.mxu0 0.0
    %1643 = vmatpush1.msra.mxu0 %v176
    %1644 = vmatprep.subr.mxu0 0.0
    %1645 = vmatpush1.msra.mxu0 %v177
    %1646 = vmatprep.subr.mxu0 0.0
    %1647 = vmatpush1.msra.mxu0 %v178
    %1648 = vmatprep.subr.mxu0 0.0
    %1649 = vmatpush1.msra.mxu0 %v179
    %1650 = vmatprep.subr.mxu0 0.0
    %1651 = vmatpush1.msra.mxu0 %v180
    %1652 = vmatprep.subr.mxu0 0.0
    %1653 = vmatpush1.msra.mxu0 %v181
    %1654 = vmatprep.subr.mxu0 0.0
    %1655 = vmatpush1.msra.mxu0 %v182
    %1656 = vmatprep.subr.mxu0 0.0
    %1657 = vmatpush1.msra.mxu0 %v183
    %1658 = vmatprep.subr.mxu0 0.0
    %1659 = vmatpush1.msra.mxu0 %v184
    %1660 = vmatprep.subr.mxu0 0.0
    %1661 = vmatpush1.msra.mxu0 %v185
    %1662 = vmatprep.subr.mxu0 0.0
    %1663 = vmatpush1.msra.mxu0 %v186
    %1664 = vmatprep.subr.mxu0 0.0
    %1665 = vmatpush1.msra.mxu0 %v187
    %1666 = vmatprep.subr.mxu0 0.0
    %1667 = vmatpush1.msra.mxu0 %v188
    %1668 = vmatprep.subr.mxu0 0.0
    %1669 = vmatpush1.msra.mxu0 %v189
    %1670 = vmatprep.subr.mxu0 0.0
    %1671 = vmatpush1.msra.mxu0 %v190
    %1672 = vmatprep.subr.mxu0 0.0
    %1673 = vmatpush1.msra.mxu0 %v191
    %1674 = vmatprep.subr.mxu0 0.0
    %1675 = vmatpush1.msra.mxu0 %v192
    %1676 = vmatprep.subr.mxu0 0.0
    %1677 = vmatpush1.msra.mxu0 %v193
    %1678 = vmatprep.subr.mxu0 0.0
    %1679 = vmatpush1.msra.mxu0 %v194
    %1680 = vmatprep.subr.mxu0 0.0
    %1681 = vmatpush1.msra.mxu0 %v195
    %1682 = vmatprep.subr.mxu0 0.0
    %1683 = vmatpush1.msra.mxu0 %v196
    %1684 = vmatprep.subr.mxu0 0.0
    %1685 = vmatpush1.msra.mxu0 %v197
    %1686 = vmatprep.subr.mxu0 0.0
    %1687 = vmatpush1.msra.mxu0 %v198
    %1688 = vmatprep.subr.mxu0 0.0
    %1689 = vmatpush1.msra.mxu0 %v199
    %1690 = vmatprep.subr.mxu0 0.0
    %1691 = vmatpush1.msra.mxu0 0.0
    %1692 = vmatprep.subr.mxu0 0.0
    %1693 = vmatpush1.msra.mxu0 0.0
    %1694 = vmatprep.subr.mxu0 0.0
    %1695 = vmatpush1.msra.mxu0 0.0
    %1696 = vmatprep.subr.mxu0 0.0
    %1697 = vmatpush1.msra.mxu0 0.0
    %1698 = vmatprep.mubr.f32.mxu0 %v1563
    %1699 = vmatmul.mubr.f32.gmra.mrb[0].mxu0 %v1514
    %v1700 = vpop.f32.mrb[0].mxu0
    %v1701 = vadd.f32 0.0, %v1700
    %v1702 = vpop.f32.mrb[0].mxu0
    %1703 = vmatprep.mubr.f32.mxu0 %v1566
    %1704 = vmatmul.mubr.f32.gmra.mrb[0].mxu0 %v1516
    %v1705 = vpop.f32.mrb[0].mxu0
    %v1706 = vadd.f32 0.0, %v1705
    %v1707 = vpop.f32.mrb[0].mxu0
    %1708 = vmatprep.mubr.f32.mxu0 %v1569
    %1709 = vmatmul.mubr.f32.gmra.mrb[0].mxu0 %v1518
    %v1710 = vpop.f32.mrb[0].mxu0
    %v1711 = vadd.f32 0.0, %v1710
    %v1712 = vpop.f32.mrb[0].mxu0
    %1713 = vmatprep.mubr.f32.mxu0 %v1572
    %1714 = vmatmul.mubr.f32.gmra.mrb[0].mxu0 %v1520
    %v1715 = vpop.f32.mrb[0].mxu0
    %v1716 = vadd.f32 0.0, %v1715
    %v1717 = vpop.f32.mrb[0].mxu0
    %1718 = vmatprep.mubr.f32.mxu0 %v1575
    %1719 = vmatmul.mubr.f32.gmra.mrb[0].mxu0 %v1522
    %v1720 = vpop.f32.mrb[0].mxu0
    %v1721 = vadd.f32 0.0, %v1720
    %v1722 = vpop.f32.mrb[0].mxu0
    %1723 = vmatprep.mubr.f32.mxu0 %v1578
    %1724 = vmatmul.mubr.f32.gmra.mrb[0].mxu0 %v1524
    %v1725 = vpop.f32.mrb[0].mxu0
    %v1726 = vadd.f32 0.0, %v1725
    %v1727 = vpop.f32.mrb[0].mxu0
    %1728 = vmatprep.mubr.f32.mxu0 %v1581
    %1729 = vmatmul.mubr.f32.gmra.mrb[0].mxu0 %v1526
    %v1730 = vpop.f32.mrb[0].mxu0
    %v1731 = vadd.f32 0.0, %v1730
    %v1732 = vpop.f32.mrb[0].mxu0
    %1733 = vmatprep.mubr.f32.mxu0 %v1584
    %1734 = vmatmul.mubr.f32.gmra.mrb[0].mxu0 %v1528
    %v1735 = vpop.f32.mrb[0].mxu0
    %v1736 = vadd.f32 0.0, %v1735
    %v1737 = vpop.f32.mrb[0].mxu0
    %1738 = vmatprep.mubr.f32.mxu0 %v1587
    %1739 = vmatmul.mubr.f32.gmra.mrb[0].mxu0 %v1530
    %v1740 = vpop.f32.mrb[0].mxu0
    %v1741 = vadd.f32 0.0, %v1740
    %v1742 = vpop.f32.mrb[0].mxu0
    %1743 = vmatprep.mubr.f32.mxu0 %v1590
    %1744 = vmatmul.mubr.f32.gmra.mrb[0].mxu0 %v1532
    %v1745 = vpop.f32.mrb[0].mxu0
    %v1746 = vadd.f32 0.0, %v1745
    %v1747 = vpop.f32.mrb[0].mxu0
    %1748 = vmatprep.mubr.f32.mxu0 %v1593
    %1749 = vmatmul.mubr.f32.gmra.mrb[0].mxu0 %v1534
    %v1750 = vpop.f32.mrb[0].mxu0
    %v1751 = vadd.f32 0.0, %v1750
    %v1752 = vpop.f32.mrb[0].mxu0
    %1753 = vmatprep.mubr.f32.mxu0 %v1596
    %1754 = vmatmul.mubr.f32.gmra.mrb[0].mxu0 %v1536
    %v1755 = vpop.f32.mrb[0].mxu0
    %v1756 = vadd.f32 0.0, %v1755
    %v1757 = vpop.f32.mrb[0].mxu0
    %1758 = vmatprep.mubr.f32.mxu0 %v1599
    %1759 = vmatmul.mubr.f32.gmra.mrb[0].mxu0 %v1538
    %v1760 = vpop.f32.mrb[0].mxu0
    %v1761 = vadd.f32 0.0, %v1760
    %v1762 = vpop.f32.mrb[0].mxu0
    %1763 = vmatprep.mubr.f32.mxu0 %v1602
    %1764 = vmatmul.mubr.f32.gmra.mrb[0].mxu0 %v1540
    %v1765 = vpop.f32.mrb[0].mxu0
    %v1766 = vadd.f32 0.0, %v1765
    %v1767 = vpop.f32.mrb[0].mxu0
    %1768 = vmatprep.mubr.f32.mxu0 %v1605
    %1769 = vmatmul.mubr.f32.gmra.mrb[0].mxu0 %v1542
    %v1770 = vpop.f32.mrb[0].mxu0
    %v1771 = vadd.f32 0.0, %v1770
    %v1772 = vpop.f32.mrb[0].mxu0
    %1773 = vmatprep.mubr.f32.mxu0 %v1608
    %1774 = vmatmul.mubr.f32.gmra.mrb[0].mxu0 %v1544
    %v1775 = vpop.f32.mrb[0].mxu0
    %v1776 = vadd.f32 0.0, %v1775
    %v1777 = vpop.f32.mrb[0].mxu0
    %1778 = vmatprep.mubr.f32.mxu0 %v1611
    %1779 = vmatmul.mubr.f32.gmra.mrb[0].mxu0 %v1546
    %v1780 = vpop.f32.mrb[0].mxu0
    %v1781 = vadd.f32 0.0, %v1780
    %v1782 = vpop.f32.mrb[0].mxu0
    %1783 = vmatprep.mubr.f32.mxu0 %v1614
    %1784 = vmatmul.mubr.f32.gmra.mrb[0].mxu0 %v1548
    %v1785 = vpop.f32.mrb[0].mxu0
    %v1786 = vadd.f32 0.0, %v1785
    %v1787 = vpop.f32.mrb[0].mxu0
    %1788 = vmatprep.mubr.f32.mxu0 %v1617
    %1789 = vmatmul.mubr.f32.gmra.mrb[0].mxu0 %v1550
    %v1790 = vpop.f32.mrb[0].mxu0
    %v1791 = vadd.f32 0.0, %v1790
    %v1792 = vpop.f32.mrb[0].mxu0
    %1793 = vmatprep.mubr.f32.mxu0 %v1620
    %1794 = vmatmul.mubr.f32.gmra.mrb[0].mxu0 %v1552
    %v1795 = vpop.f32.mrb[0].mxu0
    %v1796 = vadd.f32 0.0, %v1795
    %v1797 = vpop.f32.mrb[0].mxu0
    %1798 = vmatprep.mubr.f32.mxu0 %v1623
    %1799 = vmatmul.mubr.f32.gmra.mrb[0].mxu0 %v1554
    %v1800 = vpop.f32.mrb[0].mxu0
    %v1801 = vadd.f32 0.0, %v1800
    %v1802 = vpop.f32.mrb[0].mxu0
    %1803 = vmatprep.mubr.f32.mxu0 %v1626
    %1804 = vmatmul.mubr.f32.gmra.mrb[0].mxu0 %v1556
    %v1805 = vpop.f32.mrb[0].mxu0
    %v1806 = vadd.f32 0.0, %v1805
    %v1807 = vpop.f32.mrb[0].mxu0
    %1808 = vmatprep.mubr.f32.mxu0 %v1629
    %1809 = vmatmul.mubr.f32.gmra.mrb[0].mxu0 %v1558
    %v1810 = vpop.f32.mrb[0].mxu0
    %v1811 = vadd.f32 0.0, %v1810
    %v1812 = vpop.f32.mrb[0].mxu0
    %1813 = vmatprep.mubr.f32.mxu0 %v1632
    %1814 = vmatmul.mubr.f32.gmra.mrb[0].mxu0 %v1560
    %v1815 = vpop.f32.mrb[0].mxu0
    %v1816 = vadd.f32 0.0, %v1815
    %v1817 = vpop.f32.mrb[0].mxu0
    %1818 = vdwg.mxu0
    %s1819 = scalar_lea.vmem %s1, 128
    %v1820 = vld [vmem:[%s1819] sm:$0xff]
    %v1821 = vld [vmem:[%s1819 + $0x8] sm:$0xff]
    %v1822 = vld [vmem:[%s1819 + $0x10] sm:$0xff]
    %v1823 = vld [vmem:[%s1819 + $0x18] sm:$0xff]
    %v1824 = vld [vmem:[%s1819 + $0x20] sm:$0xff]
    %v1825 = vld [vmem:[%s1819 + $0x28] sm:$0xff]
    %v1826 = vld [vmem:[%s1819 + $0x30] sm:$0xf]
    %v1827 = vld [vmem:[%s1819 + $0x38] sm:$0xf]
    %v1829 = vsel %vm515, %v1701, 0
    %v1832 = vsel %vm515, %v1706, 0
    %v1835 = vsel %vm515, %v1711, 0
    %v1838 = vsel %vm515, %v1716, 0
    %v1841 = vsel %vm515, %v1721, 0
    %v1844 = vsel %vm515, %v1726, 0
    %v1847 = vsel %vm515, %v1731, 0
    %v1850 = vsel %vm515, %v1736, 0
    %v1853 = vsel %vm515, %v1741, 0
    %v1856 = vsel %vm515, %v1746, 0
    %v1859 = vsel %vm515, %v1751, 0
    %v1862 = vsel %vm515, %v1756, 0
    %v1865 = vsel %vm515, %v1761, 0
    %v1868 = vsel %vm515, %v1766, 0
    %v1871 = vsel %vm515, %v1771, 0
    %v1874 = vsel %vm515, %v1776, 0
    %v1877 = vsel %vm515, %v1781, 0
    %v1880 = vsel %vm515, %v1786, 0
    %v1883 = vsel %vm515, %v1791, 0
    %v1886 = vsel %vm515, %v1796, 0
    %v1889 = vsel %vm515, %v1801, 0
    %v1892 = vsel %vm515, %v1806, 0
    %v1895 = vsel %vm515, %v1811, 0
    %v1898 = vsel %vm515, %v1816, 0
    %v1901 = vsel %vm588, %v1826, 0
    %v1904 = vsel %vm588, %v1827, 0
    %1906 = vmatprep.subr.mxu0 %v1821
    %1907 = vmatpush1.msra.mxu0 %v1820
    %1908 = vmatprep.subr.mxu0 %v1823
    %1909 = vmatpush1.msra.mxu0 %v1822
    %1910 = vmatprep.subr.mxu0 %v1825
    %1911 = vmatpush1.msra.mxu0 %v1824
    %1912 = vmatprep.subr.mxu0 %v1904
    %1913 = vmatpush1.msra.mxu0 %v1901
    %1914 = vmatprep.subr.mxu0 0.0
    %1915 = vmatpush1.msra.mxu0 0.0
    %1916 = vmatprep.subr.mxu0 0.0
    %1917 = vmatpush1.msra.mxu0 0.0
    %1918 = vmatprep.subr.mxu0 0.0
    %1919 = vmatpush1.msra.mxu0 0.0
    %1920 = vmatprep.subr.mxu0 0.0
    %1921 = vmatpush1.msra.mxu0 0.0
    %1922 = vmatprep.subr.mxu0 0.0
    %1923 = vmatpush1.msra.mxu0 0.0
    %1924 = vmatprep.subr.mxu0 0.0
    %1925 = vmatpush1.msra.mxu0 0.0
    %1926 = vmatprep.subr.mxu0 0.0
    %1927 = vmatpush1.msra.mxu0 0.0
    %1928 = vmatprep.subr.mxu0 0.0
    %1929 = vmatpush1.msra.mxu0 0.0
    %1930 = vmatprep.subr.mxu0 0.0
    %1931 = vmatpush1.msra.mxu0 0.0
    %1932 = vmatprep.subr.mxu0 0.0
    %1933 = vmatpush1.msra.mxu0 0.0
    %1934 = vmatprep.subr.mxu0 0.0
    %1935 = vmatpush1.msra.mxu0 0.0
    %1936 = vmatprep.subr.mxu0 0.0
    %1937 = vmatpush1.msra.mxu0 0.0
    %1938 = vmatprep.subr.mxu0 0.0
    %1939 = vmatpush1.msra.mxu0 0.0
    %1940 = vmatprep.subr.mxu0 0.0
    %1941 = vmatpush1.msra.mxu0 0.0
    %1942 = vmatprep.subr.mxu0 0.0
    %1943 = vmatpush1.msra.mxu0 0.0
    %1944 = vmatprep.subr.mxu0 0.0
    %1945 = vmatpush1.msra.mxu0 0.0
    %1946 = vmatprep.subr.mxu0 0.0
    %1947 = vmatpush1.msra.mxu0 0.0
    %1948 = vmatprep.subr.mxu0 0.0
    %1949 = vmatpush1.msra.mxu0 0.0
    %1950 = vmatprep.subr.mxu0 0.0
    %1951 = vmatpush1.msra.mxu0 0.0
    %1952 = vmatprep.subr.mxu0 0.0
    %1953 = vmatpush1.msra.mxu0 0.0
    %1954 = vmatprep.subr.mxu0 0.0
    %1955 = vmatpush1.msra.mxu0 0.0
    %1956 = vmatprep.subr.mxu0 0.0
    %1957 = vmatpush1.msra.mxu0 0.0
    %1958 = vmatprep.subr.mxu0 0.0
    %1959 = vmatpush1.msra.mxu0 0.0
    %1960 = vmatprep.subr.mxu0 0.0
    %1961 = vmatpush1.msra.mxu0 0.0
    %1962 = vmatprep.subr.mxu0 0.0
    %1963 = vmatpush1.msra.mxu0 0.0
    %1964 = vmatprep.subr.mxu0 0.0
    %1965 = vmatpush1.msra.mxu0 0.0
    %1966 = vmatprep.subr.mxu0 0.0
    %1967 = vmatpush1.msra.mxu0 0.0
    %1968 = vmatprep.subr.mxu0 0.0
    %1969 = vmatpush1.msra.mxu0 0.0
    %1970 = vmatprep.mubr.f32.mxu0 0.0
    %1971 = vmatmul.mubr.f32.gmra.mrb[0].mxu0 %v1829
    %v1972 = vpop.f32.mrb[0].mxu0
    %v1973 = vadd.f32 0.0, %v1972
    %v1974 = vpop.f32.mrb[0].mxu0
    %v1975 = vadd.f32 0.0, %v1974
    %1976 = vmatprep.mubr.f32.mxu0 0.0
    %1977 = vmatmul.mubr.f32.gmra.mrb[0].mxu0 %v1832
    %v1978 = vpop.f32.mrb[0].mxu0
    %v1979 = vadd.f32 0.0, %v1978
    %v1980 = vpop.f32.mrb[0].mxu0
    %v1981 = vadd.f32 0.0, %v1980
    %1982 = vmatprep.mubr.f32.mxu0 0.0
    %1983 = vmatmul.mubr.f32.gmra.mrb[0].mxu0 %v1835
    %v1984 = vpop.f32.mrb[0].mxu0
    %v1985 = vadd.f32 0.0, %v1984
    %v1986 = vpop.f32.mrb[0].mxu0
    %v1987 = vadd.f32 0.0, %v1986
    %1988 = vmatprep.mubr.f32.mxu0 0.0
    %1989 = vmatmul.mubr.f32.gmra.mrb[0].mxu0 %v1838
    %v1990 = vpop.f32.mrb[0].mxu0
    %v1991 = vadd.f32 0.0, %v1990
    %v1992 = vpop.f32.mrb[0].mxu0
    %v1993 = vadd.f32 0.0, %v1992
    %1994 = vmatprep.mubr.f32.mxu0 0.0
    %1995 = vmatmul.mubr.f32.gmra.mrb[0].mxu0 %v1841
    %v1996 = vpop.f32.mrb[0].mxu0
    %v1997 = vadd.f32 0.0, %v1996
    %v1998 = vpop.f32.mrb[0].mxu0
    %v1999 = vadd.f32 0.0, %v1998
    %2000 = vmatprep.mubr.f32.mxu0 0.0
    %2001 = vmatmul.mubr.f32.gmra.mrb[0].mxu0 %v1844
    %v2002 = vpop.f32.mrb[0].mxu0
    %v2003 = vadd.f32 0.0, %v2002
    %v2004 = vpop.f32.mrb[0].mxu0
    %v2005 = vadd.f32 0.0, %v2004
    %2006 = vmatprep.mubr.f32.mxu0 0.0
    %2007 = vmatmul.mubr.f32.gmra.mrb[0].mxu0 %v1847
    %v2008 = vpop.f32.mrb[0].mxu0
    %v2009 = vadd.f32 0.0, %v2008
    %v2010 = vpop.f32.mrb[0].mxu0
    %v2011 = vadd.f32 0.0, %v2010
    %2012 = vmatprep.mubr.f32.mxu0 0.0
    %2013 = vmatmul.mubr.f32.gmra.mrb[0].mxu0 %v1850
    %v2014 = vpop.f32.mrb[0].mxu0
    %v2015 = vadd.f32 0.0, %v2014
    %v2016 = vpop.f32.mrb[0].mxu0
    %v2017 = vadd.f32 0.0, %v2016
    %2018 = vmatprep.mubr.f32.mxu0 0.0
    %2019 = vmatmul.mubr.f32.gmra.mrb[0].mxu0 %v1853
    %v2020 = vpop.f32.mrb[0].mxu0
    %v2021 = vadd.f32 0.0, %v2020
    %v2022 = vpop.f32.mrb[0].mxu0
    %v2023 = vadd.f32 0.0, %v2022
    %2024 = vmatprep.mubr.f32.mxu0 0.0
    %2025 = vmatmul.mubr.f32.gmra.mrb[0].mxu0 %v1856
    %v2026 = vpop.f32.mrb[0].mxu0
    %v2027 = vadd.f32 0.0, %v2026
    %v2028 = vpop.f32.mrb[0].mxu0
    %v2029 = vadd.f32 0.0, %v2028
    %2030 = vmatprep.mubr.f32.mxu0 0.0
    %2031 = vmatmul.mubr.f32.gmra.mrb[0].mxu0 %v1859
    %v2032 = vpop.f32.mrb[0].mxu0
    %v2033 = vadd.f32 0.0, %v2032
    %v2034 = vpop.f32.mrb[0].mxu0
    %v2035 = vadd.f32 0.0, %v2034
    %2036 = vmatprep.mubr.f32.mxu0 0.0
    %2037 = vmatmul.mubr.f32.gmra.mrb[0].mxu0 %v1862
    %v2038 = vpop.f32.mrb[0].mxu0
    %v2039 = vadd.f32 0.0, %v2038
    %v2040 = vpop.f32.mrb[0].mxu0
    %v2041 = vadd.f32 0.0, %v2040
    %2042 = vmatprep.mubr.f32.mxu0 0.0
    %2043 = vmatmul.mubr.f32.gmra.mrb[0].mxu0 %v1865
    %v2044 = vpop.f32.mrb[0].mxu0
    %v2045 = vadd.f32 0.0, %v2044
    %v2046 = vpop.f32.mrb[0].mxu0
    %v2047 = vadd.f32 0.0, %v2046
    %2048 = vmatprep.mubr.f32.mxu0 0.0
    %2049 = vmatmul.mubr.f32.gmra.mrb[0].mxu0 %v1868
    %v2050 = vpop.f32.mrb[0].mxu0
    %v2051 = vadd.f32 0.0, %v2050
    %v2052 = vpop.f32.mrb[0].mxu0
    %v2053 = vadd.f32 0.0, %v2052
    %2054 = vmatprep.mubr.f32.mxu0 0.0
    %2055 = vmatmul.mubr.f32.gmra.mrb[0].mxu0 %v1871
    %v2056 = vpop.f32.mrb[0].mxu0
    %v2057 = vadd.f32 0.0, %v2056
    %v2058 = vpop.f32.mrb[0].mxu0
    %v2059 = vadd.f32 0.0, %v2058
    %2060 = vmatprep.mubr.f32.mxu0 0.0
    %2061 = vmatmul.mubr.f32.gmra.mrb[0].mxu0 %v1874
    %v2062 = vpop.f32.mrb[0].mxu0
    %v2063 = vadd.f32 0.0, %v2062
    %v2064 = vpop.f32.mrb[0].mxu0
    %v2065 = vadd.f32 0.0, %v2064
    %2066 = vmatprep.mubr.f32.mxu0 0.0
    %2067 = vmatmul.mubr.f32.gmra.mrb[0].mxu0 %v1877
    %v2068 = vpop.f32.mrb[0].mxu0
    %v2069 = vadd.f32 0.0, %v2068
    %v2070 = vpop.f32.mrb[0].mxu0
    %v2071 = vadd.f32 0.0, %v2070
    %2072 = vmatprep.mubr.f32.mxu0 0.0
    %2073 = vmatmul.mubr.f32.gmra.mrb[0].mxu0 %v1880
    %v2074 = vpop.f32.mrb[0].mxu0
    %v2075 = vadd.f32 0.0, %v2074
    %v2076 = vpop.f32.mrb[0].mxu0
    %v2077 = vadd.f32 0.0, %v2076
    %2078 = vmatprep.mubr.f32.mxu0 0.0
    %2079 = vmatmul.mubr.f32.gmra.mrb[0].mxu0 %v1883
    %v2080 = vpop.f32.mrb[0].mxu0
    %v2081 = vadd.f32 0.0, %v2080
    %v2082 = vpop.f32.mrb[0].mxu0
    %v2083 = vadd.f32 0.0, %v2082
    %2084 = vmatprep.mubr.f32.mxu0 0.0
    %2085 = vmatmul.mubr.f32.gmra.mrb[0].mxu0 %v1886
    %v2086 = vpop.f32.mrb[0].mxu0
    %v2087 = vadd.f32 0.0, %v2086
    %v2088 = vpop.f32.mrb[0].mxu0
    %v2089 = vadd.f32 0.0, %v2088
    %2090 = vmatprep.mubr.f32.mxu0 0.0
    %2091 = vmatmul.mubr.f32.gmra.mrb[0].mxu0 %v1889
    %v2092 = vpop.f32.mrb[0].mxu0
    %v2093 = vadd.f32 0.0, %v2092
    %v2094 = vpop.f32.mrb[0].mxu0
    %v2095 = vadd.f32 0.0, %v2094
    %2096 = vmatprep.mubr.f32.mxu0 0.0
    %2097 = vmatmul.mubr.f32.gmra.mrb[0].mxu0 %v1892
    %v2098 = vpop.f32.mrb[0].mxu0
    %v2099 = vadd.f32 0.0, %v2098
    %v2100 = vpop.f32.mrb[0].mxu0
    %v2101 = vadd.f32 0.0, %v2100
    %2102 = vmatprep.mubr.f32.mxu0 0.0
    %2103 = vmatmul.mubr.f32.gmra.mrb[0].mxu0 %v1895
    %v2104 = vpop.f32.mrb[0].mxu0
    %v2105 = vadd.f32 0.0, %v2104
    %v2106 = vpop.f32.mrb[0].mxu0
    %v2107 = vadd.f32 0.0, %v2106
    %2108 = vmatprep.mubr.f32.mxu0 0.0
    %2109 = vmatmul.mubr.f32.gmra.mrb[0].mxu0 %v1898
    %v2110 = vpop.f32.mrb[0].mxu0
    %v2111 = vadd.f32 0.0, %v2110
    %v2112 = vpop.f32.mrb[0].mxu0
    %v2113 = vadd.f32 0.0, %v2112
    %2114 = vdwg.mxu0
    %v2115 = vadd.f32 %v1465, %v1973
    %v2116 = vadd.f32 %v1466, %v1975
    %v2117 = vadd.f32 %v1467, %v1979
    %v2118 = vadd.f32 %v1468, %v1981
    %v2119 = vadd.f32 %v1469, %v1985
    %v2120 = vadd.f32 %v1470, %v1987
    %v2121 = vadd.f32 %v1471, %v1991
    %v2122 = vadd.f32 %v1472, %v1993
    %v2123 = vadd.f32 %v1473, %v1997
    %v2124 = vadd.f32 %v1474, %v1999
    %v2125 = vadd.f32 %v1475, %v2003
    %v2126 = vadd.f32 %v1476, %v2005
    %v2127 = vadd.f32 %v1477, %v2009
    %v2128 = vadd.f32 %v1478, %v2011
    %v2129 = vadd.f32 %v1479, %v2015
    %v2130 = vadd.f32 %v1480, %v2017
    %v2131 = vadd.f32 %v1481, %v2021
    %v2132 = vadd.f32 %v1482, %v2023
    %v2133 = vadd.f32 %v1483, %v2027
    %v2134 = vadd.f32 %v1484, %v2029
    %v2135 = vadd.f32 %v1485, %v2033
    %v2136 = vadd.f32 %v1486, %v2035
    %v2137 = vadd.f32 %v1487, %v2039
    %v2138 = vadd.f32 %v1488, %v2041
    %v2139 = vadd.f32 %v1489, %v2045
    %v2140 = vadd.f32 %v1490, %v2047
    %v2141 = vadd.f32 %v1491, %v2051
    %v2142 = vadd.f32 %v1492, %v2053
    %v2143 = vadd.f32 %v1493, %v2057
    %v2144 = vadd.f32 %v1494, %v2059
    %v2145 = vadd.f32 %v1495, %v2063
    %v2146 = vadd.f32 %v1496, %v2065
    %v2147 = vadd.f32 %v1497, %v2069
    %v2148 = vadd.f32 %v1498, %v2071
    %v2149 = vadd.f32 %v1499, %v2075
    %v2150 = vadd.f32 %v1500, %v2077
    %v2151 = vadd.f32 %v1501, %v2081
    %v2152 = vadd.f32 %v1502, %v2083
    %v2153 = vadd.f32 %v1503, %v2087
    %v2154 = vadd.f32 %v1504, %v2089
    %v2155 = vadd.f32 %v1505, %v2093
    %v2156 = vadd.f32 %v1506, %v2095
    %v2157 = vadd.f32 %v1507, %v2099
    %v2158 = vadd.f32 %v1508, %v2101
    %v2159 = vadd.f32 %v1509, %v2105
    %v2160 = vadd.f32 %v1510, %v2107
    %v2161 = vadd.f32 %v1511, %v2111
    %v2162 = vadd.f32 %v1512, %v2113
    %s2163 = scalar_lea.vmem %s3, 1152
    %v2164 = vld [vmem:[%s2163] sm:$0xff]
    %v2165 = vld [vmem:[%s2163 + $0x8] sm:$0xff]
    %v2166 = vld [vmem:[%s2163 + $0x10] sm:$0xff]
    %v2167 = vld [vmem:[%s2163 + $0x18] sm:$0xff]
    %v2168 = vld [vmem:[%s2163 + $0x20] sm:$0xff]
    %v2169 = vld [vmem:[%s2163 + $0x28] sm:$0xff]
    %v2170 = vld [vmem:[%s2163 + $0x30] sm:$0xff]
    %v2171 = vld [vmem:[%s2163 + $0x38] sm:$0xff]
    %v2172 = vld [vmem:[%s2163 + $0x40] sm:$0xff]
    %v2173 = vld [vmem:[%s2163 + $0x48] sm:$0xff]
    %v2174 = vld [vmem:[%s2163 + $0x50] sm:$0xff]
    %v2175 = vld [vmem:[%s2163 + $0x58] sm:$0xff]
    %v2176 = vld [vmem:[%s2163 + $0x60] sm:$0xff]
    %v2177 = vld [vmem:[%s2163 + $0x68] sm:$0xff]
    %v2178 = vld [vmem:[%s2163 + $0x70] sm:$0xff]
    %v2179 = vld [vmem:[%s2163 + $0x78] sm:$0xff]
    %v2180 = vld [vmem:[%s2163 + $0x80] sm:$0xff]
    %v2181 = vld [vmem:[%s2163 + $0x88] sm:$0xff]
    %v2182 = vld [vmem:[%s2163 + $0x90] sm:$0xff]
    %v2183 = vld [vmem:[%s2163 + $0x98] sm:$0xff]
    %v2184 = vld [vmem:[%s2163 + $0xa0] sm:$0xff]
    %v2185 = vld [vmem:[%s2163 + $0xa8] sm:$0xff]
    %v2186 = vld [vmem:[%s2163 + $0xb0] sm:$0xff]
    %v2187 = vld [vmem:[%s2163 + $0xb8] sm:$0xff]
    %v2188 = vld [vmem:[%s2163 + $0xc0] sm:$0xff]
    %v2189 = vld [vmem:[%s2163 + $0xc8] sm:$0xff]
    %v2190 = vld [vmem:[%s2163 + $0xd0] sm:$0xff]
    %v2191 = vld [vmem:[%s2163 + $0xd8] sm:$0xff]
    %v2192 = vld [vmem:[%s2163 + $0xe0] sm:$0xff]
    %v2193 = vld [vmem:[%s2163 + $0xe8] sm:$0xff]
    %v2194 = vld [vmem:[%s2163 + $0xf0] sm:$0xff]
    %v2195 = vld [vmem:[%s2163 + $0xf8] sm:$0xff]
    %v2196 = vld [vmem:[%s2163 + $0x100] sm:$0xff]
    %v2197 = vld [vmem:[%s2163 + $0x108] sm:$0xff]
    %v2198 = vld [vmem:[%s2163 + $0x110] sm:$0xff]
    %v2199 = vld [vmem:[%s2163 + $0x118] sm:$0xff]
    %v2200 = vld [vmem:[%s2163 + $0x120] sm:$0xff]
    %v2201 = vld [vmem:[%s2163 + $0x128] sm:$0xff]
    %v2202 = vld [vmem:[%s2163 + $0x130] sm:$0xff]
    %v2203 = vld [vmem:[%s2163 + $0x138] sm:$0xff]
    %v2204 = vld [vmem:[%s2163 + $0x140] sm:$0xff]
    %v2205 = vld [vmem:[%s2163 + $0x148] sm:$0xff]
    %v2206 = vld [vmem:[%s2163 + $0x150] sm:$0xff]
    %v2207 = vld [vmem:[%s2163 + $0x158] sm:$0xff]
    %v2208 = vld [vmem:[%s2163 + $0x160] sm:$0xff]
    %v2209 = vld [vmem:[%s2163 + $0x168] sm:$0xff]
    %v2210 = vld [vmem:[%s2163 + $0x170] sm:$0xff]
    %v2211 = vld [vmem:[%s2163 + $0x178] sm:$0xff]
    %v2213 = vsel %vm249, %v2165, 0
    %v2216 = vsel %vm249, %v2167, 0
    %v2219 = vsel %vm249, %v2169, 0
    %v2222 = vsel %vm249, %v2171, 0
    %v2225 = vsel %vm249, %v2173, 0
    %v2228 = vsel %vm249, %v2175, 0
    %v2231 = vsel %vm249, %v2177, 0
    %v2234 = vsel %vm249, %v2179, 0
    %v2237 = vsel %vm249, %v2181, 0
    %v2240 = vsel %vm249, %v2183, 0
    %v2243 = vsel %vm249, %v2185, 0
    %v2246 = vsel %vm249, %v2187, 0
    %v2249 = vsel %vm249, %v2189, 0
    %v2252 = vsel %vm249, %v2191, 0
    %v2255 = vsel %vm249, %v2193, 0
    %v2258 = vsel %vm249, %v2195, 0
    %v2261 = vsel %vm249, %v2197, 0
    %v2264 = vsel %vm249, %v2199, 0
    %v2267 = vsel %vm249, %v2201, 0
    %v2270 = vsel %vm249, %v2203, 0
    %v2273 = vsel %vm249, %v2205, 0
    %v2276 = vsel %vm249, %v2207, 0
    %v2279 = vsel %vm249, %v2209, 0
    %v2282 = vsel %vm249, %v2211, 0
    %2284 = vmatprep.subr.mxu0 0.0
    %2285 = vmatpush1.msra.mxu0 %v172
    %2286 = vmatprep.subr.mxu0 0.0
    %2287 = vmatpush1.msra.mxu0 %v173
    %2288 = vmatprep.subr.mxu0 0.0
    %2289 = vmatpush1.msra.mxu0 %v174
    %2290 = vmatprep.subr.mxu0 0.0
    %2291 = vmatpush1.msra.mxu0 %v175
    %2292 = vmatprep.subr.mxu0 0.0
    %2293 = vmatpush1.msra.mxu0 %v176
    %2294 = vmatprep.subr.mxu0 0.0
    %2295 = vmatpush1.msra.mxu0 %v177
    %2296 = vmatprep.subr.mxu0 0.0
    %2297 = vmatpush1.msra.mxu0 %v178
    %2298 = vmatprep.subr.mxu0 0.0
    %2299 = vmatpush1.msra.mxu0 %v179
    %2300 = vmatprep.subr.mxu0 0.0
    %2301 = vmatpush1.msra.mxu0 %v180
    %2302 = vmatprep.subr.mxu0 0.0
    %2303 = vmatpush1.msra.mxu0 %v181
    %2304 = vmatprep.subr.mxu0 0.0
    %2305 = vmatpush1.msra.mxu0 %v182
    %2306 = vmatprep.subr.mxu0 0.0
    %2307 = vmatpush1.msra.mxu0 %v183
    %2308 = vmatprep.subr.mxu0 0.0
    %2309 = vmatpush1.msra.mxu0 %v184
    %2310 = vmatprep.subr.mxu0 0.0
    %2311 = vmatpush1.msra.mxu0 %v185
    %2312 = vmatprep.subr.mxu0 0.0
    %2313 = vmatpush1.msra.mxu0 %v186
    %2314 = vmatprep.subr.mxu0 0.0
    %2315 = vmatpush1.msra.mxu0 %v187
    %2316 = vmatprep.subr.mxu0 0.0
    %2317 = vmatpush1.msra.mxu0 %v188
    %2318 = vmatprep.subr.mxu0 0.0
    %2319 = vmatpush1.msra.mxu0 %v189
    %2320 = vmatprep.subr.mxu0 0.0
    %2321 = vmatpush1.msra.mxu0 %v190
    %2322 = vmatprep.subr.mxu0 0.0
    %2323 = vmatpush1.msra.mxu0 %v191
    %2324 = vmatprep.subr.mxu0 0.0
    %2325 = vmatpush1.msra.mxu0 %v192
    %2326 = vmatprep.subr.mxu0 0.0
    %2327 = vmatpush1.msra.mxu0 %v193
    %2328 = vmatprep.subr.mxu0 0.0
    %2329 = vmatpush1.msra.mxu0 %v194
    %2330 = vmatprep.subr.mxu0 0.0
    %2331 = vmatpush1.msra.mxu0 %v195
    %2332 = vmatprep.subr.mxu0 0.0
    %2333 = vmatpush1.msra.mxu0 %v196
    %2334 = vmatprep.subr.mxu0 0.0
    %2335 = vmatpush1.msra.mxu0 %v197
    %2336 = vmatprep.subr.mxu0 0.0
    %2337 = vmatpush1.msra.mxu0 %v198
    %2338 = vmatprep.subr.mxu0 0.0
    %2339 = vmatpush1.msra.mxu0 %v199
    %2340 = vmatprep.subr.mxu0 0.0
    %2341 = vmatpush1.msra.mxu0 0.0
    %2342 = vmatprep.subr.mxu0 0.0
    %2343 = vmatpush1.msra.mxu0 0.0
    %2344 = vmatprep.subr.mxu0 0.0
    %2345 = vmatpush1.msra.mxu0 0.0
    %2346 = vmatprep.subr.mxu0 0.0
    %2347 = vmatpush1.msra.mxu0 0.0
    %2348 = vmatprep.mubr.f32.mxu0 %v2213
    %2349 = vmatmul.mubr.f32.gmra.mrb[0].mxu0 %v2164
    %v2350 = vpop.f32.mrb[0].mxu0
    %v2351 = vadd.f32 0.0, %v2350
    %v2352 = vpop.f32.mrb[0].mxu0
    %2353 = vmatprep.mubr.f32.mxu0 %v2216
    %2354 = vmatmul.mubr.f32.gmra.mrb[0].mxu0 %v2166
    %v2355 = vpop.f32.mrb[0].mxu0
    %v2356 = vadd.f32 0.0, %v2355
    %v2357 = vpop.f32.mrb[0].mxu0
    %2358 = vmatprep.mubr.f32.mxu0 %v2219
    %2359 = vmatmul.mubr.f32.gmra.mrb[0].mxu0 %v2168
    %v2360 = vpop.f32.mrb[0].mxu0
    %v2361 = vadd.f32 0.0, %v2360
    %v2362 = vpop.f32.mrb[0].mxu0
    %2363 = vmatprep.mubr.f32.mxu0 %v2222
    %2364 = vmatmul.mubr.f32.gmra.mrb[0].mxu0 %v2170
    %v2365 = vpop.f32.mrb[0].mxu0
    %v2366 = vadd.f32 0.0, %v2365
    %v2367 = vpop.f32.mrb[0].mxu0
    %2368 = vmatprep.mubr.f32.mxu0 %v2225
    %2369 = vmatmul.mubr.f32.gmra.mrb[0].mxu0 %v2172
    %v2370 = vpop.f32.mrb[0].mxu0
    %v2371 = vadd.f32 0.0, %v2370
    %v2372 = vpop.f32.mrb[0].mxu0
    %2373 = vmatprep.mubr.f32.mxu0 %v2228
    %2374 = vmatmul.mubr.f32.gmra.mrb[0].mxu0 %v2174
    %v2375 = vpop.f32.mrb[0].mxu0
    %v2376 = vadd.f32 0.0, %v2375
    %v2377 = vpop.f32.mrb[0].mxu0
    %2378 = vmatprep.mubr.f32.mxu0 %v2231
    %2379 = vmatmul.mubr.f32.gmra.mrb[0].mxu0 %v2176
    %v2380 = vpop.f32.mrb[0].mxu0
    %v2381 = vadd.f32 0.0, %v2380
    %v2382 = vpop.f32.mrb[0].mxu0
    %2383 = vmatprep.mubr.f32.mxu0 %v2234
    %2384 = vmatmul.mubr.f32.gmra.mrb[0].mxu0 %v2178
    %v2385 = vpop.f32.mrb[0].mxu0
    %v2386 = vadd.f32 0.0, %v2385
    %v2387 = vpop.f32.mrb[0].mxu0
    %2388 = vmatprep.mubr.f32.mxu0 %v2237
    %2389 = vmatmul.mubr.f32.gmra.mrb[0].mxu0 %v2180
    %v2390 = vpop.f32.mrb[0].mxu0
    %v2391 = vadd.f32 0.0, %v2390
    %v2392 = vpop.f32.mrb[0].mxu0
    %2393 = vmatprep.mubr.f32.mxu0 %v2240
    %2394 = vmatmul.mubr.f32.gmra.mrb[0].mxu0 %v2182
    %v2395 = vpop.f32.mrb[0].mxu0
    %v2396 = vadd.f32 0.0, %v2395
    %v2397 = vpop.f32.mrb[0].mxu0
    %2398 = vmatprep.mubr.f32.mxu0 %v2243
    %2399 = vmatmul.mubr.f32.gmra.mrb[0].mxu0 %v2184
    %v2400 = vpop.f32.mrb[0].mxu0
    %v2401 = vadd.f32 0.0, %v2400
    %v2402 = vpop.f32.mrb[0].mxu0
    %2403 = vmatprep.mubr.f32.mxu0 %v2246
    %2404 = vmatmul.mubr.f32.gmra.mrb[0].mxu0 %v2186
    %v2405 = vpop.f32.mrb[0].mxu0
    %v2406 = vadd.f32 0.0, %v2405
    %v2407 = vpop.f32.mrb[0].mxu0
    %2408 = vmatprep.mubr.f32.mxu0 %v2249
    %2409 = vmatmul.mubr.f32.gmra.mrb[0].mxu0 %v2188
    %v2410 = vpop.f32.mrb[0].mxu0
    %v2411 = vadd.f32 0.0, %v2410
    %v2412 = vpop.f32.mrb[0].mxu0
    %2413 = vmatprep.mubr.f32.mxu0 %v2252
    %2414 = vmatmul.mubr.f32.gmra.mrb[0].mxu0 %v2190
    %v2415 = vpop.f32.mrb[0].mxu0
    %v2416 = vadd.f32 0.0, %v2415
    %v2417 = vpop.f32.mrb[0].mxu0
    %2418 = vmatprep.mubr.f32.mxu0 %v2255
    %2419 = vmatmul.mubr.f32.gmra.mrb[0].mxu0 %v2192
    %v2420 = vpop.f32.mrb[0].mxu0
    %v2421 = vadd.f32 0.0, %v2420
    %v2422 = vpop.f32.mrb[0].mxu0
    %2423 = vmatprep.mubr.f32.mxu0 %v2258
    %2424 = vmatmul.mubr.f32.gmra.mrb[0].mxu0 %v2194
    %v2425 = vpop.f32.mrb[0].mxu0
    %v2426 = vadd.f32 0.0, %v2425
    %v2427 = vpop.f32.mrb[0].mxu0
    %2428 = vmatprep.mubr.f32.mxu0 %v2261
    %2429 = vmatmul.mubr.f32.gmra.mrb[0].mxu0 %v2196
    %v2430 = vpop.f32.mrb[0].mxu0
    %v2431 = vadd.f32 0.0, %v2430
    %v2432 = vpop.f32.mrb[0].mxu0
    %2433 = vmatprep.mubr.f32.mxu0 %v2264
    %2434 = vmatmul.mubr.f32.gmra.mrb[0].mxu0 %v2198
    %v2435 = vpop.f32.mrb[0].mxu0
    %v2436 = vadd.f32 0.0, %v2435
    %v2437 = vpop.f32.mrb[0].mxu0
    %2438 = vmatprep.mubr.f32.mxu0 %v2267
    %2439 = vmatmul.mubr.f32.gmra.mrb[0].mxu0 %v2200
    %v2440 = vpop.f32.mrb[0].mxu0
    %v2441 = vadd.f32 0.0, %v2440
    %v2442 = vpop.f32.mrb[0].mxu0
    %2443 = vmatprep.mubr.f32.mxu0 %v2270
    %2444 = vmatmul.mubr.f32.gmra.mrb[0].mxu0 %v2202
    %v2445 = vpop.f32.mrb[0].mxu0
    %v2446 = vadd.f32 0.0, %v2445
    %v2447 = vpop.f32.mrb[0].mxu0
    %2448 = vmatprep.mubr.f32.mxu0 %v2273
    %2449 = vmatmul.mubr.f32.gmra.mrb[0].mxu0 %v2204
    %v2450 = vpop.f32.mrb[0].mxu0
    %v2451 = vadd.f32 0.0, %v2450
    %v2452 = vpop.f32.mrb[0].mxu0
    %2453 = vmatprep.mubr.f32.mxu0 %v2276
    %2454 = vmatmul.mubr.f32.gmra.mrb[0].mxu0 %v2206
    %v2455 = vpop.f32.mrb[0].mxu0
    %v2456 = vadd.f32 0.0, %v2455
    %v2457 = vpop.f32.mrb[0].mxu0
    %2458 = vmatprep.mubr.f32.mxu0 %v2279
    %2459 = vmatmul.mubr.f32.gmra.mrb[0].mxu0 %v2208
    %v2460 = vpop.f32.mrb[0].mxu0
    %v2461 = vadd.f32 0.0, %v2460
    %v2462 = vpop.f32.mrb[0].mxu0
    %2463 = vmatprep.mubr.f32.mxu0 %v2282
    %2464 = vmatmul.mubr.f32.gmra.mrb[0].mxu0 %v2210
    %v2465 = vpop.f32.mrb[0].mxu0
    %v2466 = vadd.f32 0.0, %v2465
    %v2467 = vpop.f32.mrb[0].mxu0
    %2468 = vdwg.mxu0
    %s2469 = scalar_lea.vmem %s1, 192
    %v2470 = vld [vmem:[%s2469] sm:$0xff]
    %v2471 = vld [vmem:[%s2469 + $0x8] sm:$0xff]
    %v2472 = vld [vmem:[%s2469 + $0x10] sm:$0xff]
    %v2473 = vld [vmem:[%s2469 + $0x18] sm:$0xff]
    %v2474 = vld [vmem:[%s2469 + $0x20] sm:$0xff]
    %v2475 = vld [vmem:[%s2469 + $0x28] sm:$0xff]
    %v2476 = vld [vmem:[%s2469 + $0x30] sm:$0xf]
    %v2477 = vld [vmem:[%s2469 + $0x38] sm:$0xf]
    %v2479 = vsel %vm515, %v2351, 0
    %v2482 = vsel %vm515, %v2356, 0
    %v2485 = vsel %vm515, %v2361, 0
    %v2488 = vsel %vm515, %v2366, 0
    %v2491 = vsel %vm515, %v2371, 0
    %v2494 = vsel %vm515, %v2376, 0
    %v2497 = vsel %vm515, %v2381, 0
    %v2500 = vsel %vm515, %v2386, 0
    %v2503 = vsel %vm515, %v2391, 0
    %v2506 = vsel %vm515, %v2396, 0
    %v2509 = vsel %vm515, %v2401, 0
    %v2512 = vsel %vm515, %v2406, 0
    %v2515 = vsel %vm515, %v2411, 0
    %v2518 = vsel %vm515, %v2416, 0
    %v2521 = vsel %vm515, %v2421, 0
    %v2524 = vsel %vm515, %v2426, 0
    %v2527 = vsel %vm515, %v2431, 0
    %v2530 = vsel %vm515, %v2436, 0
    %v2533 = vsel %vm515, %v2441, 0
    %v2536 = vsel %vm515, %v2446, 0
    %v2539 = vsel %vm515, %v2451, 0
    %v2542 = vsel %vm515, %v2456, 0
    %v2545 = vsel %vm515, %v2461, 0
    %v2548 = vsel %vm515, %v2466, 0
    %v2551 = vsel %vm588, %v2476, 0
    %v2554 = vsel %vm588, %v2477, 0
    %2556 = vmatprep.subr.mxu0 %v2471
    %2557 = vmatpush1.msra.mxu0 %v2470
    %2558 = vmatprep.subr.mxu0 %v2473
    %2559 = vmatpush1.msra.mxu0 %v2472
    %2560 = vmatprep.subr.mxu0 %v2475
    %2561 = vmatpush1.msra.mxu0 %v2474
    %2562 = vmatprep.subr.mxu0 %v2554
    %2563 = vmatpush1.msra.mxu0 %v2551
    %2564 = vmatprep.subr.mxu0 0.0
    %2565 = vmatpush1.msra.mxu0 0.0
    %2566 = vmatprep.subr.mxu0 0.0
    %2567 = vmatpush1.msra.mxu0 0.0
    %2568 = vmatprep.subr.mxu0 0.0
    %2569 = vmatpush1.msra.mxu0 0.0
    %2570 = vmatprep.subr.mxu0 0.0
    %2571 = vmatpush1.msra.mxu0 0.0
    %2572 = vmatprep.subr.mxu0 0.0
    %2573 = vmatpush1.msra.mxu0 0.0
    %2574 = vmatprep.subr.mxu0 0.0
    %2575 = vmatpush1.msra.mxu0 0.0
    %2576 = vmatprep.subr.mxu0 0.0
    %2577 = vmatpush1.msra.mxu0 0.0
    %2578 = vmatprep.subr.mxu0 0.0
    %2579 = vmatpush1.msra.mxu0 0.0
    %2580 = vmatprep.subr.mxu0 0.0
    %2581 = vmatpush1.msra.mxu0 0.0
    %2582 = vmatprep.subr.mxu0 0.0
    %2583 = vmatpush1.msra.mxu0 0.0
    %2584 = vmatprep.subr.mxu0 0.0
    %2585 = vmatpush1.msra.mxu0 0.0
    %2586 = vmatprep.subr.mxu0 0.0
    %2587 = vmatpush1.msra.mxu0 0.0
    %2588 = vmatprep.subr.mxu0 0.0
    %2589 = vmatpush1.msra.mxu0 0.0
    %2590 = vmatprep.subr.mxu0 0.0
    %2591 = vmatpush1.msra.mxu0 0.0
    %2592 = vmatprep.subr.mxu0 0.0
    %2593 = vmatpush1.msra.mxu0 0.0
    %2594 = vmatprep.subr.mxu0 0.0
    %2595 = vmatpush1.msra.mxu0 0.0
    %2596 = vmatprep.subr.mxu0 0.0
    %2597 = vmatpush1.msra.mxu0 0.0
    %2598 = vmatprep.subr.mxu0 0.0
    %2599 = vmatpush1.msra.mxu0 0.0
    %2600 = vmatprep.subr.mxu0 0.0
    %2601 = vmatpush1.msra.mxu0 0.0
    %2602 = vmatprep.subr.mxu0 0.0
    %2603 = vmatpush1.msra.mxu0 0.0
    %2604 = vmatprep.subr.mxu0 0.0
    %2605 = vmatpush1.msra.mxu0 0.0
    %2606 = vmatprep.subr.mxu0 0.0
    %2607 = vmatpush1.msra.mxu0 0.0
    %2608 = vmatprep.subr.mxu0 0.0
    %2609 = vmatpush1.msra.mxu0 0.0
    %2610 = vmatprep.subr.mxu0 0.0
    %2611 = vmatpush1.msra.mxu0 0.0
    %2612 = vmatprep.subr.mxu0 0.0
    %2613 = vmatpush1.msra.mxu0 0.0
    %2614 = vmatprep.subr.mxu0 0.0
    %2615 = vmatpush1.msra.mxu0 0.0
    %2616 = vmatprep.subr.mxu0 0.0
    %2617 = vmatpush1.msra.mxu0 0.0
    %2618 = vmatprep.subr.mxu0 0.0
    %2619 = vmatpush1.msra.mxu0 0.0
    %2620 = vmatprep.mubr.f32.mxu0 0.0
    %2621 = vmatmul.mubr.f32.gmra.mrb[0].mxu0 %v2479
    %v2622 = vpop.f32.mrb[0].mxu0
    %v2623 = vadd.f32 0.0, %v2622
    %v2624 = vpop.f32.mrb[0].mxu0
    %v2625 = vadd.f32 0.0, %v2624
    %2626 = vmatprep.mubr.f32.mxu0 0.0
    %2627 = vmatmul.mubr.f32.gmra.mrb[0].mxu0 %v2482
    %v2628 = vpop.f32.mrb[0].mxu0
    %v2629 = vadd.f32 0.0, %v2628
    %v2630 = vpop.f32.mrb[0].mxu0
    %v2631 = vadd.f32 0.0, %v2630
    %2632 = vmatprep.mubr.f32.mxu0 0.0
    %2633 = vmatmul.mubr.f32.gmra.mrb[0].mxu0 %v2485
    %v2634 = vpop.f32.mrb[0].mxu0
    %v2635 = vadd.f32 0.0, %v2634
    %v2636 = vpop.f32.mrb[0].mxu0
    %v2637 = vadd.f32 0.0, %v2636
    %2638 = vmatprep.mubr.f32.mxu0 0.0
    %2639 = vmatmul.mubr.f32.gmra.mrb[0].mxu0 %v2488
    %v2640 = vpop.f32.mrb[0].mxu0
    %v2641 = vadd.f32 0.0, %v2640
    %v2642 = vpop.f32.mrb[0].mxu0
    %v2643 = vadd.f32 0.0, %v2642
    %2644 = vmatprep.mubr.f32.mxu0 0.0
    %2645 = vmatmul.mubr.f32.gmra.mrb[0].mxu0 %v2491
    %v2646 = vpop.f32.mrb[0].mxu0
    %v2647 = vadd.f32 0.0, %v2646
    %v2648 = vpop.f32.mrb[0].mxu0
    %v2649 = vadd.f32 0.0, %v2648
    %2650 = vmatprep.mubr.f32.mxu0 0.0
    %2651 = vmatmul.mubr.f32.gmra.mrb[0].mxu0 %v2494
    %v2652 = vpop.f32.mrb[0].mxu0
    %v2653 = vadd.f32 0.0, %v2652
    %v2654 = vpop.f32.mrb[0].mxu0
    %v2655 = vadd.f32 0.0, %v2654
    %2656 = vmatprep.mubr.f32.mxu0 0.0
    %2657 = vmatmul.mubr.f32.gmra.mrb[0].mxu0 %v2497
    %v2658 = vpop.f32.mrb[0].mxu0
    %v2659 = vadd.f32 0.0, %v2658
    %v2660 = vpop.f32.mrb[0].mxu0
    %v2661 = vadd.f32 0.0, %v2660
    %2662 = vmatprep.mubr.f32.mxu0 0.0
    %2663 = vmatmul.mubr.f32.gmra.mrb[0].mxu0 %v2500
    %v2664 = vpop.f32.mrb[0].mxu0
    %v2665 = vadd.f32 0.0, %v2664
    %v2666 = vpop.f32.mrb[0].mxu0
    %v2667 = vadd.f32 0.0, %v2666
    %2668 = vmatprep.mubr.f32.mxu0 0.0
    %2669 = vmatmul.mubr.f32.gmra.mrb[0].mxu0 %v2503
    %v2670 = vpop.f32.mrb[0].mxu0
    %v2671 = vadd.f32 0.0, %v2670
    %v2672 = vpop.f32.mrb[0].mxu0
    %v2673 = vadd.f32 0.0, %v2672
    %2674 = vmatprep.mubr.f32.mxu0 0.0
    %2675 = vmatmul.mubr.f32.gmra.mrb[0].mxu0 %v2506
    %v2676 = vpop.f32.mrb[0].mxu0
    %v2677 = vadd.f32 0.0, %v2676
    %v2678 = vpop.f32.mrb[0].mxu0
    %v2679 = vadd.f32 0.0, %v2678
    %2680 = vmatprep.mubr.f32.mxu0 0.0
    %2681 = vmatmul.mubr.f32.gmra.mrb[0].mxu0 %v2509
    %v2682 = vpop.f32.mrb[0].mxu0
    %v2683 = vadd.f32 0.0, %v2682
    %v2684 = vpop.f32.mrb[0].mxu0
    %v2685 = vadd.f32 0.0, %v2684
    %2686 = vmatprep.mubr.f32.mxu0 0.0
    %2687 = vmatmul.mubr.f32.gmra.mrb[0].mxu0 %v2512
    %v2688 = vpop.f32.mrb[0].mxu0
    %v2689 = vadd.f32 0.0, %v2688
    %v2690 = vpop.f32.mrb[0].mxu0
    %v2691 = vadd.f32 0.0, %v2690
    %2692 = vmatprep.mubr.f32.mxu0 0.0
    %2693 = vmatmul.mubr.f32.gmra.mrb[0].mxu0 %v2515
    %v2694 = vpop.f32.mrb[0].mxu0
    %v2695 = vadd.f32 0.0, %v2694
    %v2696 = vpop.f32.mrb[0].mxu0
    %v2697 = vadd.f32 0.0, %v2696
    %2698 = vmatprep.mubr.f32.mxu0 0.0
    %2699 = vmatmul.mubr.f32.gmra.mrb[0].mxu0 %v2518
    %v2700 = vpop.f32.mrb[0].mxu0
    %v2701 = vadd.f32 0.0, %v2700
    %v2702 = vpop.f32.mrb[0].mxu0
    %v2703 = vadd.f32 0.0, %v2702
    %2704 = vmatprep.mubr.f32.mxu0 0.0
    %2705 = vmatmul.mubr.f32.gmra.mrb[0].mxu0 %v2521
    %v2706 = vpop.f32.mrb[0].mxu0
    %v2707 = vadd.f32 0.0, %v2706
    %v2708 = vpop.f32.mrb[0].mxu0
    %v2709 = vadd.f32 0.0, %v2708
    %2710 = vmatprep.mubr.f32.mxu0 0.0
    %2711 = vmatmul.mubr.f32.gmra.mrb[0].mxu0 %v2524
    %v2712 = vpop.f32.mrb[0].mxu0
    %v2713 = vadd.f32 0.0, %v2712
    %v2714 = vpop.f32.mrb[0].mxu0
    %v2715 = vadd.f32 0.0, %v2714
    %2716 = vmatprep.mubr.f32.mxu0 0.0
    %2717 = vmatmul.mubr.f32.gmra.mrb[0].mxu0 %v2527
    %v2718 = vpop.f32.mrb[0].mxu0
    %v2719 = vadd.f32 0.0, %v2718
    %v2720 = vpop.f32.mrb[0].mxu0
    %v2721 = vadd.f32 0.0, %v2720
    %2722 = vmatprep.mubr.f32.mxu0 0.0
    %2723 = vmatmul.mubr.f32.gmra.mrb[0].mxu0 %v2530
    %v2724 = vpop.f32.mrb[0].mxu0
    %v2725 = vadd.f32 0.0, %v2724
    %v2726 = vpop.f32.mrb[0].mxu0
    %v2727 = vadd.f32 0.0, %v2726
    %2728 = vmatprep.mubr.f32.mxu0 0.0
    %2729 = vmatmul.mubr.f32.gmra.mrb[0].mxu0 %v2533
    %v2730 = vpop.f32.mrb[0].mxu0
    %v2731 = vadd.f32 0.0, %v2730
    %v2732 = vpop.f32.mrb[0].mxu0
    %v2733 = vadd.f32 0.0, %v2732
    %2734 = vmatprep.mubr.f32.mxu0 0.0
    %2735 = vmatmul.mubr.f32.gmra.mrb[0].mxu0 %v2536
    %v2736 = vpop.f32.mrb[0].mxu0
    %v2737 = vadd.f32 0.0, %v2736
    %v2738 = vpop.f32.mrb[0].mxu0
    %v2739 = vadd.f32 0.0, %v2738
    %2740 = vmatprep.mubr.f32.mxu0 0.0
    %2741 = vmatmul.mubr.f32.gmra.mrb[0].mxu0 %v2539
    %v2742 = vpop.f32.mrb[0].mxu0
    %v2743 = vadd.f32 0.0, %v2742
    %v2744 = vpop.f32.mrb[0].mxu0
    %v2745 = vadd.f32 0.0, %v2744
    %2746 = vmatprep.mubr.f32.mxu0 0.0
    %2747 = vmatmul.mubr.f32.gmra.mrb[0].mxu0 %v2542
    %v2748 = vpop.f32.mrb[0].mxu0
    %v2749 = vadd.f32 0.0, %v2748
    %v2750 = vpop.f32.mrb[0].mxu0
    %v2751 = vadd.f32 0.0, %v2750
    %2752 = vmatprep.mubr.f32.mxu0 0.0
    %2753 = vmatmul.mubr.f32.gmra.mrb[0].mxu0 %v2545
    %v2754 = vpop.f32.mrb[0].mxu0
    %v2755 = vadd.f32 0.0, %v2754
    %v2756 = vpop.f32.mrb[0].mxu0
    %v2757 = vadd.f32 0.0, %v2756
    %2758 = vmatprep.mubr.f32.mxu0 0.0
    %2759 = vmatmul.mubr.f32.gmra.mrb[0].mxu0 %v2548
    %v2760 = vpop.f32.mrb[0].mxu0
    %v2761 = vadd.f32 0.0, %v2760
    %v2762 = vpop.f32.mrb[0].mxu0
    %v2763 = vadd.f32 0.0, %v2762
    %2764 = vdwg.mxu0
    %v2765 = vadd.f32 %v2115, %v2623
    %v2766 = vadd.f32 %v2116, %v2625
    %v2767 = vadd.f32 %v2117, %v2629
    %v2768 = vadd.f32 %v2118, %v2631
    %v2769 = vadd.f32 %v2119, %v2635
    %v2770 = vadd.f32 %v2120, %v2637
    %v2771 = vadd.f32 %v2121, %v2641
    %v2772 = vadd.f32 %v2122, %v2643
    %v2773 = vadd.f32 %v2123, %v2647
    %v2774 = vadd.f32 %v2124, %v2649
    %v2775 = vadd.f32 %v2125, %v2653
    %v2776 = vadd.f32 %v2126, %v2655
    %v2777 = vadd.f32 %v2127, %v2659
    %v2778 = vadd.f32 %v2128, %v2661
    %v2779 = vadd.f32 %v2129, %v2665
    %v2780 = vadd.f32 %v2130, %v2667
    %v2781 = vadd.f32 %v2131, %v2671
    %v2782 = vadd.f32 %v2132, %v2673
    %v2783 = vadd.f32 %v2133, %v2677
    %v2784 = vadd.f32 %v2134, %v2679
    %v2785 = vadd.f32 %v2135, %v2683
    %v2786 = vadd.f32 %v2136, %v2685
    %v2787 = vadd.f32 %v2137, %v2689
    %v2788 = vadd.f32 %v2138, %v2691
    %v2789 = vadd.f32 %v2139, %v2695
    %v2790 = vadd.f32 %v2140, %v2697
    %v2791 = vadd.f32 %v2141, %v2701
    %v2792 = vadd.f32 %v2142, %v2703
    %v2793 = vadd.f32 %v2143, %v2707
    %v2794 = vadd.f32 %v2144, %v2709
    %v2795 = vadd.f32 %v2145, %v2713
    %v2796 = vadd.f32 %v2146, %v2715
    %v2797 = vadd.f32 %v2147, %v2719
    %v2798 = vadd.f32 %v2148, %v2721
    %v2799 = vadd.f32 %v2149, %v2725
    %v2800 = vadd.f32 %v2150, %v2727
    %v2801 = vadd.f32 %v2151, %v2731
    %v2802 = vadd.f32 %v2152, %v2733
    %v2803 = vadd.f32 %v2153, %v2737
    %v2804 = vadd.f32 %v2154, %v2739
    %v2805 = vadd.f32 %v2155, %v2743
    %v2806 = vadd.f32 %v2156, %v2745
    %v2807 = vadd.f32 %v2157, %v2749
    %v2808 = vadd.f32 %v2158, %v2751
    %v2809 = vadd.f32 %v2159, %v2755
    %v2810 = vadd.f32 %v2160, %v2757
    %v2811 = vadd.f32 %v2161, %v2761
    %v2812 = vadd.f32 %v2162, %v2763
    %s2813 = scalar_lea.vmem %s3, 1536
    %v2814 = vld [vmem:[%s2813] sm:$0xff]
    %v2815 = vld [vmem:[%s2813 + $0x8] sm:$0xff]
    %v2816 = vld [vmem:[%s2813 + $0x10] sm:$0xff]
    %v2817 = vld [vmem:[%s2813 + $0x18] sm:$0xff]
    %v2818 = vld [vmem:[%s2813 + $0x20] sm:$0xff]
    %v2819 = vld [vmem:[%s2813 + $0x28] sm:$0xff]
    %v2820 = vld [vmem:[%s2813 + $0x30] sm:$0xff]
    %v2821 = vld [vmem:[%s2813 + $0x38] sm:$0xff]
    %v2822 = vld [vmem:[%s2813 + $0x40] sm:$0xff]
    %v2823 = vld [vmem:[%s2813 + $0x48] sm:$0xff]
    %v2824 = vld [vmem:[%s2813 + $0x50] sm:$0xff]
    %v2825 = vld [vmem:[%s2813 + $0x58] sm:$0xff]
    %v2826 = vld [vmem:[%s2813 + $0x60] sm:$0xff]
    %v2827 = vld [vmem:[%s2813 + $0x68] sm:$0xff]
    %v2828 = vld [vmem:[%s2813 + $0x70] sm:$0xff]
    %v2829 = vld [vmem:[%s2813 + $0x78] sm:$0xff]
    %v2830 = vld [vmem:[%s2813 + $0x80] sm:$0xff]
    %v2831 = vld [vmem:[%s2813 + $0x88] sm:$0xff]
    %v2832 = vld [vmem:[%s2813 + $0x90] sm:$0xff]
    %v2833 = vld [vmem:[%s2813 + $0x98] sm:$0xff]
    %v2834 = vld [vmem:[%s2813 + $0xa0] sm:$0xff]
    %v2835 = vld [vmem:[%s2813 + $0xa8] sm:$0xff]
    %v2836 = vld [vmem:[%s2813 + $0xb0] sm:$0xff]
    %v2837 = vld [vmem:[%s2813 + $0xb8] sm:$0xff]
    %v2838 = vld [vmem:[%s2813 + $0xc0] sm:$0xff]
    %v2839 = vld [vmem:[%s2813 + $0xc8] sm:$0xff]
    %v2840 = vld [vmem:[%s2813 + $0xd0] sm:$0xff]
    %v2841 = vld [vmem:[%s2813 + $0xd8] sm:$0xff]
    %v2842 = vld [vmem:[%s2813 + $0xe0] sm:$0xff]
    %v2843 = vld [vmem:[%s2813 + $0xe8] sm:$0xff]
    %v2844 = vld [vmem:[%s2813 + $0xf0] sm:$0xff]
    %v2845 = vld [vmem:[%s2813 + $0xf8] sm:$0xff]
    %v2846 = vld [vmem:[%s2813 + $0x100] sm:$0xff]
    %v2847 = vld [vmem:[%s2813 + $0x108] sm:$0xff]
    %v2848 = vld [vmem:[%s2813 + $0x110] sm:$0xff]
    %v2849 = vld [vmem:[%s2813 + $0x118] sm:$0xff]
    %v2850 = vld [vmem:[%s2813 + $0x120] sm:$0xff]
    %v2851 = vld [vmem:[%s2813 + $0x128] sm:$0xff]
    %v2852 = vld [vmem:[%s2813 + $0x130] sm:$0xff]
    %v2853 = vld [vmem:[%s2813 + $0x138] sm:$0xff]
    %v2854 = vld [vmem:[%s2813 + $0x140] sm:$0xff]
    %v2855 = vld [vmem:[%s2813 + $0x148] sm:$0xff]
    %v2856 = vld [vmem:[%s2813 + $0x150] sm:$0xff]
    %v2857 = vld [vmem:[%s2813 + $0x158] sm:$0xff]
    %v2858 = vld [vmem:[%s2813 + $0x160] sm:$0xff]
    %v2859 = vld [vmem:[%s2813 + $0x168] sm:$0xff]
    %v2860 = vld [vmem:[%s2813 + $0x170] sm:$0xff]
    %v2861 = vld [vmem:[%s2813 + $0x178] sm:$0xff]
    %v2863 = vsel %vm249, %v2815, 0
    %v2866 = vsel %vm249, %v2817, 0
    %v2869 = vsel %vm249, %v2819, 0
    %v2872 = vsel %vm249, %v2821, 0
    %v2875 = vsel %vm249, %v2823, 0
    %v2878 = vsel %vm249, %v2825, 0
    %v2881 = vsel %vm249, %v2827, 0
    %v2884 = vsel %vm249, %v2829, 0
    %v2887 = vsel %vm249, %v2831, 0
    %v2890 = vsel %vm249, %v2833, 0
    %v2893 = vsel %vm249, %v2835, 0
    %v2896 = vsel %vm249, %v2837, 0
    %v2899 = vsel %vm249, %v2839, 0
    %v2902 = vsel %vm249, %v2841, 0
    %v2905 = vsel %vm249, %v2843, 0
    %v2908 = vsel %vm249, %v2845, 0
    %v2911 = vsel %vm249, %v2847, 0
    %v2914 = vsel %vm249, %v2849, 0
    %v2917 = vsel %vm249, %v2851, 0
    %v2920 = vsel %vm249, %v2853, 0
    %v2923 = vsel %vm249, %v2855, 0
    %v2926 = vsel %vm249, %v2857, 0
    %v2929 = vsel %vm249, %v2859, 0
    %v2932 = vsel %vm249, %v2861, 0
    %2934 = vmatprep.subr.mxu0 0.0
    %2935 = vmatpush1.msra.mxu0 %v172
    %2936 = vmatprep.subr.mxu0 0.0
    %2937 = vmatpush1.msra.mxu0 %v173
    %2938 = vmatprep.subr.mxu0 0.0
    %2939 = vmatpush1.msra.mxu0 %v174
    %2940 = vmatprep.subr.mxu0 0.0
    %2941 = vmatpush1.msra.mxu0 %v175
    %2942 = vmatprep.subr.mxu0 0.0
    %2943 = vmatpush1.msra.mxu0 %v176
    %2944 = vmatprep.subr.mxu0 0.0
    %2945 = vmatpush1.msra.mxu0 %v177
    %2946 = vmatprep.subr.mxu0 0.0
    %2947 = vmatpush1.msra.mxu0 %v178
    %2948 = vmatprep.subr.mxu0 0.0
    %2949 = vmatpush1.msra.mxu0 %v179
    %2950 = vmatprep.subr.mxu0 0.0
    %2951 = vmatpush1.msra.mxu0 %v180
    %2952 = vmatprep.subr.mxu0 0.0
    %2953 = vmatpush1.msra.mxu0 %v181
    %2954 = vmatprep.subr.mxu0 0.0
    %2955 = vmatpush1.msra.mxu0 %v182
    %2956 = vmatprep.subr.mxu0 0.0
    %2957 = vmatpush1.msra.mxu0 %v183
    %2958 = vmatprep.subr.mxu0 0.0
    %2959 = vmatpush1.msra.mxu0 %v184
    %2960 = vmatprep.subr.mxu0 0.0
    %2961 = vmatpush1.msra.mxu0 %v185
    %2962 = vmatprep.subr.mxu0 0.0
    %2963 = vmatpush1.msra.mxu0 %v186
    %2964 = vmatprep.subr.mxu0 0.0
    %2965 = vmatpush1.msra.mxu0 %v187
    %2966 = vmatprep.subr.mxu0 0.0
    %2967 = vmatpush1.msra.mxu0 %v188
    %2968 = vmatprep.subr.mxu0 0.0
    %2969 = vmatpush1.msra.mxu0 %v189
    %2970 = vmatprep.subr.mxu0 0.0
    %2971 = vmatpush1.msra.mxu0 %v190
    %2972 = vmatprep.subr.mxu0 0.0
    %2973 = vmatpush1.msra.mxu0 %v191
    %2974 = vmatprep.subr.mxu0 0.0
    %2975 = vmatpush1.msra.mxu0 %v192
    %2976 = vmatprep.subr.mxu0 0.0
    %2977 = vmatpush1.msra.mxu0 %v193
    %2978 = vmatprep.subr.mxu0 0.0
    %2979 = vmatpush1.msra.mxu0 %v194
    %2980 = vmatprep.subr.mxu0 0.0
    %2981 = vmatpush1.msra.mxu0 %v195
    %2982 = vmatprep.subr.mxu0 0.0
    %2983 = vmatpush1.msra.mxu0 %v196
    %2984 = vmatprep.subr.mxu0 0.0
    %2985 = vmatpush1.msra.mxu0 %v197
    %2986 = vmatprep.subr.mxu0 0.0
    %2987 = vmatpush1.msra.mxu0 %v198
    %2988 = vmatprep.subr.mxu0 0.0
    %2989 = vmatpush1.msra.mxu0 %v199
    %2990 = vmatprep.subr.mxu0 0.0
    %2991 = vmatpush1.msra.mxu0 0.0
    %2992 = vmatprep.subr.mxu0 0.0
    %2993 = vmatpush1.msra.mxu0 0.0
    %2994 = vmatprep.subr.mxu0 0.0
    %2995 = vmatpush1.msra.mxu0 0.0
    %2996 = vmatprep.subr.mxu0 0.0
    %2997 = vmatpush1.msra.mxu0 0.0
    %2998 = vmatprep.mubr.f32.mxu0 %v2863
    %2999 = vmatmul.mubr.f32.gmra.mrb[0].mxu0 %v2814
    %v3000 = vpop.f32.mrb[0].mxu0
    %v3001 = vadd.f32 0.0, %v3000
    %v3002 = vpop.f32.mrb[0].mxu0
    %3003 = vmatprep.mubr.f32.mxu0 %v2866
    %3004 = vmatmul.mubr.f32.gmra.mrb[0].mxu0 %v2816
    %v3005 = vpop.f32.mrb[0].mxu0
    %v3006 = vadd.f32 0.0, %v3005
    %v3007 = vpop.f32.mrb[0].mxu0
    %3008 = vmatprep.mubr.f32.mxu0 %v2869
    %3009 = vmatmul.mubr.f32.gmra.mrb[0].mxu0 %v2818
    %v3010 = vpop.f32.mrb[0].mxu0
    %v3011 = vadd.f32 0.0, %v3010
    %v3012 = vpop.f32.mrb[0].mxu0
    %3013 = vmatprep.mubr.f32.mxu0 %v2872
    %3014 = vmatmul.mubr.f32.gmra.mrb[0].mxu0 %v2820
    %v3015 = vpop.f32.mrb[0].mxu0
    %v3016 = vadd.f32 0.0, %v3015
    %v3017 = vpop.f32.mrb[0].mxu0
    %3018 = vmatprep.mubr.f32.mxu0 %v2875
    %3019 = vmatmul.mubr.f32.gmra.mrb[0].mxu0 %v2822
    %v3020 = vpop.f32.mrb[0].mxu0
    %v3021 = vadd.f32 0.0, %v3020
    %v3022 = vpop.f32.mrb[0].mxu0
    %3023 = vmatprep.mubr.f32.mxu0 %v2878
    %3024 = vmatmul.mubr.f32.gmra.mrb[0].mxu0 %v2824
    %v3025 = vpop.f32.mrb[0].mxu0
    %v3026 = vadd.f32 0.0, %v3025
    %v3027 = vpop.f32.mrb[0].mxu0
    %3028 = vmatprep.mubr.f32.mxu0 %v2881
    %3029 = vmatmul.mubr.f32.gmra.mrb[0].mxu0 %v2826
    %v3030 = vpop.f32.mrb[0].mxu0
    %v3031 = vadd.f32 0.0, %v3030
    %v3032 = vpop.f32.mrb[0].mxu0
    %3033 = vmatprep.mubr.f32.mxu0 %v2884
    %3034 = vmatmul.mubr.f32.gmra.mrb[0].mxu0 %v2828
    %v3035 = vpop.f32.mrb[0].mxu0
    %v3036 = vadd.f32 0.0, %v3035
    %v3037 = vpop.f32.mrb[0].mxu0
    %3038 = vmatprep.mubr.f32.mxu0 %v2887
    %3039 = vmatmul.mubr.f32.gmra.mrb[0].mxu0 %v2830
    %v3040 = vpop.f32.mrb[0].mxu0
    %v3041 = vadd.f32 0.0, %v3040
    %v3042 = vpop.f32.mrb[0].mxu0
    %3043 = vmatprep.mubr.f32.mxu0 %v2890
    %3044 = vmatmul.mubr.f32.gmra.mrb[0].mxu0 %v2832
    %v3045 = vpop.f32.mrb[0].mxu0
    %v3046 = vadd.f32 0.0, %v3045
    %v3047 = vpop.f32.mrb[0].mxu0
    %3048 = vmatprep.mubr.f32.mxu0 %v2893
    %3049 = vmatmul.mubr.f32.gmra.mrb[0].mxu0 %v2834
    %v3050 = vpop.f32.mrb[0].mxu0
    %v3051 = vadd.f32 0.0, %v3050
    %v3052 = vpop.f32.mrb[0].mxu0
    %3053 = vmatprep.mubr.f32.mxu0 %v2896
    %3054 = vmatmul.mubr.f32.gmra.mrb[0].mxu0 %v2836
    %v3055 = vpop.f32.mrb[0].mxu0
    %v3056 = vadd.f32 0.0, %v3055
    %v3057 = vpop.f32.mrb[0].mxu0
    %3058 = vmatprep.mubr.f32.mxu0 %v2899
    %3059 = vmatmul.mubr.f32.gmra.mrb[0].mxu0 %v2838
    %v3060 = vpop.f32.mrb[0].mxu0
    %v3061 = vadd.f32 0.0, %v3060
    %v3062 = vpop.f32.mrb[0].mxu0
    %3063 = vmatprep.mubr.f32.mxu0 %v2902
    %3064 = vmatmul.mubr.f32.gmra.mrb[0].mxu0 %v2840
    %v3065 = vpop.f32.mrb[0].mxu0
    %v3066 = vadd.f32 0.0, %v3065
    %v3067 = vpop.f32.mrb[0].mxu0
    %3068 = vmatprep.mubr.f32.mxu0 %v2905
    %3069 = vmatmul.mubr.f32.gmra.mrb[0].mxu0 %v2842
    %v3070 = vpop.f32.mrb[0].mxu0
    %v3071 = vadd.f32 0.0, %v3070
    %v3072 = vpop.f32.mrb[0].mxu0
    %3073 = vmatprep.mubr.f32.mxu0 %v2908
    %3074 = vmatmul.mubr.f32.gmra.mrb[0].mxu0 %v2844
    %v3075 = vpop.f32.mrb[0].mxu0
    %v3076 = vadd.f32 0.0, %v3075
    %v3077 = vpop.f32.mrb[0].mxu0
    %3078 = vmatprep.mubr.f32.mxu0 %v2911
    %3079 = vmatmul.mubr.f32.gmra.mrb[0].mxu0 %v2846
    %v3080 = vpop.f32.mrb[0].mxu0
    %v3081 = vadd.f32 0.0, %v3080
    %v3082 = vpop.f32.mrb[0].mxu0
    %3083 = vmatprep.mubr.f32.mxu0 %v2914
    %3084 = vmatmul.mubr.f32.gmra.mrb[0].mxu0 %v2848
    %v3085 = vpop.f32.mrb[0].mxu0
    %v3086 = vadd.f32 0.0, %v3085
    %v3087 = vpop.f32.mrb[0].mxu0
    %3088 = vmatprep.mubr.f32.mxu0 %v2917
    %3089 = vmatmul.mubr.f32.gmra.mrb[0].mxu0 %v2850
    %v3090 = vpop.f32.mrb[0].mxu0
    %v3091 = vadd.f32 0.0, %v3090
    %v3092 = vpop.f32.mrb[0].mxu0
    %3093 = vmatprep.mubr.f32.mxu0 %v2920
    %3094 = vmatmul.mubr.f32.gmra.mrb[0].mxu0 %v2852
    %v3095 = vpop.f32.mrb[0].mxu0
    %v3096 = vadd.f32 0.0, %v3095
    %v3097 = vpop.f32.mrb[0].mxu0
    %3098 = vmatprep.mubr.f32.mxu0 %v2923
    %3099 = vmatmul.mubr.f32.gmra.mrb[0].mxu0 %v2854
    %v3100 = vpop.f32.mrb[0].mxu0
    %v3101 = vadd.f32 0.0, %v3100
    %v3102 = vpop.f32.mrb[0].mxu0
    %3103 = vmatprep.mubr.f32.mxu0 %v2926
    %3104 = vmatmul.mubr.f32.gmra.mrb[0].mxu0 %v2856
    %v3105 = vpop.f32.mrb[0].mxu0
    %v3106 = vadd.f32 0.0, %v3105
    %v3107 = vpop.f32.mrb[0].mxu0
    %3108 = vmatprep.mubr.f32.mxu0 %v2929
    %3109 = vmatmul.mubr.f32.gmra.mrb[0].mxu0 %v2858
    %v3110 = vpop.f32.mrb[0].mxu0
    %v3111 = vadd.f32 0.0, %v3110
    %v3112 = vpop.f32.mrb[0].mxu0
    %3113 = vmatprep.mubr.f32.mxu0 %v2932
    %3114 = vmatmul.mubr.f32.gmra.mrb[0].mxu0 %v2860
    %v3115 = vpop.f32.mrb[0].mxu0
    %v3116 = vadd.f32 0.0, %v3115
    %v3117 = vpop.f32.mrb[0].mxu0
    %3118 = vdwg.mxu0
    %s3119 = scalar_lea.vmem %s1, 256
    %v3120 = vld [vmem:[%s3119] sm:$0xff]
    %v3121 = vld [vmem:[%s3119 + $0x8] sm:$0xff]
    %v3122 = vld [vmem:[%s3119 + $0x10] sm:$0xff]
    %v3123 = vld [vmem:[%s3119 + $0x18] sm:$0xff]
    %v3124 = vld [vmem:[%s3119 + $0x20] sm:$0xff]
    %v3125 = vld [vmem:[%s3119 + $0x28] sm:$0xff]
    %v3126 = vld [vmem:[%s3119 + $0x30] sm:$0xf]
    %v3127 = vld [vmem:[%s3119 + $0x38] sm:$0xf]
    %v3129 = vsel %vm515, %v3001, 0
    %v3132 = vsel %vm515, %v3006, 0
    %v3135 = vsel %vm515, %v3011, 0
    %v3138 = vsel %vm515, %v3016, 0
    %v3141 = vsel %vm515, %v3021, 0
    %v3144 = vsel %vm515, %v3026, 0
    %v3147 = vsel %vm515, %v3031, 0
    %v3150 = vsel %vm515, %v3036, 0
    %v3153 = vsel %vm515, %v3041, 0
    %v3156 = vsel %vm515, %v3046, 0
    %v3159 = vsel %vm515, %v3051, 0
    %v3162 = vsel %vm515, %v3056, 0
    %v3165 = vsel %vm515, %v3061, 0
    %v3168 = vsel %vm515, %v3066, 0
    %v3171 = vsel %vm515, %v3071, 0
    %v3174 = vsel %vm515, %v3076, 0
    %v3177 = vsel %vm515, %v3081, 0
    %v3180 = vsel %vm515, %v3086, 0
    %v3183 = vsel %vm515, %v3091, 0
    %v3186 = vsel %vm515, %v3096, 0
    %v3189 = vsel %vm515, %v3101, 0
    %v3192 = vsel %vm515, %v3106, 0
    %v3195 = vsel %vm515, %v3111, 0
    %v3198 = vsel %vm515, %v3116, 0
    %v3201 = vsel %vm588, %v3126, 0
    %v3204 = vsel %vm588, %v3127, 0
    %3206 = vmatprep.subr.mxu0 %v3121
    %3207 = vmatpush1.msra.mxu0 %v3120
    %3208 = vmatprep.subr.mxu0 %v3123
    %3209 = vmatpush1.msra.mxu0 %v3122
    %3210 = vmatprep.subr.mxu0 %v3125
    %3211 = vmatpush1.msra.mxu0 %v3124
    %3212 = vmatprep.subr.mxu0 %v3204
    %3213 = vmatpush1.msra.mxu0 %v3201
    %3214 = vmatprep.subr.mxu0 0.0
    %3215 = vmatpush1.msra.mxu0 0.0
    %3216 = vmatprep.subr.mxu0 0.0
    %3217 = vmatpush1.msra.mxu0 0.0
    %3218 = vmatprep.subr.mxu0 0.0
    %3219 = vmatpush1.msra.mxu0 0.0
    %3220 = vmatprep.subr.mxu0 0.0
    %3221 = vmatpush1.msra.mxu0 0.0
    %3222 = vmatprep.subr.mxu0 0.0
    %3223 = vmatpush1.msra.mxu0 0.0
    %3224 = vmatprep.subr.mxu0 0.0
    %3225 = vmatpush1.msra.mxu0 0.0
    %3226 = vmatprep.subr.mxu0 0.0
    %3227 = vmatpush1.msra.mxu0 0.0
    %3228 = vmatprep.subr.mxu0 0.0
    %3229 = vmatpush1.msra.mxu0 0.0
    %3230 = vmatprep.subr.mxu0 0.0
    %3231 = vmatpush1.msra.mxu0 0.0
    %3232 = vmatprep.subr.mxu0 0.0
    %3233 = vmatpush1.msra.mxu0 0.0
    %3234 = vmatprep.subr.mxu0 0.0
    %3235 = vmatpush1.msra.mxu0 0.0
    %3236 = vmatprep.subr.mxu0 0.0
    %3237 = vmatpush1.msra.mxu0 0.0
    %3238 = vmatprep.subr.mxu0 0.0
    %3239 = vmatpush1.msra.mxu0 0.0
    %3240 = vmatprep.subr.mxu0 0.0
    %3241 = vmatpush1.msra.mxu0 0.0
    %3242 = vmatprep.subr.mxu0 0.0
    %3243 = vmatpush1.msra.mxu0 0.0
    %3244 = vmatprep.subr.mxu0 0.0
    %3245 = vmatpush1.msra.mxu0 0.0
    %3246 = vmatprep.subr.mxu0 0.0
    %3247 = vmatpush1.msra.mxu0 0.0
    %3248 = vmatprep.subr.mxu0 0.0
    %3249 = vmatpush1.msra.mxu0 0.0
    %3250 = vmatprep.subr.mxu0 0.0
    %3251 = vmatpush1.msra.mxu0 0.0
    %3252 = vmatprep.subr.mxu0 0.0
    %3253 = vmatpush1.msra.mxu0 0.0
    %3254 = vmatprep.subr.mxu0 0.0
    %3255 = vmatpush1.msra.mxu0 0.0
    %3256 = vmatprep.subr.mxu0 0.0
    %3257 = vmatpush1.msra.mxu0 0.0
    %3258 = vmatprep.subr.mxu0 0.0
    %3259 = vmatpush1.msra.mxu0 0.0
    %3260 = vmatprep.subr.mxu0 0.0
    %3261 = vmatpush1.msra.mxu0 0.0
    %3262 = vmatprep.subr.mxu0 0.0
    %3263 = vmatpush1.msra.mxu0 0.0
    %3264 = vmatprep.subr.mxu0 0.0
    %3265 = vmatpush1.msra.mxu0 0.0
    %3266 = vmatprep.subr.mxu0 0.0
    %3267 = vmatpush1.msra.mxu0 0.0
    %3268 = vmatprep.subr.mxu0 0.0
    %3269 = vmatpush1.msra.mxu0 0.0
    %3270 = vmatprep.mubr.f32.mxu0 0.0
    %3271 = vmatmul.mubr.f32.gmra.mrb[0].mxu0 %v3129
    %v3272 = vpop.f32.mrb[0].mxu0
    %v3273 = vadd.f32 0.0, %v3272
    %v3274 = vpop.f32.mrb[0].mxu0
    %v3275 = vadd.f32 0.0, %v3274
    %3276 = vmatprep.mubr.f32.mxu0 0.0
    %3277 = vmatmul.mubr.f32.gmra.mrb[0].mxu0 %v3132
    %v3278 = vpop.f32.mrb[0].mxu0
    %v3279 = vadd.f32 0.0, %v3278
    %v3280 = vpop.f32.mrb[0].mxu0
    %v3281 = vadd.f32 0.0, %v3280
    %3282 = vmatprep.mubr.f32.mxu0 0.0
    %3283 = vmatmul.mubr.f32.gmra.mrb[0].mxu0 %v3135
    %v3284 = vpop.f32.mrb[0].mxu0
    %v3285 = vadd.f32 0.0, %v3284
    %v3286 = vpop.f32.mrb[0].mxu0
    %v3287 = vadd.f32 0.0, %v3286
    %3288 = vmatprep.mubr.f32.mxu0 0.0
    %3289 = vmatmul.mubr.f32.gmra.mrb[0].mxu0 %v3138
    %v3290 = vpop.f32.mrb[0].mxu0
    %v3291 = vadd.f32 0.0, %v3290
    %v3292 = vpop.f32.mrb[0].mxu0
    %v3293 = vadd.f32 0.0, %v3292
    %3294 = vmatprep.mubr.f32.mxu0 0.0
    %3295 = vmatmul.mubr.f32.gmra.mrb[0].mxu0 %v3141
    %v3296 = vpop.f32.mrb[0].mxu0
    %v3297 = vadd.f32 0.0, %v3296
    %v3298 = vpop.f32.mrb[0].mxu0
    %v3299 = vadd.f32 0.0, %v3298
    %3300 = vmatprep.mubr.f32.mxu0 0.0
    %3301 = vmatmul.mubr.f32.gmra.mrb[0].mxu0 %v3144
    %v3302 = vpop.f32.mrb[0].mxu0
    %v3303 = vadd.f32 0.0, %v3302
    %v3304 = vpop.f32.mrb[0].mxu0
    %v3305 = vadd.f32 0.0, %v3304
    %3306 = vmatprep.mubr.f32.mxu0 0.0
    %3307 = vmatmul.mubr.f32.gmra.mrb[0].mxu0 %v3147
    %v3308 = vpop.f32.mrb[0].mxu0
    %v3309 = vadd.f32 0.0, %v3308
    %v3310 = vpop.f32.mrb[0].mxu0
    %v3311 = vadd.f32 0.0, %v3310
    %3312 = vmatprep.mubr.f32.mxu0 0.0
    %3313 = vmatmul.mubr.f32.gmra.mrb[0].mxu0 %v3150
    %v3314 = vpop.f32.mrb[0].mxu0
    %v3315 = vadd.f32 0.0, %v3314
    %v3316 = vpop.f32.mrb[0].mxu0
    %v3317 = vadd.f32 0.0, %v3316
    %3318 = vmatprep.mubr.f32.mxu0 0.0
    %3319 = vmatmul.mubr.f32.gmra.mrb[0].mxu0 %v3153
    %v3320 = vpop.f32.mrb[0].mxu0
    %v3321 = vadd.f32 0.0, %v3320
    %v3322 = vpop.f32.mrb[0].mxu0
    %v3323 = vadd.f32 0.0, %v3322
    %3324 = vmatprep.mubr.f32.mxu0 0.0
    %3325 = vmatmul.mubr.f32.gmra.mrb[0].mxu0 %v3156
    %v3326 = vpop.f32.mrb[0].mxu0
    %v3327 = vadd.f32 0.0, %v3326
    %v3328 = vpop.f32.mrb[0].mxu0
    %v3329 = vadd.f32 0.0, %v3328
    %3330 = vmatprep.mubr.f32.mxu0 0.0
    %3331 = vmatmul.mubr.f32.gmra.mrb[0].mxu0 %v3159
    %v3332 = vpop.f32.mrb[0].mxu0
    %v3333 = vadd.f32 0.0, %v3332
    %v3334 = vpop.f32.mrb[0].mxu0
    %v3335 = vadd.f32 0.0, %v3334
    %3336 = vmatprep.mubr.f32.mxu0 0.0
    %3337 = vmatmul.mubr.f32.gmra.mrb[0].mxu0 %v3162
    %v3338 = vpop.f32.mrb[0].mxu0
    %v3339 = vadd.f32 0.0, %v3338
    %v3340 = vpop.f32.mrb[0].mxu0
    %v3341 = vadd.f32 0.0, %v3340
    %3342 = vmatprep.mubr.f32.mxu0 0.0
    %3343 = vmatmul.mubr.f32.gmra.mrb[0].mxu0 %v3165
    %v3344 = vpop.f32.mrb[0].mxu0
    %v3345 = vadd.f32 0.0, %v3344
    %v3346 = vpop.f32.mrb[0].mxu0
    %v3347 = vadd.f32 0.0, %v3346
    %3348 = vmatprep.mubr.f32.mxu0 0.0
    %3349 = vmatmul.mubr.f32.gmra.mrb[0].mxu0 %v3168
    %v3350 = vpop.f32.mrb[0].mxu0
    %v3351 = vadd.f32 0.0, %v3350
    %v3352 = vpop.f32.mrb[0].mxu0
    %v3353 = vadd.f32 0.0, %v3352
    %3354 = vmatprep.mubr.f32.mxu0 0.0
    %3355 = vmatmul.mubr.f32.gmra.mrb[0].mxu0 %v3171
    %v3356 = vpop.f32.mrb[0].mxu0
    %v3357 = vadd.f32 0.0, %v3356
    %v3358 = vpop.f32.mrb[0].mxu0
    %v3359 = vadd.f32 0.0, %v3358
    %3360 = vmatprep.mubr.f32.mxu0 0.0
    %3361 = vmatmul.mubr.f32.gmra.mrb[0].mxu0 %v3174
    %v3362 = vpop.f32.mrb[0].mxu0
    %v3363 = vadd.f32 0.0, %v3362
    %v3364 = vpop.f32.mrb[0].mxu0
    %v3365 = vadd.f32 0.0, %v3364
    %3366 = vmatprep.mubr.f32.mxu0 0.0
    %3367 = vmatmul.mubr.f32.gmra.mrb[0].mxu0 %v3177
    %v3368 = vpop.f32.mrb[0].mxu0
    %v3369 = vadd.f32 0.0, %v3368
    %v3370 = vpop.f32.mrb[0].mxu0
    %v3371 = vadd.f32 0.0, %v3370
    %3372 = vmatprep.mubr.f32.mxu0 0.0
    %3373 = vmatmul.mubr.f32.gmra.mrb[0].mxu0 %v3180
    %v3374 = vpop.f32.mrb[0].mxu0
    %v3375 = vadd.f32 0.0, %v3374
    %v3376 = vpop.f32.mrb[0].mxu0
    %v3377 = vadd.f32 0.0, %v3376
    %3378 = vmatprep.mubr.f32.mxu0 0.0
    %3379 = vmatmul.mubr.f32.gmra.mrb[0].mxu0 %v3183
    %v3380 = vpop.f32.mrb[0].mxu0
    %v3381 = vadd.f32 0.0, %v3380
    %v3382 = vpop.f32.mrb[0].mxu0
    %v3383 = vadd.f32 0.0, %v3382
    %3384 = vmatprep.mubr.f32.mxu0 0.0
    %3385 = vmatmul.mubr.f32.gmra.mrb[0].mxu0 %v3186
    %v3386 = vpop.f32.mrb[0].mxu0
    %v3387 = vadd.f32 0.0, %v3386
    %v3388 = vpop.f32.mrb[0].mxu0
    %v3389 = vadd.f32 0.0, %v3388
    %3390 = vmatprep.mubr.f32.mxu0 0.0
    %3391 = vmatmul.mubr.f32.gmra.mrb[0].mxu0 %v3189
    %v3392 = vpop.f32.mrb[0].mxu0
    %v3393 = vadd.f32 0.0, %v3392
    %v3394 = vpop.f32.mrb[0].mxu0
    %v3395 = vadd.f32 0.0, %v3394
    %3396 = vmatprep.mubr.f32.mxu0 0.0
    %3397 = vmatmul.mubr.f32.gmra.mrb[0].mxu0 %v3192
    %v3398 = vpop.f32.mrb[0].mxu0
    %v3399 = vadd.f32 0.0, %v3398
    %v3400 = vpop.f32.mrb[0].mxu0
    %v3401 = vadd.f32 0.0, %v3400
    %3402 = vmatprep.mubr.f32.mxu0 0.0
    %3403 = vmatmul.mubr.f32.gmra.mrb[0].mxu0 %v3195
    %v3404 = vpop.f32.mrb[0].mxu0
    %v3405 = vadd.f32 0.0, %v3404
    %v3406 = vpop.f32.mrb[0].mxu0
    %v3407 = vadd.f32 0.0, %v3406
    %3408 = vmatprep.mubr.f32.mxu0 0.0
    %3409 = vmatmul.mubr.f32.gmra.mrb[0].mxu0 %v3198
    %v3410 = vpop.f32.mrb[0].mxu0
    %v3411 = vadd.f32 0.0, %v3410
    %v3412 = vpop.f32.mrb[0].mxu0
    %v3413 = vadd.f32 0.0, %v3412
    %3414 = vdwg.mxu0
    %v3415 = vadd.f32 %v2765, %v3273
    %v3416 = vadd.f32 %v2766, %v3275
    %v3417 = vadd.f32 %v2767, %v3279
    %v3418 = vadd.f32 %v2768, %v3281
    %v3419 = vadd.f32 %v2769, %v3285
    %v3420 = vadd.f32 %v2770, %v3287
    %v3421 = vadd.f32 %v2771, %v3291
    %v3422 = vadd.f32 %v2772, %v3293
    %v3423 = vadd.f32 %v2773, %v3297
    %v3424 = vadd.f32 %v2774, %v3299
    %v3425 = vadd.f32 %v2775, %v3303
    %v3426 = vadd.f32 %v2776, %v3305
    %v3427 = vadd.f32 %v2777, %v3309
    %v3428 = vadd.f32 %v2778, %v3311
    %v3429 = vadd.f32 %v2779, %v3315
    %v3430 = vadd.f32 %v2780, %v3317
    %v3431 = vadd.f32 %v2781, %v3321
    %v3432 = vadd.f32 %v2782, %v3323
    %v3433 = vadd.f32 %v2783, %v3327
    %v3434 = vadd.f32 %v2784, %v3329
    %v3435 = vadd.f32 %v2785, %v3333
    %v3436 = vadd.f32 %v2786, %v3335
    %v3437 = vadd.f32 %v2787, %v3339
    %v3438 = vadd.f32 %v2788, %v3341
    %v3439 = vadd.f32 %v2789, %v3345
    %v3440 = vadd.f32 %v2790, %v3347
    %v3441 = vadd.f32 %v2791, %v3351
    %v3442 = vadd.f32 %v2792, %v3353
    %v3443 = vadd.f32 %v2793, %v3357
    %v3444 = vadd.f32 %v2794, %v3359
    %v3445 = vadd.f32 %v2795, %v3363
    %v3446 = vadd.f32 %v2796, %v3365
    %v3447 = vadd.f32 %v2797, %v3369
    %v3448 = vadd.f32 %v2798, %v3371
    %v3449 = vadd.f32 %v2799, %v3375
    %v3450 = vadd.f32 %v2800, %v3377
    %v3451 = vadd.f32 %v2801, %v3381
    %v3452 = vadd.f32 %v2802, %v3383
    %v3453 = vadd.f32 %v2803, %v3387
    %v3454 = vadd.f32 %v2804, %v3389
    %v3455 = vadd.f32 %v2805, %v3393
    %v3456 = vadd.f32 %v2806, %v3395
    %v3457 = vadd.f32 %v2807, %v3399
    %v3458 = vadd.f32 %v2808, %v3401
    %v3459 = vadd.f32 %v2809, %v3405
    %v3460 = vadd.f32 %v2810, %v3407
    %v3461 = vadd.f32 %v2811, %v3411
    %v3462 = vadd.f32 %v2812, %v3413
    %v3463 = vld [vmem:[#allocation2] sm:$0xff]
    %v3464 = vld [vmem:[#allocation2 + $0x8] sm:$0xff]
    %v3465 = vld [vmem:[#allocation2 + $0x10] sm:$0xff]
    %v3466 = vld [vmem:[#allocation2 + $0x18] sm:$0xff]
    %v3467 = vld [vmem:[#allocation2 + $0x20] sm:$0xff]
    %v3468 = vld [vmem:[#allocation2 + $0x28] sm:$0xff]
    %v3469 = vld [vmem:[#allocation2 + $0x30] sm:$0xff]
    %v3470 = vld [vmem:[#allocation2 + $0x38] sm:$0xff]
    %v3471 = vld [vmem:[#allocation2 + $0x40] sm:$0xff]
    %v3472 = vld [vmem:[#allocation2 + $0x48] sm:$0xff]
    %v3473 = vld [vmem:[#allocation2 + $0x50] sm:$0xff]
    %v3474 = vld [vmem:[#allocation2 + $0x58] sm:$0xff]
    %v3475 = vld [vmem:[#allocation2 + $0x60] sm:$0xff]
    %v3476 = vld [vmem:[#allocation2 + $0x68] sm:$0xff]
    %v3477 = vld [vmem:[#allocation2 + $0x70] sm:$0xff]
    %v3478 = vld [vmem:[#allocation2 + $0x78] sm:$0xff]
    %v3479 = vld [vmem:[#allocation2 + $0x80] sm:$0xff]
    %v3480 = vld [vmem:[#allocation2 + $0x88] sm:$0xff]
    %v3481 = vld [vmem:[#allocation2 + $0x90] sm:$0xff]
    %v3482 = vld [vmem:[#allocation2 + $0x98] sm:$0xff]
    %v3483 = vld [vmem:[#allocation2 + $0xa0] sm:$0xff]
    %v3484 = vld [vmem:[#allocation2 + $0xa8] sm:$0xff]
    %v3485 = vld [vmem:[#allocation2 + $0xb0] sm:$0xff]
    %v3486 = vld [vmem:[#allocation2 + $0xb8] sm:$0xff]
    %vm3487 = vcmask 523264
    %v3489 = vsel %vm3487, %v3464, 0
    %v3492 = vsel %vm3487, %v3466, 0
    %v3495 = vsel %vm3487, %v3468, 0
    %v3498 = vsel %vm3487, %v3470, 0
    %v3501 = vsel %vm3487, %v3472, 0
    %v3504 = vsel %vm3487, %v3474, 0
    %v3507 = vsel %vm3487, %v3476, 0
    %v3510 = vsel %vm3487, %v3478, 0
    %v3513 = vsel %vm3487, %v3480, 0
    %v3516 = vsel %vm3487, %v3482, 0
    %v3519 = vsel %vm3487, %v3484, 0
    %v3522 = vsel %vm3487, %v3486, 0
    %3524 = vmatprep.subr.mxu0 %v3416
    %3525 = vmatpush1.msra.mxu0 %v3415
    %3526 = vmatprep.subr.mxu0 %v3418
    %3527 = vmatpush1.msra.mxu0 %v3417
    %3528 = vmatprep.subr.mxu0 %v3420
    %3529 = vmatpush1.msra.mxu0 %v3419
    %3530 = vmatprep.subr.mxu0 %v3422
    %3531 = vmatpush1.msra.mxu0 %v3421
    %3532 = vmatprep.subr.mxu0 %v3424
    %3533 = vmatpush1.msra.mxu0 %v3423
    %3534 = vmatprep.subr.mxu0 %v3426
    %3535 = vmatpush1.msra.mxu0 %v3425
    %3536 = vmatprep.subr.mxu0 %v3428
    %3537 = vmatpush1.msra.mxu0 %v3427
    %3538 = vmatprep.subr.mxu0 %v3430
    %3539 = vmatpush1.msra.mxu0 %v3429
    %3540 = vmatprep.subr.mxu0 %v3432
    %3541 = vmatpush1.msra.mxu0 %v3431
    %3542 = vmatprep.subr.mxu0 %v3434
    %3543 = vmatpush1.msra.mxu0 %v3433
    %3544 = vmatprep.subr.mxu0 %v3436
    %3545 = vmatpush1.msra.mxu0 %v3435
    %3546 = vmatprep.subr.mxu0 %v3438
    %3547 = vmatpush1.msra.mxu0 %v3437
    %3548 = vmatprep.subr.mxu0 %v3440
    %3549 = vmatpush1.msra.mxu0 %v3439
    %3550 = vmatprep.subr.mxu0 %v3442
    %3551 = vmatpush1.msra.mxu0 %v3441
    %3552 = vmatprep.subr.mxu0 %v3444
    %3553 = vmatpush1.msra.mxu0 %v3443
    %3554 = vmatprep.subr.mxu0 %v3446
    %3555 = vmatpush1.msra.mxu0 %v3445
    %3556 = vmatprep.subr.mxu0 %v3448
    %3557 = vmatpush1.msra.mxu0 %v3447
    %3558 = vmatprep.subr.mxu0 %v3450
    %3559 = vmatpush1.msra.mxu0 %v3449
    %3560 = vmatprep.subr.mxu0 %v3452
    %3561 = vmatpush1.msra.mxu0 %v3451
    %3562 = vmatprep.subr.mxu0 %v3454
    %3563 = vmatpush1.msra.mxu0 %v3453
    %3564 = vmatprep.subr.mxu0 %v3456
    %3565 = vmatpush1.msra.mxu0 %v3455
    %3566 = vmatprep.subr.mxu0 %v3458
    %3567 = vmatpush1.msra.mxu0 %v3457
    %3568 = vmatprep.subr.mxu0 %v3460
    %3569 = vmatpush1.msra.mxu0 %v3459
    %3570 = vmatprep.subr.mxu0 %v3462
    %3571 = vmatpush1.msra.mxu0 %v3461
    %3572 = vmatprep.subr.mxu0 0.0
    %3573 = vmatpush1.msra.mxu0 0.0
    %3574 = vmatprep.subr.mxu0 0.0
    %3575 = vmatpush1.msra.mxu0 0.0
    %3576 = vmatprep.subr.mxu0 0.0
    %3577 = vmatpush1.msra.mxu0 0.0
    %3578 = vmatprep.subr.mxu0 0.0
    %3579 = vmatpush1.msra.mxu0 0.0
    %3580 = vmatprep.subr.mxu0 0.0
    %3581 = vmatpush1.msra.mxu0 0.0
    %3582 = vmatprep.subr.mxu0 0.0
    %3583 = vmatpush1.msra.mxu0 0.0
    %3584 = vmatprep.subr.mxu0 0.0
    %3585 = vmatpush1.msra.mxu0 0.0
    %3586 = vmatprep.subr.mxu0 0.0
    %3587 = vmatpush1.msra.mxu0 0.0
    %3588 = vmatprep.mubr.f32.mxu0 %v3489
    %3589 = vmatmul.mubr.f32.gmra.mrb[0].mxu0 %v3463
    %v3590 = vpop.f32.mrb[0].mxu0
    %v3591 = vadd.f32 0.0, %v3590
    %v3592 = vpop.f32.mrb[0].mxu0
    %v3593 = vadd.f32 0.0, %v3592
    %3594 = vmatprep.mubr.f32.mxu0 %v3492
    %3595 = vmatmul.mubr.f32.gmra.mrb[0].mxu0 %v3465
    %v3596 = vpop.f32.mrb[0].mxu0
    %v3597 = vadd.f32 0.0, %v3596
    %v3598 = vpop.f32.mrb[0].mxu0
    %v3599 = vadd.f32 0.0, %v3598
    %3600 = vmatprep.mubr.f32.mxu0 %v3495
    %3601 = vmatmul.mubr.f32.gmra.mrb[0].mxu0 %v3467
    %v3602 = vpop.f32.mrb[0].mxu0
    %v3603 = vadd.f32 0.0, %v3602
    %v3604 = vpop.f32.mrb[0].mxu0
    %v3605 = vadd.f32 0.0, %v3604
    %3606 = vmatprep.mubr.f32.mxu0 %v3498
    %3607 = vmatmul.mubr.f32.gmra.mrb[0].mxu0 %v3469
    %v3608 = vpop.f32.mrb[0].mxu0
    %v3609 = vadd.f32 0.0, %v3608
    %v3610 = vpop.f32.mrb[0].mxu0
    %v3611 = vadd.f32 0.0, %v3610
    %3612 = vmatprep.mubr.f32.mxu0 %v3501
    %3613 = vmatmul.mubr.f32.gmra.mrb[0].mxu0 %v3471
    %v3614 = vpop.f32.mrb[0].mxu0
    %v3615 = vadd.f32 0.0, %v3614
    %v3616 = vpop.f32.mrb[0].mxu0
    %v3617 = vadd.f32 0.0, %v3616
    %3618 = vmatprep.mubr.f32.mxu0 %v3504
    %3619 = vmatmul.mubr.f32.gmra.mrb[0].mxu0 %v3473
    %v3620 = vpop.f32.mrb[0].mxu0
    %v3621 = vadd.f32 0.0, %v3620
    %v3622 = vpop.f32.mrb[0].mxu0
    %v3623 = vadd.f32 0.0, %v3622
    %3624 = vmatprep.mubr.f32.mxu0 %v3507
    %3625 = vmatmul.mubr.f32.gmra.mrb[0].mxu0 %v3475
    %v3626 = vpop.f32.mrb[0].mxu0
    %v3627 = vadd.f32 0.0, %v3626
    %v3628 = vpop.f32.mrb[0].mxu0
    %v3629 = vadd.f32 0.0, %v3628
    %3630 = vmatprep.mubr.f32.mxu0 %v3510
    %3631 = vmatmul.mubr.f32.gmra.mrb[0].mxu0 %v3477
    %v3632 = vpop.f32.mrb[0].mxu0
    %v3633 = vadd.f32 0.0, %v3632
    %v3634 = vpop.f32.mrb[0].mxu0
    %v3635 = vadd.f32 0.0, %v3634
    %3636 = vmatprep.mubr.f32.mxu0 %v3513
    %3637 = vmatmul.mubr.f32.gmra.mrb[0].mxu0 %v3479
    %v3638 = vpop.f32.mrb[0].mxu0
    %v3639 = vadd.f32 0.0, %v3638
    %v3640 = vpop.f32.mrb[0].mxu0
    %v3641 = vadd.f32 0.0, %v3640
    %3642 = vmatprep.mubr.f32.mxu0 %v3516
    %3643 = vmatmul.mubr.f32.gmra.mrb[0].mxu0 %v3481
    %v3644 = vpop.f32.mrb[0].mxu0
    %v3645 = vadd.f32 0.0, %v3644
    %v3646 = vpop.f32.mrb[0].mxu0
    %v3647 = vadd.f32 0.0, %v3646
    %3648 = vmatprep.mubr.f32.mxu0 %v3519
    %3649 = vmatmul.mubr.f32.gmra.mrb[0].mxu0 %v3483
    %v3650 = vpop.f32.mrb[0].mxu0
    %v3651 = vadd.f32 0.0, %v3650
    %v3652 = vpop.f32.mrb[0].mxu0
    %v3653 = vadd.f32 0.0, %v3652
    %3654 = vmatprep.mubr.f32.mxu0 %v3522
    %3655 = vmatmul.mubr.f32.gmra.mrb[0].mxu0 %v3485
    %v3656 = vpop.f32.mrb[0].mxu0
    %v3657 = vadd.f32 0.0, %v3656
    %v3658 = vpop.f32.mrb[0].mxu0
    %v3659 = vadd.f32 0.0, %v3658
    %3660 = vdwg.mxu0
    %v3661 = vld [vmem:[#allocation4] sm:$0xff]
    %v3662 = vld [vmem:[#allocation4 + $0x8] sm:$0xff]
    %v3663 = vld [vmem:[#allocation4 + $0x10] sm:$0xff]
    %v3664 = vld [vmem:[#allocation4 + $0x18] sm:$0xff]
    %v3665 = vld [vmem:[#allocation4 + $0x20] sm:$0xff]
    %v3666 = vld [vmem:[#allocation4 + $0x28] sm:$0xff]
    %v3667 = vld [vmem:[#allocation4 + $0x30] sm:$0xff]
    %v3668 = vld [vmem:[#allocation4 + $0x38] sm:$0xff]
    %v3669 = vld [vmem:[#allocation4 + $0x40] sm:$0xff]
    %v3670 = vld [vmem:[#allocation4 + $0x48] sm:$0xff]
    %v3671 = vld [vmem:[#allocation4 + $0x50] sm:$0xff]
    %v3672 = vld [vmem:[#allocation4 + $0x58] sm:$0xff]
    %v3673 = vld [vmem:[#allocation4 + $0x60] sm:$0xff]
    %v3674 = vld [vmem:[#allocation4 + $0x68] sm:$0xff]
    %v3675 = vld [vmem:[#allocation4 + $0x70] sm:$0xff]
    %v3676 = vld [vmem:[#allocation4 + $0x78] sm:$0xff]
    %v3677 = vld [vmem:[#allocation4 + $0x80] sm:$0xff]
    %v3678 = vld [vmem:[#allocation4 + $0x88] sm:$0xff]
    %v3679 = vld [vmem:[#allocation4 + $0x90] sm:$0xff]
    %v3680 = vld [vmem:[#allocation4 + $0x98] sm:$0xff]
    %v3681 = vld [vmem:[#allocation4 + $0xa0] sm:$0xff]
    %v3682 = vld [vmem:[#allocation4 + $0xa8] sm:$0xff]
    %v3683 = vld [vmem:[#allocation4 + $0xb0] sm:$0xff]
    %v3684 = vld [vmem:[#allocation4 + $0xb8] sm:$0xff]
    %v3686 = vsel %vm3487, %v3662, 0
    %v3689 = vsel %vm3487, %v3664, 0
    %v3692 = vsel %vm3487, %v3666, 0
    %v3695 = vsel %vm3487, %v3668, 0
    %v3698 = vsel %vm3487, %v3670, 0
    %v3701 = vsel %vm3487, %v3672, 0
    %v3704 = vsel %vm3487, %v3674, 0
    %v3707 = vsel %vm3487, %v3676, 0
    %v3710 = vsel %vm3487, %v3678, 0
    %v3713 = vsel %vm3487, %v3680, 0
    %v3716 = vsel %vm3487, %v3682, 0
    %v3719 = vsel %vm3487, %v3684, 0
    %3721 = vmatprep.subr.mxu0 %v3416
    %3722 = vmatpush1.msra.mxu0 %v3415
    %3723 = vmatprep.subr.mxu0 %v3418
    %3724 = vmatpush1.msra.mxu0 %v3417
    %3725 = vmatprep.subr.mxu0 %v3420
    %3726 = vmatpush1.msra.mxu0 %v3419
    %3727 = vmatprep.subr.mxu0 %v3422
    %3728 = vmatpush1.msra.mxu0 %v3421
    %3729 = vmatprep.subr.mxu0 %v3424
    %3730 = vmatpush1.msra.mxu0 %v3423
    %3731 = vmatprep.subr.mxu0 %v3426
    %3732 = vmatpush1.msra.mxu0 %v3425
    %3733 = vmatprep.subr.mxu0 %v3428
    %3734 = vmatpush1.msra.mxu0 %v3427
    %3735 = vmatprep.subr.mxu0 %v3430
    %3736 = vmatpush1.msra.mxu0 %v3429
    %3737 = vmatprep.subr.mxu0 %v3432
    %3738 = vmatpush1.msra.mxu0 %v3431
    %3739 = vmatprep.subr.mxu0 %v3434
    %3740 = vmatpush1.msra.mxu0 %v3433
    %3741 = vmatprep.subr.mxu0 %v3436
    %3742 = vmatpush1.msra.mxu0 %v3435
    %3743 = vmatprep.subr.mxu0 %v3438
    %3744 = vmatpush1.msra.mxu0 %v3437
    %3745 = vmatprep.subr.mxu0 %v3440
    %3746 = vmatpush1.msra.mxu0 %v3439
    %3747 = vmatprep.subr.mxu0 %v3442
    %3748 = vmatpush1.msra.mxu0 %v3441
    %3749 = vmatprep.subr.mxu0 %v3444
    %3750 = vmatpush1.msra.mxu0 %v3443
    %3751 = vmatprep.subr.mxu0 %v3446
    %3752 = vmatpush1.msra.mxu0 %v3445
    %3753 = vmatprep.subr.mxu0 %v3448
    %3754 = vmatpush1.msra.mxu0 %v3447
    %3755 = vmatprep.subr.mxu0 %v3450
    %3756 = vmatpush1.msra.mxu0 %v3449
    %3757 = vmatprep.subr.mxu0 %v3452
    %3758 = vmatpush1.msra.mxu0 %v3451
    %3759 = vmatprep.subr.mxu0 %v3454
    %3760 = vmatpush1.msra.mxu0 %v3453
    %3761 = vmatprep.subr.mxu0 %v3456
    %3762 = vmatpush1.msra.mxu0 %v3455
    %3763 = vmatprep.subr.mxu0 %v3458
    %3764 = vmatpush1.msra.mxu0 %v3457
    %3765 = vmatprep.subr.mxu0 %v3460
    %3766 = vmatpush1.msra.mxu0 %v3459
    %3767 = vmatprep.subr.mxu0 %v3462
    %3768 = vmatpush1.msra.mxu0 %v3461
    %3769 = vmatprep.subr.mxu0 0.0
    %3770 = vmatpush1.msra.mxu0 0.0
    %3771 = vmatprep.subr.mxu0 0.0
    %3772 = vmatpush1.msra.mxu0 0.0
    %3773 = vmatprep.subr.mxu0 0.0
    %3774 = vmatpush1.msra.mxu0 0.0
    %3775 = vmatprep.subr.mxu0 0.0
    %3776 = vmatpush1.msra.mxu0 0.0
    %3777 = vmatprep.subr.mxu0 0.0
    %3778 = vmatpush1.msra.mxu0 0.0
    %3779 = vmatprep.subr.mxu0 0.0
    %3780 = vmatpush1.msra.mxu0 0.0
    %3781 = vmatprep.subr.mxu0 0.0
    %3782 = vmatpush1.msra.mxu0 0.0
    %3783 = vmatprep.subr.mxu0 0.0
    %3784 = vmatpush1.msra.mxu0 0.0
    %3785 = vmatprep.mubr.f32.mxu0 %v3686
    %3786 = vmatmul.mubr.f32.gmra.mrb[0].mxu0 %v3661
    %v3787 = vpop.f32.mrb[0].mxu0
    %v3788 = vadd.f32 0.0, %v3787
    %v3789 = vpop.f32.mrb[0].mxu0
    %v3790 = vadd.f32 0.0, %v3789
    %3791 = vmatprep.mubr.f32.mxu0 %v3689
    %3792 = vmatmul.mubr.f32.gmra.mrb[0].mxu0 %v3663
    %v3793 = vpop.f32.mrb[0].mxu0
    %v3794 = vadd.f32 0.0, %v3793
    %v3795 = vpop.f32.mrb[0].mxu0
    %v3796 = vadd.f32 0.0, %v3795
    %3797 = vmatprep.mubr.f32.mxu0 %v3692
    %3798 = vmatmul.mubr.f32.gmra.mrb[0].mxu0 %v3665
    %v3799 = vpop.f32.mrb[0].mxu0
    %v3800 = vadd.f32 0.0, %v3799
    %v3801 = vpop.f32.mrb[0].mxu0
    %v3802 = vadd.f32 0.0, %v3801
    %3803 = vmatprep.mubr.f32.mxu0 %v3695
    %3804 = vmatmul.mubr.f32.gmra.mrb[0].mxu0 %v3667
    %v3805 = vpop.f32.mrb[0].mxu0
    %v3806 = vadd.f32 0.0, %v3805
    %v3807 = vpop.f32.mrb[0].mxu0
    %v3808 = vadd.f32 0.0, %v3807
    %3809 = vmatprep.mubr.f32.mxu0 %v3698
    %3810 = vmatmul.mubr.f32.gmra.mrb[0].mxu0 %v3669
    %v3811 = vpop.f32.mrb[0].mxu0
    %v3812 = vadd.f32 0.0, %v3811
    %v3813 = vpop.f32.mrb[0].mxu0
    %v3814 = vadd.f32 0.0, %v3813
    %3815 = vmatprep.mubr.f32.mxu0 %v3701
    %3816 = vmatmul.mubr.f32.gmra.mrb[0].mxu0 %v3671
    %v3817 = vpop.f32.mrb[0].mxu0
    %v3818 = vadd.f32 0.0, %v3817
    %v3819 = vpop.f32.mrb[0].mxu0
    %v3820 = vadd.f32 0.0, %v3819
    %3821 = vmatprep.mubr.f32.mxu0 %v3704
    %3822 = vmatmul.mubr.f32.gmra.mrb[0].mxu0 %v3673
    %v3823 = vpop.f32.mrb[0].mxu0
    %v3824 = vadd.f32 0.0, %v3823
    %v3825 = vpop.f32.mrb[0].mxu0
    %v3826 = vadd.f32 0.0, %v3825
    %3827 = vmatprep.mubr.f32.mxu0 %v3707
    %3828 = vmatmul.mubr.f32.gmra.mrb[0].mxu0 %v3675
    %v3829 = vpop.f32.mrb[0].mxu0
    %v3830 = vadd.f32 0.0, %v3829
    %v3831 = vpop.f32.mrb[0].mxu0
    %v3832 = vadd.f32 0.0, %v3831
    %3833 = vmatprep.mubr.f32.mxu0 %v3710
    %3834 = vmatmul.mubr.f32.gmra.mrb[0].mxu0 %v3677
    %v3835 = vpop.f32.mrb[0].mxu0
    %v3836 = vadd.f32 0.0, %v3835
    %v3837 = vpop.f32.mrb[0].mxu0
    %v3838 = vadd.f32 0.0, %v3837
    %3839 = vmatprep.mubr.f32.mxu0 %v3713
    %3840 = vmatmul.mubr.f32.gmra.mrb[0].mxu0 %v3679
    %v3841 = vpop.f32.mrb[0].mxu0
    %v3842 = vadd.f32 0.0, %v3841
    %v3843 = vpop.f32.mrb[0].mxu0
    %v3844 = vadd.f32 0.0, %v3843
    %3845 = vmatprep.mubr.f32.mxu0 %v3716
    %3846 = vmatmul.mubr.f32.gmra.mrb[0].mxu0 %v3681
    %v3847 = vpop.f32.mrb[0].mxu0
    %v3848 = vadd.f32 0.0, %v3847
    %v3849 = vpop.f32.mrb[0].mxu0
    %v3850 = vadd.f32 0.0, %v3849
    %3851 = vmatprep.mubr.f32.mxu0 %v3719
    %3852 = vmatmul.mubr.f32.gmra.mrb[0].mxu0 %v3683
    %v3853 = vpop.f32.mrb[0].mxu0
    %v3854 = vadd.f32 0.0, %v3853
    %v3855 = vpop.f32.mrb[0].mxu0
    %v3856 = vadd.f32 0.0, %v3855
    %3857 = vdwg.mxu0
    %v3858 = vmax.f32 %v3591, %v3788
    %v3859 = vmax.f32 %v3593, %v3790
    %v3860 = vmax.f32 %v3597, %v3794
    %v3861 = vmax.f32 %v3599, %v3796
    %v3862 = vmax.f32 %v3603, %v3800
    %v3863 = vmax.f32 %v3605, %v3802
    %v3864 = vmax.f32 %v3609, %v3806
    %v3865 = vmax.f32 %v3611, %v3808
    %v3866 = vmax.f32 %v3615, %v3812
    %v3867 = vmax.f32 %v3617, %v3814
    %v3868 = vmax.f32 %v3621, %v3818
    %v3869 = vmax.f32 %v3623, %v3820
    %v3870 = vmax.f32 %v3627, %v3824
    %v3871 = vmax.f32 %v3629, %v3826
    %v3872 = vmax.f32 %v3633, %v3830
    %v3873 = vmax.f32 %v3635, %v3832
    %v3874 = vmax.f32 %v3639, %v3836
    %v3875 = vmax.f32 %v3641, %v3838
    %v3876 = vmax.f32 %v3645, %v3842
    %v3877 = vmax.f32 %v3647, %v3844
    %v3878 = vmax.f32 %v3651, %v3848
    %v3879 = vmax.f32 %v3653, %v3850
    %v3880 = vmax.f32 %v3657, %v3854
    %v3881 = vmax.f32 %v3659, %v3856
    %v3882 = vld [vmem:[%s6] sm:$0xff]
    %v3883 = vld [vmem:[%s6 + $0x8] sm:$0xff]
    %v3884 = vld [vmem:[%s6 + $0x10] sm:$0xff]
    %v3885 = vld [vmem:[%s6 + $0x18] sm:$0xff]
    %v3886 = vld [vmem:[%s6 + $0x20] sm:$0xff]
    %v3887 = vld [vmem:[%s6 + $0x28] sm:$0xff]
    %v3888 = vld [vmem:[%s6 + $0x30] sm:$0xff]
    %v3889 = vld [vmem:[%s6 + $0x38] sm:$0xff]
    %v3890 = vld [vmem:[%s6 + $0x40] sm:$0xff]
    %v3891 = vld [vmem:[%s6 + $0x48] sm:$0xff]
    %v3892 = vld [vmem:[%s6 + $0x50] sm:$0xff]
    %v3893 = vld [vmem:[%s6 + $0x58] sm:$0xff]
    %v3894 = vld [vmem:[%s6 + $0x60] sm:$0xff]
    %v3895 = vld [vmem:[%s6 + $0x68] sm:$0xff]
    %v3896 = vld [vmem:[%s6 + $0x70] sm:$0xff]
    %v3897 = vld [vmem:[%s6 + $0x78] sm:$0xff]
    %v3898 = vld [vmem:[%s6 + $0x80] sm:$0xff]
    %v3899 = vld [vmem:[%s6 + $0x88] sm:$0xff]
    %v3900 = vld [vmem:[%s6 + $0x90] sm:$0xff]
    %v3901 = vld [vmem:[%s6 + $0x98] sm:$0xff]
    %v3902 = vld [vmem:[%s6 + $0xa0] sm:$0xff]
    %v3903 = vld [vmem:[%s6 + $0xa8] sm:$0xff]
    %v3904 = vld [vmem:[%s6 + $0xb0] sm:$0xff]
    %v3905 = vld [vmem:[%s6 + $0xb8] sm:$0xff]
    %v3906 = vld [vmem:[%s6 + $0xc0] sm:$0xff]
    %v3907 = vld [vmem:[%s6 + $0xc8] sm:$0xff]
    %v3908 = vld [vmem:[%s6 + $0xd0] sm:$0xff]
    %v3909 = vld [vmem:[%s6 + $0xd8] sm:$0xff]
    %v3910 = vld [vmem:[%s6 + $0xe0] sm:$0xff]
    %v3911 = vld [vmem:[%s6 + $0xe8] sm:$0xff]
    %vm3912 = vcmask 916480
    %v3914 = vsel %vm3912, %v3859, 0
    %v3917 = vsel %vm3912, %v3861, 0
    %v3920 = vsel %vm3912, %v3863, 0
    %v3923 = vsel %vm3912, %v3865, 0
    %v3926 = vsel %vm3912, %v3867, 0
    %v3929 = vsel %vm3912, %v3869, 0
    %v3932 = vsel %vm3912, %v3871, 0
    %v3935 = vsel %vm3912, %v3873, 0
    %v3938 = vsel %vm3912, %v3875, 0
    %v3941 = vsel %vm3912, %v3877, 0
    %v3944 = vsel %vm3912, %v3879, 0
    %v3947 = vsel %vm3912, %v3881, 0
    %3949 = vmatprep.subr.mxu0 0.0
    %3950 = vmatpush1.msra.mxu0 %v3882
    %3951 = vmatprep.subr.mxu0 0.0
    %3952 = vmatpush1.msra.mxu0 %v3883
    %3953 = vmatprep.subr.mxu0 0.0
    %3954 = vmatpush1.msra.mxu0 %v3884
    %3955 = vmatprep.subr.mxu0 0.0
    %3956 = vmatpush1.msra.mxu0 %v3885
    %3957 = vmatprep.subr.mxu0 0.0
    %3958 = vmatpush1.msra.mxu0 %v3886
    %3959 = vmatprep.subr.mxu0 0.0
    %3960 = vmatpush1.msra.mxu0 %v3887
    %3961 = vmatprep.subr.mxu0 0.0
    %3962 = vmatpush1.msra.mxu0 %v3888
    %3963 = vmatprep.subr.mxu0 0.0
    %3964 = vmatpush1.msra.mxu0 %v3889
    %3965 = vmatprep.subr.mxu0 0.0
    %3966 = vmatpush1.msra.mxu0 %v3890
    %3967 = vmatprep.subr.mxu0 0.0
    %3968 = vmatpush1.msra.mxu0 %v3891
    %3969 = vmatprep.subr.mxu0 0.0
    %3970 = vmatpush1.msra.mxu0 %v3892
    %3971 = vmatprep.subr.mxu0 0.0
    %3972 = vmatpush1.msra.mxu0 %v3893
    %3973 = vmatprep.subr.mxu0 0.0
    %3974 = vmatpush1.msra.mxu0 %v3894
    %3975 = vmatprep.subr.mxu0 0.0
    %3976 = vmatpush1.msra.mxu0 %v3895
    %3977 = vmatprep.subr.mxu0 0.0
    %3978 = vmatpush1.msra.mxu0 %v3896
    %3979 = vmatprep.subr.mxu0 0.0
    %3980 = vmatpush1.msra.mxu0 %v3897
    %3981 = vmatprep.subr.mxu0 0.0
    %3982 = vmatpush1.msra.mxu0 %v3898
    %3983 = vmatprep.subr.mxu0 0.0
    %3984 = vmatpush1.msra.mxu0 %v3899
    %3985 = vmatprep.subr.mxu0 0.0
    %3986 = vmatpush1.msra.mxu0 %v3900
    %3987 = vmatprep.subr.mxu0 0.0
    %3988 = vmatpush1.msra.mxu0 %v3901
    %3989 = vmatprep.subr.mxu0 0.0
    %3990 = vmatpush1.msra.mxu0 %v3902
    %3991 = vmatprep.subr.mxu0 0.0
    %3992 = vmatpush1.msra.mxu0 %v3903
    %3993 = vmatprep.subr.mxu0 0.0
    %3994 = vmatpush1.msra.mxu0 %v3904
    %3995 = vmatprep.subr.mxu0 0.0
    %3996 = vmatpush1.msra.mxu0 %v3905
    %3997 = vmatprep.subr.mxu0 0.0
    %3998 = vmatpush1.msra.mxu0 %v3906
    %3999 = vmatprep.subr.mxu0 0.0
    %4000 = vmatpush1.msra.mxu0 %v3907
    %4001 = vmatprep.subr.mxu0 0.0
    %4002 = vmatpush1.msra.mxu0 %v3908
    %4003 = vmatprep.subr.mxu0 0.0
    %4004 = vmatpush1.msra.mxu0 %v3909
    %4005 = vmatprep.subr.mxu0 0.0
    %4006 = vmatpush1.msra.mxu0 %v3910
    %4007 = vmatprep.subr.mxu0 0.0
    %4008 = vmatpush1.msra.mxu0 %v3911
    %4009 = vmatprep.subr.mxu0 0.0
    %4010 = vmatpush1.msra.mxu0 0.0
    %4011 = vmatprep.subr.mxu0 0.0
    %4012 = vmatpush1.msra.mxu0 0.0
    %4013 = vmatprep.mubr.f32.mxu0 %v3914
    %4014 = vmatmul.mubr.f32.gmra.mrb[0].mxu0 %v3858
    %v4015 = vpop.f32.mrb[0].mxu0
    %v4016 = vadd.f32 0.0, %v4015
    %v4017 = vpop.f32.mrb[0].mxu0
    %4018 = vmatprep.mubr.f32.mxu0 %v3917
    %4019 = vmatmul.mubr.f32.gmra.mrb[0].mxu0 %v3860
    %v4020 = vpop.f32.mrb[0].mxu0
    %v4021 = vadd.f32 0.0, %v4020
    %v4022 = vpop.f32.mrb[0].mxu0
    %4023 = vmatprep.mubr.f32.mxu0 %v3920
    %4024 = vmatmul.mubr.f32.gmra.mrb[0].mxu0 %v3862
    %v4025 = vpop.f32.mrb[0].mxu0
    %v4026 = vadd.f32 0.0, %v4025
    %v4027 = vpop.f32.mrb[0].mxu0
    %4028 = vmatprep.mubr.f32.mxu0 %v3923
    %4029 = vmatmul.mubr.f32.gmra.mrb[0].mxu0 %v3864
    %v4030 = vpop.f32.mrb[0].mxu0
    %v4031 = vadd.f32 0.0, %v4030
    %v4032 = vpop.f32.mrb[0].mxu0
    %4033 = vmatprep.mubr.f32.mxu0 %v3926
    %4034 = vmatmul.mubr.f32.gmra.mrb[0].mxu0 %v3866
    %v4035 = vpop.f32.mrb[0].mxu0
    %v4036 = vadd.f32 0.0, %v4035
    %v4037 = vpop.f32.mrb[0].mxu0
    %4038 = vmatprep.mubr.f32.mxu0 %v3929
    %4039 = vmatmul.mubr.f32.gmra.mrb[0].mxu0 %v3868
    %v4040 = vpop.f32.mrb[0].mxu0
    %v4041 = vadd.f32 0.0, %v4040
    %v4042 = vpop.f32.mrb[0].mxu0
    %4043 = vmatprep.mubr.f32.mxu0 %v3932
    %4044 = vmatmul.mubr.f32.gmra.mrb[0].mxu0 %v3870
    %v4045 = vpop.f32.mrb[0].mxu0
    %v4046 = vadd.f32 0.0, %v4045
    %v4047 = vpop.f32.mrb[0].mxu0
    %4048 = vmatprep.mubr.f32.mxu0 %v3935
    %4049 = vmatmul.mubr.f32.gmra.mrb[0].mxu0 %v3872
    %v4050 = vpop.f32.mrb[0].mxu0
    %v4051 = vadd.f32 0.0, %v4050
    %v4052 = vpop.f32.mrb[0].mxu0
    %4053 = vmatprep.mubr.f32.mxu0 %v3938
    %4054 = vmatmul.mubr.f32.gmra.mrb[0].mxu0 %v3874
    %v4055 = vpop.f32.mrb[0].mxu0
    %v4056 = vadd.f32 0.0, %v4055
    %v4057 = vpop.f32.mrb[0].mxu0
    %4058 = vmatprep.mubr.f32.mxu0 %v3941
    %4059 = vmatmul.mubr.f32.gmra.mrb[0].mxu0 %v3876
    %v4060 = vpop.f32.mrb[0].mxu0
    %v4061 = vadd.f32 0.0, %v4060
    %v4062 = vpop.f32.mrb[0].mxu0
    %4063 = vmatprep.mubr.f32.mxu0 %v3944
    %4064 = vmatmul.mubr.f32.gmra.mrb[0].mxu0 %v3878
    %v4065 = vpop.f32.mrb[0].mxu0
    %v4066 = vadd.f32 0.0, %v4065
    %v4067 = vpop.f32.mrb[0].mxu0
    %4068 = vmatprep.mubr.f32.mxu0 %v3947
    %4069 = vmatmul.mubr.f32.gmra.mrb[0].mxu0 %v3880
    %v4070 = vpop.f32.mrb[0].mxu0
    %v4071 = vadd.f32 0.0, %v4070
    %v4072 = vpop.f32.mrb[0].mxu0
    %4073 = vdwg.mxu0
    %v4074 = vld [vmem:[#allocation6] sm:$0xff]
    %v4075 = vld [vmem:[#allocation6 + $0x8] sm:$0xff]
    %v4076 = vld [vmem:[#allocation6 + $0x10] sm:$0xff]
    %v4077 = vld [vmem:[#allocation6 + $0x18] sm:$0xff]
    %v4078 = vld [vmem:[#allocation6 + $0x20] sm:$0xff]
    %v4079 = vld [vmem:[#allocation6 + $0x28] sm:$0xff]
    %v4080 = vld [vmem:[#allocation6 + $0x30] sm:$0xff]
    %v4081 = vld [vmem:[#allocation6 + $0x38] sm:$0xff]
    %v4082 = vld [vmem:[#allocation6 + $0x40] sm:$0xff]
    %v4083 = vld [vmem:[#allocation6 + $0x48] sm:$0xff]
    %v4084 = vld [vmem:[#allocation6 + $0x50] sm:$0xff]
    %v4085 = vld [vmem:[#allocation6 + $0x58] sm:$0xff]
    %v4086 = vld [vmem:[#allocation6 + $0x60] sm:$0xff]
    %v4087 = vld [vmem:[#allocation6 + $0x68] sm:$0xff]
    %v4088 = vld [vmem:[#allocation6 + $0x70] sm:$0xff]
    %v4089 = vld [vmem:[#allocation6 + $0x78] sm:$0xff]
    %v4090 = vld [vmem:[#allocation6 + $0x80] sm:$0xff]
    %v4091 = vld [vmem:[#allocation6 + $0x88] sm:$0xff]
    %v4092 = vld [vmem:[#allocation6 + $0x90] sm:$0xff]
    %v4093 = vld [vmem:[#allocation6 + $0x98] sm:$0xff]
    %v4094 = vld [vmem:[#allocation6 + $0xa0] sm:$0xff]
    %v4095 = vld [vmem:[#allocation6 + $0xa8] sm:$0xff]
    %v4096 = vld [vmem:[#allocation6 + $0xb0] sm:$0xff]
    %v4097 = vld [vmem:[#allocation6 + $0xb8] sm:$0xff]
    %v4098 = vld [vmem:[#allocation6 + $0xc0] sm:$0xff]
    %v4099 = vld [vmem:[#allocation6 + $0xc8] sm:$0xff]
    %v4100 = vld [vmem:[#allocation6 + $0xd0] sm:$0xff]
    %v4101 = vld [vmem:[#allocation6 + $0xd8] sm:$0xff]
    %v4102 = vld [vmem:[#allocation6 + $0xe0] sm:$0xff]
    %v4103 = vld [vmem:[#allocation6 + $0xe8] sm:$0xff]
    %4104 = vmatprep.subr.mxu0 0.0
    %4105 = vmatpush1.msra.mxu0 %v4074
    %4106 = vmatprep.subr.mxu0 0.0
    %4107 = vmatpush1.msra.mxu0 %v4075
    %4108 = vmatprep.subr.mxu0 0.0
    %4109 = vmatpush1.msra.mxu0 %v4076
    %4110 = vmatprep.subr.mxu0 0.0
    %4111 = vmatpush1.msra.mxu0 %v4077
    %4112 = vmatprep.subr.mxu0 0.0
    %4113 = vmatpush1.msra.mxu0 %v4078
    %4114 = vmatprep.subr.mxu0 0.0
    %4115 = vmatpush1.msra.mxu0 %v4079
    %4116 = vmatprep.subr.mxu0 0.0
    %4117 = vmatpush1.msra.mxu0 %v4080
    %4118 = vmatprep.subr.mxu0 0.0
    %4119 = vmatpush1.msra.mxu0 %v4081
    %4120 = vmatprep.subr.mxu0 0.0
    %4121 = vmatpush1.msra.mxu0 %v4082
    %4122 = vmatprep.subr.mxu0 0.0
    %4123 = vmatpush1.msra.mxu0 %v4083
    %4124 = vmatprep.subr.mxu0 0.0
    %4125 = vmatpush1.msra.mxu0 %v4084
    %4126 = vmatprep.subr.mxu0 0.0
    %4127 = vmatpush1.msra.mxu0 %v4085
    %4128 = vmatprep.subr.mxu0 0.0
    %4129 = vmatpush1.msra.mxu0 %v4086
    %4130 = vmatprep.subr.mxu0 0.0
    %4131 = vmatpush1.msra.mxu0 %v4087
    %4132 = vmatprep.subr.mxu0 0.0
    %4133 = vmatpush1.msra.mxu0 %v4088
    %4134 = vmatprep.subr.mxu0 0.0
    %4135 = vmatpush1.msra.mxu0 %v4089
    %4136 = vmatprep.subr.mxu0 0.0
    %4137 = vmatpush1.msra.mxu0 %v4090
    %4138 = vmatprep.subr.mxu0 0.0
    %4139 = vmatpush1.msra.mxu0 %v4091
    %4140 = vmatprep.subr.mxu0 0.0
    %4141 = vmatpush1.msra.mxu0 %v4092
    %4142 = vmatprep.subr.mxu0 0.0
    %4143 = vmatpush1.msra.mxu0 %v4093
    %4144 = vmatprep.subr.mxu0 0.0
    %4145 = vmatpush1.msra.mxu0 %v4094
    %4146 = vmatprep.subr.mxu0 0.0
    %4147 = vmatpush1.msra.mxu0 %v4095
    %4148 = vmatprep.subr.mxu0 0.0
    %4149 = vmatpush1.msra.mxu0 %v4096
    %4150 = vmatprep.subr.mxu0 0.0
    %4151 = vmatpush1.msra.mxu0 %v4097
    %4152 = vmatprep.subr.mxu0 0.0
    %4153 = vmatpush1.msra.mxu0 %v4098
    %4154 = vmatprep.subr.mxu0 0.0
    %4155 = vmatpush1.msra.mxu0 %v4099
    %4156 = vmatprep.subr.mxu0 0.0
    %4157 = vmatpush1.msra.mxu0 %v4100
    %4158 = vmatprep.subr.mxu0 0.0
    %4159 = vmatpush1.msra.mxu0 %v4101
    %4160 = vmatprep.subr.mxu0 0.0
    %4161 = vmatpush1.msra.mxu0 %v4102
    %4162 = vmatprep.subr.mxu0 0.0
    %4163 = vmatpush1.msra.mxu0 %v4103
    %4164 = vmatprep.subr.mxu0 0.0
    %4165 = vmatpush1.msra.mxu0 0.0
    %4166 = vmatprep.subr.mxu0 0.0
    %4167 = vmatpush1.msra.mxu0 0.0
    %4168 = vmatprep.mubr.f32.mxu0 %v3914
    %4169 = vmatmul.mubr.f32.gmra.mrb[0].mxu0 %v3858
    %v4170 = vpop.f32.mrb[0].mxu0
    %v4171 = vadd.f32 0.0, %v4170
    %v4172 = vpop.f32.mrb[0].mxu0
    %4173 = vmatprep.mubr.f32.mxu0 %v3917
    %4174 = vmatmul.mubr.f32.gmra.mrb[0].mxu0 %v3860
    %v4175 = vpop.f32.mrb[0].mxu0
    %v4176 = vadd.f32 0.0, %v4175
    %v4177 = vpop.f32.mrb[0].mxu0
    %4178 = vmatprep.mubr.f32.mxu0 %v3920
    %4179 = vmatmul.mubr.f32.gmra.mrb[0].mxu0 %v3862
    %v4180 = vpop.f32.mrb[0].mxu0
    %v4181 = vadd.f32 0.0, %v4180
    %v4182 = vpop.f32.mrb[0].mxu0
    %4183 = vmatprep.mubr.f32.mxu0 %v3923
    %4184 = vmatmul.mubr.f32.gmra.mrb[0].mxu0 %v3864
    %v4185 = vpop.f32.mrb[0].mxu0
    %v4186 = vadd.f32 0.0, %v4185
    %v4187 = vpop.f32.mrb[0].mxu0
    %4188 = vmatprep.mubr.f32.mxu0 %v3926
    %4189 = vmatmul.mubr.f32.gmra.mrb[0].mxu0 %v3866
    %v4190 = vpop.f32.mrb[0].mxu0
    %v4191 = vadd.f32 0.0, %v4190
    %v4192 = vpop.f32.mrb[0].mxu0
    %4193 = vmatprep.mubr.f32.mxu0 %v3929
    %4194 = vmatmul.mubr.f32.gmra.mrb[0].mxu0 %v3868
    %v4195 = vpop.f32.mrb[0].mxu0
    %v4196 = vadd.f32 0.0, %v4195
    %v4197 = vpop.f32.mrb[0].mxu0
    %4198 = vmatprep.mubr.f32.mxu0 %v3932
    %4199 = vmatmul.mubr.f32.gmra.mrb[0].mxu0 %v3870
    %v4200 = vpop.f32.mrb[0].mxu0
    %v4201 = vadd.f32 0.0, %v4200
    %v4202 = vpop.f32.mrb[0].mxu0
    %4203 = vmatprep.mubr.f32.mxu0 %v3935
    %4204 = vmatmul.mubr.f32.gmra.mrb[0].mxu0 %v3872
    %v4205 = vpop.f32.mrb[0].mxu0
    %v4206 = vadd.f32 0.0, %v4205
    %v4207 = vpop.f32.mrb[0].mxu0
    %4208 = vmatprep.mubr.f32.mxu0 %v3938
    %4209 = vmatmul.mubr.f32.gmra.mrb[0].mxu0 %v3874
    %v4210 = vpop.f32.mrb[0].mxu0
    %v4211 = vadd.f32 0.0, %v4210
    %v4212 = vpop.f32.mrb[0].mxu0
    %4213 = vmatprep.mubr.f32.mxu0 %v3941
    %4214 = vmatmul.mubr.f32.gmra.mrb[0].mxu0 %v3876
    %v4215 = vpop.f32.mrb[0].mxu0
    %v4216 = vadd.f32 0.0, %v4215
    %v4217 = vpop.f32.mrb[0].mxu0
    %4218 = vmatprep.mubr.f32.mxu0 %v3944
    %4219 = vmatmul.mubr.f32.gmra.mrb[0].mxu0 %v3878
    %v4220 = vpop.f32.mrb[0].mxu0
    %v4221 = vadd.f32 0.0, %v4220
    %v4222 = vpop.f32.mrb[0].mxu0
    %4223 = vmatprep.mubr.f32.mxu0 %v3947
    %4224 = vmatmul.mubr.f32.gmra.mrb[0].mxu0 %v3880
    %v4225 = vpop.f32.mrb[0].mxu0
    %v4226 = vadd.f32 0.0, %v4225
    %v4227 = vpop.f32.mrb[0].mxu0
    %4228 = vdwg.mxu0
    %v4229 = vmax.f32 %v4016, %v4171
    %v4230 = vmax.f32 %v4021, %v4176
    %v4231 = vmax.f32 %v4026, %v4181
    %v4232 = vmax.f32 %v4031, %v4186
    %v4233 = vmax.f32 %v4036, %v4191
    %v4234 = vmax.f32 %v4041, %v4196
    %v4235 = vmax.f32 %v4046, %v4201
    %v4236 = vmax.f32 %v4051, %v4206
    %v4237 = vmax.f32 %v4056, %v4211
    %v4238 = vmax.f32 %v4061, %v4216
    %v4239 = vmax.f32 %v4066, %v4221
    %v4240 = vmax.f32 %v4071, %v4226
    %v4241 = vmax.f32 %v4229, 0.0
    %v4242 = vmax.f32 %v4230, 0.0
    %v4243 = vmax.f32 %v4231, 0.0
    %v4244 = vmax.f32 %v4232, 0.0
    %v4245 = vmax.f32 %v4233, 0.0
    %v4246 = vmax.f32 %v4234, 0.0
    %v4247 = vmax.f32 %v4235, 0.0
    %v4248 = vmax.f32 %v4236, 0.0
    %v4249 = vmax.f32 %v4237, 0.0
    %v4250 = vmax.f32 %v4238, 0.0
    %v4251 = vmax.f32 %v4239, 0.0
    %v4252 = vmax.f32 %v4240, 0.0
    %v4253 = vld [vmem:[#allocation7] sm:$0x3]
    %v4254 = vld [vmem:[%s10] sm:$0xff]
    %v4255 = vld [vmem:[%s10 + $0x8] sm:$0xff]
    %v4256 = vld [vmem:[%s10 + $0x10] sm:$0xff]
    %v4257 = vld [vmem:[%s10 + $0x18] sm:$0xff]
    %v4258 = vld [vmem:[%s10 + $0x20] sm:$0xff]
    %v4259 = vld [vmem:[%s10 + $0x28] sm:$0xff]
    %v4260 = vld [vmem:[%s10 + $0x30] sm:$0xff]
    %v4261 = vld [vmem:[%s10 + $0x38] sm:$0xff]
    %v4263 = vsel %vm249, %v4254, 0
    %v4266 = vsel %vm249, %v4255, 0
    %v4269 = vsel %vm249, %v4256, 0
    %v4272 = vsel %vm249, %v4257, 0
    %v4275 = vsel %vm249, %v4258, 0
    %v4278 = vsel %vm249, %v4259, 0
    %v4281 = vsel %vm249, %v4260, 0
    %v4284 = vsel %vm249, %v4261, 0
    %4286 = vmatprep.subr.mxu0 0.0
    %4287 = vmatpush1.msra.mxu0 %v4241
    %4288 = vmatprep.subr.mxu0 0.0
    %4289 = vmatpush1.msra.mxu0 %v4242
    %4290 = vmatprep.subr.mxu0 0.0
    %4291 = vmatpush1.msra.mxu0 %v4243
    %4292 = vmatprep.subr.mxu0 0.0
    %4293 = vmatpush1.msra.mxu0 %v4244
    %4294 = vmatprep.subr.mxu0 0.0
    %4295 = vmatpush1.msra.mxu0 %v4245
    %4296 = vmatprep.subr.mxu0 0.0
    %4297 = vmatpush1.msra.mxu0 %v4246
    %4298 = vmatprep.subr.mxu0 0.0
    %4299 = vmatpush1.msra.mxu0 %v4247
    %4300 = vmatprep.subr.mxu0 0.0
    %4301 = vmatpush1.msra.mxu0 %v4248
    %4302 = vmatprep.subr.mxu0 0.0
    %4303 = vmatpush1.msra.mxu0 %v4249
    %4304 = vmatprep.subr.mxu0 0.0
    %4305 = vmatpush1.msra.mxu0 %v4250
    %4306 = vmatprep.subr.mxu0 0.0
    %4307 = vmatpush1.msra.mxu0 %v4251
    %4308 = vmatprep.subr.mxu0 0.0
    %4309 = vmatpush1.msra.mxu0 %v4252
    %4310 = vmatprep.subr.mxu0 0.0
    %4311 = vmatpush1.msra.mxu0 0.0
    %4312 = vmatprep.subr.mxu0 0.0
    %4313 = vmatpush1.msra.mxu0 0.0
    %4314 = vmatprep.subr.mxu0 0.0
    %4315 = vmatpush1.msra.mxu0 0.0
    %4316 = vmatprep.subr.mxu0 0.0
    %4317 = vmatpush1.msra.mxu0 0.0
    %4318 = vmatprep.subr.mxu0 0.0
    %4319 = vmatpush1.msra.mxu0 0.0
    %4320 = vmatprep.subr.mxu0 0.0
    %4321 = vmatpush1.msra.mxu0 0.0
    %4322 = vmatprep.subr.mxu0 0.0
    %4323 = vmatpush1.msra.mxu0 0.0
    %4324 = vmatprep.subr.mxu0 0.0
    %4325 = vmatpush1.msra.mxu0 0.0
    %4326 = vmatprep.subr.mxu0 0.0
    %4327 = vmatpush1.msra.mxu0 0.0
    %4328 = vmatprep.subr.mxu0 0.0
    %4329 = vmatpush1.msra.mxu0 0.0
    %4330 = vmatprep.subr.mxu0 0.0
    %4331 = vmatpush1.msra.mxu0 0.0
    %4332 = vmatprep.subr.mxu0 0.0
    %4333 = vmatpush1.msra.mxu0 0.0
    %4334 = vmatprep.subr.mxu0 0.0
    %4335 = vmatpush1.msra.mxu0 0.0
    %4336 = vmatprep.subr.mxu0 0.0
    %4337 = vmatpush1.msra.mxu0 0.0
    %4338 = vmatprep.subr.mxu0 0.0
    %4339 = vmatpush1.msra.mxu0 0.0
    %4340 = vmatprep.subr.mxu0 0.0
    %4341 = vmatpush1.msra.mxu0 0.0
    %4342 = vmatprep.subr.mxu0 0.0
    %4343 = vmatpush1.msra.mxu0 0.0
    %4344 = vmatprep.subr.mxu0 0.0
    %4345 = vmatpush1.msra.mxu0 0.0
    %4346 = vmatprep.subr.mxu0 0.0
    %4347 = vmatpush1.msra.mxu0 0.0
    %4348 = vmatprep.subr.mxu0 0.0
    %4349 = vmatpush1.msra.mxu0 0.0
    %4350 = vmatprep.mubr.f32.mxu0 0.0
    %4351 = vmatmul.mubr.f32.gmra.mrb[0].mxu0 %v4263
    %v4352 = vpop.f32.mrb[0].mxu0
    %v4353 = vadd.f32 0.0, %v4352
    %v4354 = vpop.f32.mrb[0].mxu0
    %4355 = vmatprep.mubr.f32.mxu0 0.0
    %4356 = vmatmul.mubr.f32.gmra.mrb[0].mxu0 %v4266
    %v4357 = vpop.f32.mrb[0].mxu0
    %v4358 = vadd.f32 0.0, %v4357
    %v4359 = vpop.f32.mrb[0].mxu0
    %4360 = vmatprep.mubr.f32.mxu0 0.0
    %4361 = vmatmul.mubr.f32.gmra.mrb[0].mxu0 %v4269
    %v4362 = vpop.f32.mrb[0].mxu0
    %v4363 = vadd.f32 0.0, %v4362
    %v4364 = vpop.f32.mrb[0].mxu0
    %4365 = vmatprep.mubr.f32.mxu0 0.0
    %4366 = vmatmul.mubr.f32.gmra.mrb[0].mxu0 %v4272
    %v4367 = vpop.f32.mrb[0].mxu0
    %v4368 = vadd.f32 0.0, %v4367
    %v4369 = vpop.f32.mrb[0].mxu0
    %4370 = vmatprep.mubr.f32.mxu0 0.0
    %4371 = vmatmul.mubr.f32.gmra.mrb[0].mxu0 %v4275
    %v4372 = vpop.f32.mrb[0].mxu0
    %v4373 = vadd.f32 0.0, %v4372
    %v4374 = vpop.f32.mrb[0].mxu0
    %4375 = vmatprep.mubr.f32.mxu0 0.0
    %4376 = vmatmul.mubr.f32.gmra.mrb[0].mxu0 %v4278
    %v4377 = vpop.f32.mrb[0].mxu0
    %v4378 = vadd.f32 0.0, %v4377
    %v4379 = vpop.f32.mrb[0].mxu0
    %4380 = vmatprep.mubr.f32.mxu0 0.0
    %4381 = vmatmul.mubr.f32.gmra.mrb[0].mxu0 %v4281
    %v4382 = vpop.f32.mrb[0].mxu0
    %v4383 = vadd.f32 0.0, %v4382
    %v4384 = vpop.f32.mrb[0].mxu0
    %4385 = vmatprep.mubr.f32.mxu0 0.0
    %4386 = vmatmul.mubr.f32.gmra.mrb[0].mxu0 %v4284
    %v4387 = vpop.f32.mrb[0].mxu0
    %v4388 = vadd.f32 0.0, %v4387
    %v4389 = vpop.f32.mrb[0].mxu0
    %4390 = vdwg.mxu0
    %v4391 = vld [vmem:[%s8] sm:$0xff]
    %v4392 = vld [vmem:[%s8 + $0x8] sm:$0xff]
    %v4393 = vld [vmem:[%s8 + $0x10] sm:$0xff]
    %v4394 = vld [vmem:[%s8 + $0x18] sm:$0xff]
    %v4395 = vld [vmem:[%s8 + $0x20] sm:$0xff]
    %v4396 = vld [vmem:[%s8 + $0x28] sm:$0xff]
    %v4397 = vld [vmem:[%s8 + $0x30] sm:$0xff]
    %v4398 = vld [vmem:[%s8 + $0x38] sm:$0xff]
    %v4399 = vld [vmem:[%s8 + $0x40] sm:$0xff]
    %v4400 = vld [vmem:[%s8 + $0x48] sm:$0xff]
    %v4401 = vld [vmem:[%s8 + $0x50] sm:$0xff]
    %v4402 = vld [vmem:[%s8 + $0x58] sm:$0xff]
    %v4403 = vld [vmem:[%s8 + $0x60] sm:$0xff]
    %v4404 = vld [vmem:[%s8 + $0x68] sm:$0xff]
    %v4405 = vld [vmem:[%s8 + $0x70] sm:$0xff]
    %v4406 = vld [vmem:[%s8 + $0x78] sm:$0xff]
    %v4407 = vld [vmem:[%s8 + $0x80] sm:$0xff]
    %v4408 = vld [vmem:[%s8 + $0x88] sm:$0xff]
    %v4409 = vld [vmem:[%s8 + $0x90] sm:$0xff]
    %v4410 = vld [vmem:[%s8 + $0x98] sm:$0xff]
    %v4411 = vld [vmem:[%s8 + $0xa0] sm:$0xff]
    %v4412 = vld [vmem:[%s8 + $0xa8] sm:$0xff]
    %v4413 = vld [vmem:[%s8 + $0xb0] sm:$0xff]
    %v4414 = vld [vmem:[%s8 + $0xb8] sm:$0xff]
    %v4415 = vld [vmem:[%s8 + $0xc0] sm:$0xff]
    %v4416 = vld [vmem:[%s8 + $0xc8] sm:$0xff]
    %v4417 = vld [vmem:[%s8 + $0xd0] sm:$0xff]
    %v4418 = vld [vmem:[%s8 + $0xd8] sm:$0xff]
    %v4419 = vld [vmem:[%s8 + $0xe0] sm:$0xff]
    %v4420 = vld [vmem:[%s8 + $0xe8] sm:$0xff]
    %vm4421 = vcmask 982016
    %v4423 = vsel %vm4421, %v4353, 0
    %v4426 = vsel %vm4421, %v4358, 0
    %v4429 = vsel %vm4421, %v4363, 0
    %v4432 = vsel %vm4421, %v4368, 0
    %v4435 = vsel %vm4421, %v4373, 0
    %v4438 = vsel %vm4421, %v4378, 0
    %v4441 = vsel %vm4421, %v4383, 0
    %v4444 = vsel %vm4421, %v4388, 0
    %4446 = vmatprep.subr.mxu0 %v4392
    %4447 = vmatpush1.msra.mxu0 %v4391
    %4448 = vmatprep.subr.mxu0 %v4394
    %4449 = vmatpush1.msra.mxu0 %v4393
    %4450 = vmatprep.subr.mxu0 %v4396
    %4451 = vmatpush1.msra.mxu0 %v4395
    %4452 = vmatprep.subr.mxu0 %v4398
    %4453 = vmatpush1.msra.mxu0 %v4397
    %4454 = vmatprep.subr.mxu0 %v4400
    %4455 = vmatpush1.msra.mxu0 %v4399
    %4456 = vmatprep.subr.mxu0 %v4402
    %4457 = vmatpush1.msra.mxu0 %v4401
    %4458 = vmatprep.subr.mxu0 %v4404
    %4459 = vmatpush1.msra.mxu0 %v4403
    %4460 = vmatprep.subr.mxu0 %v4406
    %4461 = vmatpush1.msra.mxu0 %v4405
    %4462 = vmatprep.subr.mxu0 %v4408
    %4463 = vmatpush1.msra.mxu0 %v4407
    %4464 = vmatprep.subr.mxu0 %v4410
    %4465 = vmatpush1.msra.mxu0 %v4409
    %4466 = vmatprep.subr.mxu0 %v4412
    %4467 = vmatpush1.msra.mxu0 %v4411
    %4468 = vmatprep.subr.mxu0 %v4414
    %4469 = vmatpush1.msra.mxu0 %v4413
    %4470 = vmatprep.subr.mxu0 %v4416
    %4471 = vmatpush1.msra.mxu0 %v4415
    %4472 = vmatprep.subr.mxu0 %v4418
    %4473 = vmatpush1.msra.mxu0 %v4417
    %4474 = vmatprep.subr.mxu0 %v4420
    %4475 = vmatpush1.msra.mxu0 %v4419
    %4476 = vmatprep.subr.mxu0 0.0
    %4477 = vmatpush1.msra.mxu0 0.0
    %4478 = vmatprep.subr.mxu0 0.0
    %4479 = vmatpush1.msra.mxu0 0.0
    %4480 = vmatprep.subr.mxu0 0.0
    %4481 = vmatpush1.msra.mxu0 0.0
    %4482 = vmatprep.subr.mxu0 0.0
    %4483 = vmatpush1.msra.mxu0 0.0
    %4484 = vmatprep.subr.mxu0 0.0
    %4485 = vmatpush1.msra.mxu0 0.0
    %4486 = vmatprep.subr.mxu0 0.0
    %4487 = vmatpush1.msra.mxu0 0.0
    %4488 = vmatprep.subr.mxu0 0.0
    %4489 = vmatpush1.msra.mxu0 0.0
    %4490 = vmatprep.subr.mxu0 0.0
    %4491 = vmatpush1.msra.mxu0 0.0
    %4492 = vmatprep.subr.mxu0 0.0
    %4493 = vmatpush1.msra.mxu0 0.0
    %4494 = vmatprep.subr.mxu0 0.0
    %4495 = vmatpush1.msra.mxu0 0.0
    %4496 = vmatprep.subr.mxu0 0.0
    %4497 = vmatpush1.msra.mxu0 0.0
    %4498 = vmatprep.subr.mxu0 0.0
    %4499 = vmatpush1.msra.mxu0 0.0
    %4500 = vmatprep.subr.mxu0 0.0
    %4501 = vmatpush1.msra.mxu0 0.0
    %4502 = vmatprep.subr.mxu0 0.0
    %4503 = vmatpush1.msra.mxu0 0.0
    %4504 = vmatprep.subr.mxu0 0.0
    %4505 = vmatpush1.msra.mxu0 0.0
    %4506 = vmatprep.subr.mxu0 0.0
    %4507 = vmatpush1.msra.mxu0 0.0
    %4508 = vmatprep.subr.mxu0 0.0
    %4509 = vmatpush1.msra.mxu0 0.0
    %4510 = vmatprep.mubr.f32.mxu0 0.0
    %4511 = vmatmul.mubr.f32.gmra.mrb[0].mxu0 %v4423
    %v4512 = vpop.f32.mrb[0].mxu0
    %v4513 = vadd.f32 0.0, %v4512
    %v4514 = vpop.f32.mrb[0].mxu0
    %v4515 = vadd.f32 0.0, %v4514
    %4516 = vmatprep.mubr.f32.mxu0 0.0
    %4517 = vmatmul.mubr.f32.gmra.mrb[0].mxu0 %v4426
    %v4518 = vpop.f32.mrb[0].mxu0
    %v4519 = vadd.f32 0.0, %v4518
    %v4520 = vpop.f32.mrb[0].mxu0
    %v4521 = vadd.f32 0.0, %v4520
    %4522 = vmatprep.mubr.f32.mxu0 0.0
    %4523 = vmatmul.mubr.f32.gmra.mrb[0].mxu0 %v4429
    %v4524 = vpop.f32.mrb[0].mxu0
    %v4525 = vadd.f32 0.0, %v4524
    %v4526 = vpop.f32.mrb[0].mxu0
    %v4527 = vadd.f32 0.0, %v4526
    %4528 = vmatprep.mubr.f32.mxu0 0.0
    %4529 = vmatmul.mubr.f32.gmra.mrb[0].mxu0 %v4432
    %v4530 = vpop.f32.mrb[0].mxu0
    %v4531 = vadd.f32 0.0, %v4530
    %v4532 = vpop.f32.mrb[0].mxu0
    %v4533 = vadd.f32 0.0, %v4532
    %4534 = vmatprep.mubr.f32.mxu0 0.0
    %4535 = vmatmul.mubr.f32.gmra.mrb[0].mxu0 %v4435
    %v4536 = vpop.f32.mrb[0].mxu0
    %v4537 = vadd.f32 0.0, %v4536
    %v4538 = vpop.f32.mrb[0].mxu0
    %v4539 = vadd.f32 0.0, %v4538
    %4540 = vmatprep.mubr.f32.mxu0 0.0
    %4541 = vmatmul.mubr.f32.gmra.mrb[0].mxu0 %v4438
    %v4542 = vpop.f32.mrb[0].mxu0
    %v4543 = vadd.f32 0.0, %v4542
    %v4544 = vpop.f32.mrb[0].mxu0
    %v4545 = vadd.f32 0.0, %v4544
    %4546 = vmatprep.mubr.f32.mxu0 0.0
    %4547 = vmatmul.mubr.f32.gmra.mrb[0].mxu0 %v4441
    %v4548 = vpop.f32.mrb[0].mxu0
    %v4549 = vadd.f32 0.0, %v4548
    %v4550 = vpop.f32.mrb[0].mxu0
    %v4551 = vadd.f32 0.0, %v4550
    %4552 = vmatprep.mubr.f32.mxu0 0.0
    %4553 = vmatmul.mubr.f32.gmra.mrb[0].mxu0 %v4444
    %v4554 = vpop.f32.mrb[0].mxu0
    %v4555 = vadd.f32 0.0, %v4554
    %v4556 = vpop.f32.mrb[0].mxu0
    %v4557 = vadd.f32 0.0, %v4556
    %4558 = vdwg.mxu0
    %v4560 = vlaneseq
    %v4561 = vshrl.u32 %v4560, 7
    %v4562 = vsub.s32 0, %v4561
    %v4563 = vrot.slane %v4253, %v4562
    %v4564 = vlaneseq
    %v4565 = vshrl.u32 %v4564, 7
    %v4566 = vsub.s32 1, %v4565
    %v4567 = vrot.slane %v4253, %v4566
    %v4570 = vadd.f32 %v4563, %v4513
    %v4571 = vadd.f32 %v4567, %v4515
    %v4572 = vadd.f32 %v4563, %v4519
    %v4573 = vadd.f32 %v4567, %v4521
    %v4574 = vadd.f32 %v4563, %v4525
    %v4575 = vadd.f32 %v4567, %v4527
    %v4576 = vadd.f32 %v4563, %v4531
    %v4577 = vadd.f32 %v4567, %v4533
    %v4578 = vadd.f32 %v4563, %v4537
    %v4579 = vadd.f32 %v4567, %v4539
    %v4580 = vadd.f32 %v4563, %v4543
    %v4581 = vadd.f32 %v4567, %v4545
    %v4582 = vadd.f32 %v4563, %v4549
    %v4583 = vadd.f32 %v4567, %v4551
    %v4584 = vadd.f32 %v4563, %v4555
    %v4585 = vadd.f32 %v4567, %v4557
    %s4586 = scalar_lea.vmem %s10, 64
    %v4587 = vld [vmem:[%s4586] sm:$0xff]
    %v4588 = vld [vmem:[%s4586 + $0x8] sm:$0xff]
    %v4589 = vld [vmem:[%s4586 + $0x10] sm:$0xff]
    %v4590 = vld [vmem:[%s4586 + $0x18] sm:$0xff]
    %v4591 = vld [vmem:[%s4586 + $0x20] sm:$0xff]
    %v4592 = vld [vmem:[%s4586 + $0x28] sm:$0xff]
    %v4593 = vld [vmem:[%s4586 + $0x30] sm:$0xff]
    %v4594 = vld [vmem:[%s4586 + $0x38] sm:$0xff]
    %v4596 = vsel %vm249, %v4587, 0
    %v4599 = vsel %vm249, %v4588, 0
    %v4602 = vsel %vm249, %v4589, 0
    %v4605 = vsel %vm249, %v4590, 0
    %v4608 = vsel %vm249, %v4591, 0
    %v4611 = vsel %vm249, %v4592, 0
    %v4614 = vsel %vm249, %v4593, 0
    %v4617 = vsel %vm249, %v4594, 0
    %4619 = vmatprep.subr.mxu0 0.0
    %4620 = vmatpush1.msra.mxu0 %v4241
    %4621 = vmatprep.subr.mxu0 0.0
    %4622 = vmatpush1.msra.mxu0 %v4242
    %4623 = vmatprep.subr.mxu0 0.0
    %4624 = vmatpush1.msra.mxu0 %v4243
    %4625 = vmatprep.subr.mxu0 0.0
    %4626 = vmatpush1.msra.mxu0 %v4244
    %4627 = vmatprep.subr.mxu0 0.0
    %4628 = vmatpush1.msra.mxu0 %v4245
    %4629 = vmatprep.subr.mxu0 0.0
    %4630 = vmatpush1.msra.mxu0 %v4246
    %4631 = vmatprep.subr.mxu0 0.0
    %4632 = vmatpush1.msra.mxu0 %v4247
    %4633 = vmatprep.subr.mxu0 0.0
    %4634 = vmatpush1.msra.mxu0 %v4248
    %4635 = vmatprep.subr.mxu0 0.0
    %4636 = vmatpush1.msra.mxu0 %v4249
    %4637 = vmatprep.subr.mxu0 0.0
    %4638 = vmatpush1.msra.mxu0 %v4250
    %4639 = vmatprep.subr.mxu0 0.0
    %4640 = vmatpush1.msra.mxu0 %v4251
    %4641 = vmatprep.subr.mxu0 0.0
    %4642 = vmatpush1.msra.mxu0 %v4252
    %4643 = vmatprep.subr.mxu0 0.0
    %4644 = vmatpush1.msra.mxu0 0.0
    %4645 = vmatprep.subr.mxu0 0.0
    %4646 = vmatpush1.msra.mxu0 0.0
    %4647 = vmatprep.subr.mxu0 0.0
    %4648 = vmatpush1.msra.mxu0 0.0
    %4649 = vmatprep.subr.mxu0 0.0
    %4650 = vmatpush1.msra.mxu0 0.0
    %4651 = vmatprep.subr.mxu0 0.0
    %4652 = vmatpush1.msra.mxu0 0.0
    %4653 = vmatprep.subr.mxu0 0.0
    %4654 = vmatpush1.msra.mxu0 0.0
    %4655 = vmatprep.subr.mxu0 0.0
    %4656 = vmatpush1.msra.mxu0 0.0
    %4657 = vmatprep.subr.mxu0 0.0
    %4658 = vmatpush1.msra.mxu0 0.0
    %4659 = vmatprep.subr.mxu0 0.0
    %4660 = vmatpush1.msra.mxu0 0.0
    %4661 = vmatprep.subr.mxu0 0.0
    %4662 = vmatpush1.msra.mxu0 0.0
    %4663 = vmatprep.subr.mxu0 0.0
    %4664 = vmatpush1.msra.mxu0 0.0
    %4665 = vmatprep.subr.mxu0 0.0
    %4666 = vmatpush1.msra.mxu0 0.0
    %4667 = vmatprep.subr.mxu0 0.0
    %4668 = vmatpush1.msra.mxu0 0.0
    %4669 = vmatprep.subr.mxu0 0.0
    %4670 = vmatpush1.msra.mxu0 0.0
    %4671 = vmatprep.subr.mxu0 0.0
    %4672 = vmatpush1.msra.mxu0 0.0
    %4673 = vmatprep.subr.mxu0 0.0
    %4674 = vmatpush1.msra.mxu0 0.0
    %4675 = vmatprep.subr.mxu0 0.0
    %4676 = vmatpush1.msra.mxu0 0.0
    %4677 = vmatprep.subr.mxu0 0.0
    %4678 = vmatpush1.msra.mxu0 0.0
    %4679 = vmatprep.subr.mxu0 0.0
    %4680 = vmatpush1.msra.mxu0 0.0
    %4681 = vmatprep.subr.mxu0 0.0
    %4682 = vmatpush1.msra.mxu0 0.0
    %4683 = vmatprep.mubr.f32.mxu0 0.0
    %4684 = vmatmul.mubr.f32.gmra.mrb[0].mxu0 %v4596
    %v4685 = vpop.f32.mrb[0].mxu0
    %v4686 = vadd.f32 0.0, %v4685
    %v4687 = vpop.f32.mrb[0].mxu0
    %4688 = vmatprep.mubr.f32.mxu0 0.0
    %4689 = vmatmul.mubr.f32.gmra.mrb[0].mxu0 %v4599
    %v4690 = vpop.f32.mrb[0].mxu0
    %v4691 = vadd.f32 0.0, %v4690
    %v4692 = vpop.f32.mrb[0].mxu0
    %4693 = vmatprep.mubr.f32.mxu0 0.0
    %4694 = vmatmul.mubr.f32.gmra.mrb[0].mxu0 %v4602
    %v4695 = vpop.f32.mrb[0].mxu0
    %v4696 = vadd.f32 0.0, %v4695
    %v4697 = vpop.f32.mrb[0].mxu0
    %4698 = vmatprep.mubr.f32.mxu0 0.0
    %4699 = vmatmul.mubr.f32.gmra.mrb[0].mxu0 %v4605
    %v4700 = vpop.f32.mrb[0].mxu0
    %v4701 = vadd.f32 0.0, %v4700
    %v4702 = vpop.f32.mrb[0].mxu0
    %4703 = vmatprep.mubr.f32.mxu0 0.0
    %4704 = vmatmul.mubr.f32.gmra.mrb[0].mxu0 %v4608
    %v4705 = vpop.f32.mrb[0].mxu0
    %v4706 = vadd.f32 0.0, %v4705
    %v4707 = vpop.f32.mrb[0].mxu0
    %4708 = vmatprep.mubr.f32.mxu0 0.0
    %4709 = vmatmul.mubr.f32.gmra.mrb[0].mxu0 %v4611
    %v4710 = vpop.f32.mrb[0].mxu0
    %v4711 = vadd.f32 0.0, %v4710
    %v4712 = vpop.f32.mrb[0].mxu0
    %4713 = vmatprep.mubr.f32.mxu0 0.0
    %4714 = vmatmul.mubr.f32.gmra.mrb[0].mxu0 %v4614
    %v4715 = vpop.f32.mrb[0].mxu0
    %v4716 = vadd.f32 0.0, %v4715
    %v4717 = vpop.f32.mrb[0].mxu0
    %4718 = vmatprep.mubr.f32.mxu0 0.0
    %4719 = vmatmul.mubr.f32.gmra.mrb[0].mxu0 %v4617
    %v4720 = vpop.f32.mrb[0].mxu0
    %v4721 = vadd.f32 0.0, %v4720
    %v4722 = vpop.f32.mrb[0].mxu0
    %4723 = vdwg.mxu0
    %s4724 = scalar_lea.vmem %s8, 240
    %v4725 = vld [vmem:[%s4724] sm:$0xff]
    %v4726 = vld [vmem:[%s4724 + $0x8] sm:$0xff]
    %v4727 = vld [vmem:[%s4724 + $0x10] sm:$0xff]
    %v4728 = vld [vmem:[%s4724 + $0x18] sm:$0xff]
    %v4729 = vld [vmem:[%s4724 + $0x20] sm:$0xff]
    %v4730 = vld [vmem:[%s4724 + $0x28] sm:$0xff]
    %v4731 = vld [vmem:[%s4724 + $0x30] sm:$0xff]
    %v4732 = vld [vmem:[%s4724 + $0x38] sm:$0xff]
    %v4733 = vld [vmem:[%s4724 + $0x40] sm:$0xff]
    %v4734 = vld [vmem:[%s4724 + $0x48] sm:$0xff]
    %v4735 = vld [vmem:[%s4724 + $0x50] sm:$0xff]
    %v4736 = vld [vmem:[%s4724 + $0x58] sm:$0xff]
    %v4737 = vld [vmem:[%s4724 + $0x60] sm:$0xff]
    %v4738 = vld [vmem:[%s4724 + $0x68] sm:$0xff]
    %v4739 = vld [vmem:[%s4724 + $0x70] sm:$0xff]
    %v4740 = vld [vmem:[%s4724 + $0x78] sm:$0xff]
    %v4741 = vld [vmem:[%s4724 + $0x80] sm:$0xff]
    %v4742 = vld [vmem:[%s4724 + $0x88] sm:$0xff]
    %v4743 = vld [vmem:[%s4724 + $0x90] sm:$0xff]
    %v4744 = vld [vmem:[%s4724 + $0x98] sm:$0xff]
    %v4745 = vld [vmem:[%s4724 + $0xa0] sm:$0xff]
    %v4746 = vld [vmem:[%s4724 + $0xa8] sm:$0xff]
    %v4747 = vld [vmem:[%s4724 + $0xb0] sm:$0xff]
    %v4748 = vld [vmem:[%s4724 + $0xb8] sm:$0xff]
    %v4749 = vld [vmem:[%s4724 + $0xc0] sm:$0xff]
    %v4750 = vld [vmem:[%s4724 + $0xc8] sm:$0xff]
    %v4751 = vld [vmem:[%s4724 + $0xd0] sm:$0xff]
    %v4752 = vld [vmem:[%s4724 + $0xd8] sm:$0xff]
    %v4753 = vld [vmem:[%s4724 + $0xe0] sm:$0xff]
    %v4754 = vld [vmem:[%s4724 + $0xe8] sm:$0xff]
    %v4756 = vsel %vm4421, %v4686, 0
    %v4759 = vsel %vm4421, %v4691, 0
    %v4762 = vsel %vm4421, %v4696, 0
    %v4765 = vsel %vm4421, %v4701, 0
    %v4768 = vsel %vm4421, %v4706, 0
    %v4771 = vsel %vm4421, %v4711, 0
    %v4774 = vsel %vm4421, %v4716, 0
    %v4777 = vsel %vm4421, %v4721, 0
    %4779 = vmatprep.subr.mxu0 %v4726
    %4780 = vmatpush1.msra.mxu0 %v4725
    %4781 = vmatprep.subr.mxu0 %v4728
    %4782 = vmatpush1.msra.mxu0 %v4727
    %4783 = vmatprep.subr.mxu0 %v4730
    %4784 = vmatpush1.msra.mxu0 %v4729
    %4785 = vmatprep.subr.mxu0 %v4732
    %4786 = vmatpush1.msra.mxu0 %v4731
    %4787 = vmatprep.subr.mxu0 %v4734
    %4788 = vmatpush1.msra.mxu0 %v4733
    %4789 = vmatprep.subr.mxu0 %v4736
    %4790 = vmatpush1.msra.mxu0 %v4735
    %4791 = vmatprep.subr.mxu0 %v4738
    %4792 = vmatpush1.msra.mxu0 %v4737
    %4793 = vmatprep.subr.mxu0 %v4740
    %4794 = vmatpush1.msra.mxu0 %v4739
    %4795 = vmatprep.subr.mxu0 %v4742
    %4796 = vmatpush1.msra.mxu0 %v4741
    %4797 = vmatprep.subr.mxu0 %v4744
    %4798 = vmatpush1.msra.mxu0 %v4743
    %4799 = vmatprep.subr.mxu0 %v4746
    %4800 = vmatpush1.msra.mxu0 %v4745
    %4801 = vmatprep.subr.mxu0 %v4748
    %4802 = vmatpush1.msra.mxu0 %v4747
    %4803 = vmatprep.subr.mxu0 %v4750
    %4804 = vmatpush1.msra.mxu0 %v4749
    %4805 = vmatprep.subr.mxu0 %v4752
    %4806 = vmatpush1.msra.mxu0 %v4751
    %4807 = vmatprep.subr.mxu0 %v4754
    %4808 = vmatpush1.msra.mxu0 %v4753
    %4809 = vmatprep.subr.mxu0 0.0
    %4810 = vmatpush1.msra.mxu0 0.0
    %4811 = vmatprep.subr.mxu0 0.0
    %4812 = vmatpush1.msra.mxu0 0.0
    %4813 = vmatprep.subr.mxu0 0.0
    %4814 = vmatpush1.msra.mxu0 0.0
    %4815 = vmatprep.subr.mxu0 0.0
    %4816 = vmatpush1.msra.mxu0 0.0
    %4817 = vmatprep.subr.mxu0 0.0
    %4818 = vmatpush1.msra.mxu0 0.0
    %4819 = vmatprep.subr.mxu0 0.0
    %4820 = vmatpush1.msra.mxu0 0.0
    %4821 = vmatprep.subr.mxu0 0.0
    %4822 = vmatpush1.msra.mxu0 0.0
    %4823 = vmatprep.subr.mxu0 0.0
    %4824 = vmatpush1.msra.mxu0 0.0
    %4825 = vmatprep.subr.mxu0 0.0
    %4826 = vmatpush1.msra.mxu0 0.0
    %4827 = vmatprep.subr.mxu0 0.0
    %4828 = vmatpush1.msra.mxu0 0.0
    %4829 = vmatprep.subr.mxu0 0.0
    %4830 = vmatpush1.msra.mxu0 0.0
    %4831 = vmatprep.subr.mxu0 0.0
    %4832 = vmatpush1.msra.mxu0 0.0
    %4833 = vmatprep.subr.mxu0 0.0
    %4834 = vmatpush1.msra.mxu0 0.0
    %4835 = vmatprep.subr.mxu0 0.0
    %4836 = vmatpush1.msra.mxu0 0.0
    %4837 = vmatprep.subr.mxu0 0.0
    %4838 = vmatpush1.msra.mxu0 0.0
    %4839 = vmatprep.subr.mxu0 0.0
    %4840 = vmatpush1.msra.mxu0 0.0
    %4841 = vmatprep.subr.mxu0 0.0
    %4842 = vmatpush1.msra.mxu0 0.0
    %4843 = vmatprep.mubr.f32.mxu0 0.0
    %4844 = vmatmul.mubr.f32.gmra.mrb[0].mxu0 %v4756
    %v4845 = vpop.f32.mrb[0].mxu0
    %v4846 = vadd.f32 0.0, %v4845
    %v4847 = vpop.f32.mrb[0].mxu0
    %v4848 = vadd.f32 0.0, %v4847
    %4849 = vmatprep.mubr.f32.mxu0 0.0
    %4850 = vmatmul.mubr.f32.gmra.mrb[0].mxu0 %v4759
    %v4851 = vpop.f32.mrb[0].mxu0
    %v4852 = vadd.f32 0.0, %v4851
    %v4853 = vpop.f32.mrb[0].mxu0
    %v4854 = vadd.f32 0.0, %v4853
    %4855 = vmatprep.mubr.f32.mxu0 0.0
    %4856 = vmatmul.mubr.f32.gmra.mrb[0].mxu0 %v4762
    %v4857 = vpop.f32.mrb[0].mxu0
    %v4858 = vadd.f32 0.0, %v4857
    %v4859 = vpop.f32.mrb[0].mxu0
    %v4860 = vadd.f32 0.0, %v4859
    %4861 = vmatprep.mubr.f32.mxu0 0.0
    %4862 = vmatmul.mubr.f32.gmra.mrb[0].mxu0 %v4765
    %v4863 = vpop.f32.mrb[0].mxu0
    %v4864 = vadd.f32 0.0, %v4863
    %v4865 = vpop.f32.mrb[0].mxu0
    %v4866 = vadd.f32 0.0, %v4865
    %4867 = vmatprep.mubr.f32.mxu0 0.0
    %4868 = vmatmul.mubr.f32.gmra.mrb[0].mxu0 %v4768
    %v4869 = vpop.f32.mrb[0].mxu0
    %v4870 = vadd.f32 0.0, %v4869
    %v4871 = vpop.f32.mrb[0].mxu0
    %v4872 = vadd.f32 0.0, %v4871
    %4873 = vmatprep.mubr.f32.mxu0 0.0
    %4874 = vmatmul.mubr.f32.gmra.mrb[0].mxu0 %v4771
    %v4875 = vpop.f32.mrb[0].mxu0
    %v4876 = vadd.f32 0.0, %v4875
    %v4877 = vpop.f32.mrb[0].mxu0
    %v4878 = vadd.f32 0.0, %v4877
    %4879 = vmatprep.mubr.f32.mxu0 0.0
    %4880 = vmatmul.mubr.f32.gmra.mrb[0].mxu0 %v4774
    %v4881 = vpop.f32.mrb[0].mxu0
    %v4882 = vadd.f32 0.0, %v4881
    %v4883 = vpop.f32.mrb[0].mxu0
    %v4884 = vadd.f32 0.0, %v4883
    %4885 = vmatprep.mubr.f32.mxu0 0.0
    %4886 = vmatmul.mubr.f32.gmra.mrb[0].mxu0 %v4777
    %v4887 = vpop.f32.mrb[0].mxu0
    %v4888 = vadd.f32 0.0, %v4887
    %v4889 = vpop.f32.mrb[0].mxu0
    %v4890 = vadd.f32 0.0, %v4889
    %4891 = vdwg.mxu0
    %v4892 = vadd.f32 %v4570, %v4846
    %v4893 = vadd.f32 %v4571, %v4848
    %v4894 = vadd.f32 %v4572, %v4852
    %v4895 = vadd.f32 %v4573, %v4854
    %v4896 = vadd.f32 %v4574, %v4858
    %v4897 = vadd.f32 %v4575, %v4860
    %v4898 = vadd.f32 %v4576, %v4864
    %v4899 = vadd.f32 %v4577, %v4866
    %v4900 = vadd.f32 %v4578, %v4870
    %v4901 = vadd.f32 %v4579, %v4872
    %v4902 = vadd.f32 %v4580, %v4876
    %v4903 = vadd.f32 %v4581, %v4878
    %v4904 = vadd.f32 %v4582, %v4882
    %v4905 = vadd.f32 %v4583, %v4884
    %v4906 = vadd.f32 %v4584, %v4888
    %v4907 = vadd.f32 %v4585, %v4890
    %s4908 = scalar_lea.vmem %s10, 128
    %v4909 = vld [vmem:[%s4908] sm:$0xff]
    %v4910 = vld [vmem:[%s4908 + $0x8] sm:$0xff]
    %v4911 = vld [vmem:[%s4908 + $0x10] sm:$0xff]
    %v4912 = vld [vmem:[%s4908 + $0x18] sm:$0xff]
    %v4913 = vld [vmem:[%s4908 + $0x20] sm:$0xff]
    %v4914 = vld [vmem:[%s4908 + $0x28] sm:$0xff]
    %v4915 = vld [vmem:[%s4908 + $0x30] sm:$0xff]
    %v4916 = vld [vmem:[%s4908 + $0x38] sm:$0xff]
    %v4918 = vsel %vm249, %v4909, 0
    %v4921 = vsel %vm249, %v4910, 0
    %v4924 = vsel %vm249, %v4911, 0
    %v4927 = vsel %vm249, %v4912, 0
    %v4930 = vsel %vm249, %v4913, 0
    %v4933 = vsel %vm249, %v4914, 0
    %v4936 = vsel %vm249, %v4915, 0
    %v4939 = vsel %vm249, %v4916, 0
    %4941 = vmatprep.subr.mxu0 0.0
    %4942 = vmatpush1.msra.mxu0 %v4241
    %4943 = vmatprep.subr.mxu0 0.0
    %4944 = vmatpush1.msra.mxu0 %v4242
    %4945 = vmatprep.subr.mxu0 0.0
    %4946 = vmatpush1.msra.mxu0 %v4243
    %4947 = vmatprep.subr.mxu0 0.0
    %4948 = vmatpush1.msra.mxu0 %v4244
    %4949 = vmatprep.subr.mxu0 0.0
    %4950 = vmatpush1.msra.mxu0 %v4245
    %4951 = vmatprep.subr.mxu0 0.0
    %4952 = vmatpush1.msra.mxu0 %v4246
    %4953 = vmatprep.subr.mxu0 0.0
    %4954 = vmatpush1.msra.mxu0 %v4247
    %4955 = vmatprep.subr.mxu0 0.0
    %4956 = vmatpush1.msra.mxu0 %v4248
    %4957 = vmatprep.subr.mxu0 0.0
    %4958 = vmatpush1.msra.mxu0 %v4249
    %4959 = vmatprep.subr.mxu0 0.0
    %4960 = vmatpush1.msra.mxu0 %v4250
    %4961 = vmatprep.subr.mxu0 0.0
    %4962 = vmatpush1.msra.mxu0 %v4251
    %4963 = vmatprep.subr.mxu0 0.0
    %4964 = vmatpush1.msra.mxu0 %v4252
    %4965 = vmatprep.subr.mxu0 0.0
    %4966 = vmatpush1.msra.mxu0 0.0
    %4967 = vmatprep.subr.mxu0 0.0
    %4968 = vmatpush1.msra.mxu0 0.0
    %4969 = vmatprep.subr.mxu0 0.0
    %4970 = vmatpush1.msra.mxu0 0.0
    %4971 = vmatprep.subr.mxu0 0.0
    %4972 = vmatpush1.msra.mxu0 0.0
    %4973 = vmatprep.subr.mxu0 0.0
    %4974 = vmatpush1.msra.mxu0 0.0
    %4975 = vmatprep.subr.mxu0 0.0
    %4976 = vmatpush1.msra.mxu0 0.0
    %4977 = vmatprep.subr.mxu0 0.0
    %4978 = vmatpush1.msra.mxu0 0.0
    %4979 = vmatprep.subr.mxu0 0.0
    %4980 = vmatpush1.msra.mxu0 0.0
    %4981 = vmatprep.subr.mxu0 0.0
    %4982 = vmatpush1.msra.mxu0 0.0
    %4983 = vmatprep.subr.mxu0 0.0
    %4984 = vmatpush1.msra.mxu0 0.0
    %4985 = vmatprep.subr.mxu0 0.0
    %4986 = vmatpush1.msra.mxu0 0.0
    %4987 = vmatprep.subr.mxu0 0.0
    %4988 = vmatpush1.msra.mxu0 0.0
    %4989 = vmatprep.subr.mxu0 0.0
    %4990 = vmatpush1.msra.mxu0 0.0
    %4991 = vmatprep.subr.mxu0 0.0
    %4992 = vmatpush1.msra.mxu0 0.0
    %4993 = vmatprep.subr.mxu0 0.0
    %4994 = vmatpush1.msra.mxu0 0.0
    %4995 = vmatprep.subr.mxu0 0.0
    %4996 = vmatpush1.msra.mxu0 0.0
    %4997 = vmatprep.subr.mxu0 0.0
    %4998 = vmatpush1.msra.mxu0 0.0
    %4999 = vmatprep.subr.mxu0 0.0
    %5000 = vmatpush1.msra.mxu0 0.0
    %5001 = vmatprep.subr.mxu0 0.0
    %5002 = vmatpush1.msra.mxu0 0.0
    %5003 = vmatprep.subr.mxu0 0.0
    %5004 = vmatpush1.msra.mxu0 0.0
    %5005 = vmatprep.mubr.f32.mxu0 0.0
    %5006 = vmatmul.mubr.f32.gmra.mrb[0].mxu0 %v4918
    %v5007 = vpop.f32.mrb[0].mxu0
    %v5008 = vadd.f32 0.0, %v5007
    %v5009 = vpop.f32.mrb[0].mxu0
    %5010 = vmatprep.mubr.f32.mxu0 0.0
    %5011 = vmatmul.mubr.f32.gmra.mrb[0].mxu0 %v4921
    %v5012 = vpop.f32.mrb[0].mxu0
    %v5013 = vadd.f32 0.0, %v5012
    %v5014 = vpop.f32.mrb[0].mxu0
    %5015 = vmatprep.mubr.f32.mxu0 0.0
    %5016 = vmatmul.mubr.f32.gmra.mrb[0].mxu0 %v4924
    %v5017 = vpop.f32.mrb[0].mxu0
    %v5018 = vadd.f32 0.0, %v5017
    %v5019 = vpop.f32.mrb[0].mxu0
    %5020 = vmatprep.mubr.f32.mxu0 0.0
    %5021 = vmatmul.mubr.f32.gmra.mrb[0].mxu0 %v4927
    %v5022 = vpop.f32.mrb[0].mxu0
    %v5023 = vadd.f32 0.0, %v5022
    %v5024 = vpop.f32.mrb[0].mxu0
    %5025 = vmatprep.mubr.f32.mxu0 0.0
    %5026 = vmatmul.mubr.f32.gmra.mrb[0].mxu0 %v4930
    %v5027 = vpop.f32.mrb[0].mxu0
    %v5028 = vadd.f32 0.0, %v5027
    %v5029 = vpop.f32.mrb[0].mxu0
    %5030 = vmatprep.mubr.f32.mxu0 0.0
    %5031 = vmatmul.mubr.f32.gmra.mrb[0].mxu0 %v4933
    %v5032 = vpop.f32.mrb[0].mxu0
    %v5033 = vadd.f32 0.0, %v5032
    %v5034 = vpop.f32.mrb[0].mxu0
    %5035 = vmatprep.mubr.f32.mxu0 0.0
    %5036 = vmatmul.mubr.f32.gmra.mrb[0].mxu0 %v4936
    %v5037 = vpop.f32.mrb[0].mxu0
    %v5038 = vadd.f32 0.0, %v5037
    %v5039 = vpop.f32.mrb[0].mxu0
    %5040 = vmatprep.mubr.f32.mxu0 0.0
    %5041 = vmatmul.mubr.f32.gmra.mrb[0].mxu0 %v4939
    %v5042 = vpop.f32.mrb[0].mxu0
    %v5043 = vadd.f32 0.0, %v5042
    %v5044 = vpop.f32.mrb[0].mxu0
    %5045 = vdwg.mxu0
    %s5046 = scalar_lea.vmem %s8, 480
    %v5047 = vld [vmem:[%s5046] sm:$0xff]
    %v5048 = vld [vmem:[%s5046 + $0x8] sm:$0xff]
    %v5049 = vld [vmem:[%s5046 + $0x10] sm:$0xff]
    %v5050 = vld [vmem:[%s5046 + $0x18] sm:$0xff]
    %v5051 = vld [vmem:[%s5046 + $0x20] sm:$0xff]
    %v5052 = vld [vmem:[%s5046 + $0x28] sm:$0xff]
    %v5053 = vld [vmem:[%s5046 + $0x30] sm:$0xff]
    %v5054 = vld [vmem:[%s5046 + $0x38] sm:$0xff]
    %v5055 = vld [vmem:[%s5046 + $0x40] sm:$0xff]
    %v5056 = vld [vmem:[%s5046 + $0x48] sm:$0xff]
    %v5057 = vld [vmem:[%s5046 + $0x50] sm:$0xff]
    %v5058 = vld [vmem:[%s5046 + $0x58] sm:$0xff]
    %v5059 = vld [vmem:[%s5046 + $0x60] sm:$0xff]
    %v5060 = vld [vmem:[%s5046 + $0x68] sm:$0xff]
    %v5061 = vld [vmem:[%s5046 + $0x70] sm:$0xff]
    %v5062 = vld [vmem:[%s5046 + $0x78] sm:$0xff]
    %v5063 = vld [vmem:[%s5046 + $0x80] sm:$0xff]
    %v5064 = vld [vmem:[%s5046 + $0x88] sm:$0xff]
    %v5065 = vld [vmem:[%s5046 + $0x90] sm:$0xff]
    %v5066 = vld [vmem:[%s5046 + $0x98] sm:$0xff]
    %v5067 = vld [vmem:[%s5046 + $0xa0] sm:$0xff]
    %v5068 = vld [vmem:[%s5046 + $0xa8] sm:$0xff]
    %v5069 = vld [vmem:[%s5046 + $0xb0] sm:$0xff]
    %v5070 = vld [vmem:[%s5046 + $0xb8] sm:$0xff]
    %v5071 = vld [vmem:[%s5046 + $0xc0] sm:$0xff]
    %v5072 = vld [vmem:[%s5046 + $0xc8] sm:$0xff]
    %v5073 = vld [vmem:[%s5046 + $0xd0] sm:$0xff]
    %v5074 = vld [vmem:[%s5046 + $0xd8] sm:$0xff]
    %v5075 = vld [vmem:[%s5046 + $0xe0] sm:$0xff]
    %v5076 = vld [vmem:[%s5046 + $0xe8] sm:$0xff]
    %v5078 = vsel %vm4421, %v5008, 0
    %v5081 = vsel %vm4421, %v5013, 0
    %v5084 = vsel %vm4421, %v5018, 0
    %v5087 = vsel %vm4421, %v5023, 0
    %v5090 = vsel %vm4421, %v5028, 0
    %v5093 = vsel %vm4421, %v5033, 0
    %v5096 = vsel %vm4421, %v5038, 0
    %v5099 = vsel %vm4421, %v5043, 0
    %5101 = vmatprep.subr.mxu0 %v5048
    %5102 = vmatpush1.msra.mxu0 %v5047
    %5103 = vmatprep.subr.mxu0 %v5050
    %5104 = vmatpush1.msra.mxu0 %v5049
    %5105 = vmatprep.subr.mxu0 %v5052
    %5106 = vmatpush1.msra.mxu0 %v5051
    %5107 = vmatprep.subr.mxu0 %v5054
    %5108 = vmatpush1.msra.mxu0 %v5053
    %5109 = vmatprep.subr.mxu0 %v5056
    %5110 = vmatpush1.msra.mxu0 %v5055
    %5111 = vmatprep.subr.mxu0 %v5058
    %5112 = vmatpush1.msra.mxu0 %v5057
    %5113 = vmatprep.subr.mxu0 %v5060
    %5114 = vmatpush1.msra.mxu0 %v5059
    %5115 = vmatprep.subr.mxu0 %v5062
    %5116 = vmatpush1.msra.mxu0 %v5061
    %5117 = vmatprep.subr.mxu0 %v5064
    %5118 = vmatpush1.msra.mxu0 %v5063
    %5119 = vmatprep.subr.mxu0 %v5066
    %5120 = vmatpush1.msra.mxu0 %v5065
    %5121 = vmatprep.subr.mxu0 %v5068
    %5122 = vmatpush1.msra.mxu0 %v5067
    %5123 = vmatprep.subr.mxu0 %v5070
    %5124 = vmatpush1.msra.mxu0 %v5069
    %5125 = vmatprep.subr.mxu0 %v5072
    %5126 = vmatpush1.msra.mxu0 %v5071
    %5127 = vmatprep.subr.mxu0 %v5074
    %5128 = vmatpush1.msra.mxu0 %v5073
    %5129 = vmatprep.subr.mxu0 %v5076
    %5130 = vmatpush1.msra.mxu0 %v5075
    %5131 = vmatprep.subr.mxu0 0.0
    %5132 = vmatpush1.msra.mxu0 0.0
    %5133 = vmatprep.subr.mxu0 0.0
    %5134 = vmatpush1.msra.mxu0 0.0
    %5135 = vmatprep.subr.mxu0 0.0
    %5136 = vmatpush1.msra.mxu0 0.0
    %5137 = vmatprep.subr.mxu0 0.0
    %5138 = vmatpush1.msra.mxu0 0.0
    %5139 = vmatprep.subr.mxu0 0.0
    %5140 = vmatpush1.msra.mxu0 0.0
    %5141 = vmatprep.subr.mxu0 0.0
    %5142 = vmatpush1.msra.mxu0 0.0
    %5143 = vmatprep.subr.mxu0 0.0
    %5144 = vmatpush1.msra.mxu0 0.0
    %5145 = vmatprep.subr.mxu0 0.0
    %5146 = vmatpush1.msra.mxu0 0.0
    %5147 = vmatprep.subr.mxu0 0.0
    %5148 = vmatpush1.msra.mxu0 0.0
    %5149 = vmatprep.subr.mxu0 0.0
    %5150 = vmatpush1.msra.mxu0 0.0
    %5151 = vmatprep.subr.mxu0 0.0
    %5152 = vmatpush1.msra.mxu0 0.0
    %5153 = vmatprep.subr.mxu0 0.0
    %5154 = vmatpush1.msra.mxu0 0.0
    %5155 = vmatprep.subr.mxu0 0.0
    %5156 = vmatpush1.msra.mxu0 0.0
    %5157 = vmatprep.subr.mxu0 0.0
    %5158 = vmatpush1.msra.mxu0 0.0
    %5159 = vmatprep.subr.mxu0 0.0
    %5160 = vmatpush1.msra.mxu0 0.0
    %5161 = vmatprep.subr.mxu0 0.0
    %5162 = vmatpush1.msra.mxu0 0.0
    %5163 = vmatprep.subr.mxu0 0.0
    %5164 = vmatpush1.msra.mxu0 0.0
    %5165 = vmatprep.mubr.f32.mxu0 0.0
    %5166 = vmatmul.mubr.f32.gmra.mrb[0].mxu0 %v5078
    %v5167 = vpop.f32.mrb[0].mxu0
    %v5168 = vadd.f32 0.0, %v5167
    %v5169 = vpop.f32.mrb[0].mxu0
    %v5170 = vadd.f32 0.0, %v5169
    %5171 = vmatprep.mubr.f32.mxu0 0.0
    %5172 = vmatmul.mubr.f32.gmra.mrb[0].mxu0 %v5081
    %v5173 = vpop.f32.mrb[0].mxu0
    %v5174 = vadd.f32 0.0, %v5173
    %v5175 = vpop.f32.mrb[0].mxu0
    %v5176 = vadd.f32 0.0, %v5175
    %5177 = vmatprep.mubr.f32.mxu0 0.0
    %5178 = vmatmul.mubr.f32.gmra.mrb[0].mxu0 %v5084
    %v5179 = vpop.f32.mrb[0].mxu0
    %v5180 = vadd.f32 0.0, %v5179
    %v5181 = vpop.f32.mrb[0].mxu0
    %v5182 = vadd.f32 0.0, %v5181
    %5183 = vmatprep.mubr.f32.mxu0 0.0
    %5184 = vmatmul.mubr.f32.gmra.mrb[0].mxu0 %v5087
    %v5185 = vpop.f32.mrb[0].mxu0
    %v5186 = vadd.f32 0.0, %v5185
    %v5187 = vpop.f32.mrb[0].mxu0
    %v5188 = vadd.f32 0.0, %v5187
    %5189 = vmatprep.mubr.f32.mxu0 0.0
    %5190 = vmatmul.mubr.f32.gmra.mrb[0].mxu0 %v5090
    %v5191 = vpop.f32.mrb[0].mxu0
    %v5192 = vadd.f32 0.0, %v5191
    %v5193 = vpop.f32.mrb[0].mxu0
    %v5194 = vadd.f32 0.0, %v5193
    %5195 = vmatprep.mubr.f32.mxu0 0.0
    %5196 = vmatmul.mubr.f32.gmra.mrb[0].mxu0 %v5093
    %v5197 = vpop.f32.mrb[0].mxu0
    %v5198 = vadd.f32 0.0, %v5197
    %v5199 = vpop.f32.mrb[0].mxu0
    %v5200 = vadd.f32 0.0, %v5199
    %5201 = vmatprep.mubr.f32.mxu0 0.0
    %5202 = vmatmul.mubr.f32.gmra.mrb[0].mxu0 %v5096
    %v5203 = vpop.f32.mrb[0].mxu0
    %v5204 = vadd.f32 0.0, %v5203
    %v5205 = vpop.f32.mrb[0].mxu0
    %v5206 = vadd.f32 0.0, %v5205
    %5207 = vmatprep.mubr.f32.mxu0 0.0
    %5208 = vmatmul.mubr.f32.gmra.mrb[0].mxu0 %v5099
    %v5209 = vpop.f32.mrb[0].mxu0
    %v5210 = vadd.f32 0.0, %v5209
    %v5211 = vpop.f32.mrb[0].mxu0
    %v5212 = vadd.f32 0.0, %v5211
    %5213 = vdwg.mxu0
    %v5214 = vadd.f32 %v4892, %v5168
    %v5215 = vadd.f32 %v4893, %v5170
    %v5216 = vadd.f32 %v4894, %v5174
    %v5217 = vadd.f32 %v4895, %v5176
    %v5218 = vadd.f32 %v4896, %v5180
    %v5219 = vadd.f32 %v4897, %v5182
    %v5220 = vadd.f32 %v4898, %v5186
    %v5221 = vadd.f32 %v4899, %v5188
    %v5222 = vadd.f32 %v4900, %v5192
    %v5223 = vadd.f32 %v4901, %v5194
    %v5224 = vadd.f32 %v4902, %v5198
    %v5225 = vadd.f32 %v4903, %v5200
    %v5226 = vadd.f32 %v4904, %v5204
    %v5227 = vadd.f32 %v4905, %v5206
    %v5228 = vadd.f32 %v4906, %v5210
    %v5229 = vadd.f32 %v4907, %v5212
    %s5230 = scalar_lea.vmem %s10, 192
    %v5231 = vld [vmem:[%s5230] sm:$0xff]
    %v5232 = vld [vmem:[%s5230 + $0x8] sm:$0xff]
    %v5233 = vld [vmem:[%s5230 + $0x10] sm:$0xff]
    %v5234 = vld [vmem:[%s5230 + $0x18] sm:$0xff]
    %v5235 = vld [vmem:[%s5230 + $0x20] sm:$0xff]
    %v5236 = vld [vmem:[%s5230 + $0x28] sm:$0xff]
    %v5237 = vld [vmem:[%s5230 + $0x30] sm:$0xff]
    %v5238 = vld [vmem:[%s5230 + $0x38] sm:$0xff]
    %v5240 = vsel %vm249, %v5231, 0
    %v5243 = vsel %vm249, %v5232, 0
    %v5246 = vsel %vm249, %v5233, 0
    %v5249 = vsel %vm249, %v5234, 0
    %v5252 = vsel %vm249, %v5235, 0
    %v5255 = vsel %vm249, %v5236, 0
    %v5258 = vsel %vm249, %v5237, 0
    %v5261 = vsel %vm249, %v5238, 0
    %5263 = vmatprep.subr.mxu0 0.0
    %5264 = vmatpush1.msra.mxu0 %v4241
    %5265 = vmatprep.subr.mxu0 0.0
    %5266 = vmatpush1.msra.mxu0 %v4242
    %5267 = vmatprep.subr.mxu0 0.0
    %5268 = vmatpush1.msra.mxu0 %v4243
    %5269 = vmatprep.subr.mxu0 0.0
    %5270 = vmatpush1.msra.mxu0 %v4244
    %5271 = vmatprep.subr.mxu0 0.0
    %5272 = vmatpush1.msra.mxu0 %v4245
    %5273 = vmatprep.subr.mxu0 0.0
    %5274 = vmatpush1.msra.mxu0 %v4246
    %5275 = vmatprep.subr.mxu0 0.0
    %5276 = vmatpush1.msra.mxu0 %v4247
    %5277 = vmatprep.subr.mxu0 0.0
    %5278 = vmatpush1.msra.mxu0 %v4248
    %5279 = vmatprep.subr.mxu0 0.0
    %5280 = vmatpush1.msra.mxu0 %v4249
    %5281 = vmatprep.subr.mxu0 0.0
    %5282 = vmatpush1.msra.mxu0 %v4250
    %5283 = vmatprep.subr.mxu0 0.0
    %5284 = vmatpush1.msra.mxu0 %v4251
    %5285 = vmatprep.subr.mxu0 0.0
    %5286 = vmatpush1.msra.mxu0 %v4252
    %5287 = vmatprep.subr.mxu0 0.0
    %5288 = vmatpush1.msra.mxu0 0.0
    %5289 = vmatprep.subr.mxu0 0.0
    %5290 = vmatpush1.msra.mxu0 0.0
    %5291 = vmatprep.subr.mxu0 0.0
    %5292 = vmatpush1.msra.mxu0 0.0
    %5293 = vmatprep.subr.mxu0 0.0
    %5294 = vmatpush1.msra.mxu0 0.0
    %5295 = vmatprep.subr.mxu0 0.0
    %5296 = vmatpush1.msra.mxu0 0.0
    %5297 = vmatprep.subr.mxu0 0.0
    %5298 = vmatpush1.msra.mxu0 0.0
    %5299 = vmatprep.subr.mxu0 0.0
    %5300 = vmatpush1.msra.mxu0 0.0
    %5301 = vmatprep.subr.mxu0 0.0
    %5302 = vmatpush1.msra.mxu0 0.0
    %5303 = vmatprep.subr.mxu0 0.0
    %5304 = vmatpush1.msra.mxu0 0.0
    %5305 = vmatprep.subr.mxu0 0.0
    %5306 = vmatpush1.msra.mxu0 0.0
    %5307 = vmatprep.subr.mxu0 0.0
    %5308 = vmatpush1.msra.mxu0 0.0
    %5309 = vmatprep.subr.mxu0 0.0
    %5310 = vmatpush1.msra.mxu0 0.0
    %5311 = vmatprep.subr.mxu0 0.0
    %5312 = vmatpush1.msra.mxu0 0.0
    %5313 = vmatprep.subr.mxu0 0.0
    %5314 = vmatpush1.msra.mxu0 0.0
    %5315 = vmatprep.subr.mxu0 0.0
    %5316 = vmatpush1.msra.mxu0 0.0
    %5317 = vmatprep.subr.mxu0 0.0
    %5318 = vmatpush1.msra.mxu0 0.0
    %5319 = vmatprep.subr.mxu0 0.0
    %5320 = vmatpush1.msra.mxu0 0.0
    %5321 = vmatprep.subr.mxu0 0.0
    %5322 = vmatpush1.msra.mxu0 0.0
    %5323 = vmatprep.subr.mxu0 0.0
    %5324 = vmatpush1.msra.mxu0 0.0
    %5325 = vmatprep.subr.mxu0 0.0
    %5326 = vmatpush1.msra.mxu0 0.0
    %5327 = vmatprep.mubr.f32.mxu0 0.0
    %5328 = vmatmul.mubr.f32.gmra.mrb[0].mxu0 %v5240
    %v5329 = vpop.f32.mrb[0].mxu0
    %v5330 = vadd.f32 0.0, %v5329
    %v5331 = vpop.f32.mrb[0].mxu0
    %5332 = vmatprep.mubr.f32.mxu0 0.0
    %5333 = vmatmul.mubr.f32.gmra.mrb[0].mxu0 %v5243
    %v5334 = vpop.f32.mrb[0].mxu0
    %v5335 = vadd.f32 0.0, %v5334
    %v5336 = vpop.f32.mrb[0].mxu0
    %5337 = vmatprep.mubr.f32.mxu0 0.0
    %5338 = vmatmul.mubr.f32.gmra.mrb[0].mxu0 %v5246
    %v5339 = vpop.f32.mrb[0].mxu0
    %v5340 = vadd.f32 0.0, %v5339
    %v5341 = vpop.f32.mrb[0].mxu0
    %5342 = vmatprep.mubr.f32.mxu0 0.0
    %5343 = vmatmul.mubr.f32.gmra.mrb[0].mxu0 %v5249
    %v5344 = vpop.f32.mrb[0].mxu0
    %v5345 = vadd.f32 0.0, %v5344
    %v5346 = vpop.f32.mrb[0].mxu0
    %5347 = vmatprep.mubr.f32.mxu0 0.0
    %5348 = vmatmul.mubr.f32.gmra.mrb[0].mxu0 %v5252
    %v5349 = vpop.f32.mrb[0].mxu0
    %v5350 = vadd.f32 0.0, %v5349
    %v5351 = vpop.f32.mrb[0].mxu0
    %5352 = vmatprep.mubr.f32.mxu0 0.0
    %5353 = vmatmul.mubr.f32.gmra.mrb[0].mxu0 %v5255
    %v5354 = vpop.f32.mrb[0].mxu0
    %v5355 = vadd.f32 0.0, %v5354
    %v5356 = vpop.f32.mrb[0].mxu0
    %5357 = vmatprep.mubr.f32.mxu0 0.0
    %5358 = vmatmul.mubr.f32.gmra.mrb[0].mxu0 %v5258
    %v5359 = vpop.f32.mrb[0].mxu0
    %v5360 = vadd.f32 0.0, %v5359
    %v5361 = vpop.f32.mrb[0].mxu0
    %5362 = vmatprep.mubr.f32.mxu0 0.0
    %5363 = vmatmul.mubr.f32.gmra.mrb[0].mxu0 %v5261
    %v5364 = vpop.f32.mrb[0].mxu0
    %v5365 = vadd.f32 0.0, %v5364
    %v5366 = vpop.f32.mrb[0].mxu0
    %5367 = vdwg.mxu0
    %s5368 = scalar_lea.vmem %s8, 720
    %v5369 = vld [vmem:[%s5368] sm:$0xff]
    %v5370 = vld [vmem:[%s5368 + $0x8] sm:$0xff]
    %v5371 = vld [vmem:[%s5368 + $0x10] sm:$0xff]
    %v5372 = vld [vmem:[%s5368 + $0x18] sm:$0xff]
    %v5373 = vld [vmem:[%s5368 + $0x20] sm:$0xff]
    %v5374 = vld [vmem:[%s5368 + $0x28] sm:$0xff]
    %v5375 = vld [vmem:[%s5368 + $0x30] sm:$0xff]
    %v5376 = vld [vmem:[%s5368 + $0x38] sm:$0xff]
    %v5377 = vld [vmem:[%s5368 + $0x40] sm:$0xff]
    %v5378 = vld [vmem:[%s5368 + $0x48] sm:$0xff]
    %v5379 = vld [vmem:[%s5368 + $0x50] sm:$0xff]
    %v5380 = vld [vmem:[%s5368 + $0x58] sm:$0xff]
    %v5381 = vld [vmem:[%s5368 + $0x60] sm:$0xff]
    %v5382 = vld [vmem:[%s5368 + $0x68] sm:$0xff]
    %v5383 = vld [vmem:[%s5368 + $0x70] sm:$0xff]
    %v5384 = vld [vmem:[%s5368 + $0x78] sm:$0xff]
    %v5385 = vld [vmem:[%s5368 + $0x80] sm:$0xff]
    %v5386 = vld [vmem:[%s5368 + $0x88] sm:$0xff]
    %v5387 = vld [vmem:[%s5368 + $0x90] sm:$0xff]
    %v5388 = vld [vmem:[%s5368 + $0x98] sm:$0xff]
    %v5389 = vld [vmem:[%s5368 + $0xa0] sm:$0xff]
    %v5390 = vld [vmem:[%s5368 + $0xa8] sm:$0xff]
    %v5391 = vld [vmem:[%s5368 + $0xb0] sm:$0xff]
    %v5392 = vld [vmem:[%s5368 + $0xb8] sm:$0xff]
    %v5393 = vld [vmem:[%s5368 + $0xc0] sm:$0xff]
    %v5394 = vld [vmem:[%s5368 + $0xc8] sm:$0xff]
    %v5395 = vld [vmem:[%s5368 + $0xd0] sm:$0xff]
    %v5396 = vld [vmem:[%s5368 + $0xd8] sm:$0xff]
    %v5397 = vld [vmem:[%s5368 + $0xe0] sm:$0xff]
    %v5398 = vld [vmem:[%s5368 + $0xe8] sm:$0xff]
    %v5400 = vsel %vm4421, %v5330, 0
    %v5403 = vsel %vm4421, %v5335, 0
    %v5406 = vsel %vm4421, %v5340, 0
    %v5409 = vsel %vm4421, %v5345, 0
    %v5412 = vsel %vm4421, %v5350, 0
    %v5415 = vsel %vm4421, %v5355, 0
    %v5418 = vsel %vm4421, %v5360, 0
    %v5421 = vsel %vm4421, %v5365, 0
    %5423 = vmatprep.subr.mxu0 %v5370
    %5424 = vmatpush1.msra.mxu0 %v5369
    %5425 = vmatprep.subr.mxu0 %v5372
    %5426 = vmatpush1.msra.mxu0 %v5371
    %5427 = vmatprep.subr.mxu0 %v5374
    %5428 = vmatpush1.msra.mxu0 %v5373
    %5429 = vmatprep.subr.mxu0 %v5376
    %5430 = vmatpush1.msra.mxu0 %v5375
    %5431 = vmatprep.subr.mxu0 %v5378
    %5432 = vmatpush1.msra.mxu0 %v5377
    %5433 = vmatprep.subr.mxu0 %v5380
    %5434 = vmatpush1.msra.mxu0 %v5379
    %5435 = vmatprep.subr.mxu0 %v5382
    %5436 = vmatpush1.msra.mxu0 %v5381
    %5437 = vmatprep.subr.mxu0 %v5384
    %5438 = vmatpush1.msra.mxu0 %v5383
    %5439 = vmatprep.subr.mxu0 %v5386
    %5440 = vmatpush1.msra.mxu0 %v5385
    %5441 = vmatprep.subr.mxu0 %v5388
    %5442 = vmatpush1.msra.mxu0 %v5387
    %5443 = vmatprep.subr.mxu0 %v5390
    %5444 = vmatpush1.msra.mxu0 %v5389
    %5445 = vmatprep.subr.mxu0 %v5392
    %5446 = vmatpush1.msra.mxu0 %v5391
    %5447 = vmatprep.subr.mxu0 %v5394
    %5448 = vmatpush1.msra.mxu0 %v5393
    %5449 = vmatprep.subr.mxu0 %v5396
    %5450 = vmatpush1.msra.mxu0 %v5395
    %5451 = vmatprep.subr.mxu0 %v5398
    %5452 = vmatpush1.msra.mxu0 %v5397
    %5453 = vmatprep.subr.mxu0 0.0
    %5454 = vmatpush1.msra.mxu0 0.0
    %5455 = vmatprep.subr.mxu0 0.0
    %5456 = vmatpush1.msra.mxu0 0.0
    %5457 = vmatprep.subr.mxu0 0.0
    %5458 = vmatpush1.msra.mxu0 0.0
    %5459 = vmatprep.subr.mxu0 0.0
    %5460 = vmatpush1.msra.mxu0 0.0
    %5461 = vmatprep.subr.mxu0 0.0
    %5462 = vmatpush1.msra.mxu0 0.0
    %5463 = vmatprep.subr.mxu0 0.0
    %5464 = vmatpush1.msra.mxu0 0.0
    %5465 = vmatprep.subr.mxu0 0.0
    %5466 = vmatpush1.msra.mxu0 0.0
    %5467 = vmatprep.subr.mxu0 0.0
    %5468 = vmatpush1.msra.mxu0 0.0
    %5469 = vmatprep.subr.mxu0 0.0
    %5470 = vmatpush1.msra.mxu0 0.0
    %5471 = vmatprep.subr.mxu0 0.0
    %5472 = vmatpush1.msra.mxu0 0.0
    %5473 = vmatprep.subr.mxu0 0.0
    %5474 = vmatpush1.msra.mxu0 0.0
    %5475 = vmatprep.subr.mxu0 0.0
    %5476 = vmatpush1.msra.mxu0 0.0
    %5477 = vmatprep.subr.mxu0 0.0
    %5478 = vmatpush1.msra.mxu0 0.0
    %5479 = vmatprep.subr.mxu0 0.0
    %5480 = vmatpush1.msra.mxu0 0.0
    %5481 = vmatprep.subr.mxu0 0.0
    %5482 = vmatpush1.msra.mxu0 0.0
    %5483 = vmatprep.subr.mxu0 0.0
    %5484 = vmatpush1.msra.mxu0 0.0
    %5485 = vmatprep.subr.mxu0 0.0
    %5486 = vmatpush1.msra.mxu0 0.0
    %5487 = vmatprep.mubr.f32.mxu0 0.0
    %5488 = vmatmul.mubr.f32.gmra.mrb[0].mxu0 %v5400
    %v5489 = vpop.f32.mrb[0].mxu0
    %v5490 = vadd.f32 0.0, %v5489
    %v5491 = vpop.f32.mrb[0].mxu0
    %v5492 = vadd.f32 0.0, %v5491
    %5493 = vmatprep.mubr.f32.mxu0 0.0
    %5494 = vmatmul.mubr.f32.gmra.mrb[0].mxu0 %v5403
    %v5495 = vpop.f32.mrb[0].mxu0
    %v5496 = vadd.f32 0.0, %v5495
    %v5497 = vpop.f32.mrb[0].mxu0
    %v5498 = vadd.f32 0.0, %v5497
    %5499 = vmatprep.mubr.f32.mxu0 0.0
    %5500 = vmatmul.mubr.f32.gmra.mrb[0].mxu0 %v5406
    %v5501 = vpop.f32.mrb[0].mxu0
    %v5502 = vadd.f32 0.0, %v5501
    %v5503 = vpop.f32.mrb[0].mxu0
    %v5504 = vadd.f32 0.0, %v5503
    %5505 = vmatprep.mubr.f32.mxu0 0.0
    %5506 = vmatmul.mubr.f32.gmra.mrb[0].mxu0 %v5409
    %v5507 = vpop.f32.mrb[0].mxu0
    %v5508 = vadd.f32 0.0, %v5507
    %v5509 = vpop.f32.mrb[0].mxu0
    %v5510 = vadd.f32 0.0, %v5509
    %5511 = vmatprep.mubr.f32.mxu0 0.0
    %5512 = vmatmul.mubr.f32.gmra.mrb[0].mxu0 %v5412
    %v5513 = vpop.f32.mrb[0].mxu0
    %v5514 = vadd.f32 0.0, %v5513
    %v5515 = vpop.f32.mrb[0].mxu0
    %v5516 = vadd.f32 0.0, %v5515
    %5517 = vmatprep.mubr.f32.mxu0 0.0
    %5518 = vmatmul.mubr.f32.gmra.mrb[0].mxu0 %v5415
    %v5519 = vpop.f32.mrb[0].mxu0
    %v5520 = vadd.f32 0.0, %v5519
    %v5521 = vpop.f32.mrb[0].mxu0
    %v5522 = vadd.f32 0.0, %v5521
    %5523 = vmatprep.mubr.f32.mxu0 0.0
    %5524 = vmatmul.mubr.f32.gmra.mrb[0].mxu0 %v5418
    %v5525 = vpop.f32.mrb[0].mxu0
    %v5526 = vadd.f32 0.0, %v5525
    %v5527 = vpop.f32.mrb[0].mxu0
    %v5528 = vadd.f32 0.0, %v5527
    %5529 = vmatprep.mubr.f32.mxu0 0.0
    %5530 = vmatmul.mubr.f32.gmra.mrb[0].mxu0 %v5421
    %v5531 = vpop.f32.mrb[0].mxu0
    %v5532 = vadd.f32 0.0, %v5531
    %v5533 = vpop.f32.mrb[0].mxu0
    %v5534 = vadd.f32 0.0, %v5533
    %5535 = vdwg.mxu0
    %v5536 = vadd.f32 %v5214, %v5490
    %v5537 = vadd.f32 %v5215, %v5492
    %v5538 = vadd.f32 %v5216, %v5496
    %v5539 = vadd.f32 %v5217, %v5498
    %v5540 = vadd.f32 %v5218, %v5502
    %v5541 = vadd.f32 %v5219, %v5504
    %v5542 = vadd.f32 %v5220, %v5508
    %v5543 = vadd.f32 %v5221, %v5510
    %v5544 = vadd.f32 %v5222, %v5514
    %v5545 = vadd.f32 %v5223, %v5516
    %v5546 = vadd.f32 %v5224, %v5520
    %v5547 = vadd.f32 %v5225, %v5522
    %v5548 = vadd.f32 %v5226, %v5526
    %v5549 = vadd.f32 %v5227, %v5528
    %v5550 = vadd.f32 %v5228, %v5532
    %v5551 = vadd.f32 %v5229, %v5534
    %s5552 = scalar_lea.vmem %s10, 256
    %v5553 = vld [vmem:[%s5552] sm:$0xff]
    %v5554 = vld [vmem:[%s5552 + $0x8] sm:$0xff]
    %v5555 = vld [vmem:[%s5552 + $0x10] sm:$0xff]
    %v5556 = vld [vmem:[%s5552 + $0x18] sm:$0xff]
    %v5557 = vld [vmem:[%s5552 + $0x20] sm:$0xff]
    %v5558 = vld [vmem:[%s5552 + $0x28] sm:$0xff]
    %v5559 = vld [vmem:[%s5552 + $0x30] sm:$0xff]
    %v5560 = vld [vmem:[%s5552 + $0x38] sm:$0xff]
    %v5562 = vsel %vm249, %v5553, 0
    %v5565 = vsel %vm249, %v5554, 0
    %v5568 = vsel %vm249, %v5555, 0
    %v5571 = vsel %vm249, %v5556, 0
    %v5574 = vsel %vm249, %v5557, 0
    %v5577 = vsel %vm249, %v5558, 0
    %v5580 = vsel %vm249, %v5559, 0
    %v5583 = vsel %vm249, %v5560, 0
    %5585 = vmatprep.subr.mxu0 0.0
    %5586 = vmatpush1.msra.mxu0 %v4241
    %5587 = vmatprep.subr.mxu0 0.0
    %5588 = vmatpush1.msra.mxu0 %v4242
    %5589 = vmatprep.subr.mxu0 0.0
    %5590 = vmatpush1.msra.mxu0 %v4243
    %5591 = vmatprep.subr.mxu0 0.0
    %5592 = vmatpush1.msra.mxu0 %v4244
    %5593 = vmatprep.subr.mxu0 0.0
    %5594 = vmatpush1.msra.mxu0 %v4245
    %5595 = vmatprep.subr.mxu0 0.0
    %5596 = vmatpush1.msra.mxu0 %v4246
    %5597 = vmatprep.subr.mxu0 0.0
    %5598 = vmatpush1.msra.mxu0 %v4247
    %5599 = vmatprep.subr.mxu0 0.0
    %5600 = vmatpush1.msra.mxu0 %v4248
    %5601 = vmatprep.subr.mxu0 0.0
    %5602 = vmatpush1.msra.mxu0 %v4249
    %5603 = vmatprep.subr.mxu0 0.0
    %5604 = vmatpush1.msra.mxu0 %v4250
    %5605 = vmatprep.subr.mxu0 0.0
    %5606 = vmatpush1.msra.mxu0 %v4251
    %5607 = vmatprep.subr.mxu0 0.0
    %5608 = vmatpush1.msra.mxu0 %v4252
    %5609 = vmatprep.subr.mxu0 0.0
    %5610 = vmatpush1.msra.mxu0 0.0
    %5611 = vmatprep.subr.mxu0 0.0
    %5612 = vmatpush1.msra.mxu0 0.0
    %5613 = vmatprep.subr.mxu0 0.0
    %5614 = vmatpush1.msra.mxu0 0.0
    %5615 = vmatprep.subr.mxu0 0.0
    %5616 = vmatpush1.msra.mxu0 0.0
    %5617 = vmatprep.subr.mxu0 0.0
    %5618 = vmatpush1.msra.mxu0 0.0
    %5619 = vmatprep.subr.mxu0 0.0
    %5620 = vmatpush1.msra.mxu0 0.0
    %5621 = vmatprep.subr.mxu0 0.0
    %5622 = vmatpush1.msra.mxu0 0.0
    %5623 = vmatprep.subr.mxu0 0.0
    %5624 = vmatpush1.msra.mxu0 0.0
    %5625 = vmatprep.subr.mxu0 0.0
    %5626 = vmatpush1.msra.mxu0 0.0
    %5627 = vmatprep.subr.mxu0 0.0
    %5628 = vmatpush1.msra.mxu0 0.0
    %5629 = vmatprep.subr.mxu0 0.0
    %5630 = vmatpush1.msra.mxu0 0.0
    %5631 = vmatprep.subr.mxu0 0.0
    %5632 = vmatpush1.msra.mxu0 0.0
    %5633 = vmatprep.subr.mxu0 0.0
    %5634 = vmatpush1.msra.mxu0 0.0
    %5635 = vmatprep.subr.mxu0 0.0
    %5636 = vmatpush1.msra.mxu0 0.0
    %5637 = vmatprep.subr.mxu0 0.0
    %5638 = vmatpush1.msra.mxu0 0.0
    %5639 = vmatprep.subr.mxu0 0.0
    %5640 = vmatpush1.msra.mxu0 0.0
    %5641 = vmatprep.subr.mxu0 0.0
    %5642 = vmatpush1.msra.mxu0 0.0
    %5643 = vmatprep.subr.mxu0 0.0
    %5644 = vmatpush1.msra.mxu0 0.0
    %5645 = vmatprep.subr.mxu0 0.0
    %5646 = vmatpush1.msra.mxu0 0.0
    %5647 = vmatprep.subr.mxu0 0.0
    %5648 = vmatpush1.msra.mxu0 0.0
    %5649 = vmatprep.mubr.f32.mxu0 0.0
    %5650 = vmatmul.mubr.f32.gmra.mrb[0].mxu0 %v5562
    %v5651 = vpop.f32.mrb[0].mxu0
    %v5652 = vadd.f32 0.0, %v5651
    %v5653 = vpop.f32.mrb[0].mxu0
    %5654 = vmatprep.mubr.f32.mxu0 0.0
    %5655 = vmatmul.mubr.f32.gmra.mrb[0].mxu0 %v5565
    %v5656 = vpop.f32.mrb[0].mxu0
    %v5657 = vadd.f32 0.0, %v5656
    %v5658 = vpop.f32.mrb[0].mxu0
    %5659 = vmatprep.mubr.f32.mxu0 0.0
    %5660 = vmatmul.mubr.f32.gmra.mrb[0].mxu0 %v5568
    %v5661 = vpop.f32.mrb[0].mxu0
    %v5662 = vadd.f32 0.0, %v5661
    %v5663 = vpop.f32.mrb[0].mxu0
    %5664 = vmatprep.mubr.f32.mxu0 0.0
    %5665 = vmatmul.mubr.f32.gmra.mrb[0].mxu0 %v5571
    %v5666 = vpop.f32.mrb[0].mxu0
    %v5667 = vadd.f32 0.0, %v5666
    %v5668 = vpop.f32.mrb[0].mxu0
    %5669 = vmatprep.mubr.f32.mxu0 0.0
    %5670 = vmatmul.mubr.f32.gmra.mrb[0].mxu0 %v5574
    %v5671 = vpop.f32.mrb[0].mxu0
    %v5672 = vadd.f32 0.0, %v5671
    %v5673 = vpop.f32.mrb[0].mxu0
    %5674 = vmatprep.mubr.f32.mxu0 0.0
    %5675 = vmatmul.mubr.f32.gmra.mrb[0].mxu0 %v5577
    %v5676 = vpop.f32.mrb[0].mxu0
    %v5677 = vadd.f32 0.0, %v5676
    %v5678 = vpop.f32.mrb[0].mxu0
    %5679 = vmatprep.mubr.f32.mxu0 0.0
    %5680 = vmatmul.mubr.f32.gmra.mrb[0].mxu0 %v5580
    %v5681 = vpop.f32.mrb[0].mxu0
    %v5682 = vadd.f32 0.0, %v5681
    %v5683 = vpop.f32.mrb[0].mxu0
    %5684 = vmatprep.mubr.f32.mxu0 0.0
    %5685 = vmatmul.mubr.f32.gmra.mrb[0].mxu0 %v5583
    %v5686 = vpop.f32.mrb[0].mxu0
    %v5687 = vadd.f32 0.0, %v5686
    %v5688 = vpop.f32.mrb[0].mxu0
    %5689 = vdwg.mxu0
    %s5690 = scalar_lea.vmem %s8, 960
    %v5691 = vld [vmem:[%s5690] sm:$0xff]
    %v5692 = vld [vmem:[%s5690 + $0x8] sm:$0xff]
    %v5693 = vld [vmem:[%s5690 + $0x10] sm:$0xff]
    %v5694 = vld [vmem:[%s5690 + $0x18] sm:$0xff]
    %v5695 = vld [vmem:[%s5690 + $0x20] sm:$0xff]
    %v5696 = vld [vmem:[%s5690 + $0x28] sm:$0xff]
    %v5697 = vld [vmem:[%s5690 + $0x30] sm:$0xff]
    %v5698 = vld [vmem:[%s5690 + $0x38] sm:$0xff]
    %v5699 = vld [vmem:[%s5690 + $0x40] sm:$0xff]
    %v5700 = vld [vmem:[%s5690 + $0x48] sm:$0xff]
    %v5701 = vld [vmem:[%s5690 + $0x50] sm:$0xff]
    %v5702 = vld [vmem:[%s5690 + $0x58] sm:$0xff]
    %v5703 = vld [vmem:[%s5690 + $0x60] sm:$0xff]
    %v5704 = vld [vmem:[%s5690 + $0x68] sm:$0xff]
    %v5705 = vld [vmem:[%s5690 + $0x70] sm:$0xff]
    %v5706 = vld [vmem:[%s5690 + $0x78] sm:$0xff]
    %v5707 = vld [vmem:[%s5690 + $0x80] sm:$0xff]
    %v5708 = vld [vmem:[%s5690 + $0x88] sm:$0xff]
    %v5709 = vld [vmem:[%s5690 + $0x90] sm:$0xff]
    %v5710 = vld [vmem:[%s5690 + $0x98] sm:$0xff]
    %v5711 = vld [vmem:[%s5690 + $0xa0] sm:$0xff]
    %v5712 = vld [vmem:[%s5690 + $0xa8] sm:$0xff]
    %v5713 = vld [vmem:[%s5690 + $0xb0] sm:$0xff]
    %v5714 = vld [vmem:[%s5690 + $0xb8] sm:$0xff]
    %v5715 = vld [vmem:[%s5690 + $0xc0] sm:$0xff]
    %v5716 = vld [vmem:[%s5690 + $0xc8] sm:$0xff]
    %v5717 = vld [vmem:[%s5690 + $0xd0] sm:$0xff]
    %v5718 = vld [vmem:[%s5690 + $0xd8] sm:$0xff]
    %v5719 = vld [vmem:[%s5690 + $0xe0] sm:$0xff]
    %v5720 = vld [vmem:[%s5690 + $0xe8] sm:$0xff]
    %v5722 = vsel %vm4421, %v5652, 0
    %v5725 = vsel %vm4421, %v5657, 0
    %v5728 = vsel %vm4421, %v5662, 0
    %v5731 = vsel %vm4421, %v5667, 0
    %v5734 = vsel %vm4421, %v5672, 0
    %v5737 = vsel %vm4421, %v5677, 0
    %v5740 = vsel %vm4421, %v5682, 0
    %v5743 = vsel %vm4421, %v5687, 0
    %5745 = vmatprep.subr.mxu0 %v5692
    %5746 = vmatpush1.msra.mxu0 %v5691
    %5747 = vmatprep.subr.mxu0 %v5694
    %5748 = vmatpush1.msra.mxu0 %v5693
    %5749 = vmatprep.subr.mxu0 %v5696
    %5750 = vmatpush1.msra.mxu0 %v5695
    %5751 = vmatprep.subr.mxu0 %v5698
    %5752 = vmatpush1.msra.mxu0 %v5697
    %5753 = vmatprep.subr.mxu0 %v5700
    %5754 = vmatpush1.msra.mxu0 %v5699
    %5755 = vmatprep.subr.mxu0 %v5702
    %5756 = vmatpush1.msra.mxu0 %v5701
    %5757 = vmatprep.subr.mxu0 %v5704
    %5758 = vmatpush1.msra.mxu0 %v5703
    %5759 = vmatprep.subr.mxu0 %v5706
    %5760 = vmatpush1.msra.mxu0 %v5705
    %5761 = vmatprep.subr.mxu0 %v5708
    %5762 = vmatpush1.msra.mxu0 %v5707
    %5763 = vmatprep.subr.mxu0 %v5710
    %5764 = vmatpush1.msra.mxu0 %v5709
    %5765 = vmatprep.subr.mxu0 %v5712
    %5766 = vmatpush1.msra.mxu0 %v5711
    %5767 = vmatprep.subr.mxu0 %v5714
    %5768 = vmatpush1.msra.mxu0 %v5713
    %5769 = vmatprep.subr.mxu0 %v5716
    %5770 = vmatpush1.msra.mxu0 %v5715
    %5771 = vmatprep.subr.mxu0 %v5718
    %5772 = vmatpush1.msra.mxu0 %v5717
    %5773 = vmatprep.subr.mxu0 %v5720
    %5774 = vmatpush1.msra.mxu0 %v5719
    %5775 = vmatprep.subr.mxu0 0.0
    %5776 = vmatpush1.msra.mxu0 0.0
    %5777 = vmatprep.subr.mxu0 0.0
    %5778 = vmatpush1.msra.mxu0 0.0
    %5779 = vmatprep.subr.mxu0 0.0
    %5780 = vmatpush1.msra.mxu0 0.0
    %5781 = vmatprep.subr.mxu0 0.0
    %5782 = vmatpush1.msra.mxu0 0.0
    %5783 = vmatprep.subr.mxu0 0.0
    %5784 = vmatpush1.msra.mxu0 0.0
    %5785 = vmatprep.subr.mxu0 0.0
    %5786 = vmatpush1.msra.mxu0 0.0
    %5787 = vmatprep.subr.mxu0 0.0
    %5788 = vmatpush1.msra.mxu0 0.0
    %5789 = vmatprep.subr.mxu0 0.0
    %5790 = vmatpush1.msra.mxu0 0.0
    %5791 = vmatprep.subr.mxu0 0.0
    %5792 = vmatpush1.msra.mxu0 0.0
    %5793 = vmatprep.subr.mxu0 0.0
    %5794 = vmatpush1.msra.mxu0 0.0
    %5795 = vmatprep.subr.mxu0 0.0
    %5796 = vmatpush1.msra.mxu0 0.0
    %5797 = vmatprep.subr.mxu0 0.0
    %5798 = vmatpush1.msra.mxu0 0.0
    %5799 = vmatprep.subr.mxu0 0.0
    %5800 = vmatpush1.msra.mxu0 0.0
    %5801 = vmatprep.subr.mxu0 0.0
    %5802 = vmatpush1.msra.mxu0 0.0
    %5803 = vmatprep.subr.mxu0 0.0
    %5804 = vmatpush1.msra.mxu0 0.0
    %5805 = vmatprep.subr.mxu0 0.0
    %5806 = vmatpush1.msra.mxu0 0.0
    %5807 = vmatprep.subr.mxu0 0.0
    %5808 = vmatpush1.msra.mxu0 0.0
    %5809 = vmatprep.mubr.f32.mxu0 0.0
    %5810 = vmatmul.mubr.f32.gmra.mrb[0].mxu0 %v5722
    %v5811 = vpop.f32.mrb[0].mxu0
    %v5812 = vadd.f32 0.0, %v5811
    %v5813 = vpop.f32.mrb[0].mxu0
    %v5814 = vadd.f32 0.0, %v5813
    %5815 = vmatprep.mubr.f32.mxu0 0.0
    %5816 = vmatmul.mubr.f32.gmra.mrb[0].mxu0 %v5725
    %v5817 = vpop.f32.mrb[0].mxu0
    %v5818 = vadd.f32 0.0, %v5817
    %v5819 = vpop.f32.mrb[0].mxu0
    %v5820 = vadd.f32 0.0, %v5819
    %5821 = vmatprep.mubr.f32.mxu0 0.0
    %5822 = vmatmul.mubr.f32.gmra.mrb[0].mxu0 %v5728
    %v5823 = vpop.f32.mrb[0].mxu0
    %v5824 = vadd.f32 0.0, %v5823
    %v5825 = vpop.f32.mrb[0].mxu0
    %v5826 = vadd.f32 0.0, %v5825
    %5827 = vmatprep.mubr.f32.mxu0 0.0
    %5828 = vmatmul.mubr.f32.gmra.mrb[0].mxu0 %v5731
    %v5829 = vpop.f32.mrb[0].mxu0
    %v5830 = vadd.f32 0.0, %v5829
    %v5831 = vpop.f32.mrb[0].mxu0
    %v5832 = vadd.f32 0.0, %v5831
    %5833 = vmatprep.mubr.f32.mxu0 0.0
    %5834 = vmatmul.mubr.f32.gmra.mrb[0].mxu0 %v5734
    %v5835 = vpop.f32.mrb[0].mxu0
    %v5836 = vadd.f32 0.0, %v5835
    %v5837 = vpop.f32.mrb[0].mxu0
    %v5838 = vadd.f32 0.0, %v5837
    %5839 = vmatprep.mubr.f32.mxu0 0.0
    %5840 = vmatmul.mubr.f32.gmra.mrb[0].mxu0 %v5737
    %v5841 = vpop.f32.mrb[0].mxu0
    %v5842 = vadd.f32 0.0, %v5841
    %v5843 = vpop.f32.mrb[0].mxu0
    %v5844 = vadd.f32 0.0, %v5843
    %5845 = vmatprep.mubr.f32.mxu0 0.0
    %5846 = vmatmul.mubr.f32.gmra.mrb[0].mxu0 %v5740
    %v5847 = vpop.f32.mrb[0].mxu0
    %v5848 = vadd.f32 0.0, %v5847
    %v5849 = vpop.f32.mrb[0].mxu0
    %v5850 = vadd.f32 0.0, %v5849
    %5851 = vmatprep.mubr.f32.mxu0 0.0
    %5852 = vmatmul.mubr.f32.gmra.mrb[0].mxu0 %v5743
    %v5853 = vpop.f32.mrb[0].mxu0
    %v5854 = vadd.f32 0.0, %v5853
    %v5855 = vpop.f32.mrb[0].mxu0
    %v5856 = vadd.f32 0.0, %v5855
    %5857 = vdwg.mxu0
    %v5858 = vadd.f32 %v5536, %v5812
    %v5859 = vadd.f32 %v5537, %v5814
    %v5860 = vadd.f32 %v5538, %v5818
    %v5861 = vadd.f32 %v5539, %v5820
    %v5862 = vadd.f32 %v5540, %v5824
    %v5863 = vadd.f32 %v5541, %v5826
    %v5864 = vadd.f32 %v5542, %v5830
    %v5865 = vadd.f32 %v5543, %v5832
    %v5866 = vadd.f32 %v5544, %v5836
    %v5867 = vadd.f32 %v5545, %v5838
    %v5868 = vadd.f32 %v5546, %v5842
    %v5869 = vadd.f32 %v5547, %v5844
    %v5870 = vadd.f32 %v5548, %v5848
    %v5871 = vadd.f32 %v5549, %v5850
    %v5872 = vadd.f32 %v5550, %v5854
    %v5873 = vadd.f32 %v5551, %v5856
    %v5874 = vld [vmem:[%s11] sm:$0xff]
    %v5875 = vld [vmem:[%s11 + $0x8] sm:$0xff]
    %v5876 = vld [vmem:[%s11 + $0x10] sm:$0xff]
    %v5877 = vld [vmem:[%s11 + $0x18] sm:$0xff]
    %v5879 = vsel %vm3487, %v5874, 0
    %v5882 = vsel %vm3487, %v5875, 0
    %v5885 = vsel %vm3487, %v5876, 0
    %v5888 = vsel %vm3487, %v5877, 0
    %5890 = vmatprep.subr.mxu0 %v5859
    %5891 = vmatpush1.msra.mxu0 %v5858
    %5892 = vmatprep.subr.mxu0 %v5861
    %5893 = vmatpush1.msra.mxu0 %v5860
    %5894 = vmatprep.subr.mxu0 %v5863
    %5895 = vmatpush1.msra.mxu0 %v5862
    %5896 = vmatprep.subr.mxu0 %v5865
    %5897 = vmatpush1.msra.mxu0 %v5864
    %5898 = vmatprep.subr.mxu0 %v5867
    %5899 = vmatpush1.msra.mxu0 %v5866
    %5900 = vmatprep.subr.mxu0 %v5869
    %5901 = vmatpush1.msra.mxu0 %v5868
    %5902 = vmatprep.subr.mxu0 %v5871
    %5903 = vmatpush1.msra.mxu0 %v5870
    %5904 = vmatprep.subr.mxu0 %v5873
    %5905 = vmatpush1.msra.mxu0 %v5872
    %5906 = vmatprep.subr.mxu0 0.0
    %5907 = vmatpush1.msra.mxu0 0.0
    %5908 = vmatprep.subr.mxu0 0.0
    %5909 = vmatpush1.msra.mxu0 0.0
    %5910 = vmatprep.subr.mxu0 0.0
    %5911 = vmatpush1.msra.mxu0 0.0
    %5912 = vmatprep.subr.mxu0 0.0
    %5913 = vmatpush1.msra.mxu0 0.0
    %5914 = vmatprep.subr.mxu0 0.0
    %5915 = vmatpush1.msra.mxu0 0.0
    %5916 = vmatprep.subr.mxu0 0.0
    %5917 = vmatpush1.msra.mxu0 0.0
    %5918 = vmatprep.subr.mxu0 0.0
    %5919 = vmatpush1.msra.mxu0 0.0
    %5920 = vmatprep.subr.mxu0 0.0
    %5921 = vmatpush1.msra.mxu0 0.0
    %5922 = vmatprep.subr.mxu0 0.0
    %5923 = vmatpush1.msra.mxu0 0.0
    %5924 = vmatprep.subr.mxu0 0.0
    %5925 = vmatpush1.msra.mxu0 0.0
    %5926 = vmatprep.subr.mxu0 0.0
    %5927 = vmatpush1.msra.mxu0 0.0
    %5928 = vmatprep.subr.mxu0 0.0
    %5929 = vmatpush1.msra.mxu0 0.0
    %5930 = vmatprep.subr.mxu0 0.0
    %5931 = vmatpush1.msra.mxu0 0.0
    %5932 = vmatprep.subr.mxu0 0.0
    %5933 = vmatpush1.msra.mxu0 0.0
    %5934 = vmatprep.subr.mxu0 0.0
    %5935 = vmatpush1.msra.mxu0 0.0
    %5936 = vmatprep.subr.mxu0 0.0
    %5937 = vmatpush1.msra.mxu0 0.0
    %5938 = vmatprep.subr.mxu0 0.0
    %5939 = vmatpush1.msra.mxu0 0.0
    %5940 = vmatprep.subr.mxu0 0.0
    %5941 = vmatpush1.msra.mxu0 0.0
    %5942 = vmatprep.subr.mxu0 0.0
    %5943 = vmatpush1.msra.mxu0 0.0
    %5944 = vmatprep.subr.mxu0 0.0
    %5945 = vmatpush1.msra.mxu0 0.0
    %5946 = vmatprep.subr.mxu0 0.0
    %5947 = vmatpush1.msra.mxu0 0.0
    %5948 = vmatprep.subr.mxu0 0.0
    %5949 = vmatpush1.msra.mxu0 0.0
    %5950 = vmatprep.subr.mxu0 0.0
    %5951 = vmatpush1.msra.mxu0 0.0
    %5952 = vmatprep.subr.mxu0 0.0
    %5953 = vmatpush1.msra.mxu0 0.0
    %5954 = vmatprep.mubr.f32.mxu0 0.0
    %5955 = vmatmul.mubr.f32.gmra.mrb[0].mxu0 %v5879
    %v5956 = vpop.f32.mrb[0].mxu0
    %v5957 = vadd.f32 0.0, %v5956
    %v5958 = vpop.f32.mrb[0].mxu0
    %v5959 = vadd.f32 0.0, %v5958
    %5960 = vmatprep.mubr.f32.mxu0 0.0
    %5961 = vmatmul.mubr.f32.gmra.mrb[0].mxu0 %v5882
    %v5962 = vpop.f32.mrb[0].mxu0
    %v5963 = vadd.f32 0.0, %v5962
    %v5964 = vpop.f32.mrb[0].mxu0
    %v5965 = vadd.f32 0.0, %v5964
    %5966 = vmatprep.mubr.f32.mxu0 0.0
    %5967 = vmatmul.mubr.f32.gmra.mrb[0].mxu0 %v5885
    %v5968 = vpop.f32.mrb[0].mxu0
    %v5969 = vadd.f32 0.0, %v5968
    %v5970 = vpop.f32.mrb[0].mxu0
    %v5971 = vadd.f32 0.0, %v5970
    %5972 = vmatprep.mubr.f32.mxu0 0.0
    %5973 = vmatmul.mubr.f32.gmra.mrb[0].mxu0 %v5888
    %v5974 = vpop.f32.mrb[0].mxu0
    %v5975 = vadd.f32 0.0, %v5974
    %v5976 = vpop.f32.mrb[0].mxu0
    %v5977 = vadd.f32 0.0, %v5976
    %5978 = vdwg.mxu0
    %v5979 = vld [vmem:[#allocation9] sm:$0xff]
    %v5980 = vld [vmem:[#allocation9 + $0x8] sm:$0xff]
    %v5981 = vld [vmem:[#allocation9 + $0x10] sm:$0xff]
    %v5982 = vld [vmem:[#allocation9 + $0x18] sm:$0xff]
    %v5984 = vsel %vm3487, %v5979, 0
    %v5987 = vsel %vm3487, %v5980, 0
    %v5990 = vsel %vm3487, %v5981, 0
    %v5993 = vsel %vm3487, %v5982, 0
    %5995 = vmatprep.subr.mxu0 %v5859
    %5996 = vmatpush1.msra.mxu0 %v5858
    %5997 = vmatprep.subr.mxu0 %v5861
    %5998 = vmatpush1.msra.mxu0 %v5860
    %5999 = vmatprep.subr.mxu0 %v5863
    %6000 = vmatpush1.msra.mxu0 %v5862
    %6001 = vmatprep.subr.mxu0 %v5865
    %6002 = vmatpush1.msra.mxu0 %v5864
    %6003 = vmatprep.subr.mxu0 %v5867
    %6004 = vmatpush1.msra.mxu0 %v5866
    %6005 = vmatprep.subr.mxu0 %v5869
    %6006 = vmatpush1.msra.mxu0 %v5868
    %6007 = vmatprep.subr.mxu0 %v5871
    %6008 = vmatpush1.msra.mxu0 %v5870
    %6009 = vmatprep.subr.mxu0 %v5873
    %6010 = vmatpush1.msra.mxu0 %v5872
    %6011 = vmatprep.subr.mxu0 0.0
    %6012 = vmatpush1.msra.mxu0 0.0
    %6013 = vmatprep.subr.mxu0 0.0
    %6014 = vmatpush1.msra.mxu0 0.0
    %6015 = vmatprep.subr.mxu0 0.0
    %6016 = vmatpush1.msra.mxu0 0.0
    %6017 = vmatprep.subr.mxu0 0.0
    %6018 = vmatpush1.msra.mxu0 0.0
    %6019 = vmatprep.subr.mxu0 0.0
    %6020 = vmatpush1.msra.mxu0 0.0
    %6021 = vmatprep.subr.mxu0 0.0
    %6022 = vmatpush1.msra.mxu0 0.0
    %6023 = vmatprep.subr.mxu0 0.0
    %6024 = vmatpush1.msra.mxu0 0.0
    %6025 = vmatprep.subr.mxu0 0.0
    %6026 = vmatpush1.msra.mxu0 0.0
    %6027 = vmatprep.subr.mxu0 0.0
    %6028 = vmatpush1.msra.mxu0 0.0
    %6029 = vmatprep.subr.mxu0 0.0
    %6030 = vmatpush1.msra.mxu0 0.0
    %6031 = vmatprep.subr.mxu0 0.0
    %6032 = vmatpush1.msra.mxu0 0.0
    %6033 = vmatprep.subr.mxu0 0.0
    %6034 = vmatpush1.msra.mxu0 0.0
    %6035 = vmatprep.subr.mxu0 0.0
    %6036 = vmatpush1.msra.mxu0 0.0
    %6037 = vmatprep.subr.mxu0 0.0
    %6038 = vmatpush1.msra.mxu0 0.0
    %6039 = vmatprep.subr.mxu0 0.0
    %6040 = vmatpush1.msra.mxu0 0.0
    %6041 = vmatprep.subr.mxu0 0.0
    %6042 = vmatpush1.msra.mxu0 0.0
    %6043 = vmatprep.subr.mxu0 0.0
    %6044 = vmatpush1.msra.mxu0 0.0
    %6045 = vmatprep.subr.mxu0 0.0
    %6046 = vmatpush1.msra.mxu0 0.0
    %6047 = vmatprep.subr.mxu0 0.0
    %6048 = vmatpush1.msra.mxu0 0.0
    %6049 = vmatprep.subr.mxu0 0.0
    %6050 = vmatpush1.msra.mxu0 0.0
    %6051 = vmatprep.subr.mxu0 0.0
    %6052 = vmatpush1.msra.mxu0 0.0
    %6053 = vmatprep.subr.mxu0 0.0
    %6054 = vmatpush1.msra.mxu0 0.0
    %6055 = vmatprep.subr.mxu0 0.0
    %6056 = vmatpush1.msra.mxu0 0.0
    %6057 = vmatprep.subr.mxu0 0.0
    %6058 = vmatpush1.msra.mxu0 0.0
    %6059 = vmatprep.mubr.f32.mxu0 0.0
    %6060 = vmatmul.mubr.f32.gmra.mrb[0].mxu0 %v5984
    %v6061 = vpop.f32.mrb[0].mxu0
    %v6062 = vadd.f32 0.0, %v6061
    %v6063 = vpop.f32.mrb[0].mxu0
    %v6064 = vadd.f32 0.0, %v6063
    %6065 = vmatprep.mubr.f32.mxu0 0.0
    %6066 = vmatmul.mubr.f32.gmra.mrb[0].mxu0 %v5987
    %v6067 = vpop.f32.mrb[0].mxu0
    %v6068 = vadd.f32 0.0, %v6067
    %v6069 = vpop.f32.mrb[0].mxu0
    %v6070 = vadd.f32 0.0, %v6069
    %6071 = vmatprep.mubr.f32.mxu0 0.0
    %6072 = vmatmul.mubr.f32.gmra.mrb[0].mxu0 %v5990
    %v6073 = vpop.f32.mrb[0].mxu0
    %v6074 = vadd.f32 0.0, %v6073
    %v6075 = vpop.f32.mrb[0].mxu0
    %v6076 = vadd.f32 0.0, %v6075
    %6077 = vmatprep.mubr.f32.mxu0 0.0
    %6078 = vmatmul.mubr.f32.gmra.mrb[0].mxu0 %v5993
    %v6079 = vpop.f32.mrb[0].mxu0
    %v6080 = vadd.f32 0.0, %v6079
    %v6081 = vpop.f32.mrb[0].mxu0
    %v6082 = vadd.f32 0.0, %v6081
    %6083 = vdwg.mxu0
    %v6084 = vmax.f32 %v5957, %v6062
    %v6085 = vmax.f32 %v5959, %v6064
    %v6086 = vmax.f32 %v5963, %v6068
    %v6087 = vmax.f32 %v5965, %v6070
    %v6088 = vmax.f32 %v5969, %v6074
    %v6089 = vmax.f32 %v5971, %v6076
    %v6090 = vmax.f32 %v5975, %v6080
    %v6091 = vmax.f32 %v5977, %v6082
    %v6092 = vld [vmem:[#allocation10] sm:$0xff]
    %v6093 = vld [vmem:[#allocation10 + $0x8] sm:$0xff]
    %v6094 = vld [vmem:[#allocation10 + $0x10] sm:$0xff]
    %v6095 = vld [vmem:[#allocation10 + $0x18] sm:$0xff]
    %v6096 = vld [vmem:[#allocation10 + $0x20] sm:$0xff]
    %v6097 = vld [vmem:[#allocation10 + $0x28] sm:$0xff]
    %v6098 = vld [vmem:[#allocation10 + $0x30] sm:$0xff]
    %v6099 = vld [vmem:[#allocation10 + $0x38] sm:$0xff]
    %v6100 = vld [vmem:[#allocation10 + $0x40] sm:$0xff]
    %v6101 = vld [vmem:[#allocation10 + $0x48] sm:$0xff]
    %v6102 = vld [vmem:[#allocation10 + $0x50] sm:$0xff]
    %v6103 = vld [vmem:[#allocation10 + $0x58] sm:$0xff]
    %v6104 = vld [vmem:[#allocation10 + $0x60] sm:$0xff]
    %v6105 = vld [vmem:[#allocation10 + $0x68] sm:$0xff]
    %v6106 = vld [vmem:[#allocation10 + $0x70] sm:$0xff]
    %v6107 = vld [vmem:[#allocation10 + $0x78] sm:$0xff]
    %v6108 = vld [vmem:[#allocation10 + $0x80] sm:$0xff]
    %v6109 = vld [vmem:[#allocation10 + $0x88] sm:$0xff]
    %v6110 = vld [vmem:[#allocation10 + $0x90] sm:$0xff]
    %v6111 = vld [vmem:[#allocation10 + $0x98] sm:$0xff]
    %vm6112 = vcmask 261120
    %v6114 = vsel %vm6112, %v6085, 0
    %v6117 = vsel %vm6112, %v6087, 0
    %v6120 = vsel %vm6112, %v6089, 0
    %v6123 = vsel %vm6112, %v6091, 0
    %6125 = vmatprep.subr.mxu0 0.0
    %6126 = vmatpush1.msra.mxu0 %v6092
    %6127 = vmatprep.subr.mxu0 0.0
    %6128 = vmatpush1.msra.mxu0 %v6093
    %6129 = vmatprep.subr.mxu0 0.0
    %6130 = vmatpush1.msra.mxu0 %v6094
    %6131 = vmatprep.subr.mxu0 0.0
    %6132 = vmatpush1.msra.mxu0 %v6095
    %6133 = vmatprep.subr.mxu0 0.0
    %6134 = vmatpush1.msra.mxu0 %v6096
    %6135 = vmatprep.subr.mxu0 0.0
    %6136 = vmatpush1.msra.mxu0 %v6097
    %6137 = vmatprep.subr.mxu0 0.0
    %6138 = vmatpush1.msra.mxu0 %v6098
    %6139 = vmatprep.subr.mxu0 0.0
    %6140 = vmatpush1.msra.mxu0 %v6099
    %6141 = vmatprep.subr.mxu0 0.0
    %6142 = vmatpush1.msra.mxu0 %v6100
    %6143 = vmatprep.subr.mxu0 0.0
    %6144 = vmatpush1.msra.mxu0 %v6101
    %6145 = vmatprep.subr.mxu0 0.0
    %6146 = vmatpush1.msra.mxu0 %v6102
    %6147 = vmatprep.subr.mxu0 0.0
    %6148 = vmatpush1.msra.mxu0 %v6103
    %6149 = vmatprep.subr.mxu0 0.0
    %6150 = vmatpush1.msra.mxu0 %v6104
    %6151 = vmatprep.subr.mxu0 0.0
    %6152 = vmatpush1.msra.mxu0 %v6105
    %6153 = vmatprep.subr.mxu0 0.0
    %6154 = vmatpush1.msra.mxu0 %v6106
    %6155 = vmatprep.subr.mxu0 0.0
    %6156 = vmatpush1.msra.mxu0 %v6107
    %6157 = vmatprep.subr.mxu0 0.0
    %6158 = vmatpush1.msra.mxu0 %v6108
    %6159 = vmatprep.subr.mxu0 0.0
    %6160 = vmatpush1.msra.mxu0 %v6109
    %6161 = vmatprep.subr.mxu0 0.0
    %6162 = vmatpush1.msra.mxu0 %v6110
    %6163 = vmatprep.subr.mxu0 0.0
    %6164 = vmatpush1.msra.mxu0 %v6111
    %6165 = vmatprep.subr.mxu0 0.0
    %6166 = vmatpush1.msra.mxu0 0.0
    %6167 = vmatprep.subr.mxu0 0.0
    %6168 = vmatpush1.msra.mxu0 0.0
    %6169 = vmatprep.subr.mxu0 0.0
    %6170 = vmatpush1.msra.mxu0 0.0
    %6171 = vmatprep.subr.mxu0 0.0
    %6172 = vmatpush1.msra.mxu0 0.0
    %6173 = vmatprep.subr.mxu0 0.0
    %6174 = vmatpush1.msra.mxu0 0.0
    %6175 = vmatprep.subr.mxu0 0.0
    %6176 = vmatpush1.msra.mxu0 0.0
    %6177 = vmatprep.subr.mxu0 0.0
    %6178 = vmatpush1.msra.mxu0 0.0
    %6179 = vmatprep.subr.mxu0 0.0
    %6180 = vmatpush1.msra.mxu0 0.0
    %6181 = vmatprep.subr.mxu0 0.0
    %6182 = vmatpush1.msra.mxu0 0.0
    %6183 = vmatprep.subr.mxu0 0.0
    %6184 = vmatpush1.msra.mxu0 0.0
    %6185 = vmatprep.subr.mxu0 0.0
    %6186 = vmatpush1.msra.mxu0 0.0
    %6187 = vmatprep.subr.mxu0 0.0
    %6188 = vmatpush1.msra.mxu0 0.0
    %6189 = vmatprep.mubr.f32.mxu0 %v6114
    %6190 = vmatmul.mubr.f32.gmra.mrb[0].mxu0 %v6084
    %v6191 = vpop.f32.mrb[0].mxu0
    %v6192 = vadd.f32 0.0, %v6191
    %v6193 = vpop.f32.mrb[0].mxu0
    %6194 = vmatprep.mubr.f32.mxu0 %v6117
    %6195 = vmatmul.mubr.f32.gmra.mrb[0].mxu0 %v6086
    %v6196 = vpop.f32.mrb[0].mxu0
    %v6197 = vadd.f32 0.0, %v6196
    %v6198 = vpop.f32.mrb[0].mxu0
    %6199 = vmatprep.mubr.f32.mxu0 %v6120
    %6200 = vmatmul.mubr.f32.gmra.mrb[0].mxu0 %v6088
    %v6201 = vpop.f32.mrb[0].mxu0
    %v6202 = vadd.f32 0.0, %v6201
    %v6203 = vpop.f32.mrb[0].mxu0
    %6204 = vmatprep.mubr.f32.mxu0 %v6123
    %6205 = vmatmul.mubr.f32.gmra.mrb[0].mxu0 %v6090
    %v6206 = vpop.f32.mrb[0].mxu0
    %v6207 = vadd.f32 0.0, %v6206
    %v6208 = vpop.f32.mrb[0].mxu0
    %6209 = vdwg.mxu0
    %v6210 = vld [vmem:[#allocation12] sm:$0xff]
    %v6211 = vld [vmem:[#allocation12 + $0x8] sm:$0xff]
    %v6212 = vld [vmem:[#allocation12 + $0x10] sm:$0xff]
    %v6213 = vld [vmem:[#allocation12 + $0x18] sm:$0xff]
    %v6214 = vld [vmem:[#allocation12 + $0x20] sm:$0xff]
    %v6215 = vld [vmem:[#allocation12 + $0x28] sm:$0xff]
    %v6216 = vld [vmem:[#allocation12 + $0x30] sm:$0xff]
    %v6217 = vld [vmem:[#allocation12 + $0x38] sm:$0xff]
    %v6218 = vld [vmem:[#allocation12 + $0x40] sm:$0xff]
    %v6219 = vld [vmem:[#allocation12 + $0x48] sm:$0xff]
    %v6220 = vld [vmem:[#allocation12 + $0x50] sm:$0xff]
    %v6221 = vld [vmem:[#allocation12 + $0x58] sm:$0xff]
    %v6222 = vld [vmem:[#allocation12 + $0x60] sm:$0xff]
    %v6223 = vld [vmem:[#allocation12 + $0x68] sm:$0xff]
    %v6224 = vld [vmem:[#allocation12 + $0x70] sm:$0xff]
    %v6225 = vld [vmem:[#allocation12 + $0x78] sm:$0xff]
    %v6226 = vld [vmem:[#allocation12 + $0x80] sm:$0xff]
    %v6227 = vld [vmem:[#allocation12 + $0x88] sm:$0xff]
    %v6228 = vld [vmem:[#allocation12 + $0x90] sm:$0xff]
    %v6229 = vld [vmem:[#allocation12 + $0x98] sm:$0xff]
    %6230 = vmatprep.subr.mxu0 0.0
    %6231 = vmatpush1.msra.mxu0 %v6210
    %6232 = vmatprep.subr.mxu0 0.0
    %6233 = vmatpush1.msra.mxu0 %v6211
    %6234 = vmatprep.subr.mxu0 0.0
    %6235 = vmatpush1.msra.mxu0 %v6212
    %6236 = vmatprep.subr.mxu0 0.0
    %6237 = vmatpush1.msra.mxu0 %v6213
    %6238 = vmatprep.subr.mxu0 0.0
    %6239 = vmatpush1.msra.mxu0 %v6214
    %6240 = vmatprep.subr.mxu0 0.0
    %6241 = vmatpush1.msra.mxu0 %v6215
    %6242 = vmatprep.subr.mxu0 0.0
    %6243 = vmatpush1.msra.mxu0 %v6216
    %6244 = vmatprep.subr.mxu0 0.0
    %6245 = vmatpush1.msra.mxu0 %v6217
    %6246 = vmatprep.subr.mxu0 0.0
    %6247 = vmatpush1.msra.mxu0 %v6218
    %6248 = vmatprep.subr.mxu0 0.0
    %6249 = vmatpush1.msra.mxu0 %v6219
    %6250 = vmatprep.subr.mxu0 0.0
    %6251 = vmatpush1.msra.mxu0 %v6220
    %6252 = vmatprep.subr.mxu0 0.0
    %6253 = vmatpush1.msra.mxu0 %v6221
    %6254 = vmatprep.subr.mxu0 0.0
    %6255 = vmatpush1.msra.mxu0 %v6222
    %6256 = vmatprep.subr.mxu0 0.0
    %6257 = vmatpush1.msra.mxu0 %v6223
    %6258 = vmatprep.subr.mxu0 0.0
    %6259 = vmatpush1.msra.mxu0 %v6224
    %6260 = vmatprep.subr.mxu0 0.0
    %6261 = vmatpush1.msra.mxu0 %v6225
    %6262 = vmatprep.subr.mxu0 0.0
    %6263 = vmatpush1.msra.mxu0 %v6226
    %6264 = vmatprep.subr.mxu0 0.0
    %6265 = vmatpush1.msra.mxu0 %v6227
    %6266 = vmatprep.subr.mxu0 0.0
    %6267 = vmatpush1.msra.mxu0 %v6228
    %6268 = vmatprep.subr.mxu0 0.0
    %6269 = vmatpush1.msra.mxu0 %v6229
    %6270 = vmatprep.subr.mxu0 0.0
    %6271 = vmatpush1.msra.mxu0 0.0
    %6272 = vmatprep.subr.mxu0 0.0
    %6273 = vmatpush1.msra.mxu0 0.0
    %6274 = vmatprep.subr.mxu0 0.0
    %6275 = vmatpush1.msra.mxu0 0.0
    %6276 = vmatprep.subr.mxu0 0.0
    %6277 = vmatpush1.msra.mxu0 0.0
    %6278 = vmatprep.subr.mxu0 0.0
    %6279 = vmatpush1.msra.mxu0 0.0
    %6280 = vmatprep.subr.mxu0 0.0
    %6281 = vmatpush1.msra.mxu0 0.0
    %6282 = vmatprep.subr.mxu0 0.0
    %6283 = vmatpush1.msra.mxu0 0.0
    %6284 = vmatprep.subr.mxu0 0.0
    %6285 = vmatpush1.msra.mxu0 0.0
    %6286 = vmatprep.subr.mxu0 0.0
    %6287 = vmatpush1.msra.mxu0 0.0
    %6288 = vmatprep.subr.mxu0 0.0
    %6289 = vmatpush1.msra.mxu0 0.0
    %6290 = vmatprep.subr.mxu0 0.0
    %6291 = vmatpush1.msra.mxu0 0.0
    %6292 = vmatprep.subr.mxu0 0.0
    %6293 = vmatpush1.msra.mxu0 0.0
    %6294 = vmatprep.mubr.f32.mxu0 %v6114
    %6295 = vmatmul.mubr.f32.gmra.mrb[0].mxu0 %v6084
    %v6296 = vpop.f32.mrb[0].mxu0
    %v6297 = vadd.f32 0.0, %v6296
    %v6298 = vpop.f32.mrb[0].mxu0
    %6299 = vmatprep.mubr.f32.mxu0 %v6117
    %6300 = vmatmul.mubr.f32.gmra.mrb[0].mxu0 %v6086
    %v6301 = vpop.f32.mrb[0].mxu0
    %v6302 = vadd.f32 0.0, %v6301
    %v6303 = vpop.f32.mrb[0].mxu0
    %6304 = vmatprep.mubr.f32.mxu0 %v6120
    %6305 = vmatmul.mubr.f32.gmra.mrb[0].mxu0 %v6088
    %v6306 = vpop.f32.mrb[0].mxu0
    %v6307 = vadd.f32 0.0, %v6306
    %v6308 = vpop.f32.mrb[0].mxu0
    %6309 = vmatprep.mubr.f32.mxu0 %v6123
    %6310 = vmatmul.mubr.f32.gmra.mrb[0].mxu0 %v6090
    %v6311 = vpop.f32.mrb[0].mxu0
    %v6312 = vadd.f32 0.0, %v6311
    %v6313 = vpop.f32.mrb[0].mxu0
    %6314 = vdwg.mxu0
    %v6315 = vmax.f32 %v6192, %v6297
    %v6316 = vmax.f32 %v6197, %v6302
    %v6317 = vmax.f32 %v6202, %v6307
    %v6318 = vmax.f32 %v6207, %v6312
    %v6319 = vmax.f32 %v6315, 0.0
    %v6320 = vmax.f32 %v6316, 0.0
    %v6321 = vmax.f32 %v6317, 0.0
    %v6322 = vmax.f32 %v6318, 0.0
    %v6323 = vld [vmem:[%s17] sm:$0x1]
    %v6324 = vld [vmem:[#allocation13] sm:$0xff]
    %v6326 = vsel %vm6112, %v6324, 0
    %6328 = vmatprep.subr.mxu0 0.0
    %6329 = vmatpush1.msra.mxu0 %v6319
    %6330 = vmatprep.subr.mxu0 0.0
    %6331 = vmatpush1.msra.mxu0 %v6320
    %6332 = vmatprep.subr.mxu0 0.0
    %6333 = vmatpush1.msra.mxu0 %v6321
    %6334 = vmatprep.subr.mxu0 0.0
    %6335 = vmatpush1.msra.mxu0 %v6322
    %6336 = vmatprep.subr.mxu0 0.0
    %6337 = vmatpush1.msra.mxu0 0.0
    %6338 = vmatprep.subr.mxu0 0.0
    %6339 = vmatpush1.msra.mxu0 0.0
    %6340 = vmatprep.subr.mxu0 0.0
    %6341 = vmatpush1.msra.mxu0 0.0
    %6342 = vmatprep.subr.mxu0 0.0
    %6343 = vmatpush1.msra.mxu0 0.0
    %6344 = vmatprep.subr.mxu0 0.0
    %6345 = vmatpush1.msra.mxu0 0.0
    %6346 = vmatprep.subr.mxu0 0.0
    %6347 = vmatpush1.msra.mxu0 0.0
    %6348 = vmatprep.subr.mxu0 0.0
    %6349 = vmatpush1.msra.mxu0 0.0
    %6350 = vmatprep.subr.mxu0 0.0
    %6351 = vmatpush1.msra.mxu0 0.0
    %6352 = vmatprep.subr.mxu0 0.0
    %6353 = vmatpush1.msra.mxu0 0.0
    %6354 = vmatprep.subr.mxu0 0.0
    %6355 = vmatpush1.msra.mxu0 0.0
    %6356 = vmatprep.subr.mxu0 0.0
    %6357 = vmatpush1.msra.mxu0 0.0
    %6358 = vmatprep.subr.mxu0 0.0
    %6359 = vmatpush1.msra.mxu0 0.0
    %6360 = vmatprep.subr.mxu0 0.0
    %6361 = vmatpush1.msra.mxu0 0.0
    %6362 = vmatprep.subr.mxu0 0.0
    %6363 = vmatpush1.msra.mxu0 0.0
    %6364 = vmatprep.subr.mxu0 0.0
    %6365 = vmatpush1.msra.mxu0 0.0
    %6366 = vmatprep.subr.mxu0 0.0
    %6367 = vmatpush1.msra.mxu0 0.0
    %6368 = vmatprep.subr.mxu0 0.0
    %6369 = vmatpush1.msra.mxu0 0.0
    %6370 = vmatprep.subr.mxu0 0.0
    %6371 = vmatpush1.msra.mxu0 0.0
    %6372 = vmatprep.subr.mxu0 0.0
    %6373 = vmatpush1.msra.mxu0 0.0
    %6374 = vmatprep.subr.mxu0 0.0
    %6375 = vmatpush1.msra.mxu0 0.0
    %6376 = vmatprep.subr.mxu0 0.0
    %6377 = vmatpush1.msra.mxu0 0.0
    %6378 = vmatprep.subr.mxu0 0.0
    %6379 = vmatpush1.msra.mxu0 0.0
    %6380 = vmatprep.subr.mxu0 0.0
    %6381 = vmatpush1.msra.mxu0 0.0
    %6382 = vmatprep.subr.mxu0 0.0
    %6383 = vmatpush1.msra.mxu0 0.0
    %6384 = vmatprep.subr.mxu0 0.0
    %6385 = vmatpush1.msra.mxu0 0.0
    %6386 = vmatprep.subr.mxu0 0.0
    %6387 = vmatpush1.msra.mxu0 0.0
    %6388 = vmatprep.subr.mxu0 0.0
    %6389 = vmatpush1.msra.mxu0 0.0
    %6390 = vmatprep.subr.mxu0 0.0
    %6391 = vmatpush1.msra.mxu0 0.0
    %6392 = vmatprep.mubr.f32.mxu0 0.0
    %6393 = vmatmul.mubr.f32.gmra.mrb[0].mxu0 %v6326
    %v6394 = vpop.f32.mrb[0].mxu0
    %v6395 = vadd.f32 0.0, %v6394
    %v6396 = vpop.f32.mrb[0].mxu0
    %6397 = vdwg.mxu0
    %v6398 = vld [vmem:[%s16] sm:$0xff]
    %v6399 = vld [vmem:[%s16 + $0x8] sm:$0xff]
    %v6400 = vld [vmem:[%s16 + $0x10] sm:$0xff]
    %v6401 = vld [vmem:[%s16 + $0x18] sm:$0xff]
    %v6402 = vld [vmem:[%s16 + $0x20] sm:$0xff]
    %v6403 = vld [vmem:[%s16 + $0x28] sm:$0xff]
    %v6404 = vld [vmem:[%s16 + $0x30] sm:$0xff]
    %v6405 = vld [vmem:[%s16 + $0x38] sm:$0xff]
    %v6406 = vld [vmem:[%s16 + $0x40] sm:$0xff]
    %v6407 = vld [vmem:[%s16 + $0x48] sm:$0xff]
    %vm6408 = vcmask 654336
    %v6410 = vsel %vm6408, %v6395, 0
    %6412 = vmatprep.subr.mxu0 0.0
    %6413 = vmatpush1.msra.mxu0 %v6398
    %6414 = vmatprep.subr.mxu0 0.0
    %6415 = vmatpush1.msra.mxu0 %v6399
    %6416 = vmatprep.subr.mxu0 0.0
    %6417 = vmatpush1.msra.mxu0 %v6400
    %6418 = vmatprep.subr.mxu0 0.0
    %6419 = vmatpush1.msra.mxu0 %v6401
    %6420 = vmatprep.subr.mxu0 0.0
    %6421 = vmatpush1.msra.mxu0 %v6402
    %6422 = vmatprep.subr.mxu0 0.0
    %6423 = vmatpush1.msra.mxu0 %v6403
    %6424 = vmatprep.subr.mxu0 0.0
    %6425 = vmatpush1.msra.mxu0 %v6404
    %6426 = vmatprep.subr.mxu0 0.0
    %6427 = vmatpush1.msra.mxu0 %v6405
    %6428 = vmatprep.subr.mxu0 0.0
    %6429 = vmatpush1.msra.mxu0 %v6406
    %6430 = vmatprep.subr.mxu0 0.0
    %6431 = vmatpush1.msra.mxu0 %v6407
    %6432 = vmatprep.subr.mxu0 0.0
    %6433 = vmatpush1.msra.mxu0 0.0
    %6434 = vmatprep.subr.mxu0 0.0
    %6435 = vmatpush1.msra.mxu0 0.0
    %6436 = vmatprep.subr.mxu0 0.0
    %6437 = vmatpush1.msra.mxu0 0.0
    %6438 = vmatprep.subr.mxu0 0.0
    %6439 = vmatpush1.msra.mxu0 0.0
    %6440 = vmatprep.subr.mxu0 0.0
    %6441 = vmatpush1.msra.mxu0 0.0
    %6442 = vmatprep.subr.mxu0 0.0
    %6443 = vmatpush1.msra.mxu0 0.0
    %6444 = vmatprep.subr.mxu0 0.0
    %6445 = vmatpush1.msra.mxu0 0.0
    %6446 = vmatprep.subr.mxu0 0.0
    %6447 = vmatpush1.msra.mxu0 0.0
    %6448 = vmatprep.subr.mxu0 0.0
    %6449 = vmatpush1.msra.mxu0 0.0
    %6450 = vmatprep.subr.mxu0 0.0
    %6451 = vmatpush1.msra.mxu0 0.0
    %6452 = vmatprep.subr.mxu0 0.0
    %6453 = vmatpush1.msra.mxu0 0.0
    %6454 = vmatprep.subr.mxu0 0.0
    %6455 = vmatpush1.msra.mxu0 0.0
    %6456 = vmatprep.subr.mxu0 0.0
    %6457 = vmatpush1.msra.mxu0 0.0
    %6458 = vmatprep.subr.mxu0 0.0
    %6459 = vmatpush1.msra.mxu0 0.0
    %6460 = vmatprep.subr.mxu0 0.0
    %6461 = vmatpush1.msra.mxu0 0.0
    %6462 = vmatprep.subr.mxu0 0.0
    %6463 = vmatpush1.msra.mxu0 0.0
    %6464 = vmatprep.subr.mxu0 0.0
    %6465 = vmatpush1.msra.mxu0 0.0
    %6466 = vmatprep.subr.mxu0 0.0
    %6467 = vmatpush1.msra.mxu0 0.0
    %6468 = vmatprep.subr.mxu0 0.0
    %6469 = vmatpush1.msra.mxu0 0.0
    %6470 = vmatprep.subr.mxu0 0.0
    %6471 = vmatpush1.msra.mxu0 0.0
    %6472 = vmatprep.subr.mxu0 0.0
    %6473 = vmatpush1.msra.mxu0 0.0
    %6474 = vmatprep.subr.mxu0 0.0
    %6475 = vmatpush1.msra.mxu0 0.0
    %6476 = vmatprep.mubr.f32.mxu0 0.0
    %6477 = vmatmul.mubr.f32.gmra.mrb[0].mxu0 %v6410
    %v6478 = vpop.f32.mrb[0].mxu0
    %v6479 = vadd.f32 0.0, %v6478
    %v6480 = vpop.f32.mrb[0].mxu0
    %6481 = vdwg.mxu0
    %v6483 = vlaneseq
    %v6484 = vshrl.u32 %v6483, 7
    %v6485 = vsub.s32 0, %v6484
    %v6486 = vrot.slane %v6323, %v6485
    %v6488 = vadd.f32 %v6486, %v6479
    %s6489 = scalar_lea.vmem [#allocation13], 8
    %v6490 = vld [vmem:[%s6489] sm:$0xff]
    %v6492 = vsel %vm6112, %v6490, 0
    %6494 = vmatprep.subr.mxu0 0.0
    %6495 = vmatpush1.msra.mxu0 %v6319
    %6496 = vmatprep.subr.mxu0 0.0
    %6497 = vmatpush1.msra.mxu0 %v6320
    %6498 = vmatprep.subr.mxu0 0.0
    %6499 = vmatpush1.msra.mxu0 %v6321
    %6500 = vmatprep.subr.mxu0 0.0
    %6501 = vmatpush1.msra.mxu0 %v6322
    %6502 = vmatprep.subr.mxu0 0.0
    %6503 = vmatpush1.msra.mxu0 0.0
    %6504 = vmatprep.subr.mxu0 0.0
    %6505 = vmatpush1.msra.mxu0 0.0
    %6506 = vmatprep.subr.mxu0 0.0
    %6507 = vmatpush1.msra.mxu0 0.0
    %6508 = vmatprep.subr.mxu0 0.0
    %6509 = vmatpush1.msra.mxu0 0.0
    %6510 = vmatprep.subr.mxu0 0.0
    %6511 = vmatpush1.msra.mxu0 0.0
    %6512 = vmatprep.subr.mxu0 0.0
    %6513 = vmatpush1.msra.mxu0 0.0
    %6514 = vmatprep.subr.mxu0 0.0
    %6515 = vmatpush1.msra.mxu0 0.0
    %6516 = vmatprep.subr.mxu0 0.0
    %6517 = vmatpush1.msra.mxu0 0.0
    %6518 = vmatprep.subr.mxu0 0.0
    %6519 = vmatpush1.msra.mxu0 0.0
    %6520 = vmatprep.subr.mxu0 0.0
    %6521 = vmatpush1.msra.mxu0 0.0
    %6522 = vmatprep.subr.mxu0 0.0
    %6523 = vmatpush1.msra.mxu0 0.0
    %6524 = vmatprep.subr.mxu0 0.0
    %6525 = vmatpush1.msra.mxu0 0.0
    %6526 = vmatprep.subr.mxu0 0.0
    %6527 = vmatpush1.msra.mxu0 0.0
    %6528 = vmatprep.subr.mxu0 0.0
    %6529 = vmatpush1.msra.mxu0 0.0
    %6530 = vmatprep.subr.mxu0 0.0
    %6531 = vmatpush1.msra.mxu0 0.0
    %6532 = vmatprep.subr.mxu0 0.0
    %6533 = vmatpush1.msra.mxu0 0.0
    %6534 = vmatprep.subr.mxu0 0.0
    %6535 = vmatpush1.msra.mxu0 0.0
    %6536 = vmatprep.subr.mxu0 0.0
    %6537 = vmatpush1.msra.mxu0 0.0
    %6538 = vmatprep.subr.mxu0 0.0
    %6539 = vmatpush1.msra.mxu0 0.0
    %6540 = vmatprep.subr.mxu0 0.0
    %6541 = vmatpush1.msra.mxu0 0.0
    %6542 = vmatprep.subr.mxu0 0.0
    %6543 = vmatpush1.msra.mxu0 0.0
    %6544 = vmatprep.subr.mxu0 0.0
    %6545 = vmatpush1.msra.mxu0 0.0
    %6546 = vmatprep.subr.mxu0 0.0
    %6547 = vmatpush1.msra.mxu0 0.0
    %6548 = vmatprep.subr.mxu0 0.0
    %6549 = vmatpush1.msra.mxu0 0.0
    %6550 = vmatprep.subr.mxu0 0.0
    %6551 = vmatpush1.msra.mxu0 0.0
    %6552 = vmatprep.subr.mxu0 0.0
    %6553 = vmatpush1.msra.mxu0 0.0
    %6554 = vmatprep.subr.mxu0 0.0
    %6555 = vmatpush1.msra.mxu0 0.0
    %6556 = vmatprep.subr.mxu0 0.0
    %6557 = vmatpush1.msra.mxu0 0.0
    %6558 = vmatprep.mubr.f32.mxu0 0.0
    %6559 = vmatmul.mubr.f32.gmra.mrb[0].mxu0 %v6492
    %v6560 = vpop.f32.mrb[0].mxu0
    %v6561 = vadd.f32 0.0, %v6560
    %v6562 = vpop.f32.mrb[0].mxu0
    %6563 = vdwg.mxu0
    %s6564 = scalar_lea.vmem %s16, 80
    %v6565 = vld [vmem:[%s6564] sm:$0xff]
    %v6566 = vld [vmem:[%s6564 + $0x8] sm:$0xff]
    %v6567 = vld [vmem:[%s6564 + $0x10] sm:$0xff]
    %v6568 = vld [vmem:[%s6564 + $0x18] sm:$0xff]
    %v6569 = vld [vmem:[%s6564 + $0x20] sm:$0xff]
    %v6570 = vld [vmem:[%s6564 + $0x28] sm:$0xff]
    %v6571 = vld [vmem:[%s6564 + $0x30] sm:$0xff]
    %v6572 = vld [vmem:[%s6564 + $0x38] sm:$0xff]
    %v6573 = vld [vmem:[%s6564 + $0x40] sm:$0xff]
    %v6574 = vld [vmem:[%s6564 + $0x48] sm:$0xff]
    %v6576 = vsel %vm6408, %v6561, 0
    %6578 = vmatprep.subr.mxu0 0.0
    %6579 = vmatpush1.msra.mxu0 %v6565
    %6580 = vmatprep.subr.mxu0 0.0
    %6581 = vmatpush1.msra.mxu0 %v6566
    %6582 = vmatprep.subr.mxu0 0.0
    %6583 = vmatpush1.msra.mxu0 %v6567
    %6584 = vmatprep.subr.mxu0 0.0
    %6585 = vmatpush1.msra.mxu0 %v6568
    %6586 = vmatprep.subr.mxu0 0.0
    %6587 = vmatpush1.msra.mxu0 %v6569
    %6588 = vmatprep.subr.mxu0 0.0
    %6589 = vmatpush1.msra.mxu0 %v6570
    %6590 = vmatprep.subr.mxu0 0.0
    %6591 = vmatpush1.msra.mxu0 %v6571
    %6592 = vmatprep.subr.mxu0 0.0
    %6593 = vmatpush1.msra.mxu0 %v6572
    %6594 = vmatprep.subr.mxu0 0.0
    %6595 = vmatpush1.msra.mxu0 %v6573
    %6596 = vmatprep.subr.mxu0 0.0
    %6597 = vmatpush1.msra.mxu0 %v6574
    %6598 = vmatprep.subr.mxu0 0.0
    %6599 = vmatpush1.msra.mxu0 0.0
    %6600 = vmatprep.subr.mxu0 0.0
    %6601 = vmatpush1.msra.mxu0 0.0
    %6602 = vmatprep.subr.mxu0 0.0
    %6603 = vmatpush1.msra.mxu0 0.0
    %6604 = vmatprep.subr.mxu0 0.0
    %6605 = vmatpush1.msra.mxu0 0.0
    %6606 = vmatprep.subr.mxu0 0.0
    %6607 = vmatpush1.msra.mxu0 0.0
    %6608 = vmatprep.subr.mxu0 0.0
    %6609 = vmatpush1.msra.mxu0 0.0
    %6610 = vmatprep.subr.mxu0 0.0
    %6611 = vmatpush1.msra.mxu0 0.0
    %6612 = vmatprep.subr.mxu0 0.0
    %6613 = vmatpush1.msra.mxu0 0.0
    %6614 = vmatprep.subr.mxu0 0.0
    %6615 = vmatpush1.msra.mxu0 0.0
    %6616 = vmatprep.subr.mxu0 0.0
    %6617 = vmatpush1.msra.mxu0 0.0
    %6618 = vmatprep.subr.mxu0 0.0
    %6619 = vmatpush1.msra.mxu0 0.0
    %6620 = vmatprep.subr.mxu0 0.0
    %6621 = vmatpush1.msra.mxu0 0.0
    %6622 = vmatprep.subr.mxu0 0.0
    %6623 = vmatpush1.msra.mxu0 0.0
    %6624 = vmatprep.subr.mxu0 0.0
    %6625 = vmatpush1.msra.mxu0 0.0
    %6626 = vmatprep.subr.mxu0 0.0
    %6627 = vmatpush1.msra.mxu0 0.0
    %6628 = vmatprep.subr.mxu0 0.0
    %6629 = vmatpush1.msra.mxu0 0.0
    %6630 = vmatprep.subr.mxu0 0.0
    %6631 = vmatpush1.msra.mxu0 0.0
    %6632 = vmatprep.subr.mxu0 0.0
    %6633 = vmatpush1.msra.mxu0 0.0
    %6634 = vmatprep.subr.mxu0 0.0
    %6635 = vmatpush1.msra.mxu0 0.0
    %6636 = vmatprep.subr.mxu0 0.0
    %6637 = vmatpush1.msra.mxu0 0.0
    %6638 = vmatprep.subr.mxu0 0.0
    %6639 = vmatpush1.msra.mxu0 0.0
    %6640 = vmatprep.subr.mxu0 0.0
    %6641 = vmatpush1.msra.mxu0 0.0
    %6642 = vmatprep.mubr.f32.mxu0 0.0
    %6643 = vmatmul.mubr.f32.gmra.mrb[0].mxu0 %v6576
    %v6644 = vpop.f32.mrb[0].mxu0
    %v6645 = vadd.f32 0.0, %v6644
    %v6646 = vpop.f32.mrb[0].mxu0
    %6647 = vdwg.mxu0
    %v6648 = vadd.f32 %v6488, %v6645
    %s6649 = scalar_lea.vmem [#allocation13], 16
    %v6650 = vld [vmem:[%s6649] sm:$0xff]
    %v6652 = vsel %vm6112, %v6650, 0
    %6654 = vmatprep.subr.mxu0 0.0
    %6655 = vmatpush1.msra.mxu0 %v6319
    %6656 = vmatprep.subr.mxu0 0.0
    %6657 = vmatpush1.msra.mxu0 %v6320
    %6658 = vmatprep.subr.mxu0 0.0
    %6659 = vmatpush1.msra.mxu0 %v6321
    %6660 = vmatprep.subr.mxu0 0.0
    %6661 = vmatpush1.msra.mxu0 %v6322
    %6662 = vmatprep.subr.mxu0 0.0
    %6663 = vmatpush1.msra.mxu0 0.0
    %6664 = vmatprep.subr.mxu0 0.0
    %6665 = vmatpush1.msra.mxu0 0.0
    %6666 = vmatprep.subr.mxu0 0.0
    %6667 = vmatpush1.msra.mxu0 0.0
    %6668 = vmatprep.subr.mxu0 0.0
    %6669 = vmatpush1.msra.mxu0 0.0
    %6670 = vmatprep.subr.mxu0 0.0
    %6671 = vmatpush1.msra.mxu0 0.0
    %6672 = vmatprep.subr.mxu0 0.0
    %6673 = vmatpush1.msra.mxu0 0.0
    %6674 = vmatprep.subr.mxu0 0.0
    %6675 = vmatpush1.msra.mxu0 0.0
    %6676 = vmatprep.subr.mxu0 0.0
    %6677 = vmatpush1.msra.mxu0 0.0
    %6678 = vmatprep.subr.mxu0 0.0
    %6679 = vmatpush1.msra.mxu0 0.0
    %6680 = vmatprep.subr.mxu0 0.0
    %6681 = vmatpush1.msra.mxu0 0.0
    %6682 = vmatprep.subr.mxu0 0.0
    %6683 = vmatpush1.msra.mxu0 0.0
    %6684 = vmatprep.subr.mxu0 0.0
    %6685 = vmatpush1.msra.mxu0 0.0
    %6686 = vmatprep.subr.mxu0 0.0
    %6687 = vmatpush1.msra.mxu0 0.0
    %6688 = vmatprep.subr.mxu0 0.0
    %6689 = vmatpush1.msra.mxu0 0.0
    %6690 = vmatprep.subr.mxu0 0.0
    %6691 = vmatpush1.msra.mxu0 0.0
    %6692 = vmatprep.subr.mxu0 0.0
    %6693 = vmatpush1.msra.mxu0 0.0
    %6694 = vmatprep.subr.mxu0 0.0
    %6695 = vmatpush1.msra.mxu0 0.0
    %6696 = vmatprep.subr.mxu0 0.0
    %6697 = vmatpush1.msra.mxu0 0.0
    %6698 = vmatprep.subr.mxu0 0.0
    %6699 = vmatpush1.msra.mxu0 0.0
    %6700 = vmatprep.subr.mxu0 0.0
    %6701 = vmatpush1.msra.mxu0 0.0
    %6702 = vmatprep.subr.mxu0 0.0
    %6703 = vmatpush1.msra.mxu0 0.0
    %6704 = vmatprep.subr.mxu0 0.0
    %6705 = vmatpush1.msra.mxu0 0.0
    %6706 = vmatprep.subr.mxu0 0.0
    %6707 = vmatpush1.msra.mxu0 0.0
    %6708 = vmatprep.subr.mxu0 0.0
    %6709 = vmatpush1.msra.mxu0 0.0
    %6710 = vmatprep.subr.mxu0 0.0
    %6711 = vmatpush1.msra.mxu0 0.0
    %6712 = vmatprep.subr.mxu0 0.0
    %6713 = vmatpush1.msra.mxu0 0.0
    %6714 = vmatprep.subr.mxu0 0.0
    %6715 = vmatpush1.msra.mxu0 0.0
    %6716 = vmatprep.subr.mxu0 0.0
    %6717 = vmatpush1.msra.mxu0 0.0
    %6718 = vmatprep.mubr.f32.mxu0 0.0
    %6719 = vmatmul.mubr.f32.gmra.mrb[0].mxu0 %v6652
    %v6720 = vpop.f32.mrb[0].mxu0
    %v6721 = vadd.f32 0.0, %v6720
    %v6722 = vpop.f32.mrb[0].mxu0
    %6723 = vdwg.mxu0
    %s6724 = scalar_lea.vmem %s16, 160
    %v6725 = vld [vmem:[%s6724] sm:$0xff]
    %v6726 = vld [vmem:[%s6724 + $0x8] sm:$0xff]
    %v6727 = vld [vmem:[%s6724 + $0x10] sm:$0xff]
    %v6728 = vld [vmem:[%s6724 + $0x18] sm:$0xff]
    %v6729 = vld [vmem:[%s6724 + $0x20] sm:$0xff]
    %v6730 = vld [vmem:[%s6724 + $0x28] sm:$0xff]
    %v6731 = vld [vmem:[%s6724 + $0x30] sm:$0xff]
    %v6732 = vld [vmem:[%s6724 + $0x38] sm:$0xff]
    %v6733 = vld [vmem:[%s6724 + $0x40] sm:$0xff]
    %v6734 = vld [vmem:[%s6724 + $0x48] sm:$0xff]
    %v6736 = vsel %vm6408, %v6721, 0
    %6738 = vmatprep.subr.mxu0 0.0
    %6739 = vmatpush1.msra.mxu0 %v6725
    %6740 = vmatprep.subr.mxu0 0.0
    %6741 = vmatpush1.msra.mxu0 %v6726
    %6742 = vmatprep.subr.mxu0 0.0
    %6743 = vmatpush1.msra.mxu0 %v6727
    %6744 = vmatprep.subr.mxu0 0.0
    %6745 = vmatpush1.msra.mxu0 %v6728
    %6746 = vmatprep.subr.mxu0 0.0
    %6747 = vmatpush1.msra.mxu0 %v6729
    %6748 = vmatprep.subr.mxu0 0.0
    %6749 = vmatpush1.msra.mxu0 %v6730
    %6750 = vmatprep.subr.mxu0 0.0
    %6751 = vmatpush1.msra.mxu0 %v6731
    %6752 = vmatprep.subr.mxu0 0.0
    %6753 = vmatpush1.msra.mxu0 %v6732
    %6754 = vmatprep.subr.mxu0 0.0
    %6755 = vmatpush1.msra.mxu0 %v6733
    %6756 = vmatprep.subr.mxu0 0.0
    %6757 = vmatpush1.msra.mxu0 %v6734
    %6758 = vmatprep.subr.mxu0 0.0
    %6759 = vmatpush1.msra.mxu0 0.0
    %6760 = vmatprep.subr.mxu0 0.0
    %6761 = vmatpush1.msra.mxu0 0.0
    %6762 = vmatprep.subr.mxu0 0.0
    %6763 = vmatpush1.msra.mxu0 0.0
    %6764 = vmatprep.subr.mxu0 0.0
    %6765 = vmatpush1.msra.mxu0 0.0
    %6766 = vmatprep.subr.mxu0 0.0
    %6767 = vmatpush1.msra.mxu0 0.0
    %6768 = vmatprep.subr.mxu0 0.0
    %6769 = vmatpush1.msra.mxu0 0.0
    %6770 = vmatprep.subr.mxu0 0.0
    %6771 = vmatpush1.msra.mxu0 0.0
    %6772 = vmatprep.subr.mxu0 0.0
    %6773 = vmatpush1.msra.mxu0 0.0
    %6774 = vmatprep.subr.mxu0 0.0
    %6775 = vmatpush1.msra.mxu0 0.0
    %6776 = vmatprep.subr.mxu0 0.0
    %6777 = vmatpush1.msra.mxu0 0.0
    %6778 = vmatprep.subr.mxu0 0.0
    %6779 = vmatpush1.msra.mxu0 0.0
    %6780 = vmatprep.subr.mxu0 0.0
    %6781 = vmatpush1.msra.mxu0 0.0
    %6782 = vmatprep.subr.mxu0 0.0
    %6783 = vmatpush1.msra.mxu0 0.0
    %6784 = vmatprep.subr.mxu0 0.0
    %6785 = vmatpush1.msra.mxu0 0.0
    %6786 = vmatprep.subr.mxu0 0.0
    %6787 = vmatpush1.msra.mxu0 0.0
    %6788 = vmatprep.subr.mxu0 0.0
    %6789 = vmatpush1.msra.mxu0 0.0
    %6790 = vmatprep.subr.mxu0 0.0
    %6791 = vmatpush1.msra.mxu0 0.0
    %6792 = vmatprep.subr.mxu0 0.0
    %6793 = vmatpush1.msra.mxu0 0.0
    %6794 = vmatprep.subr.mxu0 0.0
    %6795 = vmatpush1.msra.mxu0 0.0
    %6796 = vmatprep.subr.mxu0 0.0
    %6797 = vmatpush1.msra.mxu0 0.0
    %6798 = vmatprep.subr.mxu0 0.0
    %6799 = vmatpush1.msra.mxu0 0.0
    %6800 = vmatprep.subr.mxu0 0.0
    %6801 = vmatpush1.msra.mxu0 0.0
    %6802 = vmatprep.mubr.f32.mxu0 0.0
    %6803 = vmatmul.mubr.f32.gmra.mrb[0].mxu0 %v6736
    %v6804 = vpop.f32.mrb[0].mxu0
    %v6805 = vadd.f32 0.0, %v6804
    %v6806 = vpop.f32.mrb[0].mxu0
    %6807 = vdwg.mxu0
    %v6808 = vadd.f32 %v6648, %v6805
    %s6809 = scalar_lea.vmem [#allocation13], 24
    %v6810 = vld [vmem:[%s6809] sm:$0xff]
    %v6812 = vsel %vm6112, %v6810, 0
    %6814 = vmatprep.subr.mxu0 0.0
    %6815 = vmatpush1.msra.mxu0 %v6319
    %6816 = vmatprep.subr.mxu0 0.0
    %6817 = vmatpush1.msra.mxu0 %v6320
    %6818 = vmatprep.subr.mxu0 0.0
    %6819 = vmatpush1.msra.mxu0 %v6321
    %6820 = vmatprep.subr.mxu0 0.0
    %6821 = vmatpush1.msra.mxu0 %v6322
    %6822 = vmatprep.subr.mxu0 0.0
    %6823 = vmatpush1.msra.mxu0 0.0
    %6824 = vmatprep.subr.mxu0 0.0
    %6825 = vmatpush1.msra.mxu0 0.0
    %6826 = vmatprep.subr.mxu0 0.0
    %6827 = vmatpush1.msra.mxu0 0.0
    %6828 = vmatprep.subr.mxu0 0.0
    %6829 = vmatpush1.msra.mxu0 0.0
    %6830 = vmatprep.subr.mxu0 0.0
    %6831 = vmatpush1.msra.mxu0 0.0
    %6832 = vmatprep.subr.mxu0 0.0
    %6833 = vmatpush1.msra.mxu0 0.0
    %6834 = vmatprep.subr.mxu0 0.0
    %6835 = vmatpush1.msra.mxu0 0.0
    %6836 = vmatprep.subr.mxu0 0.0
    %6837 = vmatpush1.msra.mxu0 0.0
    %6838 = vmatprep.subr.mxu0 0.0
    %6839 = vmatpush1.msra.mxu0 0.0
    %6840 = vmatprep.subr.mxu0 0.0
    %6841 = vmatpush1.msra.mxu0 0.0
    %6842 = vmatprep.subr.mxu0 0.0
    %6843 = vmatpush1.msra.mxu0 0.0
    %6844 = vmatprep.subr.mxu0 0.0
    %6845 = vmatpush1.msra.mxu0 0.0
    %6846 = vmatprep.subr.mxu0 0.0
    %6847 = vmatpush1.msra.mxu0 0.0
    %6848 = vmatprep.subr.mxu0 0.0
    %6849 = vmatpush1.msra.mxu0 0.0
    %6850 = vmatprep.subr.mxu0 0.0
    %6851 = vmatpush1.msra.mxu0 0.0
    %6852 = vmatprep.subr.mxu0 0.0
    %6853 = vmatpush1.msra.mxu0 0.0
    %6854 = vmatprep.subr.mxu0 0.0
    %6855 = vmatpush1.msra.mxu0 0.0
    %6856 = vmatprep.subr.mxu0 0.0
    %6857 = vmatpush1.msra.mxu0 0.0
    %6858 = vmatprep.subr.mxu0 0.0
    %6859 = vmatpush1.msra.mxu0 0.0
    %6860 = vmatprep.subr.mxu0 0.0
    %6861 = vmatpush1.msra.mxu0 0.0
    %6862 = vmatprep.subr.mxu0 0.0
    %6863 = vmatpush1.msra.mxu0 0.0
    %6864 = vmatprep.subr.mxu0 0.0
    %6865 = vmatpush1.msra.mxu0 0.0
    %6866 = vmatprep.subr.mxu0 0.0
    %6867 = vmatpush1.msra.mxu0 0.0
    %6868 = vmatprep.subr.mxu0 0.0
    %6869 = vmatpush1.msra.mxu0 0.0
    %6870 = vmatprep.subr.mxu0 0.0
    %6871 = vmatpush1.msra.mxu0 0.0
    %6872 = vmatprep.subr.mxu0 0.0
    %6873 = vmatpush1.msra.mxu0 0.0
    %6874 = vmatprep.subr.mxu0 0.0
    %6875 = vmatpush1.msra.mxu0 0.0
    %6876 = vmatprep.subr.mxu0 0.0
    %6877 = vmatpush1.msra.mxu0 0.0
    %6878 = vmatprep.mubr.f32.mxu0 0.0
    %6879 = vmatmul.mubr.f32.gmra.mrb[0].mxu0 %v6812
    %v6880 = vpop.f32.mrb[0].mxu0
    %v6881 = vadd.f32 0.0, %v6880
    %v6882 = vpop.f32.mrb[0].mxu0
    %6883 = vdwg.mxu0
    %s6884 = scalar_lea.vmem %s16, 240
    %v6885 = vld [vmem:[%s6884] sm:$0xff]
    %v6886 = vld [vmem:[%s6884 + $0x8] sm:$0xff]
    %v6887 = vld [vmem:[%s6884 + $0x10] sm:$0xff]
    %v6888 = vld [vmem:[%s6884 + $0x18] sm:$0xff]
    %v6889 = vld [vmem:[%s6884 + $0x20] sm:$0xff]
    %v6890 = vld [vmem:[%s6884 + $0x28] sm:$0xff]
    %v6891 = vld [vmem:[%s6884 + $0x30] sm:$0xff]
    %v6892 = vld [vmem:[%s6884 + $0x38] sm:$0xff]
    %v6893 = vld [vmem:[%s6884 + $0x40] sm:$0xff]
    %v6894 = vld [vmem:[%s6884 + $0x48] sm:$0xff]
    %v6896 = vsel %vm6408, %v6881, 0
    %6898 = vmatprep.subr.mxu0 0.0
    %6899 = vmatpush1.msra.mxu0 %v6885
    %6900 = vmatprep.subr.mxu0 0.0
    %6901 = vmatpush1.msra.mxu0 %v6886
    %6902 = vmatprep.subr.mxu0 0.0
    %6903 = vmatpush1.msra.mxu0 %v6887
    %6904 = vmatprep.subr.mxu0 0.0
    %6905 = vmatpush1.msra.mxu0 %v6888
    %6906 = vmatprep.subr.mxu0 0.0
    %6907 = vmatpush1.msra.mxu0 %v6889
    %6908 = vmatprep.subr.mxu0 0.0
    %6909 = vmatpush1.msra.mxu0 %v6890
    %6910 = vmatprep.subr.mxu0 0.0
    %6911 = vmatpush1.msra.mxu0 %v6891
    %6912 = vmatprep.subr.mxu0 0.0
    %6913 = vmatpush1.msra.mxu0 %v6892
    %6914 = vmatprep.subr.mxu0 0.0
    %6915 = vmatpush1.msra.mxu0 %v6893
    %6916 = vmatprep.subr.mxu0 0.0
    %6917 = vmatpush1.msra.mxu0 %v6894
    %6918 = vmatprep.subr.mxu0 0.0
    %6919 = vmatpush1.msra.mxu0 0.0
    %6920 = vmatprep.subr.mxu0 0.0
    %6921 = vmatpush1.msra.mxu0 0.0
    %6922 = vmatprep.subr.mxu0 0.0
    %6923 = vmatpush1.msra.mxu0 0.0
    %6924 = vmatprep.subr.mxu0 0.0
    %6925 = vmatpush1.msra.mxu0 0.0
    %6926 = vmatprep.subr.mxu0 0.0
    %6927 = vmatpush1.msra.mxu0 0.0
    %6928 = vmatprep.subr.mxu0 0.0
    %6929 = vmatpush1.msra.mxu0 0.0
    %6930 = vmatprep.subr.mxu0 0.0
    %6931 = vmatpush1.msra.mxu0 0.0
    %6932 = vmatprep.subr.mxu0 0.0
    %6933 = vmatpush1.msra.mxu0 0.0
    %6934 = vmatprep.subr.mxu0 0.0
    %6935 = vmatpush1.msra.mxu0 0.0
    %6936 = vmatprep.subr.mxu0 0.0
    %6937 = vmatpush1.msra.mxu0 0.0
    %6938 = vmatprep.subr.mxu0 0.0
    %6939 = vmatpush1.msra.mxu0 0.0
    %6940 = vmatprep.subr.mxu0 0.0
    %6941 = vmatpush1.msra.mxu0 0.0
    %6942 = vmatprep.subr.mxu0 0.0
    %6943 = vmatpush1.msra.mxu0 0.0
    %6944 = vmatprep.subr.mxu0 0.0
    %6945 = vmatpush1.msra.mxu0 0.0
    %6946 = vmatprep.subr.mxu0 0.0
    %6947 = vmatpush1.msra.mxu0 0.0
    %6948 = vmatprep.subr.mxu0 0.0
    %6949 = vmatpush1.msra.mxu0 0.0
    %6950 = vmatprep.subr.mxu0 0.0
    %6951 = vmatpush1.msra.mxu0 0.0
    %6952 = vmatprep.subr.mxu0 0.0
    %6953 = vmatpush1.msra.mxu0 0.0
    %6954 = vmatprep.subr.mxu0 0.0
    %6955 = vmatpush1.msra.mxu0 0.0
    %6956 = vmatprep.subr.mxu0 0.0
    %6957 = vmatpush1.msra.mxu0 0.0
    %6958 = vmatprep.subr.mxu0 0.0
    %6959 = vmatpush1.msra.mxu0 0.0
    %6960 = vmatprep.subr.mxu0 0.0
    %6961 = vmatpush1.msra.mxu0 0.0
    %6962 = vmatprep.mubr.f32.mxu0 0.0
    %6963 = vmatmul.mubr.f32.gmra.mrb[0].mxu0 %v6896
    %v6964 = vpop.f32.mrb[0].mxu0
    %v6965 = vadd.f32 0.0, %v6964
    %v6966 = vpop.f32.mrb[0].mxu0
    %6967 = vdwg.mxu0
    %v6968 = vadd.f32 %v6808, %v6965
    %v6969 = vmax.f32 %v6968, 0.0
    %v6970 = vld [vmem:[%s18] sm:$0xff]
    %v6971 = vld [vmem:[%s18 + $0x8] sm:$0xff]
    %v6972 = vld [vmem:[%s18 + $0x10] sm:$0xff]
    %v6973 = vld [vmem:[%s18 + $0x18] sm:$0xff]
    %v6974 = vld [vmem:[%s18 + $0x20] sm:$0xff]
    %v6975 = vld [vmem:[%s18 + $0x28] sm:$0xff]
    %v6976 = vld [vmem:[%s18 + $0x30] sm:$0x3]
    %v6977 = vld [vmem:[%s19] sm:$0x1]
    %v6979 = vlaneseq
    %v6980 = vshrl.u32 %v6979, 7
    %v6981 = vsub.s32 0, %v6980
    %v6982 = vrot.slane %v6977, %v6981
    %vm6984 = vcmask 408576
    %v6986 = vsel %vm6984, %v6969, 0
    %vm6988 = vcmask 1041408
    %v6990 = vsel %vm6988, %v6976, 0
    %6992 = vmatprep.subr.mxu0 0.0
    %6993 = vmatpush1.msra.mxu0 %v6970
    %6994 = vmatprep.subr.mxu0 0.0
    %6995 = vmatpush1.msra.mxu0 %v6971
    %6996 = vmatprep.subr.mxu0 0.0
    %6997 = vmatpush1.msra.mxu0 %v6972
    %6998 = vmatprep.subr.mxu0 0.0
    %6999 = vmatpush1.msra.mxu0 %v6973
    %7000 = vmatprep.subr.mxu0 0.0
    %7001 = vmatpush1.msra.mxu0 %v6974
    %7002 = vmatprep.subr.mxu0 0.0
    %7003 = vmatpush1.msra.mxu0 %v6975
    %7004 = vmatprep.subr.mxu0 0.0
    %7005 = vmatpush1.msra.mxu0 %v6990
    %7006 = vmatprep.subr.mxu0 0.0
    %7007 = vmatpush1.msra.mxu0 0.0
    %7008 = vmatprep.subr.mxu0 0.0
    %7009 = vmatpush1.msra.mxu0 0.0
    %7010 = vmatprep.subr.mxu0 0.0
    %7011 = vmatpush1.msra.mxu0 0.0
    %7012 = vmatprep.subr.mxu0 0.0
    %7013 = vmatpush1.msra.mxu0 0.0
    %7014 = vmatprep.subr.mxu0 0.0
    %7015 = vmatpush1.msra.mxu0 0.0
    %7016 = vmatprep.subr.mxu0 0.0
    %7017 = vmatpush1.msra.mxu0 0.0
    %7018 = vmatprep.subr.mxu0 0.0
    %7019 = vmatpush1.msra.mxu0 0.0
    %7020 = vmatprep.subr.mxu0 0.0
    %7021 = vmatpush1.msra.mxu0 0.0
    %7022 = vmatprep.subr.mxu0 0.0
    %7023 = vmatpush1.msra.mxu0 0.0
    %7024 = vmatprep.subr.mxu0 0.0
    %7025 = vmatpush1.msra.mxu0 0.0
    %7026 = vmatprep.subr.mxu0 0.0
    %7027 = vmatpush1.msra.mxu0 0.0
    %7028 = vmatprep.subr.mxu0 0.0
    %7029 = vmatpush1.msra.mxu0 0.0
    %7030 = vmatprep.subr.mxu0 0.0
    %7031 = vmatpush1.msra.mxu0 0.0
    %7032 = vmatprep.subr.mxu0 0.0
    %7033 = vmatpush1.msra.mxu0 0.0
    %7034 = vmatprep.subr.mxu0 0.0
    %7035 = vmatpush1.msra.mxu0 0.0
    %7036 = vmatprep.subr.mxu0 0.0
    %7037 = vmatpush1.msra.mxu0 0.0
    %7038 = vmatprep.subr.mxu0 0.0
    %7039 = vmatpush1.msra.mxu0 0.0
    %7040 = vmatprep.subr.mxu0 0.0
    %7041 = vmatpush1.msra.mxu0 0.0
    %7042 = vmatprep.subr.mxu0 0.0
    %7043 = vmatpush1.msra.mxu0 0.0
    %7044 = vmatprep.subr.mxu0 0.0
    %7045 = vmatpush1.msra.mxu0 0.0
    %7046 = vmatprep.subr.mxu0 0.0
    %7047 = vmatpush1.msra.mxu0 0.0
    %7048 = vmatprep.subr.mxu0 0.0
    %7049 = vmatpush1.msra.mxu0 0.0
    %7050 = vmatprep.subr.mxu0 0.0
    %7051 = vmatpush1.msra.mxu0 0.0
    %7052 = vmatprep.subr.mxu0 0.0
    %7053 = vmatpush1.msra.mxu0 0.0
    %7054 = vmatprep.subr.mxu0 0.0
    %7055 = vmatpush1.msra.mxu0 0.0
    %7056 = vmatprep.mubr.f32.mxu0 0.0
    %7057 = vmatmul.mubr.f32.gmra.mrb[0].mxu0 %v6986
    %v7058 = vpop.f32.mrb[0].mxu0
    %v7059 = vadd.f32 %v6982, %v7058
    %v7060 = vpop.f32.mrb[0].mxu0
    %7061 = vdwg.mxu0
    %vm7062 = vcmask 80896
    %v7063 = vsel %vm7062, %v7059, -inf
    %7064 = vmax.xlane.f32.xlu0 %v7063
    %v7065 = vpop.xlane.xlu0 %7064
    %v7066 = vsub.f32 %v7059, %v7065
    %v7067 = vmul.f32 %v7066, 1.442695
    %v7068 = vpow.pop %v7067
    %v7069 = vsel %vm7062, %v7068, 0.0
    %7070 = vadd.xlane.f32.xlu0 %v7069
    %v7071 = vpop.xlane.xlu0 %7070
    %v7072 = vlog2.pop %v7071
    %v7073 = vmul.f32 %v7072, 0.6931472
    %v7074 = vsub.f32 %v7066, %v7073
    %7075 = vst.msk [vmem:[%s20] sm:$0xff] %vm7062, %v7074
    // Predicated region
    $region114: #{my_network_forward.1} parent=1 // pred_check
      _
    $region115: #{my_network_forward.1} parent=1 // pred_check_branch
      %7077 = sbr.rel (0) target = $region117
    $region116: #{my_network_forward.1} parent=1 // pred_region
      _
    $region117: #{my_network_forward.1} parent=1 // pred_fallthru
      _
    // Predicated region
    $region118: #{my_network_forward.1} parent=1 // pred_check
      _
    $region119: #{my_network_forward.1} parent=1 // pred_check_branch
      %7079 = sbr.rel (0) target = $region121
    $region120: #{my_network_forward.1} parent=1 // pred_region
      _
    $region121: #{my_network_forward.1} parent=1 // pred_fallthru
      _
    %7080 = vsyncpa [#allocation3], 1
    %7081 = vsyncpa [#allocation5], 1
    %7082 = vsyncpa [#allocation8], 1
    %7083 = vsyncpa [#allocation11], 1
    %7084 = vsyncpa [#allocation14], 1

</llo_original>
